<compile_context>
chip_gen: v5e
topology: v5e:2x2
jax: 0.10.0
libtpu: 0.0.40
codegen_flags: <defaults>
</compile_context>

<pallas_src>
import jax
import jax.numpy as jnp
from jax.experimental import pallas as pl
from jax.experimental.pallas import tpu as pltpu

N_HIDDEN = 100          # n_hidden in the PyTorch module
INPUT_SIZE = 200        # LSTM input_size
NUM_LAYERS = 2
NUM_DIRECTIONS = 2

HP = 128                # padded hidden width (lane aligned)
IN_PAD = 2 * HP         # padded 2H concat width (inter-layer activation)
GP = 4 * HP             # padded gate width per direction = 512
G2 = 2 * GP             # both directions stacked = 1024


def _timeloop(seq, body, init):
    """Python-unrolled loop for short sequences (static ref indices, full LLO
    visibility); lax.fori_loop for long ones."""
    if seq <= 32:
        carry = init
        for t in range(seq):
            carry = body(t, carry)
        return carry
    return jax.lax.fori_loop(0, seq, body, init)


# ----------------------------------------------------------------------------
# Single fused kernel, grid=() -- everything resident in VMEM.
# ----------------------------------------------------------------------------
def _bilstm_kernel(gx0_ref, wih1_ref, whh0_ref, whh1_ref, b1_ref,
                   h0_ref, c0_ref, fcw_ref, fcb_ref,
                   out_ref,
                   act_ref, gx1_ref):
    """
    gx0_ref : (seq, BP, 1024) f32   layer-0 input gates x@W_ih + b (fwd|bwd)
    wih1_ref: (256, 1024)     bf16  layer-1 stacked input weights
    whh0_ref: (128, 1024)     bf16  layer-0 recurrent weights (fwd|bwd)
    whh1_ref: (128, 1024)     bf16  layer-1 recurrent weights (fwd|bwd)
    b1_ref  : (1, 1024)       f32   layer-1 combined bias (fwd|bwd)
    h0_ref  : (2, 2, BP, 128) f32   initial hidden states [layer, dir]
    c0_ref  : (2, 2, BP, 128) f32   initial cell states
    fcw_ref : (256, 128)      f32   padded FC weight (transposed)
    fcb_ref : (1, 128)        f32   padded FC bias
    out_ref : (BP, 128)       f32   relu(fc(...)) output
    act_ref : VMEM (seq, BP, 256) f32  layer-0 output activations (fwd|bwd)
    gx1_ref : VMEM (seq, BP, 1024) f32 layer-1 input gates
    """
    seq, BP, _ = act_ref.shape

    def gates(g, c_prev):
        i_g = jax.nn.sigmoid(g[:, 0 * HP:1 * HP])
        f_g = jax.nn.sigmoid(g[:, 1 * HP:2 * HP])
        g_g = jnp.tanh(g[:, 2 * HP:3 * HP])
        o_g = jax.nn.sigmoid(g[:, 3 * HP:4 * HP])
        c_new = f_g * c_prev + i_g * g_g
        h_new = o_g * jnp.tanh(c_new)
        return h_new, c_new

    # ------------- layer 0: full bidirectional recurrence -------------------
    # Stacked carries: rows [0:BP] = forward dir, rows [BP:2BP] = backward dir.
    h_init = jnp.concatenate([h0_ref[0, 0], h0_ref[0, 1]], axis=0)
    c_init = jnp.concatenate([c0_ref[0, 0], c0_ref[0, 1]], axis=0)

    def l0_step(t, carry):
        hfb, cfb = carry
        rt = seq - 1 - t
        # one fused recurrent matmul for both directions: (2BP,128)@(128,1024)
        gh = jnp.dot(hfb.astype(jnp.bfloat16), whh0_ref[...],
                     preferred_element_type=jnp.float32)
        g = jnp.concatenate(
            [gx0_ref[t, :, 0:GP] + gh[0:BP, 0:GP],
             gx0_ref[rt, :, GP:G2] + gh[BP:2 * BP, GP:G2]], axis=0)
        h_new, c_new = gates(g, cfb)
        # stash activations for layer 1: fwd at time t, bwd at time rt
        act_ref[t, :, 0:HP] = h_new[0:BP]
        act_ref[rt, :, HP:IN_PAD] = h_new[BP:2 * BP]
        return h_new, c_new

    _timeloop(seq, l0_step, (h_init, c_init))

    # ------------- layer 1 input projection (off the recurrence) ------------
    # TODO(synk): inter-layer dropout (p=0.6, training) would be applied here.
    t_chunk = max(1, min(seq, 64 // BP))
    for t0 in range(0, seq, t_chunk):
        tc = min(t_chunk, seq - t0)
        a = act_ref[t0:t0 + tc].reshape(tc * BP, IN_PAD).astype(jnp.bfloat16)
        g = jnp.dot(a, wih1_ref[...], preferred_element_type=jnp.float32)
        gx1_ref[t0:t0 + tc] = (g + b1_ref[...]).reshape(tc, BP, G2)

    # ------------- layer 1 backward: ONLY original time seq-1 is needed -----
    gh_b = jnp.dot(h0_ref[1, 1].astype(jnp.bfloat16), whh1_ref[:, GP:G2],
                   preferred_element_type=jnp.float32)
    g_b = gx1_ref[seq - 1, :, GP:G2] + gh_b
    h_bwd_last, _ = gates(g_b, c0_ref[1, 1])

    # ------------- layer 1 forward: full chain -------------------------------
    def l1_step(t, carry):
        hf, cf = carry
        gh = jnp.dot(hf.astype(jnp.bfloat16), whh1_ref[:, 0:GP],
                     preferred_element_type=jnp.float32)
        g = gx1_ref[t, :, 0:GP] + gh
        return gates(g, cf)

    h_fwd_last, _ = _timeloop(seq, l1_step, (h0_ref[1, 0], c0_ref[1, 0]))

    # ------------- fused FC + ReLU on outputs[-1] ----------------------------
    feat = jnp.concatenate([h_fwd_last, h_bwd_last], axis=1)   # (BP, 256)
    y = jnp.dot(feat, fcw_ref[...], preferred_element_type=jnp.float32)
    out_ref[...] = jnp.maximum(y + fcb_ref[...], 0.0)


def _bilstm_pallas(gx0_p, wih1, whh0, whh1, b1, h0_p, c0_p, fcw_p, fcb_p):
    seq, bp, _ = gx0_p.shape
    return pl.pallas_call(
        _bilstm_kernel,
        out_shape=jax.ShapeDtypeStruct((bp, HP), jnp.float32),
        scratch_shapes=[
            pltpu.VMEM((seq, bp, IN_PAD), jnp.float32),   # inter-layer act
            pltpu.VMEM((seq, bp, G2), jnp.float32),       # layer-1 input gates
        ],
    )(gx0_p, wih1, whh0, whh1, b1, h0_p, c0_p, fcw_p, fcb_p)


# ----------------------------------------------------------------------------
# Parameter packing (torch layout -> stacked / padded / pre-transposed)
# ----------------------------------------------------------------------------
def _pack_layer0_input_weights(params):
    """(200, 1024) stacked [fwd|bwd] input weights and (1, 1024) combined bias."""
    H = N_HIDDEN
    W = jnp.zeros((INPUT_SIZE, G2), jnp.float32)
    b = jnp.zeros((1, G2), jnp.float32)
    for d, sfx in enumerate(("", "_reverse")):
        w_ih = params[f"w_ih_l0{sfx}"]
        bi, bh = params[f"b_ih_l0{sfx}"], params[f"b_hh_l0{sfx}"]
        for g in range(4):
            col = slice(d * GP + g * HP, d * GP + g * HP + H)
            W = W.at[:, col].set(w_ih[g * H:(g + 1) * H, :].T)
            b = b.at[0, col].set(bi[g * H:(g + 1) * H] + bh[g * H:(g + 1) * H])
    return W, b


def _pack_layer1_input_weights(params):
    """(256, 1024): rows 0:100 <- fwd-act half, rows 128:228 <- bwd-act half."""
    H = N_HIDDEN
    W = jnp.zeros((IN_PAD, G2), jnp.float32)
    b = jnp.zeros((1, G2), jnp.float32)
    for d, sfx in enumerate(("", "_reverse")):
        w_ih = params[f"w_ih_l1{sfx}"]                 # (4H, 2H)
        bi, bh = params[f"b_ih_l1{sfx}"], params[f"b_hh_l1{sfx}"]
        for g in range(4):
            col = slice(d * GP + g * HP, d * GP + g * HP + H)
            W = W.at[0:H, col].set(w_ih[g * H:(g + 1) * H, 0:H].T)
            W = W.at[HP:HP + H, col].set(w_ih[g * H:(g + 1) * H, H:2 * H].T)
            b = b.at[0, col].set(bi[g * H:(g + 1) * H] + bh[g * H:(g + 1) * H])
    return W, b


def _pack_recurrent_weights(params, layer):
    """(128, 1024) stacked [fwd|bwd] recurrent weights for one layer."""
    H = N_HIDDEN
    W = jnp.zeros((HP, G2), jnp.float32)
    for d, sfx in enumerate(("", "_reverse")):
        w_hh = params[f"w_hh_l{layer}{sfx}"]           # (4H, H)
        for g in range(4):
            col = slice(d * GP + g * HP, d * GP + g * HP + H)
            W = W.at[0:H, col].set(w_hh[g * H:(g + 1) * H, :].T)
    return W


def init_params(key):
    """Deterministic init matching PyTorch LSTM/Linear parameter shapes."""
    H = N_HIDDEN
    bound = 1.0 / jnp.sqrt(jnp.float32(H))
    params = {}
    keys = iter(jax.random.split(key, 64))

    def u(shape):
        return jax.random.uniform(next(keys), shape, jnp.float32,
                                  minval=-bound, maxval=bound)

    for layer in range(NUM_LAYERS):
        in_dim = INPUT_SIZE if layer == 0 else 2 * H
        for suffix in ("", "_reverse"):
            params[f"w_ih_l{layer}{suffix}"] = u((4 * H, in_dim))
            params[f"w_hh_l{layer}{suffix}"] = u((4 * H, H))
            params[f"b_ih_l{layer}{suffix}"] = u((4 * H,))
            params[f"b_hh_l{layer}{suffix}"] = u((4 * H,))

    fc_bound = 1.0 / jnp.sqrt(jnp.float32(2 * H))
    params["fc_w"] = jax.random.uniform(next(keys), (2, 2 * H), jnp.float32,
                                        minval=-fc_bound, maxval=fc_bound)
    params["fc_b"] = jax.random.uniform(next(keys), (2,), jnp.float32,
                                        minval=-fc_bound, maxval=fc_bound)
    return params


# ----------------------------------------------------------------------------
# Forward pass (mirrors BiLSTM.forward, eval-mode semantics)
# ----------------------------------------------------------------------------
@jax.jit
def bilstm_forward(X, params, state_key):
    """X: (batch, seq, 200) -> (batch, 2)."""
    B, seq, _ = X.shape
    bp = max(8, ((B + 7) // 8) * 8)           # pad batch to sublane multiple

    # ---- layer-0 input projection hoisted into one XLA GEMM (cuDNN-style) --
    w0, b0 = _pack_layer0_input_weights(params)
    x_t = jnp.transpose(X, (1, 0, 2))                          # (seq, B, 200)
    gx0 = jnp.einsum('sbi,ig->sbg', x_t, w0) + b0              # (seq, B, 1024)
    gx0_p = jnp.zeros((seq, bp, G2), jnp.float32).at[:, :B].set(gx0)

    # ---- packed weights for the kernel (bf16 MXU inputs) --------------------
    w1, b1 = _pack_layer1_input_weights(params)
    wih1 = w1.astype(jnp.bfloat16)
    whh0 = _pack_recurrent_weights(params, 0).astype(jnp.bfloat16)
    whh1 = _pack_recurrent_weights(params, 1).astype(jnp.bfloat16)

    # ---- padded FC (Linear 200 -> 2), pre-transposed ------------------------
    fc_w, fc_b = params["fc_w"], params["fc_b"]
    n_out = fc_w.shape[0]
    fcw_p = jnp.zeros((IN_PAD, HP), jnp.float32)
    fcw_p = fcw_p.at[0:N_HIDDEN, 0:n_out].set(fc_w[:, 0:N_HIDDEN].T)
    fcw_p = fcw_p.at[HP:HP + N_HIDDEN, 0:n_out].set(fc_w[:, N_HIDDEN:].T)
    fcb_p = jnp.zeros((1, HP), jnp.float32).at[0, 0:n_out].set(fc_b)

    # ---- random initial states (matches torch.randn(...) in forward) -------
    k_h, k_c = jax.random.split(state_key)
    h0 = jax.random.normal(k_h, (NUM_LAYERS * NUM_DIRECTIONS, B, N_HIDDEN),
                           jnp.float32)
    c0 = jax.random.normal(k_c, (NUM_LAYERS * NUM_DIRECTIONS, B, N_HIDDEN),
                           jnp.float32)
    h0_p = jnp.zeros((NUM_LAYERS, NUM_DIRECTIONS, bp, HP), jnp.float32)
    c0_p = jnp.zeros((NUM_LAYERS, NUM_DIRECTIONS, bp, HP), jnp.float32)
    h0_p = h0_p.at[:, :, :B, :N_HIDDEN].set(
        h0.reshape(NUM_LAYERS, NUM_DIRECTIONS, B, N_HIDDEN))
    c0_p = c0_p.at[:, :, :B, :N_HIDDEN].set(
        c0.reshape(NUM_LAYERS, NUM_DIRECTIONS, B, N_HIDDEN))

    out_p = _bilstm_pallas(gx0_p, wih1, whh0, whh1, b1, h0_p, c0_p,
                           fcw_p, fcb_p)
    return out_p[:B, :n_out]


if __name__ == "__main__":
    key = jax.random.PRNGKey(0)
    k_x, k_p, k_s = jax.random.split(key, 3)

    batch, seq = 2, 8
    X = jax.random.normal(k_x, (batch, seq, INPUT_SIZE), jnp.float32)
    params = init_params(k_p)

    out = bilstm_forward(X, params, k_s)
    out = jax.block_until_ready(out)
    assert out.shape == (batch, 2)
    assert bool(jnp.all(out >= 0.0))          # ReLU output
    print("KERNEL_OK")
</pallas_src>

<mosaic_0001>
module attributes {stable_mosaic.version = 11 : i64} {
  func.func @_bilstm_kernel(%arg0: memref<8x8x1024xf32, #tpu.memory_space<vmem>>, %arg1: memref<256x1024xbf16, #tpu.memory_space<vmem>>, %arg2: memref<128x1024xbf16, #tpu.memory_space<vmem>>, %arg3: memref<128x1024xbf16, #tpu.memory_space<vmem>>, %arg4: memref<1x1024xf32, #tpu.memory_space<vmem>>, %arg5: memref<2x2x8x128xf32, #tpu.memory_space<vmem>>, %arg6: memref<2x2x8x128xf32, #tpu.memory_space<vmem>>, %arg7: memref<256x128xf32, #tpu.memory_space<vmem>>, %arg8: memref<1x128xf32, #tpu.memory_space<vmem>>, %arg9: memref<8x128xf32, #tpu.memory_space<vmem>>, %arg10: memref<8x8x256xf32, #tpu.memory_space<vmem>>, %arg11: memref<8x8x1024xf32, #tpu.memory_space<vmem>>) attributes {dimension_semantics = [], scalar_prefetch = 0 : i64, scratch_operands = 2 : i64, tpu.core_type = #tpu.core_type<tc>} {
    %c0 = arith.constant 0 : index
    %c0_0 = arith.constant 0 : index
    %c0_1 = arith.constant 0 : index
    %c0_2 = arith.constant 0 : index
    %0 = vector.load %arg5[%c0, %c0_0, %c0_1, %c0_2] : memref<2x2x8x128xf32, #tpu.memory_space<vmem>>, vector<1x1x8x128xf32>
    %1 = vector.shape_cast %0 : vector<1x1x8x128xf32> to vector<8x128xf32>
    %c0_3 = arith.constant 0 : index
    %c1 = arith.constant 1 : index
    %c0_4 = arith.constant 0 : index
    %c0_5 = arith.constant 0 : index
    %2 = vector.load %arg5[%c0_3, %c1, %c0_4, %c0_5] : memref<2x2x8x128xf32, #tpu.memory_space<vmem>>, vector<1x1x8x128xf32>
    %3 = vector.shape_cast %2 : vector<1x1x8x128xf32> to vector<8x128xf32>
    %4 = tpu.concatenate %1, %3 in 0 : vector<8x128xf32>, vector<8x128xf32> -> vector<16x128xf32>
    %c0_6 = arith.constant 0 : index
    %c0_7 = arith.constant 0 : index
    %c0_8 = arith.constant 0 : index
    %c0_9 = arith.constant 0 : index
    %5 = vector.load %arg6[%c0_6, %c0_7, %c0_8, %c0_9] : memref<2x2x8x128xf32, #tpu.memory_space<vmem>>, vector<1x1x8x128xf32>
    %6 = vector.shape_cast %5 : vector<1x1x8x128xf32> to vector<8x128xf32>
    %c0_10 = arith.constant 0 : index
    %c1_11 = arith.constant 1 : index
    %c0_12 = arith.constant 0 : index
    %c0_13 = arith.constant 0 : index
    %7 = vector.load %arg6[%c0_10, %c1_11, %c0_12, %c0_13] : memref<2x2x8x128xf32, #tpu.memory_space<vmem>>, vector<1x1x8x128xf32>
    %8 = vector.shape_cast %7 : vector<1x1x8x128xf32> to vector<8x128xf32>
    %9 = tpu.concatenate %6, %8 in 0 : vector<8x128xf32>, vector<8x128xf32> -> vector<16x128xf32>
    %10 = arith.truncf %4 : vector<16x128xf32> to vector<16x128xbf16>
    %c0_14 = arith.constant 0 : index
    %c0_15 = arith.constant 0 : index
    %11 = vector.load %arg2[%c0_14, %c0_15] : memref<128x1024xbf16, #tpu.memory_space<vmem>>, vector<128x1024xbf16>
    %cst = arith.constant dense<0.000000e+00> : vector<16x1024xf32>
    %12 = tpu.matmul %10, %11, %cst {dimension_numbers = #tpu.dot_dimension_numbers<[1], [0], [0], [1], [0, 0, 1, 1], [], []>} : vector<16x128xbf16>, vector<128x1024xbf16>, vector<16x1024xf32> -> vector<16x1024xf32>
    %c0_16 = arith.constant 0 : index
    %c0_17 = arith.constant 0 : index
    %c0_18 = arith.constant 0 : index
    %13 = vector.load %arg0[%c0_16, %c0_17, %c0_18] : memref<8x8x1024xf32, #tpu.memory_space<vmem>>, vector<1x8x512xf32>
    %14 = vector.shape_cast %13 : vector<1x8x512xf32> to vector<8x512xf32>
    %15 = vector.extract_strided_slice %12 {offsets = [0, 0], sizes = [8, 512], strides = [1, 1]} : vector<16x1024xf32> to vector<8x512xf32>
    %16 = arith.addf %14, %15 : vector<8x512xf32>
    %c7 = arith.constant 7 : index
    %c0_19 = arith.constant 0 : index
    %c512 = arith.constant 512 : index
    %17 = vector.load %arg0[%c7, %c0_19, %c512] : memref<8x8x1024xf32, #tpu.memory_space<vmem>>, vector<1x8x512xf32>
    %18 = vector.shape_cast %17 : vector<1x8x512xf32> to vector<8x512xf32>
    %19 = vector.extract_strided_slice %12 {offsets = [8, 512], sizes = [8, 512], strides = [1, 1]} : vector<16x1024xf32> to vector<8x512xf32>
    %20 = arith.addf %18, %19 : vector<8x512xf32>
    %21 = tpu.concatenate %16, %20 in 0 : vector<8x512xf32>, vector<8x512xf32> -> vector<16x512xf32>
    %22 = vector.extract_strided_slice %21 {offsets = [0, 0], sizes = [16, 128], strides = [1, 1]} : vector<16x512xf32> to vector<16x128xf32>
    %23 = arith.negf %22 : vector<16x128xf32>
    %24 = math.exp %23 : vector<16x128xf32>
    %cst_20 = arith.constant 1.000000e+00 : f32
    %25 = vector.broadcast %cst_20 : f32 to vector<16x128xf32>
    %26 = arith.addf %25, %24 : vector<16x128xf32>
    %27 = arith.divf %25, %26 : vector<16x128xf32>
    %28 = vector.extract_strided_slice %21 {offsets = [0, 128], sizes = [16, 128], strides = [1, 1]} : vector<16x512xf32> to vector<16x128xf32>
    %29 = arith.negf %28 : vector<16x128xf32>
    %30 = math.exp %29 : vector<16x128xf32>
    %cst_21 = arith.constant 1.000000e+00 : f32
    %31 = vector.broadcast %cst_21 : f32 to vector<16x128xf32>
    %32 = arith.addf %31, %30 : vector<16x128xf32>
    %33 = arith.divf %31, %32 : vector<16x128xf32>
    %34 = vector.extract_strided_slice %21 {offsets = [0, 256], sizes = [16, 128], strides = [1, 1]} : vector<16x512xf32> to vector<16x128xf32>
    %35 = math.tanh %34 : vector<16x128xf32>
    %36 = vector.extract_strided_slice %21 {offsets = [0, 384], sizes = [16, 128], strides = [1, 1]} : vector<16x512xf32> to vector<16x128xf32>
    %37 = arith.negf %36 : vector<16x128xf32>
    %38 = math.exp %37 : vector<16x128xf32>
    %cst_22 = arith.constant 1.000000e+00 : f32
    %39 = vector.broadcast %cst_22 : f32 to vector<16x128xf32>
    %40 = arith.addf %39, %38 : vector<16x128xf32>
    %41 = arith.divf %39, %40 : vector<16x128xf32>
    %42 = arith.mulf %33, %9 : vector<16x128xf32>
    %43 = arith.mulf %27, %35 : vector<16x128xf32>
    %44 = arith.addf %42, %43 : vector<16x128xf32>
    %45 = math.tanh %44 : vector<16x128xf32>
    %46 = arith.mulf %41, %45 : vector<16x128xf32>
    %47 = vector.extract_strided_slice %46 {offsets = [0, 0], sizes = [8, 128], strides = [1, 1]} : vector<16x128xf32> to vector<8x128xf32>
    %c0_23 = arith.constant 0 : index
    %c0_24 = arith.constant 0 : index
    %c0_25 = arith.constant 0 : index
    %48 = vector.load %arg10[%c0_23, %c0_24, %c0_25] : memref<8x8x256xf32, #tpu.memory_space<vmem>>, vector<1x8x128xf32>
    %49 = vector.shape_cast %48 : vector<1x8x128xf32> to vector<8x128xf32>
    %50 = vector.shape_cast %47 : vector<8x128xf32> to vector<1x8x128xf32>
    tpu.vector_store %arg10[%c0_23, %c0_24, %c0_25], %50 {strides = array<i32>} : memref<8x8x256xf32, #tpu.memory_space<vmem>>, vector<1x8x128xf32>,
    %51 = vector.extract_strided_slice %46 {offsets = [8, 0], sizes = [8, 128], strides = [1, 1]} : vector<16x128xf32> to vector<8x128xf32>
    %c7_26 = arith.constant 7 : index
    %c0_27 = arith.constant 0 : index
    %c128 = arith.constant 128 : index
    %52 = vector.load %arg10[%c7_26, %c0_27, %c128] : memref<8x8x256xf32, #tpu.memory_space<vmem>>, vector<1x8x128xf32>
    %53 = vector.shape_cast %52 : vector<1x8x128xf32> to vector<8x128xf32>
    %54 = vector.shape_cast %51 : vector<8x128xf32> to vector<1x8x128xf32>
    tpu.vector_store %arg10[%c7_26, %c0_27, %c128], %54 {strides = array<i32>} : memref<8x8x256xf32, #tpu.memory_space<vmem>>, vector<1x8x128xf32>,
    %55 = arith.truncf %46 : vector<16x128xf32> to vector<16x128xbf16>
    %c0_28 = arith.constant 0 : index
    %c0_29 = arith.constant 0 : index
    %56 = vector.load %arg2[%c0_28, %c0_29] : memref<128x1024xbf16, #tpu.memory_space<vmem>>, vector<128x1024xbf16>
    %cst_30 = arith.constant dense<0.000000e+00> : vector<16x1024xf32>
    %57 = tpu.matmul %55, %56, %cst_30 {dimension_numbers = #tpu.dot_dimension_numbers<[1], [0], [0], [1], [0, 0, 1, 1], [], []>} : vector<16x128xbf16>, vector<128x1024xbf16>, vector<16x1024xf32> -> vector<16x1024xf32>
    %c1_31 = arith.constant 1 : index
    %c0_32 = arith.constant 0 : index
    %c0_33 = arith.constant 0 : index
    %58 = vector.load %arg0[%c1_31, %c0_32, %c0_33] : memref<8x8x1024xf32, #tpu.memory_space<vmem>>, vector<1x8x512xf32>
    %59 = vector.shape_cast %58 : vector<1x8x512xf32> to vector<8x512xf32>
    %60 = vector.extract_strided_slice %57 {offsets = [0, 0], sizes = [8, 512], strides = [1, 1]} : vector<16x1024xf32> to vector<8x512xf32>
    %61 = arith.addf %59, %60 : vector<8x512xf32>
    %c6 = arith.constant 6 : index
    %c0_34 = arith.constant 0 : index
    %c512_35 = arith.constant 512 : index
    %62 = vector.load %arg0[%c6, %c0_34, %c512_35] : memref<8x8x1024xf32, #tpu.memory_space<vmem>>, vector<1x8x512xf32>
    %63 = vector.shape_cast %62 : vector<1x8x512xf32> to vector<8x512xf32>
    %64 = vector.extract_strided_slice %57 {offsets = [8, 512], sizes = [8, 512], strides = [1, 1]} : vector<16x1024xf32> to vector<8x512xf32>
    %65 = arith.addf %63, %64 : vector<8x512xf32>
    %66 = tpu.concatenate %61, %65 in 0 : vector<8x512xf32>, vector<8x512xf32> -> vector<16x512xf32>
    %67 = vector.extract_strided_slice %66 {offsets = [0, 0], sizes = [16, 128], strides = [1, 1]} : vector<16x512xf32> to vector<16x128xf32>
    %68 = arith.negf %67 : vector<16x128xf32>
    %69 = math.exp %68 : vector<16x128xf32>
    %cst_36 = arith.constant 1.000000e+00 : f32
    %70 = vector.broadcast %cst_36 : f32 to vector<16x128xf32>
    %71 = arith.addf %70, %69 : vector<16x128xf32>
    %72 = arith.divf %70, %71 : vector<16x128xf32>
    %73 = vector.extract_strided_slice %66 {offsets = [0, 128], sizes = [16, 128], strides = [1, 1]} : vector<16x512xf32> to vector<16x128xf32>
    %74 = arith.negf %73 : vector<16x128xf32>
    %75 = math.exp %74 : vector<16x128xf32>
    %cst_37 = arith.constant 1.000000e+00 : f32
    %76 = vector.broadcast %cst_37 : f32 to vector<16x128xf32>
    %77 = arith.addf %76, %75 : vector<16x128xf32>
    %78 = arith.divf %76, %77 : vector<16x128xf32>
    %79 = vector.extract_strided_slice %66 {offsets = [0, 256], sizes = [16, 128], strides = [1, 1]} : vector<16x512xf32> to vector<16x128xf32>
    %80 = math.tanh %79 : vector<16x128xf32>
    %81 = vector.extract_strided_slice %66 {offsets = [0, 384], sizes = [16, 128], strides = [1, 1]} : vector<16x512xf32> to vector<16x128xf32>
    %82 = arith.negf %81 : vector<16x128xf32>
    %83 = math.exp %82 : vector<16x128xf32>
    %cst_38 = arith.constant 1.000000e+00 : f32
    %84 = vector.broadcast %cst_38 : f32 to vector<16x128xf32>
    %85 = arith.addf %84, %83 : vector<16x128xf32>
    %86 = arith.divf %84, %85 : vector<16x128xf32>
    %87 = arith.mulf %78, %44 : vector<16x128xf32>
    %88 = arith.mulf %72, %80 : vector<16x128xf32>
    %89 = arith.addf %87, %88 : vector<16x128xf32>
    %90 = math.tanh %89 : vector<16x128xf32>
    %91 = arith.mulf %86, %90 : vector<16x128xf32>
    %92 = vector.extract_strided_slice %91 {offsets = [0, 0], sizes = [8, 128], strides = [1, 1]} : vector<16x128xf32> to vector<8x128xf32>
    %c1_39 = arith.constant 1 : index
    %c0_40 = arith.constant 0 : index
    %c0_41 = arith.constant 0 : index
    %93 = vector.load %arg10[%c1_39, %c0_40, %c0_41] : memref<8x8x256xf32, #tpu.memory_space<vmem>>, vector<1x8x128xf32>
    %94 = vector.shape_cast %93 : vector<1x8x128xf32> to vector<8x128xf32>
    %95 = vector.shape_cast %92 : vector<8x128xf32> to vector<1x8x128xf32>
    tpu.vector_store %arg10[%c1_39, %c0_40, %c0_41], %95 {strides = array<i32>} : memref<8x8x256xf32, #tpu.memory_space<vmem>>, vector<1x8x128xf32>,
    %96 = vector.extract_strided_slice %91 {offsets = [8, 0], sizes = [8, 128], strides = [1, 1]} : vector<16x128xf32> to vector<8x128xf32>
    %c6_42 = arith.constant 6 : index
    %c0_43 = arith.constant 0 : index
    %c128_44 = arith.constant 128 : index
    %97 = vector.load %arg10[%c6_42, %c0_43, %c128_44] : memref<8x8x256xf32, #tpu.memory_space<vmem>>, vector<1x8x128xf32>
    %98 = vector.shape_cast %97 : vector<1x8x128xf32> to vector<8x128xf32>
    %99 = vector.shape_cast %96 : vector<8x128xf32> to vector<1x8x128xf32>
    tpu.vector_store %arg10[%c6_42, %c0_43, %c128_44], %99 {strides = array<i32>} : memref<8x8x256xf32, #tpu.memory_space<vmem>>, vector<1x8x128xf32>,
    %100 = arith.truncf %91 : vector<16x128xf32> to vector<16x128xbf16>
    %c0_45 = arith.constant 0 : index
    %c0_46 = arith.constant 0 : index
    %101 = vector.load %arg2[%c0_45, %c0_46] : memref<128x1024xbf16, #tpu.memory_space<vmem>>, vector<128x1024xbf16>
    %cst_47 = arith.constant dense<0.000000e+00> : vector<16x1024xf32>
    %102 = tpu.matmul %100, %101, %cst_47 {dimension_numbers = #tpu.dot_dimension_numbers<[1], [0], [0], [1], [0, 0, 1, 1], [], []>} : vector<16x128xbf16>, vector<128x1024xbf16>, vector<16x1024xf32> -> vector<16x1024xf32>
    %c2 = arith.constant 2 : index
    %c0_48 = arith.constant 0 : index
    %c0_49 = arith.constant 0 : index
    %103 = vector.load %arg0[%c2, %c0_48, %c0_49] : memref<8x8x1024xf32, #tpu.memory_space<vmem>>, vector<1x8x512xf32>
    %104 = vector.shape_cast %103 : vector<1x8x512xf32> to vector<8x512xf32>
    %105 = vector.extract_strided_slice %102 {offsets = [0, 0], sizes = [8, 512], strides = [1, 1]} : vector<16x1024xf32> to vector<8x512xf32>
    %106 = arith.addf %104, %105 : vector<8x512xf32>
    %c5 = arith.constant 5 : index
    %c0_50 = arith.constant 0 : index
    %c512_51 = arith.constant 512 : index
    %107 = vector.load %arg0[%c5, %c0_50, %c512_51] : memref<8x8x1024xf32, #tpu.memory_space<vmem>>, vector<1x8x512xf32>
    %108 = vector.shape_cast %107 : vector<1x8x512xf32> to vector<8x512xf32>
    %109 = vector.extract_strided_slice %102 {offsets = [8, 512], sizes = [8, 512], strides = [1, 1]} : vector<16x1024xf32> to vector<8x512xf32>
    %110 = arith.addf %108, %109 : vector<8x512xf32>
    %111 = tpu.concatenate %106, %110 in 0 : vector<8x512xf32>, vector<8x512xf32> -> vector<16x512xf32>
    %112 = vector.extract_strided_slice %111 {offsets = [0, 0], sizes = [16, 128], strides = [1, 1]} : vector<16x512xf32> to vector<16x128xf32>
    %113 = arith.negf %112 : vector<16x128xf32>
    %114 = math.exp %113 : vector<16x128xf32>
    %cst_52 = arith.constant 1.000000e+00 : f32
    %115 = vector.broadcast %cst_52 : f32 to vector<16x128xf32>
    %116 = arith.addf %115, %114 : vector<16x128xf32>
    %117 = arith.divf %115, %116 : vector<16x128xf32>
    %118 = vector.extract_strided_slice %111 {offsets = [0, 128], sizes = [16, 128], strides = [1, 1]} : vector<16x512xf32> to vector<16x128xf32>
    %119 = arith.negf %118 : vector<16x128xf32>
    %120 = math.exp %119 : vector<16x128xf32>
    %cst_53 = arith.constant 1.000000e+00 : f32
    %121 = vector.broadcast %cst_53 : f32 to vector<16x128xf32>
    %122 = arith.addf %121, %120 : vector<16x128xf32>
    %123 = arith.divf %121, %122 : vector<16x128xf32>
    %124 = vector.extract_strided_slice %111 {offsets = [0, 256], sizes = [16, 128], strides = [1, 1]} : vector<16x512xf32> to vector<16x128xf32>
    %125 = math.tanh %124 : vector<16x128xf32>
    %126 = vector.extract_strided_slice %111 {offsets = [0, 384], sizes = [16, 128], strides = [1, 1]} : vector<16x512xf32> to vector<16x128xf32>
    %127 = arith.negf %126 : vector<16x128xf32>
    %128 = math.exp %127 : vector<16x128xf32>
    %cst_54 = arith.constant 1.000000e+00 : f32
    %129 = vector.broadcast %cst_54 : f32 to vector<16x128xf32>
    %130 = arith.addf %129, %128 : vector<16x128xf32>
    %131 = arith.divf %129, %130 : vector<16x128xf32>
    %132 = arith.mulf %123, %89 : vector<16x128xf32>
    %133 = arith.mulf %117, %125 : vector<16x128xf32>
    %134 = arith.addf %132, %133 : vector<16x128xf32>
    %135 = math.tanh %134 : vector<16x128xf32>
    %136 = arith.mulf %131, %135 : vector<16x128xf32>
    %137 = vector.extract_strided_slice %136 {offsets = [0, 0], sizes = [8, 128], strides = [1, 1]} : vector<16x128xf32> to vector<8x128xf32>
    %c2_55 = arith.constant 2 : index
    %c0_56 = arith.constant 0 : index
    %c0_57 = arith.constant 0 : index
    %138 = vector.load %arg10[%c2_55, %c0_56, %c0_57] : memref<8x8x256xf32, #tpu.memory_space<vmem>>, vector<1x8x128xf32>
    %139 = vector.shape_cast %138 : vector<1x8x128xf32> to vector<8x128xf32>
    %140 = vector.shape_cast %137 : vector<8x128xf32> to vector<1x8x128xf32>
    tpu.vector_store %arg10[%c2_55, %c0_56, %c0_57], %140 {strides = array<i32>} : memref<8x8x256xf32, #tpu.memory_space<vmem>>, vector<1x8x128xf32>,
    %141 = vector.extract_strided_slice %136 {offsets = [8, 0], sizes = [8, 128], strides = [1, 1]} : vector<16x128xf32> to vector<8x128xf32>
    %c5_58 = arith.constant 5 : index
    %c0_59 = arith.constant 0 : index
    %c128_60 = arith.constant 128 : index
    %142 = vector.load %arg10[%c5_58, %c0_59, %c128_60] : memref<8x8x256xf32, #tpu.memory_space<vmem>>, vector<1x8x128xf32>
    %143 = vector.shape_cast %142 : vector<1x8x128xf32> to vector<8x128xf32>
    %144 = vector.shape_cast %141 : vector<8x128xf32> to vector<1x8x128xf32>
    tpu.vector_store %arg10[%c5_58, %c0_59, %c128_60], %144 {strides = array<i32>} : memref<8x8x256xf32, #tpu.memory_space<vmem>>, vector<1x8x128xf32>,
    %145 = arith.truncf %136 : vector<16x128xf32> to vector<16x128xbf16>
    %c0_61 = arith.constant 0 : index
    %c0_62 = arith.constant 0 : index
    %146 = vector.load %arg2[%c0_61, %c0_62] : memref<128x1024xbf16, #tpu.memory_space<vmem>>, vector<128x1024xbf16>
    %cst_63 = arith.constant dense<0.000000e+00> : vector<16x1024xf32>
    %147 = tpu.matmul %145, %146, %cst_63 {dimension_numbers = #tpu.dot_dimension_numbers<[1], [0], [0], [1], [0, 0, 1, 1], [], []>} : vector<16x128xbf16>, vector<128x1024xbf16>, vector<16x1024xf32> -> vector<16x1024xf32>
    %c3 = arith.constant 3 : index
    %c0_64 = arith.constant 0 : index
    %c0_65 = arith.constant 0 : index
    %148 = vector.load %arg0[%c3, %c0_64, %c0_65] : memref<8x8x1024xf32, #tpu.memory_space<vmem>>, vector<1x8x512xf32>
    %149 = vector.shape_cast %148 : vector<1x8x512xf32> to vector<8x512xf32>
    %150 = vector.extract_strided_slice %147 {offsets = [0, 0], sizes = [8, 512], strides = [1, 1]} : vector<16x1024xf32> to vector<8x512xf32>
    %151 = arith.addf %149, %150 : vector<8x512xf32>
    %c4 = arith.constant 4 : index
    %c0_66 = arith.constant 0 : index
    %c512_67 = arith.constant 512 : index
    %152 = vector.load %arg0[%c4, %c0_66, %c512_67] : memref<8x8x1024xf32, #tpu.memory_space<vmem>>, vector<1x8x512xf32>
    %153 = vector.shape_cast %152 : vector<1x8x512xf32> to vector<8x512xf32>
    %154 = vector.extract_strided_slice %147 {offsets = [8, 512], sizes = [8, 512], strides = [1, 1]} : vector<16x1024xf32> to vector<8x512xf32>
    %155 = arith.addf %153, %154 : vector<8x512xf32>
    %156 = tpu.concatenate %151, %155 in 0 : vector<8x512xf32>, vector<8x512xf32> -> vector<16x512xf32>
    %157 = vector.extract_strided_slice %156 {offsets = [0, 0], sizes = [16, 128], strides = [1, 1]} : vector<16x512xf32> to vector<16x128xf32>
    %158 = arith.negf %157 : vector<16x128xf32>
    %159 = math.exp %158 : vector<16x128xf32>
    %cst_68 = arith.constant 1.000000e+00 : f32
    %160 = vector.broadcast %cst_68 : f32 to vector<16x128xf32>
    %161 = arith.addf %160, %159 : vector<16x128xf32>
    %162 = arith.divf %160, %161 : vector<16x128xf32>
    %163 = vector.extract_strided_slice %156 {offsets = [0, 128], sizes = [16, 128], strides = [1, 1]} : vector<16x512xf32> to vector<16x128xf32>
    %164 = arith.negf %163 : vector<16x128xf32>
    %165 = math.exp %164 : vector<16x128xf32>
    %cst_69 = arith.constant 1.000000e+00 : f32
    %166 = vector.broadcast %cst_69 : f32 to vector<16x128xf32>
    %167 = arith.addf %166, %165 : vector<16x128xf32>
    %168 = arith.divf %166, %167 : vector<16x128xf32>
    %169 = vector.extract_strided_slice %156 {offsets = [0, 256], sizes = [16, 128], strides = [1, 1]} : vector<16x512xf32> to vector<16x128xf32>
    %170 = math.tanh %169 : vector<16x128xf32>
    %171 = vector.extract_strided_slice %156 {offsets = [0, 384], sizes = [16, 128], strides = [1, 1]} : vector<16x512xf32> to vector<16x128xf32>
    %172 = arith.negf %171 : vector<16x128xf32>
    %173 = math.exp %172 : vector<16x128xf32>
    %cst_70 = arith.constant 1.000000e+00 : f32
    %174 = vector.broadcast %cst_70 : f32 to vector<16x128xf32>
    %175 = arith.addf %174, %173 : vector<16x128xf32>
    %176 = arith.divf %174, %175 : vector<16x128xf32>
    %177 = arith.mulf %168, %134 : vector<16x128xf32>
    %178 = arith.mulf %162, %170 : vector<16x128xf32>
    %179 = arith.addf %177, %178 : vector<16x128xf32>
    %180 = math.tanh %179 : vector<16x128xf32>
    %181 = arith.mulf %176, %180 : vector<16x128xf32>
    %182 = vector.extract_strided_slice %181 {offsets = [0, 0], sizes = [8, 128], strides = [1, 1]} : vector<16x128xf32> to vector<8x128xf32>
    %c3_71 = arith.constant 3 : index
    %c0_72 = arith.constant 0 : index
    %c0_73 = arith.constant 0 : index
    %183 = vector.load %arg10[%c3_71, %c0_72, %c0_73] : memref<8x8x256xf32, #tpu.memory_space<vmem>>, vector<1x8x128xf32>
    %184 = vector.shape_cast %183 : vector<1x8x128xf32> to vector<8x128xf32>
    %185 = vector.shape_cast %182 : vector<8x128xf32> to vector<1x8x128xf32>
    tpu.vector_store %arg10[%c3_71, %c0_72, %c0_73], %185 {strides = array<i32>} : memref<8x8x256xf32, #tpu.memory_space<vmem>>, vector<1x8x128xf32>,
    %186 = vector.extract_strided_slice %181 {offsets = [8, 0], sizes = [8, 128], strides = [1, 1]} : vector<16x128xf32> to vector<8x128xf32>
    %c4_74 = arith.constant 4 : index
    %c0_75 = arith.constant 0 : index
    %c128_76 = arith.constant 128 : index
    %187 = vector.load %arg10[%c4_74, %c0_75, %c128_76] : memref<8x8x256xf32, #tpu.memory_space<vmem>>, vector<1x8x128xf32>
    %188 = vector.shape_cast %187 : vector<1x8x128xf32> to vector<8x128xf32>
    %189 = vector.shape_cast %186 : vector<8x128xf32> to vector<1x8x128xf32>
    tpu.vector_store %arg10[%c4_74, %c0_75, %c128_76], %189 {strides = array<i32>} : memref<8x8x256xf32, #tpu.memory_space<vmem>>, vector<1x8x128xf32>,
    %190 = arith.truncf %181 : vector<16x128xf32> to vector<16x128xbf16>
    %c0_77 = arith.constant 0 : index
    %c0_78 = arith.constant 0 : index
    %191 = vector.load %arg2[%c0_77, %c0_78] : memref<128x1024xbf16, #tpu.memory_space<vmem>>, vector<128x1024xbf16>
    %cst_79 = arith.constant dense<0.000000e+00> : vector<16x1024xf32>
    %192 = tpu.matmul %190, %191, %cst_79 {dimension_numbers = #tpu.dot_dimension_numbers<[1], [0], [0], [1], [0, 0, 1, 1], [], []>} : vector<16x128xbf16>, vector<128x1024xbf16>, vector<16x1024xf32> -> vector<16x1024xf32>
    %c4_80 = arith.constant 4 : index
    %c0_81 = arith.constant 0 : index
    %c0_82 = arith.constant 0 : index
    %193 = vector.load %arg0[%c4_80, %c0_81, %c0_82] : memref<8x8x1024xf32, #tpu.memory_space<vmem>>, vector<1x8x512xf32>
    %194 = vector.shape_cast %193 : vector<1x8x512xf32> to vector<8x512xf32>
    %195 = vector.extract_strided_slice %192 {offsets = [0, 0], sizes = [8, 512], strides = [1, 1]} : vector<16x1024xf32> to vector<8x512xf32>
    %196 = arith.addf %194, %195 : vector<8x512xf32>
    %c3_83 = arith.constant 3 : index
    %c0_84 = arith.constant 0 : index
    %c512_85 = arith.constant 512 : index
    %197 = vector.load %arg0[%c3_83, %c0_84, %c512_85] : memref<8x8x1024xf32, #tpu.memory_space<vmem>>, vector<1x8x512xf32>
    %198 = vector.shape_cast %197 : vector<1x8x512xf32> to vector<8x512xf32>
    %199 = vector.extract_strided_slice %192 {offsets = [8, 512], sizes = [8, 512], strides = [1, 1]} : vector<16x1024xf32> to vector<8x512xf32>
    %200 = arith.addf %198, %199 : vector<8x512xf32>
    %201 = tpu.concatenate %196, %200 in 0 : vector<8x512xf32>, vector<8x512xf32> -> vector<16x512xf32>
    %202 = vector.extract_strided_slice %201 {offsets = [0, 0], sizes = [16, 128], strides = [1, 1]} : vector<16x512xf32> to vector<16x128xf32>
    %203 = arith.negf %202 : vector<16x128xf32>
    %204 = math.exp %203 : vector<16x128xf32>
    %cst_86 = arith.constant 1.000000e+00 : f32
    %205 = vector.broadcast %cst_86 : f32 to vector<16x128xf32>
    %206 = arith.addf %205, %204 : vector<16x128xf32>
    %207 = arith.divf %205, %206 : vector<16x128xf32>
    %208 = vector.extract_strided_slice %201 {offsets = [0, 128], sizes = [16, 128], strides = [1, 1]} : vector<16x512xf32> to vector<16x128xf32>
    %209 = arith.negf %208 : vector<16x128xf32>
    %210 = math.exp %209 : vector<16x128xf32>
    %cst_87 = arith.constant 1.000000e+00 : f32
    %211 = vector.broadcast %cst_87 : f32 to vector<16x128xf32>
    %212 = arith.addf %211, %210 : vector<16x128xf32>
    %213 = arith.divf %211, %212 : vector<16x128xf32>
    %214 = vector.extract_strided_slice %201 {offsets = [0, 256], sizes = [16, 128], strides = [1, 1]} : vector<16x512xf32> to vector<16x128xf32>
    %215 = math.tanh %214 : vector<16x128xf32>
    %216 = vector.extract_strided_slice %201 {offsets = [0, 384], sizes = [16, 128], strides = [1, 1]} : vector<16x512xf32> to vector<16x128xf32>
    %217 = arith.negf %216 : vector<16x128xf32>
    %218 = math.exp %217 : vector<16x128xf32>
    %cst_88 = arith.constant 1.000000e+00 : f32
    %219 = vector.broadcast %cst_88 : f32 to vector<16x128xf32>
    %220 = arith.addf %219, %218 : vector<16x128xf32>
    %221 = arith.divf %219, %220 : vector<16x128xf32>
    %222 = arith.mulf %213, %179 : vector<16x128xf32>
    %223 = arith.mulf %207, %215 : vector<16x128xf32>
    %224 = arith.addf %222, %223 : vector<16x128xf32>
    %225 = math.tanh %224 : vector<16x128xf32>
    %226 = arith.mulf %221, %225 : vector<16x128xf32>
    %227 = vector.extract_strided_slice %226 {offsets = [0, 0], sizes = [8, 128], strides = [1, 1]} : vector<16x128xf32> to vector<8x128xf32>
    %c4_89 = arith.constant 4 : index
    %c0_90 = arith.constant 0 : index
    %c0_91 = arith.constant 0 : index
    %228 = vector.load %arg10[%c4_89, %c0_90, %c0_91] : memref<8x8x256xf32, #tpu.memory_space<vmem>>, vector<1x8x128xf32>
    %229 = vector.shape_cast %228 : vector<1x8x128xf32> to vector<8x128xf32>
    %230 = vector.shape_cast %227 : vector<8x128xf32> to vector<1x8x128xf32>
    tpu.vector_store %arg10[%c4_89, %c0_90, %c0_91], %230 {strides = array<i32>} : memref<8x8x256xf32, #tpu.memory_space<vmem>>, vector<1x8x128xf32>,
    %231 = vector.extract_strided_slice %226 {offsets = [8, 0], sizes = [8, 128], strides = [1, 1]} : vector<16x128xf32> to vector<8x128xf32>
    %c3_92 = arith.constant 3 : index
    %c0_93 = arith.constant 0 : index
    %c128_94 = arith.constant 128 : index
    %232 = vector.load %arg10[%c3_92, %c0_93, %c128_94] : memref<8x8x256xf32, #tpu.memory_space<vmem>>, vector<1x8x128xf32>
    %233 = vector.shape_cast %232 : vector<1x8x128xf32> to vector<8x128xf32>
    %234 = vector.shape_cast %231 : vector<8x128xf32> to vector<1x8x128xf32>
    tpu.vector_store %arg10[%c3_92, %c0_93, %c128_94], %234 {strides = array<i32>} : memref<8x8x256xf32, #tpu.memory_space<vmem>>, vector<1x8x128xf32>,
    %235 = arith.truncf %226 : vector<16x128xf32> to vector<16x128xbf16>
    %c0_95 = arith.constant 0 : index
    %c0_96 = arith.constant 0 : index
    %236 = vector.load %arg2[%c0_95, %c0_96] : memref<128x1024xbf16, #tpu.memory_space<vmem>>, vector<128x1024xbf16>
    %cst_97 = arith.constant dense<0.000000e+00> : vector<16x1024xf32>
    %237 = tpu.matmul %235, %236, %cst_97 {dimension_numbers = #tpu.dot_dimension_numbers<[1], [0], [0], [1], [0, 0, 1, 1], [], []>} : vector<16x128xbf16>, vector<128x1024xbf16>, vector<16x1024xf32> -> vector<16x1024xf32>
    %c5_98 = arith.constant 5 : index
    %c0_99 = arith.constant 0 : index
    %c0_100 = arith.constant 0 : index
    %238 = vector.load %arg0[%c5_98, %c0_99, %c0_100] : memref<8x8x1024xf32, #tpu.memory_space<vmem>>, vector<1x8x512xf32>
    %239 = vector.shape_cast %238 : vector<1x8x512xf32> to vector<8x512xf32>
    %240 = vector.extract_strided_slice %237 {offsets = [0, 0], sizes = [8, 512], strides = [1, 1]} : vector<16x1024xf32> to vector<8x512xf32>
    %241 = arith.addf %239, %240 : vector<8x512xf32>
    %c2_101 = arith.constant 2 : index
    %c0_102 = arith.constant 0 : index
    %c512_103 = arith.constant 512 : index
    %242 = vector.load %arg0[%c2_101, %c0_102, %c512_103] : memref<8x8x1024xf32, #tpu.memory_space<vmem>>, vector<1x8x512xf32>
    %243 = vector.shape_cast %242 : vector<1x8x512xf32> to vector<8x512xf32>
    %244 = vector.extract_strided_slice %237 {offsets = [8, 512], sizes = [8, 512], strides = [1, 1]} : vector<16x1024xf32> to vector<8x512xf32>
    %245 = arith.addf %243, %244 : vector<8x512xf32>
    %246 = tpu.concatenate %241, %245 in 0 : vector<8x512xf32>, vector<8x512xf32> -> vector<16x512xf32>
    %247 = vector.extract_strided_slice %246 {offsets = [0, 0], sizes = [16, 128], strides = [1, 1]} : vector<16x512xf32> to vector<16x128xf32>
    %248 = arith.negf %247 : vector<16x128xf32>
    %249 = math.exp %248 : vector<16x128xf32>
    %cst_104 = arith.constant 1.000000e+00 : f32
    %250 = vector.broadcast %cst_104 : f32 to vector<16x128xf32>
    %251 = arith.addf %250, %249 : vector<16x128xf32>
    %252 = arith.divf %250, %251 : vector<16x128xf32>
    %253 = vector.extract_strided_slice %246 {offsets = [0, 128], sizes = [16, 128], strides = [1, 1]} : vector<16x512xf32> to vector<16x128xf32>
    %254 = arith.negf %253 : vector<16x128xf32>
    %255 = math.exp %254 : vector<16x128xf32>
    %cst_105 = arith.constant 1.000000e+00 : f32
    %256 = vector.broadcast %cst_105 : f32 to vector<16x128xf32>
    %257 = arith.addf %256, %255 : vector<16x128xf32>
    %258 = arith.divf %256, %257 : vector<16x128xf32>
    %259 = vector.extract_strided_slice %246 {offsets = [0, 256], sizes = [16, 128], strides = [1, 1]} : vector<16x512xf32> to vector<16x128xf32>
    %260 = math.tanh %259 : vector<16x128xf32>
    %261 = vector.extract_strided_slice %246 {offsets = [0, 384], sizes = [16, 128], strides = [1, 1]} : vector<16x512xf32> to vector<16x128xf32>
    %262 = arith.negf %261 : vector<16x128xf32>
    %263 = math.exp %262 : vector<16x128xf32>
    %cst_106 = arith.constant 1.000000e+00 : f32
    %264 = vector.broadcast %cst_106 : f32 to vector<16x128xf32>
    %265 = arith.addf %264, %263 : vector<16x128xf32>
    %266 = arith.divf %264, %265 : vector<16x128xf32>
    %267 = arith.mulf %258, %224 : vector<16x128xf32>
    %268 = arith.mulf %252, %260 : vector<16x128xf32>
    %269 = arith.addf %267, %268 : vector<16x128xf32>
    %270 = math.tanh %269 : vector<16x128xf32>
    %271 = arith.mulf %266, %270 : vector<16x128xf32>
    %272 = vector.extract_strided_slice %271 {offsets = [0, 0], sizes = [8, 128], strides = [1, 1]} : vector<16x128xf32> to vector<8x128xf32>
    %c5_107 = arith.constant 5 : index
    %c0_108 = arith.constant 0 : index
    %c0_109 = arith.constant 0 : index
    %273 = vector.load %arg10[%c5_107, %c0_108, %c0_109] : memref<8x8x256xf32, #tpu.memory_space<vmem>>, vector<1x8x128xf32>
    %274 = vector.shape_cast %273 : vector<1x8x128xf32> to vector<8x128xf32>
    %275 = vector.shape_cast %272 : vector<8x128xf32> to vector<1x8x128xf32>
    tpu.vector_store %arg10[%c5_107, %c0_108, %c0_109], %275 {strides = array<i32>} : memref<8x8x256xf32, #tpu.memory_space<vmem>>, vector<1x8x128xf32>,
    %276 = vector.extract_strided_slice %271 {offsets = [8, 0], sizes = [8, 128], strides = [1, 1]} : vector<16x128xf32> to vector<8x128xf32>
    %c2_110 = arith.constant 2 : index
    %c0_111 = arith.constant 0 : index
    %c128_112 = arith.constant 128 : index
    %277 = vector.load %arg10[%c2_110, %c0_111, %c128_112] : memref<8x8x256xf32, #tpu.memory_space<vmem>>, vector<1x8x128xf32>
    %278 = vector.shape_cast %277 : vector<1x8x128xf32> to vector<8x128xf32>
    %279 = vector.shape_cast %276 : vector<8x128xf32> to vector<1x8x128xf32>
    tpu.vector_store %arg10[%c2_110, %c0_111, %c128_112], %279 {strides = array<i32>} : memref<8x8x256xf32, #tpu.memory_space<vmem>>, vector<1x8x128xf32>,
    %280 = arith.truncf %271 : vector<16x128xf32> to vector<16x128xbf16>
    %c0_113 = arith.constant 0 : index
    %c0_114 = arith.constant 0 : index
    %281 = vector.load %arg2[%c0_113, %c0_114] : memref<128x1024xbf16, #tpu.memory_space<vmem>>, vector<128x1024xbf16>
    %cst_115 = arith.constant dense<0.000000e+00> : vector<16x1024xf32>
    %282 = tpu.matmul %280, %281, %cst_115 {dimension_numbers = #tpu.dot_dimension_numbers<[1], [0], [0], [1], [0, 0, 1, 1], [], []>} : vector<16x128xbf16>, vector<128x1024xbf16>, vector<16x1024xf32> -> vector<16x1024xf32>
    %c6_116 = arith.constant 6 : index
    %c0_117 = arith.constant 0 : index
    %c0_118 = arith.constant 0 : index
    %283 = vector.load %arg0[%c6_116, %c0_117, %c0_118] : memref<8x8x1024xf32, #tpu.memory_space<vmem>>, vector<1x8x512xf32>
    %284 = vector.shape_cast %283 : vector<1x8x512xf32> to vector<8x512xf32>
    %285 = vector.extract_strided_slice %282 {offsets = [0, 0], sizes = [8, 512], strides = [1, 1]} : vector<16x1024xf32> to vector<8x512xf32>
    %286 = arith.addf %284, %285 : vector<8x512xf32>
    %c1_119 = arith.constant 1 : index
    %c0_120 = arith.constant 0 : index
    %c512_121 = arith.constant 512 : index
    %287 = vector.load %arg0[%c1_119, %c0_120, %c512_121] : memref<8x8x1024xf32, #tpu.memory_space<vmem>>, vector<1x8x512xf32>
    %288 = vector.shape_cast %287 : vector<1x8x512xf32> to vector<8x512xf32>
    %289 = vector.extract_strided_slice %282 {offsets = [8, 512], sizes = [8, 512], strides = [1, 1]} : vector<16x1024xf32> to vector<8x512xf32>
    %290 = arith.addf %288, %289 : vector<8x512xf32>
    %291 = tpu.concatenate %286, %290 in 0 : vector<8x512xf32>, vector<8x512xf32> -> vector<16x512xf32>
    %292 = vector.extract_strided_slice %291 {offsets = [0, 0], sizes = [16, 128], strides = [1, 1]} : vector<16x512xf32> to vector<16x128xf32>
    %293 = arith.negf %292 : vector<16x128xf32>
    %294 = math.exp %293 : vector<16x128xf32>
    %cst_122 = arith.constant 1.000000e+00 : f32
    %295 = vector.broadcast %cst_122 : f32 to vector<16x128xf32>
    %296 = arith.addf %295, %294 : vector<16x128xf32>
    %297 = arith.divf %295, %296 : vector<16x128xf32>
    %298 = vector.extract_strided_slice %291 {offsets = [0, 128], sizes = [16, 128], strides = [1, 1]} : vector<16x512xf32> to vector<16x128xf32>
    %299 = arith.negf %298 : vector<16x128xf32>
    %300 = math.exp %299 : vector<16x128xf32>
    %cst_123 = arith.constant 1.000000e+00 : f32
    %301 = vector.broadcast %cst_123 : f32 to vector<16x128xf32>
    %302 = arith.addf %301, %300 : vector<16x128xf32>
    %303 = arith.divf %301, %302 : vector<16x128xf32>
    %304 = vector.extract_strided_slice %291 {offsets = [0, 256], sizes = [16, 128], strides = [1, 1]} : vector<16x512xf32> to vector<16x128xf32>
    %305 = math.tanh %304 : vector<16x128xf32>
    %306 = vector.extract_strided_slice %291 {offsets = [0, 384], sizes = [16, 128], strides = [1, 1]} : vector<16x512xf32> to vector<16x128xf32>
    %307 = arith.negf %306 : vector<16x128xf32>
    %308 = math.exp %307 : vector<16x128xf32>
    %cst_124 = arith.constant 1.000000e+00 : f32
    %309 = vector.broadcast %cst_124 : f32 to vector<16x128xf32>
    %310 = arith.addf %309, %308 : vector<16x128xf32>
    %311 = arith.divf %309, %310 : vector<16x128xf32>
    %312 = arith.mulf %303, %269 : vector<16x128xf32>
    %313 = arith.mulf %297, %305 : vector<16x128xf32>
    %314 = arith.addf %312, %313 : vector<16x128xf32>
    %315 = math.tanh %314 : vector<16x128xf32>
    %316 = arith.mulf %311, %315 : vector<16x128xf32>
    %317 = vector.extract_strided_slice %316 {offsets = [0, 0], sizes = [8, 128], strides = [1, 1]} : vector<16x128xf32> to vector<8x128xf32>
    %c6_125 = arith.constant 6 : index
    %c0_126 = arith.constant 0 : index
    %c0_127 = arith.constant 0 : index
    %318 = vector.load %arg10[%c6_125, %c0_126, %c0_127] : memref<8x8x256xf32, #tpu.memory_space<vmem>>, vector<1x8x128xf32>
    %319 = vector.shape_cast %318 : vector<1x8x128xf32> to vector<8x128xf32>
    %320 = vector.shape_cast %317 : vector<8x128xf32> to vector<1x8x128xf32>
    tpu.vector_store %arg10[%c6_125, %c0_126, %c0_127], %320 {strides = array<i32>} : memref<8x8x256xf32, #tpu.memory_space<vmem>>, vector<1x8x128xf32>,
    %321 = vector.extract_strided_slice %316 {offsets = [8, 0], sizes = [8, 128], strides = [1, 1]} : vector<16x128xf32> to vector<8x128xf32>
    %c1_128 = arith.constant 1 : index
    %c0_129 = arith.constant 0 : index
    %c128_130 = arith.constant 128 : index
    %322 = vector.load %arg10[%c1_128, %c0_129, %c128_130] : memref<8x8x256xf32, #tpu.memory_space<vmem>>, vector<1x8x128xf32>
    %323 = vector.shape_cast %322 : vector<1x8x128xf32> to vector<8x128xf32>
    %324 = vector.shape_cast %321 : vector<8x128xf32> to vector<1x8x128xf32>
    tpu.vector_store %arg10[%c1_128, %c0_129, %c128_130], %324 {strides = array<i32>} : memref<8x8x256xf32, #tpu.memory_space<vmem>>, vector<1x8x128xf32>,
    %325 = arith.truncf %316 : vector<16x128xf32> to vector<16x128xbf16>
    %c0_131 = arith.constant 0 : index
    %c0_132 = arith.constant 0 : index
    %326 = vector.load %arg2[%c0_131, %c0_132] : memref<128x1024xbf16, #tpu.memory_space<vmem>>, vector<128x1024xbf16>
    %cst_133 = arith.constant dense<0.000000e+00> : vector<16x1024xf32>
    %327 = tpu.matmul %325, %326, %cst_133 {dimension_numbers = #tpu.dot_dimension_numbers<[1], [0], [0], [1], [0, 0, 1, 1], [], []>} : vector<16x128xbf16>, vector<128x1024xbf16>, vector<16x1024xf32> -> vector<16x1024xf32>
    %c7_134 = arith.constant 7 : index
    %c0_135 = arith.constant 0 : index
    %c0_136 = arith.constant 0 : index
    %328 = vector.load %arg0[%c7_134, %c0_135, %c0_136] : memref<8x8x1024xf32, #tpu.memory_space<vmem>>, vector<1x8x512xf32>
    %329 = vector.shape_cast %328 : vector<1x8x512xf32> to vector<8x512xf32>
    %330 = vector.extract_strided_slice %327 {offsets = [0, 0], sizes = [8, 512], strides = [1, 1]} : vector<16x1024xf32> to vector<8x512xf32>
    %331 = arith.addf %329, %330 : vector<8x512xf32>
    %c0_137 = arith.constant 0 : index
    %c0_138 = arith.constant 0 : index
    %c512_139 = arith.constant 512 : index
    %332 = vector.load %arg0[%c0_137, %c0_138, %c512_139] : memref<8x8x1024xf32, #tpu.memory_space<vmem>>, vector<1x8x512xf32>
    %333 = vector.shape_cast %332 : vector<1x8x512xf32> to vector<8x512xf32>
    %334 = vector.extract_strided_slice %327 {offsets = [8, 512], sizes = [8, 512], strides = [1, 1]} : vector<16x1024xf32> to vector<8x512xf32>
    %335 = arith.addf %333, %334 : vector<8x512xf32>
    %336 = tpu.concatenate %331, %335 in 0 : vector<8x512xf32>, vector<8x512xf32> -> vector<16x512xf32>
    %337 = vector.extract_strided_slice %336 {offsets = [0, 0], sizes = [16, 128], strides = [1, 1]} : vector<16x512xf32> to vector<16x128xf32>
    %338 = arith.negf %337 : vector<16x128xf32>
    %339 = math.exp %338 : vector<16x128xf32>
    %cst_140 = arith.constant 1.000000e+00 : f32
    %340 = vector.broadcast %cst_140 : f32 to vector<16x128xf32>
    %341 = arith.addf %340, %339 : vector<16x128xf32>
    %342 = arith.divf %340, %341 : vector<16x128xf32>
    %343 = vector.extract_strided_slice %336 {offsets = [0, 128], sizes = [16, 128], strides = [1, 1]} : vector<16x512xf32> to vector<16x128xf32>
    %344 = arith.negf %343 : vector<16x128xf32>
    %345 = math.exp %344 : vector<16x128xf32>
    %cst_141 = arith.constant 1.000000e+00 : f32
    %346 = vector.broadcast %cst_141 : f32 to vector<16x128xf32>
    %347 = arith.addf %346, %345 : vector<16x128xf32>
    %348 = arith.divf %346, %347 : vector<16x128xf32>
    %349 = vector.extract_strided_slice %336 {offsets = [0, 256], sizes = [16, 128], strides = [1, 1]} : vector<16x512xf32> to vector<16x128xf32>
    %350 = math.tanh %349 : vector<16x128xf32>
    %351 = vector.extract_strided_slice %336 {offsets = [0, 384], sizes = [16, 128], strides = [1, 1]} : vector<16x512xf32> to vector<16x128xf32>
    %352 = arith.negf %351 : vector<16x128xf32>
    %353 = math.exp %352 : vector<16x128xf32>
    %cst_142 = arith.constant 1.000000e+00 : f32
    %354 = vector.broadcast %cst_142 : f32 to vector<16x128xf32>
    %355 = arith.addf %354, %353 : vector<16x128xf32>
    %356 = arith.divf %354, %355 : vector<16x128xf32>
    %357 = arith.mulf %348, %314 : vector<16x128xf32>
    %358 = arith.mulf %342, %350 : vector<16x128xf32>
    %359 = arith.addf %357, %358 : vector<16x128xf32>
    %360 = math.tanh %359 : vector<16x128xf32>
    %361 = arith.mulf %356, %360 : vector<16x128xf32>
    %362 = vector.extract_strided_slice %361 {offsets = [0, 0], sizes = [8, 128], strides = [1, 1]} : vector<16x128xf32> to vector<8x128xf32>
    %c7_143 = arith.constant 7 : index
    %c0_144 = arith.constant 0 : index
    %c0_145 = arith.constant 0 : index
    %363 = vector.load %arg10[%c7_143, %c0_144, %c0_145] : memref<8x8x256xf32, #tpu.memory_space<vmem>>, vector<1x8x128xf32>
    %364 = vector.shape_cast %363 : vector<1x8x128xf32> to vector<8x128xf32>
    %365 = vector.shape_cast %362 : vector<8x128xf32> to vector<1x8x128xf32>
    tpu.vector_store %arg10[%c7_143, %c0_144, %c0_145], %365 {strides = array<i32>} : memref<8x8x256xf32, #tpu.memory_space<vmem>>, vector<1x8x128xf32>,
    %366 = vector.extract_strided_slice %361 {offsets = [8, 0], sizes = [8, 128], strides = [1, 1]} : vector<16x128xf32> to vector<8x128xf32>
    %c0_146 = arith.constant 0 : index
    %c0_147 = arith.constant 0 : index
    %c128_148 = arith.constant 128 : index
    %367 = vector.load %arg10[%c0_146, %c0_147, %c128_148] : memref<8x8x256xf32, #tpu.memory_space<vmem>>, vector<1x8x128xf32>
    %368 = vector.shape_cast %367 : vector<1x8x128xf32> to vector<8x128xf32>
    %369 = vector.shape_cast %366 : vector<8x128xf32> to vector<1x8x128xf32>
    tpu.vector_store %arg10[%c0_146, %c0_147, %c128_148], %369 {strides = array<i32>} : memref<8x8x256xf32, #tpu.memory_space<vmem>>, vector<1x8x128xf32>,
    %c0_149 = arith.constant 0 : index
    %c0_150 = arith.constant 0 : index
    %c0_151 = arith.constant 0 : index
    %370 = vector.load %arg10[%c0_149, %c0_150, %c0_151] : memref<8x8x256xf32, #tpu.memory_space<vmem>>, vector<8x8x256xf32>
    %371 = vector.shape_cast %370 : vector<8x8x256xf32> to vector<64x256xf32>
    %372 = arith.truncf %371 : vector<64x256xf32> to vector<64x256xbf16>
    %c0_152 = arith.constant 0 : index
    %c0_153 = arith.constant 0 : index
    %373 = vector.load %arg1[%c0_152, %c0_153] : memref<256x1024xbf16, #tpu.memory_space<vmem>>, vector<256x1024xbf16>
    %cst_154 = arith.constant dense<0.000000e+00> : vector<64x1024xf32>
    %374 = tpu.matmul %372, %373, %cst_154 {dimension_numbers = #tpu.dot_dimension_numbers<[1], [0], [0], [1], [0, 0, 1, 1], [], []>} : vector<64x256xbf16>, vector<256x1024xbf16>, vector<64x1024xf32> -> vector<64x1024xf32>
    %c0_155 = arith.constant 0 : index
    %c0_156 = arith.constant 0 : index
    %375 = vector.load %arg4[%c0_155, %c0_156] : memref<1x1024xf32, #tpu.memory_space<vmem>>, vector<1x1024xf32>
    %376 = vector.broadcast %375 : vector<1x1024xf32> to vector<64x1024xf32>
    %377 = arith.addf %374, %376 : vector<64x1024xf32>
    %378 = vector.shape_cast %377 : vector<64x1024xf32> to vector<8x8x1024xf32>
    %c0_157 = arith.constant 0 : index
    %c0_158 = arith.constant 0 : index
    %c0_159 = arith.constant 0 : index
    %379 = vector.load %arg11[%c0_157, %c0_158, %c0_159] : memref<8x8x1024xf32, #tpu.memory_space<vmem>>, vector<8x8x1024xf32>
    tpu.vector_store %arg11[%c0_157, %c0_158, %c0_159], %378 {strides = array<i32>} : memref<8x8x1024xf32, #tpu.memory_space<vmem>>, vector<8x8x1024xf32>,
    %c1_160 = arith.constant 1 : index
    %c1_161 = arith.constant 1 : index
    %c0_162 = arith.constant 0 : index
    %c0_163 = arith.constant 0 : index
    %380 = vector.load %arg5[%c1_160, %c1_161, %c0_162, %c0_163] : memref<2x2x8x128xf32, #tpu.memory_space<vmem>>, vector<1x1x8x128xf32>
    %381 = vector.shape_cast %380 : vector<1x1x8x128xf32> to vector<8x128xf32>
    %382 = arith.truncf %381 : vector<8x128xf32> to vector<8x128xbf16>
    %c0_164 = arith.constant 0 : index
    %c512_165 = arith.constant 512 : index
    %383 = vector.load %arg3[%c0_164, %c512_165] : memref<128x1024xbf16, #tpu.memory_space<vmem>>, vector<128x512xbf16>
    %cst_166 = arith.constant dense<0.000000e+00> : vector<8x512xf32>
    %384 = tpu.matmul %382, %383, %cst_166 {dimension_numbers = #tpu.dot_dimension_numbers<[1], [0], [0], [1], [0, 0, 1, 1], [], []>} : vector<8x128xbf16>, vector<128x512xbf16>, vector<8x512xf32> -> vector<8x512xf32>
    %c7_167 = arith.constant 7 : index
    %c0_168 = arith.constant 0 : index
    %c512_169 = arith.constant 512 : index
    %385 = vector.load %arg11[%c7_167, %c0_168, %c512_169] : memref<8x8x1024xf32, #tpu.memory_space<vmem>>, vector<1x8x512xf32>
    %386 = vector.shape_cast %385 : vector<1x8x512xf32> to vector<8x512xf32>
    %387 = arith.addf %386, %384 : vector<8x512xf32>
    %c1_170 = arith.constant 1 : index
    %c1_171 = arith.constant 1 : index
    %c0_172 = arith.constant 0 : index
    %c0_173 = arith.constant 0 : index
    %388 = vector.load %arg6[%c1_170, %c1_171, %c0_172, %c0_173] : memref<2x2x8x128xf32, #tpu.memory_space<vmem>>, vector<1x1x8x128xf32>
    %389 = vector.shape_cast %388 : vector<1x1x8x128xf32> to vector<8x128xf32>
    %390 = vector.extract_strided_slice %387 {offsets = [0, 0], sizes = [8, 128], strides = [1, 1]} : vector<8x512xf32> to vector<8x128xf32>
    %391 = arith.negf %390 : vector<8x128xf32>
    %392 = math.exp %391 : vector<8x128xf32>
    %cst_174 = arith.constant 1.000000e+00 : f32
    %393 = vector.broadcast %cst_174 : f32 to vector<8x128xf32>
    %394 = arith.addf %393, %392 : vector<8x128xf32>
    %395 = arith.divf %393, %394 : vector<8x128xf32>
    %396 = vector.extract_strided_slice %387 {offsets = [0, 128], sizes = [8, 128], strides = [1, 1]} : vector<8x512xf32> to vector<8x128xf32>
    %397 = arith.negf %396 : vector<8x128xf32>
    %398 = math.exp %397 : vector<8x128xf32>
    %cst_175 = arith.constant 1.000000e+00 : f32
    %399 = vector.broadcast %cst_175 : f32 to vector<8x128xf32>
    %400 = arith.addf %399, %398 : vector<8x128xf32>
    %401 = arith.divf %399, %400 : vector<8x128xf32>
    %402 = vector.extract_strided_slice %387 {offsets = [0, 256], sizes = [8, 128], strides = [1, 1]} : vector<8x512xf32> to vector<8x128xf32>
    %403 = math.tanh %402 : vector<8x128xf32>
    %404 = vector.extract_strided_slice %387 {offsets = [0, 384], sizes = [8, 128], strides = [1, 1]} : vector<8x512xf32> to vector<8x128xf32>
    %405 = arith.negf %404 : vector<8x128xf32>
    %406 = math.exp %405 : vector<8x128xf32>
    %cst_176 = arith.constant 1.000000e+00 : f32
    %407 = vector.broadcast %cst_176 : f32 to vector<8x128xf32>
    %408 = arith.addf %407, %406 : vector<8x128xf32>
    %409 = arith.divf %407, %408 : vector<8x128xf32>
    %410 = arith.mulf %401, %389 : vector<8x128xf32>
    %411 = arith.mulf %395, %403 : vector<8x128xf32>
    %412 = arith.addf %410, %411 : vector<8x128xf32>
    %413 = math.tanh %412 : vector<8x128xf32>
    %414 = arith.mulf %409, %413 : vector<8x128xf32>
    %c1_177 = arith.constant 1 : index
    %c0_178 = arith.constant 0 : index
    %c0_179 = arith.constant 0 : index
    %c0_180 = arith.constant 0 : index
    %415 = vector.load %arg5[%c1_177, %c0_178, %c0_179, %c0_180] : memref<2x2x8x128xf32, #tpu.memory_space<vmem>>, vector<1x1x8x128xf32>
    %416 = vector.shape_cast %415 : vector<1x1x8x128xf32> to vector<8x128xf32>
    %c1_181 = arith.constant 1 : index
    %c0_182 = arith.constant 0 : index
    %c0_183 = arith.constant 0 : index
    %c0_184 = arith.constant 0 : index
    %417 = vector.load %arg6[%c1_181, %c0_182, %c0_183, %c0_184] : memref<2x2x8x128xf32, #tpu.memory_space<vmem>>, vector<1x1x8x128xf32>
    %418 = vector.shape_cast %417 : vector<1x1x8x128xf32> to vector<8x128xf32>
    %419 = arith.truncf %416 : vector<8x128xf32> to vector<8x128xbf16>
    %c0_185 = arith.constant 0 : index
    %c0_186 = arith.constant 0 : index
    %420 = vector.load %arg3[%c0_185, %c0_186] : memref<128x1024xbf16, #tpu.memory_space<vmem>>, vector<128x512xbf16>
    %cst_187 = arith.constant dense<0.000000e+00> : vector<8x512xf32>
    %421 = tpu.matmul %419, %420, %cst_187 {dimension_numbers = #tpu.dot_dimension_numbers<[1], [0], [0], [1], [0, 0, 1, 1], [], []>} : vector<8x128xbf16>, vector<128x512xbf16>, vector<8x512xf32> -> vector<8x512xf32>
    %c0_188 = arith.constant 0 : index
    %c0_189 = arith.constant 0 : index
    %c0_190 = arith.constant 0 : index
    %422 = vector.load %arg11[%c0_188, %c0_189, %c0_190] : memref<8x8x1024xf32, #tpu.memory_space<vmem>>, vector<1x8x512xf32>
    %423 = vector.shape_cast %422 : vector<1x8x512xf32> to vector<8x512xf32>
    %424 = arith.addf %423, %421 : vector<8x512xf32>
    %425 = vector.extract_strided_slice %424 {offsets = [0, 0], sizes = [8, 128], strides = [1, 1]} : vector<8x512xf32> to vector<8x128xf32>
    %426 = arith.negf %425 : vector<8x128xf32>
    %427 = math.exp %426 : vector<8x128xf32>
    %cst_191 = arith.constant 1.000000e+00 : f32
    %428 = vector.broadcast %cst_191 : f32 to vector<8x128xf32>
    %429 = arith.addf %428, %427 : vector<8x128xf32>
    %430 = arith.divf %428, %429 : vector<8x128xf32>
    %431 = vector.extract_strided_slice %424 {offsets = [0, 128], sizes = [8, 128], strides = [1, 1]} : vector<8x512xf32> to vector<8x128xf32>
    %432 = arith.negf %431 : vector<8x128xf32>
    %433 = math.exp %432 : vector<8x128xf32>
    %cst_192 = arith.constant 1.000000e+00 : f32
    %434 = vector.broadcast %cst_192 : f32 to vector<8x128xf32>
    %435 = arith.addf %434, %433 : vector<8x128xf32>
    %436 = arith.divf %434, %435 : vector<8x128xf32>
    %437 = vector.extract_strided_slice %424 {offsets = [0, 256], sizes = [8, 128], strides = [1, 1]} : vector<8x512xf32> to vector<8x128xf32>
    %438 = math.tanh %437 : vector<8x128xf32>
    %439 = vector.extract_strided_slice %424 {offsets = [0, 384], sizes = [8, 128], strides = [1, 1]} : vector<8x512xf32> to vector<8x128xf32>
    %440 = arith.negf %439 : vector<8x128xf32>
    %441 = math.exp %440 : vector<8x128xf32>
    %cst_193 = arith.constant 1.000000e+00 : f32
    %442 = vector.broadcast %cst_193 : f32 to vector<8x128xf32>
    %443 = arith.addf %442, %441 : vector<8x128xf32>
    %444 = arith.divf %442, %443 : vector<8x128xf32>
    %445 = arith.mulf %436, %418 : vector<8x128xf32>
    %446 = arith.mulf %430, %438 : vector<8x128xf32>
    %447 = arith.addf %445, %446 : vector<8x128xf32>
    %448 = math.tanh %447 : vector<8x128xf32>
    %449 = arith.mulf %444, %448 : vector<8x128xf32>
    %450 = arith.truncf %449 : vector<8x128xf32> to vector<8x128xbf16>
    %c0_194 = arith.constant 0 : index
    %c0_195 = arith.constant 0 : index
    %451 = vector.load %arg3[%c0_194, %c0_195] : memref<128x1024xbf16, #tpu.memory_space<vmem>>, vector<128x512xbf16>
    %cst_196 = arith.constant dense<0.000000e+00> : vector<8x512xf32>
    %452 = tpu.matmul %450, %451, %cst_196 {dimension_numbers = #tpu.dot_dimension_numbers<[1], [0], [0], [1], [0, 0, 1, 1], [], []>} : vector<8x128xbf16>, vector<128x512xbf16>, vector<8x512xf32> -> vector<8x512xf32>
    %c1_197 = arith.constant 1 : index
    %c0_198 = arith.constant 0 : index
    %c0_199 = arith.constant 0 : index
    %453 = vector.load %arg11[%c1_197, %c0_198, %c0_199] : memref<8x8x1024xf32, #tpu.memory_space<vmem>>, vector<1x8x512xf32>
    %454 = vector.shape_cast %453 : vector<1x8x512xf32> to vector<8x512xf32>
    %455 = arith.addf %454, %452 : vector<8x512xf32>
    %456 = vector.extract_strided_slice %455 {offsets = [0, 0], sizes = [8, 128], strides = [1, 1]} : vector<8x512xf32> to vector<8x128xf32>
    %457 = arith.negf %456 : vector<8x128xf32>
    %458 = math.exp %457 : vector<8x128xf32>
    %cst_200 = arith.constant 1.000000e+00 : f32
    %459 = vector.broadcast %cst_200 : f32 to vector<8x128xf32>
    %460 = arith.addf %459, %458 : vector<8x128xf32>
    %461 = arith.divf %459, %460 : vector<8x128xf32>
    %462 = vector.extract_strided_slice %455 {offsets = [0, 128], sizes = [8, 128], strides = [1, 1]} : vector<8x512xf32> to vector<8x128xf32>
    %463 = arith.negf %462 : vector<8x128xf32>
    %464 = math.exp %463 : vector<8x128xf32>
    %cst_201 = arith.constant 1.000000e+00 : f32
    %465 = vector.broadcast %cst_201 : f32 to vector<8x128xf32>
    %466 = arith.addf %465, %464 : vector<8x128xf32>
    %467 = arith.divf %465, %466 : vector<8x128xf32>
    %468 = vector.extract_strided_slice %455 {offsets = [0, 256], sizes = [8, 128], strides = [1, 1]} : vector<8x512xf32> to vector<8x128xf32>
    %469 = math.tanh %468 : vector<8x128xf32>
    %470 = vector.extract_strided_slice %455 {offsets = [0, 384], sizes = [8, 128], strides = [1, 1]} : vector<8x512xf32> to vector<8x128xf32>
    %471 = arith.negf %470 : vector<8x128xf32>
    %472 = math.exp %471 : vector<8x128xf32>
    %cst_202 = arith.constant 1.000000e+00 : f32
    %473 = vector.broadcast %cst_202 : f32 to vector<8x128xf32>
    %474 = arith.addf %473, %472 : vector<8x128xf32>
    %475 = arith.divf %473, %474 : vector<8x128xf32>
    %476 = arith.mulf %467, %447 : vector<8x128xf32>
    %477 = arith.mulf %461, %469 : vector<8x128xf32>
    %478 = arith.addf %476, %477 : vector<8x128xf32>
    %479 = math.tanh %478 : vector<8x128xf32>
    %480 = arith.mulf %475, %479 : vector<8x128xf32>
    %481 = arith.truncf %480 : vector<8x128xf32> to vector<8x128xbf16>
    %c0_203 = arith.constant 0 : index
    %c0_204 = arith.constant 0 : index
    %482 = vector.load %arg3[%c0_203, %c0_204] : memref<128x1024xbf16, #tpu.memory_space<vmem>>, vector<128x512xbf16>
    %cst_205 = arith.constant dense<0.000000e+00> : vector<8x512xf32>
    %483 = tpu.matmul %481, %482, %cst_205 {dimension_numbers = #tpu.dot_dimension_numbers<[1], [0], [0], [1], [0, 0, 1, 1], [], []>} : vector<8x128xbf16>, vector<128x512xbf16>, vector<8x512xf32> -> vector<8x512xf32>
    %c2_206 = arith.constant 2 : index
    %c0_207 = arith.constant 0 : index
    %c0_208 = arith.constant 0 : index
    %484 = vector.load %arg11[%c2_206, %c0_207, %c0_208] : memref<8x8x1024xf32, #tpu.memory_space<vmem>>, vector<1x8x512xf32>
    %485 = vector.shape_cast %484 : vector<1x8x512xf32> to vector<8x512xf32>
    %486 = arith.addf %485, %483 : vector<8x512xf32>
    %487 = vector.extract_strided_slice %486 {offsets = [0, 0], sizes = [8, 128], strides = [1, 1]} : vector<8x512xf32> to vector<8x128xf32>
    %488 = arith.negf %487 : vector<8x128xf32>
    %489 = math.exp %488 : vector<8x128xf32>
    %cst_209 = arith.constant 1.000000e+00 : f32
    %490 = vector.broadcast %cst_209 : f32 to vector<8x128xf32>
    %491 = arith.addf %490, %489 : vector<8x128xf32>
    %492 = arith.divf %490, %491 : vector<8x128xf32>
    %493 = vector.extract_strided_slice %486 {offsets = [0, 128], sizes = [8, 128], strides = [1, 1]} : vector<8x512xf32> to vector<8x128xf32>
    %494 = arith.negf %493 : vector<8x128xf32>
    %495 = math.exp %494 : vector<8x128xf32>
    %cst_210 = arith.constant 1.000000e+00 : f32
    %496 = vector.broadcast %cst_210 : f32 to vector<8x128xf32>
    %497 = arith.addf %496, %495 : vector<8x128xf32>
    %498 = arith.divf %496, %497 : vector<8x128xf32>
    %499 = vector.extract_strided_slice %486 {offsets = [0, 256], sizes = [8, 128], strides = [1, 1]} : vector<8x512xf32> to vector<8x128xf32>
    %500 = math.tanh %499 : vector<8x128xf32>
    %501 = vector.extract_strided_slice %486 {offsets = [0, 384], sizes = [8, 128], strides = [1, 1]} : vector<8x512xf32> to vector<8x128xf32>
    %502 = arith.negf %501 : vector<8x128xf32>
    %503 = math.exp %502 : vector<8x128xf32>
    %cst_211 = arith.constant 1.000000e+00 : f32
    %504 = vector.broadcast %cst_211 : f32 to vector<8x128xf32>
    %505 = arith.addf %504, %503 : vector<8x128xf32>
    %506 = arith.divf %504, %505 : vector<8x128xf32>
    %507 = arith.mulf %498, %478 : vector<8x128xf32>
    %508 = arith.mulf %492, %500 : vector<8x128xf32>
    %509 = arith.addf %507, %508 : vector<8x128xf32>
    %510 = math.tanh %509 : vector<8x128xf32>
    %511 = arith.mulf %506, %510 : vector<8x128xf32>
    %512 = arith.truncf %511 : vector<8x128xf32> to vector<8x128xbf16>
    %c0_212 = arith.constant 0 : index
    %c0_213 = arith.constant 0 : index
    %513 = vector.load %arg3[%c0_212, %c0_213] : memref<128x1024xbf16, #tpu.memory_space<vmem>>, vector<128x512xbf16>
    %cst_214 = arith.constant dense<0.000000e+00> : vector<8x512xf32>
    %514 = tpu.matmul %512, %513, %cst_214 {dimension_numbers = #tpu.dot_dimension_numbers<[1], [0], [0], [1], [0, 0, 1, 1], [], []>} : vector<8x128xbf16>, vector<128x512xbf16>, vector<8x512xf32> -> vector<8x512xf32>
    %c3_215 = arith.constant 3 : index
    %c0_216 = arith.constant 0 : index
    %c0_217 = arith.constant 0 : index
    %515 = vector.load %arg11[%c3_215, %c0_216, %c0_217] : memref<8x8x1024xf32, #tpu.memory_space<vmem>>, vector<1x8x512xf32>
    %516 = vector.shape_cast %515 : vector<1x8x512xf32> to vector<8x512xf32>
    %517 = arith.addf %516, %514 : vector<8x512xf32>
    %518 = vector.extract_strided_slice %517 {offsets = [0, 0], sizes = [8, 128], strides = [1, 1]} : vector<8x512xf32> to vector<8x128xf32>
    %519 = arith.negf %518 : vector<8x128xf32>
    %520 = math.exp %519 : vector<8x128xf32>
    %cst_218 = arith.constant 1.000000e+00 : f32
    %521 = vector.broadcast %cst_218 : f32 to vector<8x128xf32>
    %522 = arith.addf %521, %520 : vector<8x128xf32>
    %523 = arith.divf %521, %522 : vector<8x128xf32>
    %524 = vector.extract_strided_slice %517 {offsets = [0, 128], sizes = [8, 128], strides = [1, 1]} : vector<8x512xf32> to vector<8x128xf32>
    %525 = arith.negf %524 : vector<8x128xf32>
    %526 = math.exp %525 : vector<8x128xf32>
    %cst_219 = arith.constant 1.000000e+00 : f32
    %527 = vector.broadcast %cst_219 : f32 to vector<8x128xf32>
    %528 = arith.addf %527, %526 : vector<8x128xf32>
    %529 = arith.divf %527, %528 : vector<8x128xf32>
    %530 = vector.extract_strided_slice %517 {offsets = [0, 256], sizes = [8, 128], strides = [1, 1]} : vector<8x512xf32> to vector<8x128xf32>
    %531 = math.tanh %530 : vector<8x128xf32>
    %532 = vector.extract_strided_slice %517 {offsets = [0, 384], sizes = [8, 128], strides = [1, 1]} : vector<8x512xf32> to vector<8x128xf32>
    %533 = arith.negf %532 : vector<8x128xf32>
    %534 = math.exp %533 : vector<8x128xf32>
    %cst_220 = arith.constant 1.000000e+00 : f32
    %535 = vector.broadcast %cst_220 : f32 to vector<8x128xf32>
    %536 = arith.addf %535, %534 : vector<8x128xf32>
    %537 = arith.divf %535, %536 : vector<8x128xf32>
    %538 = arith.mulf %529, %509 : vector<8x128xf32>
    %539 = arith.mulf %523, %531 : vector<8x128xf32>
    %540 = arith.addf %538, %539 : vector<8x128xf32>
    %541 = math.tanh %540 : vector<8x128xf32>
    %542 = arith.mulf %537, %541 : vector<8x128xf32>
    %543 = arith.truncf %542 : vector<8x128xf32> to vector<8x128xbf16>
    %c0_221 = arith.constant 0 : index
    %c0_222 = arith.constant 0 : index
    %544 = vector.load %arg3[%c0_221, %c0_222] : memref<128x1024xbf16, #tpu.memory_space<vmem>>, vector<128x512xbf16>
    %cst_223 = arith.constant dense<0.000000e+00> : vector<8x512xf32>
    %545 = tpu.matmul %543, %544, %cst_223 {dimension_numbers = #tpu.dot_dimension_numbers<[1], [0], [0], [1], [0, 0, 1, 1], [], []>} : vector<8x128xbf16>, vector<128x512xbf16>, vector<8x512xf32> -> vector<8x512xf32>
    %c4_224 = arith.constant 4 : index
    %c0_225 = arith.constant 0 : index
    %c0_226 = arith.constant 0 : index
    %546 = vector.load %arg11[%c4_224, %c0_225, %c0_226] : memref<8x8x1024xf32, #tpu.memory_space<vmem>>, vector<1x8x512xf32>
    %547 = vector.shape_cast %546 : vector<1x8x512xf32> to vector<8x512xf32>
    %548 = arith.addf %547, %545 : vector<8x512xf32>
    %549 = vector.extract_strided_slice %548 {offsets = [0, 0], sizes = [8, 128], strides = [1, 1]} : vector<8x512xf32> to vector<8x128xf32>
    %550 = arith.negf %549 : vector<8x128xf32>
    %551 = math.exp %550 : vector<8x128xf32>
    %cst_227 = arith.constant 1.000000e+00 : f32
    %552 = vector.broadcast %cst_227 : f32 to vector<8x128xf32>
    %553 = arith.addf %552, %551 : vector<8x128xf32>
    %554 = arith.divf %552, %553 : vector<8x128xf32>
    %555 = vector.extract_strided_slice %548 {offsets = [0, 128], sizes = [8, 128], strides = [1, 1]} : vector<8x512xf32> to vector<8x128xf32>
    %556 = arith.negf %555 : vector<8x128xf32>
    %557 = math.exp %556 : vector<8x128xf32>
    %cst_228 = arith.constant 1.000000e+00 : f32
    %558 = vector.broadcast %cst_228 : f32 to vector<8x128xf32>
    %559 = arith.addf %558, %557 : vector<8x128xf32>
    %560 = arith.divf %558, %559 : vector<8x128xf32>
    %561 = vector.extract_strided_slice %548 {offsets = [0, 256], sizes = [8, 128], strides = [1, 1]} : vector<8x512xf32> to vector<8x128xf32>
    %562 = math.tanh %561 : vector<8x128xf32>
    %563 = vector.extract_strided_slice %548 {offsets = [0, 384], sizes = [8, 128], strides = [1, 1]} : vector<8x512xf32> to vector<8x128xf32>
    %564 = arith.negf %563 : vector<8x128xf32>
    %565 = math.exp %564 : vector<8x128xf32>
    %cst_229 = arith.constant 1.000000e+00 : f32
    %566 = vector.broadcast %cst_229 : f32 to vector<8x128xf32>
    %567 = arith.addf %566, %565 : vector<8x128xf32>
    %568 = arith.divf %566, %567 : vector<8x128xf32>
    %569 = arith.mulf %560, %540 : vector<8x128xf32>
    %570 = arith.mulf %554, %562 : vector<8x128xf32>
    %571 = arith.addf %569, %570 : vector<8x128xf32>
    %572 = math.tanh %571 : vector<8x128xf32>
    %573 = arith.mulf %568, %572 : vector<8x128xf32>
    %574 = arith.truncf %573 : vector<8x128xf32> to vector<8x128xbf16>
    %c0_230 = arith.constant 0 : index
    %c0_231 = arith.constant 0 : index
    %575 = vector.load %arg3[%c0_230, %c0_231] : memref<128x1024xbf16, #tpu.memory_space<vmem>>, vector<128x512xbf16>
    %cst_232 = arith.constant dense<0.000000e+00> : vector<8x512xf32>
    %576 = tpu.matmul %574, %575, %cst_232 {dimension_numbers = #tpu.dot_dimension_numbers<[1], [0], [0], [1], [0, 0, 1, 1], [], []>} : vector<8x128xbf16>, vector<128x512xbf16>, vector<8x512xf32> -> vector<8x512xf32>
    %c5_233 = arith.constant 5 : index
    %c0_234 = arith.constant 0 : index
    %c0_235 = arith.constant 0 : index
    %577 = vector.load %arg11[%c5_233, %c0_234, %c0_235] : memref<8x8x1024xf32, #tpu.memory_space<vmem>>, vector<1x8x512xf32>
    %578 = vector.shape_cast %577 : vector<1x8x512xf32> to vector<8x512xf32>
    %579 = arith.addf %578, %576 : vector<8x512xf32>
    %580 = vector.extract_strided_slice %579 {offsets = [0, 0], sizes = [8, 128], strides = [1, 1]} : vector<8x512xf32> to vector<8x128xf32>
    %581 = arith.negf %580 : vector<8x128xf32>
    %582 = math.exp %581 : vector<8x128xf32>
    %cst_236 = arith.constant 1.000000e+00 : f32
    %583 = vector.broadcast %cst_236 : f32 to vector<8x128xf32>
    %584 = arith.addf %583, %582 : vector<8x128xf32>
    %585 = arith.divf %583, %584 : vector<8x128xf32>
    %586 = vector.extract_strided_slice %579 {offsets = [0, 128], sizes = [8, 128], strides = [1, 1]} : vector<8x512xf32> to vector<8x128xf32>
    %587 = arith.negf %586 : vector<8x128xf32>
    %588 = math.exp %587 : vector<8x128xf32>
    %cst_237 = arith.constant 1.000000e+00 : f32
    %589 = vector.broadcast %cst_237 : f32 to vector<8x128xf32>
    %590 = arith.addf %589, %588 : vector<8x128xf32>
    %591 = arith.divf %589, %590 : vector<8x128xf32>
    %592 = vector.extract_strided_slice %579 {offsets = [0, 256], sizes = [8, 128], strides = [1, 1]} : vector<8x512xf32> to vector<8x128xf32>
    %593 = math.tanh %592 : vector<8x128xf32>
    %594 = vector.extract_strided_slice %579 {offsets = [0, 384], sizes = [8, 128], strides = [1, 1]} : vector<8x512xf32> to vector<8x128xf32>
    %595 = arith.negf %594 : vector<8x128xf32>
    %596 = math.exp %595 : vector<8x128xf32>
    %cst_238 = arith.constant 1.000000e+00 : f32
    %597 = vector.broadcast %cst_238 : f32 to vector<8x128xf32>
    %598 = arith.addf %597, %596 : vector<8x128xf32>
    %599 = arith.divf %597, %598 : vector<8x128xf32>
    %600 = arith.mulf %591, %571 : vector<8x128xf32>
    %601 = arith.mulf %585, %593 : vector<8x128xf32>
    %602 = arith.addf %600, %601 : vector<8x128xf32>
    %603 = math.tanh %602 : vector<8x128xf32>
    %604 = arith.mulf %599, %603 : vector<8x128xf32>
    %605 = arith.truncf %604 : vector<8x128xf32> to vector<8x128xbf16>
    %c0_239 = arith.constant 0 : index
    %c0_240 = arith.constant 0 : index
    %606 = vector.load %arg3[%c0_239, %c0_240] : memref<128x1024xbf16, #tpu.memory_space<vmem>>, vector<128x512xbf16>
    %cst_241 = arith.constant dense<0.000000e+00> : vector<8x512xf32>
    %607 = tpu.matmul %605, %606, %cst_241 {dimension_numbers = #tpu.dot_dimension_numbers<[1], [0], [0], [1], [0, 0, 1, 1], [], []>} : vector<8x128xbf16>, vector<128x512xbf16>, vector<8x512xf32> -> vector<8x512xf32>
    %c6_242 = arith.constant 6 : index
    %c0_243 = arith.constant 0 : index
    %c0_244 = arith.constant 0 : index
    %608 = vector.load %arg11[%c6_242, %c0_243, %c0_244] : memref<8x8x1024xf32, #tpu.memory_space<vmem>>, vector<1x8x512xf32>
    %609 = vector.shape_cast %608 : vector<1x8x512xf32> to vector<8x512xf32>
    %610 = arith.addf %609, %607 : vector<8x512xf32>
    %611 = vector.extract_strided_slice %610 {offsets = [0, 0], sizes = [8, 128], strides = [1, 1]} : vector<8x512xf32> to vector<8x128xf32>
    %612 = arith.negf %611 : vector<8x128xf32>
    %613 = math.exp %612 : vector<8x128xf32>
    %cst_245 = arith.constant 1.000000e+00 : f32
    %614 = vector.broadcast %cst_245 : f32 to vector<8x128xf32>
    %615 = arith.addf %614, %613 : vector<8x128xf32>
    %616 = arith.divf %614, %615 : vector<8x128xf32>
    %617 = vector.extract_strided_slice %610 {offsets = [0, 128], sizes = [8, 128], strides = [1, 1]} : vector<8x512xf32> to vector<8x128xf32>
    %618 = arith.negf %617 : vector<8x128xf32>
    %619 = math.exp %618 : vector<8x128xf32>
    %cst_246 = arith.constant 1.000000e+00 : f32
    %620 = vector.broadcast %cst_246 : f32 to vector<8x128xf32>
    %621 = arith.addf %620, %619 : vector<8x128xf32>
    %622 = arith.divf %620, %621 : vector<8x128xf32>
    %623 = vector.extract_strided_slice %610 {offsets = [0, 256], sizes = [8, 128], strides = [1, 1]} : vector<8x512xf32> to vector<8x128xf32>
    %624 = math.tanh %623 : vector<8x128xf32>
    %625 = vector.extract_strided_slice %610 {offsets = [0, 384], sizes = [8, 128], strides = [1, 1]} : vector<8x512xf32> to vector<8x128xf32>
    %626 = arith.negf %625 : vector<8x128xf32>
    %627 = math.exp %626 : vector<8x128xf32>
    %cst_247 = arith.constant 1.000000e+00 : f32
    %628 = vector.broadcast %cst_247 : f32 to vector<8x128xf32>
    %629 = arith.addf %628, %627 : vector<8x128xf32>
    %630 = arith.divf %628, %629 : vector<8x128xf32>
    %631 = arith.mulf %622, %602 : vector<8x128xf32>
    %632 = arith.mulf %616, %624 : vector<8x128xf32>
    %633 = arith.addf %631, %632 : vector<8x128xf32>
    %634 = math.tanh %633 : vector<8x128xf32>
    %635 = arith.mulf %630, %634 : vector<8x128xf32>
    %636 = arith.truncf %635 : vector<8x128xf32> to vector<8x128xbf16>
    %c0_248 = arith.constant 0 : index
    %c0_249 = arith.constant 0 : index
    %637 = vector.load %arg3[%c0_248, %c0_249] : memref<128x1024xbf16, #tpu.memory_space<vmem>>, vector<128x512xbf16>
    %cst_250 = arith.constant dense<0.000000e+00> : vector<8x512xf32>
    %638 = tpu.matmul %636, %637, %cst_250 {dimension_numbers = #tpu.dot_dimension_numbers<[1], [0], [0], [1], [0, 0, 1, 1], [], []>} : vector<8x128xbf16>, vector<128x512xbf16>, vector<8x512xf32> -> vector<8x512xf32>
    %c7_251 = arith.constant 7 : index
    %c0_252 = arith.constant 0 : index
    %c0_253 = arith.constant 0 : index
    %639 = vector.load %arg11[%c7_251, %c0_252, %c0_253] : memref<8x8x1024xf32, #tpu.memory_space<vmem>>, vector<1x8x512xf32>
    %640 = vector.shape_cast %639 : vector<1x8x512xf32> to vector<8x512xf32>
    %641 = arith.addf %640, %638 : vector<8x512xf32>
    %642 = vector.extract_strided_slice %641 {offsets = [0, 0], sizes = [8, 128], strides = [1, 1]} : vector<8x512xf32> to vector<8x128xf32>
    %643 = arith.negf %642 : vector<8x128xf32>
    %644 = math.exp %643 : vector<8x128xf32>
    %cst_254 = arith.constant 1.000000e+00 : f32
    %645 = vector.broadcast %cst_254 : f32 to vector<8x128xf32>
    %646 = arith.addf %645, %644 : vector<8x128xf32>
    %647 = arith.divf %645, %646 : vector<8x128xf32>
    %648 = vector.extract_strided_slice %641 {offsets = [0, 128], sizes = [8, 128], strides = [1, 1]} : vector<8x512xf32> to vector<8x128xf32>
    %649 = arith.negf %648 : vector<8x128xf32>
    %650 = math.exp %649 : vector<8x128xf32>
    %cst_255 = arith.constant 1.000000e+00 : f32
    %651 = vector.broadcast %cst_255 : f32 to vector<8x128xf32>
    %652 = arith.addf %651, %650 : vector<8x128xf32>
    %653 = arith.divf %651, %652 : vector<8x128xf32>
    %654 = vector.extract_strided_slice %641 {offsets = [0, 256], sizes = [8, 128], strides = [1, 1]} : vector<8x512xf32> to vector<8x128xf32>
    %655 = math.tanh %654 : vector<8x128xf32>
    %656 = vector.extract_strided_slice %641 {offsets = [0, 384], sizes = [8, 128], strides = [1, 1]} : vector<8x512xf32> to vector<8x128xf32>
    %657 = arith.negf %656 : vector<8x128xf32>
    %658 = math.exp %657 : vector<8x128xf32>
    %cst_256 = arith.constant 1.000000e+00 : f32
    %659 = vector.broadcast %cst_256 : f32 to vector<8x128xf32>
    %660 = arith.addf %659, %658 : vector<8x128xf32>
    %661 = arith.divf %659, %660 : vector<8x128xf32>
    %662 = arith.mulf %653, %633 : vector<8x128xf32>
    %663 = arith.mulf %647, %655 : vector<8x128xf32>
    %664 = arith.addf %662, %663 : vector<8x128xf32>
    %665 = math.tanh %664 : vector<8x128xf32>
    %666 = arith.mulf %661, %665 : vector<8x128xf32>
    %667 = tpu.concatenate %666, %414 in 1 : vector<8x128xf32>, vector<8x128xf32> -> vector<8x256xf32>
    %c0_257 = arith.constant 0 : index
    %c0_258 = arith.constant 0 : index
    %668 = vector.load %arg7[%c0_257, %c0_258] : memref<256x128xf32, #tpu.memory_space<vmem>>, vector<256x128xf32>
    %cst_259 = arith.constant dense<0.000000e+00> : vector<8x128xf32>
    %669 = tpu.matmul %667, %668, %cst_259 {dimension_numbers = #tpu.dot_dimension_numbers<[1], [0], [0], [1], [0, 0, 1, 1], [], []>} : vector<8x256xf32>, vector<256x128xf32>, vector<8x128xf32> -> vector<8x128xf32>
    %c0_260 = arith.constant 0 : index
    %c0_261 = arith.constant 0 : index
    %670 = vector.load %arg8[%c0_260, %c0_261] : memref<1x128xf32, #tpu.memory_space<vmem>>, vector<1x128xf32>
    %671 = vector.broadcast %670 : vector<1x128xf32> to vector<8x128xf32>
    %672 = arith.addf %669, %671 : vector<8x128xf32>
    %cst_262 = arith.constant 0.000000e+00 : f32
    %673 = vector.broadcast %cst_262 : f32 to vector<8x128xf32>
    %674 = arith.maximumf %672, %673 : vector<8x128xf32>
    %c0_263 = arith.constant 0 : index
    %c0_264 = arith.constant 0 : index
    %675 = vector.load %arg9[%c0_263, %c0_264] : memref<8x128xf32, #tpu.memory_space<vmem>>, vector<8x128xf32>
    tpu.vector_store %arg9[%c0_263, %c0_264], %674 {strides = array<i32>} : memref<8x128xf32, #tpu.memory_space<vmem>>, vector<8x128xf32>,
    return
  }
}

</mosaic_0001>

<llo_original>
// kernel: bilstm_forward.3
$region0: #{bilstm_forward.3}
  #allocation0 [shape = 'u32[]', space=smem, size = 0x4, offset = 0x4, fixed_abs, tag = 'smem constant byte address 0x4 - core index']
  #allocation1 [shape = 'u32[72,128]{1,0:T(1,128)}', space=vmem, size = 0x9000, scoped, tag = 'internal scratch']
  #allocation2 [shape = 'f32[8,8,256]{2,1,0:T(8,128)}', space=vmem, size = 0x10000, scoped, tag = 'scratch operand']
  #allocation3 [shape = 'f32[8,8,1024]{2,1,0:T(8,128)}', space=vmem, size = 0x40000, scoped, tag = 'scratch operand']
  %s0 = inlined_call_operand.vmem [shape: f32[8,8,1024], index: 0, kind: input, shape index: {}]
  %s1 = inlined_call_operand.vmem [shape: bf16[256,1024], index: 1, kind: input, shape index: {}]
  %s2 = inlined_call_operand.vmem [shape: bf16[128,1024], index: 2, kind: input, shape index: {}]
  %s3 = inlined_call_operand.vmem [shape: bf16[128,1024], index: 3, kind: input, shape index: {}]
  %s4 = inlined_call_operand.vmem [shape: f32[1,1024], index: 4, kind: input, shape index: {}]
  %s5 = inlined_call_operand.vmem [shape: f32[2,2,8,128], index: 5, kind: input, shape index: {}]
  %s6 = inlined_call_operand.vmem [shape: f32[2,2,8,128], index: 6, kind: input, shape index: {}]
  %s7 = inlined_call_operand.vmem [shape: f32[256,128], index: 7, kind: input, shape index: {}]
  %s8 = inlined_call_operand.vmem [shape: f32[1,128], index: 8, kind: input, shape index: {}]
  %s9 = inlined_call_operand.vmem [shape: f32[8,128], index: 9, kind: output, shape index: {}]
  %s10 = sld [smem:[#allocation0]]
  $region46: #{bilstm_forward.3} parent=0
    _
  %s12 = ssub.s32 1, %s10
  %s13 = scalar_select 0, %s12, %s10
  // Predicated region
  $region2: #{bilstm_forward.3} parent=0 // pred_check
    _
  $region3: #{bilstm_forward.3} parent=0 // pred_check_branch
    %15 = sbr.rel (0) target = $region5
  $region4: #{bilstm_forward.3} parent=0 // pred_region
    _
  $region5: #{bilstm_forward.3} parent=0 // pred_fallthru
    _
  // Predicated region
  $region6: #{bilstm_forward.3} parent=0 // pred_check
    _
  $region7: #{bilstm_forward.3} parent=0 // pred_check_branch
    %17 = sbr.rel (0) target = $region9
  $region8: #{bilstm_forward.3} parent=0 // pred_region
    _
  $region9: #{bilstm_forward.3} parent=0 // pred_fallthru
    _
  // Predicated region
  $region10: #{bilstm_forward.3} parent=0 // pred_check
    _
  $region11: #{bilstm_forward.3} parent=0 // pred_check_branch
    %19 = sbr.rel (0) target = $region13
  $region12: #{bilstm_forward.3} parent=0 // pred_region
    _
  $region13: #{bilstm_forward.3} parent=0 // pred_fallthru
    _
  // Predicated region
  $region14: #{bilstm_forward.3} parent=0 // pred_check
    _
  $region15: #{bilstm_forward.3} parent=0 // pred_check_branch
    %21 = sbr.rel (0) target = $region17
  $region16: #{bilstm_forward.3} parent=0 // pred_region
    _
  $region17: #{bilstm_forward.3} parent=0 // pred_fallthru
    _
  // Predicated region
  $region18: #{bilstm_forward.3} parent=0 // pred_check
    _
  $region19: #{bilstm_forward.3} parent=0 // pred_check_branch
    %23 = sbr.rel (0) target = $region21
  $region20: #{bilstm_forward.3} parent=0 // pred_region
    _
  $region21: #{bilstm_forward.3} parent=0 // pred_fallthru
    _
  // Predicated region
  $region22: #{bilstm_forward.3} parent=0 // pred_check
    _
  $region23: #{bilstm_forward.3} parent=0 // pred_check_branch
    %25 = sbr.rel (0) target = $region25
  $region24: #{bilstm_forward.3} parent=0 // pred_region
    _
  $region25: #{bilstm_forward.3} parent=0 // pred_fallthru
    _
  // Predicated region
  $region26: #{bilstm_forward.3} parent=0 // pred_check
    _
  $region27: #{bilstm_forward.3} parent=0 // pred_check_branch
    %27 = sbr.rel (0) target = $region29
  $region28: #{bilstm_forward.3} parent=0 // pred_region
    _
  $region29: #{bilstm_forward.3} parent=0 // pred_fallthru
    _
  // Predicated region
  $region30: #{bilstm_forward.3} parent=0 // pred_check
    _
  $region31: #{bilstm_forward.3} parent=0 // pred_check_branch
    %29 = sbr.rel (0) target = $region33
  $region32: #{bilstm_forward.3} parent=0 // pred_region
    _
  $region33: #{bilstm_forward.3} parent=0 // pred_fallthru
    _
  // Predicated region
  $region34: #{bilstm_forward.3} parent=0 // pred_check
    _
  $region35: #{bilstm_forward.3} parent=0 // pred_check_branch
    %31 = sbr.rel (0) target = $region37
  $region36: #{bilstm_forward.3} parent=0 // pred_region
    _
  $region37: #{bilstm_forward.3} parent=0 // pred_fallthru
    _
  %v32 = vld [vmem:[%s5] sm:$0xff]
  %s33 = scalar_lea.vmem %s5, 8
  %v34 = vld [vmem:[%s33] sm:$0xff]
  %v35 = vld [vmem:[%s6] sm:$0xff]
  %s36 = scalar_lea.vmem %s6, 8
  %v37 = vld [vmem:[%s36] sm:$0xff]
  %v38 = vpack.c.bf16 %v34, %v32
  %v39 = vld [vmem:[%s2] sm:$0xff]
  %v40 = vld [vmem:[%s2 + $0x8] sm:$0xff]
  %v41 = vld [vmem:[%s2 + $0x10] sm:$0xff]
  %v42 = vld [vmem:[%s2 + $0x18] sm:$0xff]
  %v43 = vld [vmem:[%s2 + $0x20] sm:$0xff]
  %v44 = vld [vmem:[%s2 + $0x28] sm:$0xff]
  %v45 = vld [vmem:[%s2 + $0x30] sm:$0xff]
  %v46 = vld [vmem:[%s2 + $0x38] sm:$0xff]
  %v47 = vld [vmem:[%s2 + $0x40] sm:$0xff]
  %v48 = vld [vmem:[%s2 + $0x48] sm:$0xff]
  %v49 = vld [vmem:[%s2 + $0x50] sm:$0xff]
  %v50 = vld [vmem:[%s2 + $0x58] sm:$0xff]
  %v51 = vld [vmem:[%s2 + $0x60] sm:$0xff]
  %v52 = vld [vmem:[%s2 + $0x68] sm:$0xff]
  %v53 = vld [vmem:[%s2 + $0x70] sm:$0xff]
  %v54 = vld [vmem:[%s2 + $0x78] sm:$0xff]
  %v55 = vld [vmem:[%s2 + $0x80] sm:$0xff]
  %v56 = vld [vmem:[%s2 + $0x88] sm:$0xff]
  %v57 = vld [vmem:[%s2 + $0x90] sm:$0xff]
  %v58 = vld [vmem:[%s2 + $0x98] sm:$0xff]
  %v59 = vld [vmem:[%s2 + $0xa0] sm:$0xff]
  %v60 = vld [vmem:[%s2 + $0xa8] sm:$0xff]
  %v61 = vld [vmem:[%s2 + $0xb0] sm:$0xff]
  %v62 = vld [vmem:[%s2 + $0xb8] sm:$0xff]
  %v63 = vld [vmem:[%s2 + $0xc0] sm:$0xff]
  %v64 = vld [vmem:[%s2 + $0xc8] sm:$0xff]
  %v65 = vld [vmem:[%s2 + $0xd0] sm:$0xff]
  %v66 = vld [vmem:[%s2 + $0xd8] sm:$0xff]
  %v67 = vld [vmem:[%s2 + $0xe0] sm:$0xff]
  %v68 = vld [vmem:[%s2 + $0xe8] sm:$0xff]
  %v69 = vld [vmem:[%s2 + $0xf0] sm:$0xff]
  %v70 = vld [vmem:[%s2 + $0xf8] sm:$0xff]
  %v71 = vld [vmem:[%s2 + $0x100] sm:$0xff]
  %v72 = vld [vmem:[%s2 + $0x108] sm:$0xff]
  %v73 = vld [vmem:[%s2 + $0x110] sm:$0xff]
  %v74 = vld [vmem:[%s2 + $0x118] sm:$0xff]
  %v75 = vld [vmem:[%s2 + $0x120] sm:$0xff]
  %v76 = vld [vmem:[%s2 + $0x128] sm:$0xff]
  %v77 = vld [vmem:[%s2 + $0x130] sm:$0xff]
  %v78 = vld [vmem:[%s2 + $0x138] sm:$0xff]
  %v79 = vld [vmem:[%s2 + $0x140] sm:$0xff]
  %v80 = vld [vmem:[%s2 + $0x148] sm:$0xff]
  %v81 = vld [vmem:[%s2 + $0x150] sm:$0xff]
  %v82 = vld [vmem:[%s2 + $0x158] sm:$0xff]
  %v83 = vld [vmem:[%s2 + $0x160] sm:$0xff]
  %v84 = vld [vmem:[%s2 + $0x168] sm:$0xff]
  %v85 = vld [vmem:[%s2 + $0x170] sm:$0xff]
  %v86 = vld [vmem:[%s2 + $0x178] sm:$0xff]
  %v87 = vld [vmem:[%s2 + $0x180] sm:$0xff]
  %v88 = vld [vmem:[%s2 + $0x188] sm:$0xff]
  %v89 = vld [vmem:[%s2 + $0x190] sm:$0xff]
  %v90 = vld [vmem:[%s2 + $0x198] sm:$0xff]
  %v91 = vld [vmem:[%s2 + $0x1a0] sm:$0xff]
  %v92 = vld [vmem:[%s2 + $0x1a8] sm:$0xff]
  %v93 = vld [vmem:[%s2 + $0x1b0] sm:$0xff]
  %v94 = vld [vmem:[%s2 + $0x1b8] sm:$0xff]
  %v95 = vld [vmem:[%s2 + $0x1c0] sm:$0xff]
  %v96 = vld [vmem:[%s2 + $0x1c8] sm:$0xff]
  %v97 = vld [vmem:[%s2 + $0x1d0] sm:$0xff]
  %v98 = vld [vmem:[%s2 + $0x1d8] sm:$0xff]
  %v99 = vld [vmem:[%s2 + $0x1e0] sm:$0xff]
  %v100 = vld [vmem:[%s2 + $0x1e8] sm:$0xff]
  %v101 = vld [vmem:[%s2 + $0x1f0] sm:$0xff]
  %v102 = vld [vmem:[%s2 + $0x1f8] sm:$0xff]
  %v167 = vunpack.c.l.b16 %v39
  %v168 = vunpack.c.h.b16 %v39
  %v169 = vunpack.c.l.b16 %v40
  %v170 = vunpack.c.h.b16 %v40
  %v171 = vunpack.c.l.b16 %v41
  %v172 = vunpack.c.h.b16 %v41
  %v173 = vunpack.c.l.b16 %v42
  %v174 = vunpack.c.h.b16 %v42
  %v175 = vunpack.c.l.b16 %v43
  %v176 = vunpack.c.h.b16 %v43
  %v177 = vunpack.c.l.b16 %v44
  %v178 = vunpack.c.h.b16 %v44
  %v179 = vunpack.c.l.b16 %v45
  %v180 = vunpack.c.h.b16 %v45
  %v181 = vunpack.c.l.b16 %v46
  %v182 = vunpack.c.h.b16 %v46
  %v183 = vunpack.c.l.b16 %v47
  %v184 = vunpack.c.h.b16 %v47
  %v185 = vunpack.c.l.b16 %v48
  %v186 = vunpack.c.h.b16 %v48
  %v187 = vunpack.c.l.b16 %v49
  %v188 = vunpack.c.h.b16 %v49
  %v189 = vunpack.c.l.b16 %v50
  %v190 = vunpack.c.h.b16 %v50
  %v191 = vunpack.c.l.b16 %v51
  %v192 = vunpack.c.h.b16 %v51
  %v193 = vunpack.c.l.b16 %v52
  %v194 = vunpack.c.h.b16 %v52
  %v195 = vunpack.c.l.b16 %v53
  %v196 = vunpack.c.h.b16 %v53
  %v197 = vunpack.c.l.b16 %v54
  %v198 = vunpack.c.h.b16 %v54
  %v199 = vunpack.c.l.b16 %v55
  %v200 = vunpack.c.h.b16 %v55
  %v201 = vunpack.c.l.b16 %v56
  %v202 = vunpack.c.h.b16 %v56
  %v203 = vunpack.c.l.b16 %v57
  %v204 = vunpack.c.h.b16 %v57
  %v205 = vunpack.c.l.b16 %v58
  %v206 = vunpack.c.h.b16 %v58
  %v207 = vunpack.c.l.b16 %v59
  %v208 = vunpack.c.h.b16 %v59
  %v209 = vunpack.c.l.b16 %v60
  %v210 = vunpack.c.h.b16 %v60
  %v211 = vunpack.c.l.b16 %v61
  %v212 = vunpack.c.h.b16 %v61
  %v213 = vunpack.c.l.b16 %v62
  %v214 = vunpack.c.h.b16 %v62
  %v215 = vunpack.c.l.b16 %v63
  %v216 = vunpack.c.h.b16 %v63
  %v217 = vunpack.c.l.b16 %v64
  %v218 = vunpack.c.h.b16 %v64
  %v219 = vunpack.c.l.b16 %v65
  %v220 = vunpack.c.h.b16 %v65
  %v221 = vunpack.c.l.b16 %v66
  %v222 = vunpack.c.h.b16 %v66
  %v223 = vunpack.c.l.b16 %v67
  %v224 = vunpack.c.h.b16 %v67
  %v225 = vunpack.c.l.b16 %v68
  %v226 = vunpack.c.h.b16 %v68
  %v227 = vunpack.c.l.b16 %v69
  %v228 = vunpack.c.h.b16 %v69
  %v229 = vunpack.c.l.b16 %v70
  %v230 = vunpack.c.h.b16 %v70
  %v231 = vunpack.c.l.b16 %v71
  %v232 = vunpack.c.h.b16 %v71
  %v233 = vunpack.c.l.b16 %v72
  %v234 = vunpack.c.h.b16 %v72
  %v235 = vunpack.c.l.b16 %v73
  %v236 = vunpack.c.h.b16 %v73
  %v237 = vunpack.c.l.b16 %v74
  %v238 = vunpack.c.h.b16 %v74
  %v239 = vunpack.c.l.b16 %v75
  %v240 = vunpack.c.h.b16 %v75
  %v241 = vunpack.c.l.b16 %v76
  %v242 = vunpack.c.h.b16 %v76
  %v243 = vunpack.c.l.b16 %v77
  %v244 = vunpack.c.h.b16 %v77
  %v245 = vunpack.c.l.b16 %v78
  %v246 = vunpack.c.h.b16 %v78
  %v247 = vunpack.c.l.b16 %v79
  %v248 = vunpack.c.h.b16 %v79
  %v249 = vunpack.c.l.b16 %v80
  %v250 = vunpack.c.h.b16 %v80
  %v251 = vunpack.c.l.b16 %v81
  %v252 = vunpack.c.h.b16 %v81
  %v253 = vunpack.c.l.b16 %v82
  %v254 = vunpack.c.h.b16 %v82
  %v255 = vunpack.c.l.b16 %v83
  %v256 = vunpack.c.h.b16 %v83
  %v257 = vunpack.c.l.b16 %v84
  %v258 = vunpack.c.h.b16 %v84
  %v259 = vunpack.c.l.b16 %v85
  %v260 = vunpack.c.h.b16 %v85
  %v261 = vunpack.c.l.b16 %v86
  %v262 = vunpack.c.h.b16 %v86
  %v263 = vunpack.c.l.b16 %v87
  %v264 = vunpack.c.h.b16 %v87
  %v265 = vunpack.c.l.b16 %v88
  %v266 = vunpack.c.h.b16 %v88
  %v267 = vunpack.c.l.b16 %v89
  %v268 = vunpack.c.h.b16 %v89
  %v269 = vunpack.c.l.b16 %v90
  %v270 = vunpack.c.h.b16 %v90
  %v271 = vunpack.c.l.b16 %v91
  %v272 = vunpack.c.h.b16 %v91
  %v273 = vunpack.c.l.b16 %v92
  %v274 = vunpack.c.h.b16 %v92
  %v275 = vunpack.c.l.b16 %v93
  %v276 = vunpack.c.h.b16 %v93
  %v277 = vunpack.c.l.b16 %v94
  %v278 = vunpack.c.h.b16 %v94
  %v279 = vunpack.c.l.b16 %v95
  %v280 = vunpack.c.h.b16 %v95
  %v281 = vunpack.c.l.b16 %v96
  %v282 = vunpack.c.h.b16 %v96
  %v283 = vunpack.c.l.b16 %v97
  %v284 = vunpack.c.h.b16 %v97
  %v285 = vunpack.c.l.b16 %v98
  %v286 = vunpack.c.h.b16 %v98
  %v287 = vunpack.c.l.b16 %v99
  %v288 = vunpack.c.h.b16 %v99
  %v289 = vunpack.c.l.b16 %v100
  %v290 = vunpack.c.h.b16 %v100
  %v291 = vunpack.c.l.b16 %v101
  %v292 = vunpack.c.h.b16 %v101
  %v293 = vunpack.c.l.b16 %v102
  %v294 = vunpack.c.h.b16 %v102
  %v295 = vpack.c.b16 %v175, %v167
  %v296 = vpack.c.b16 %v176, %v168
  %v297 = vpack.c.b16 %v177, %v169
  %v298 = vpack.c.b16 %v178, %v170
  %v299 = vpack.c.b16 %v179, %v171
  %v300 = vpack.c.b16 %v180, %v172
  %v301 = vpack.c.b16 %v181, %v173
  %v302 = vpack.c.b16 %v182, %v174
  %v303 = vpack.c.b16 %v191, %v183
  %v304 = vpack.c.b16 %v192, %v184
  %v305 = vpack.c.b16 %v193, %v185
  %v306 = vpack.c.b16 %v194, %v186
  %v307 = vpack.c.b16 %v195, %v187
  %v308 = vpack.c.b16 %v196, %v188
  %v309 = vpack.c.b16 %v197, %v189
  %v310 = vpack.c.b16 %v198, %v190
  %v311 = vpack.c.b16 %v207, %v199
  %v312 = vpack.c.b16 %v208, %v200
  %v313 = vpack.c.b16 %v209, %v201
  %v314 = vpack.c.b16 %v210, %v202
  %v315 = vpack.c.b16 %v211, %v203
  %v316 = vpack.c.b16 %v212, %v204
  %v317 = vpack.c.b16 %v213, %v205
  %v318 = vpack.c.b16 %v214, %v206
  %v319 = vpack.c.b16 %v223, %v215
  %v320 = vpack.c.b16 %v224, %v216
  %v321 = vpack.c.b16 %v225, %v217
  %v322 = vpack.c.b16 %v226, %v218
  %v323 = vpack.c.b16 %v227, %v219
  %v324 = vpack.c.b16 %v228, %v220
  %v325 = vpack.c.b16 %v229, %v221
  %v326 = vpack.c.b16 %v230, %v222
  %v327 = vpack.c.b16 %v239, %v231
  %v328 = vpack.c.b16 %v240, %v232
  %v329 = vpack.c.b16 %v241, %v233
  %v330 = vpack.c.b16 %v242, %v234
  %v331 = vpack.c.b16 %v243, %v235
  %v332 = vpack.c.b16 %v244, %v236
  %v333 = vpack.c.b16 %v245, %v237
  %v334 = vpack.c.b16 %v246, %v238
  %v335 = vpack.c.b16 %v255, %v247
  %v336 = vpack.c.b16 %v256, %v248
  %v337 = vpack.c.b16 %v257, %v249
  %v338 = vpack.c.b16 %v258, %v250
  %v339 = vpack.c.b16 %v259, %v251
  %v340 = vpack.c.b16 %v260, %v252
  %v341 = vpack.c.b16 %v261, %v253
  %v342 = vpack.c.b16 %v262, %v254
  %v343 = vpack.c.b16 %v271, %v263
  %v344 = vpack.c.b16 %v272, %v264
  %v345 = vpack.c.b16 %v273, %v265
  %v346 = vpack.c.b16 %v274, %v266
  %v347 = vpack.c.b16 %v275, %v267
  %v348 = vpack.c.b16 %v276, %v268
  %v349 = vpack.c.b16 %v277, %v269
  %v350 = vpack.c.b16 %v278, %v270
  %v351 = vpack.c.b16 %v287, %v279
  %v352 = vpack.c.b16 %v288, %v280
  %v353 = vpack.c.b16 %v289, %v281
  %v354 = vpack.c.b16 %v290, %v282
  %v355 = vpack.c.b16 %v291, %v283
  %v356 = vpack.c.b16 %v292, %v284
  %v357 = vpack.c.b16 %v293, %v285
  %v358 = vpack.c.b16 %v294, %v286
  %423 = vmatpush.bf16.msra.mxu0 %v351
  %424 = vmatpush.bf16.msra.mxu0 %v343
  %425 = vmatpush.bf16.msra.mxu0 %v335
  %426 = vmatpush.bf16.msra.mxu0 %v327
  %427 = vmatpush.bf16.msra.mxu0 %v319
  %428 = vmatpush.bf16.msra.mxu0 %v311
  %429 = vmatpush.bf16.msra.mxu0 %v303
  %430 = vmatpush.bf16.msra.mxu0 %v295
  %431 = vmatmul.bf16.gmra.mxu0 %v38
  %v432 = vpop.f32.mrf.mxu0
  %v433 = vadd.f32 0.0, %v432
  %v434 = vpop.f32.mrf.mxu0
  %435 = vdwg.mxu0
  %436 = vmatpush.bf16.msra.mxu0 %v352
  %437 = vmatpush.bf16.msra.mxu0 %v344
  %438 = vmatpush.bf16.msra.mxu0 %v336
  %439 = vmatpush.bf16.msra.mxu0 %v328
  %440 = vmatpush.bf16.msra.mxu0 %v320
  %441 = vmatpush.bf16.msra.mxu0 %v312
  %442 = vmatpush.bf16.msra.mxu0 %v304
  %443 = vmatpush.bf16.msra.mxu0 %v296
  %444 = vmatmul.bf16.gmra.mxu0 %v38
  %v445 = vpop.f32.mrf.mxu0
  %v446 = vadd.f32 0.0, %v445
  %v447 = vpop.f32.mrf.mxu0
  %448 = vdwg.mxu0
  %449 = vmatpush.bf16.msra.mxu0 %v353
  %450 = vmatpush.bf16.msra.mxu0 %v345
  %451 = vmatpush.bf16.msra.mxu0 %v337
  %452 = vmatpush.bf16.msra.mxu0 %v329
  %453 = vmatpush.bf16.msra.mxu0 %v321
  %454 = vmatpush.bf16.msra.mxu0 %v313
  %455 = vmatpush.bf16.msra.mxu0 %v305
  %456 = vmatpush.bf16.msra.mxu0 %v297
  %457 = vmatmul.bf16.gmra.mxu0 %v38
  %v458 = vpop.f32.mrf.mxu0
  %v459 = vadd.f32 0.0, %v458
  %v460 = vpop.f32.mrf.mxu0
  %461 = vdwg.mxu0
  %462 = vmatpush.bf16.msra.mxu0 %v354
  %463 = vmatpush.bf16.msra.mxu0 %v346
  %464 = vmatpush.bf16.msra.mxu0 %v338
  %465 = vmatpush.bf16.msra.mxu0 %v330
  %466 = vmatpush.bf16.msra.mxu0 %v322
  %467 = vmatpush.bf16.msra.mxu0 %v314
  %468 = vmatpush.bf16.msra.mxu0 %v306
  %469 = vmatpush.bf16.msra.mxu0 %v298
  %470 = vmatmul.bf16.gmra.mxu0 %v38
  %v471 = vpop.f32.mrf.mxu0
  %v472 = vadd.f32 0.0, %v471
  %v473 = vpop.f32.mrf.mxu0
  %474 = vdwg.mxu0
  %475 = vmatpush.bf16.msra.mxu0 %v355
  %476 = vmatpush.bf16.msra.mxu0 %v347
  %477 = vmatpush.bf16.msra.mxu0 %v339
  %478 = vmatpush.bf16.msra.mxu0 %v331
  %479 = vmatpush.bf16.msra.mxu0 %v323
  %480 = vmatpush.bf16.msra.mxu0 %v315
  %481 = vmatpush.bf16.msra.mxu0 %v307
  %482 = vmatpush.bf16.msra.mxu0 %v299
  %483 = vmatmul.bf16.gmra.mxu0 %v38
  %v484 = vpop.f32.mrf.mxu0
  %v485 = vpop.f32.mrf.mxu0
  %v486 = vadd.f32 0.0, %v485
  %487 = vdwg.mxu0
  %488 = vmatpush.bf16.msra.mxu0 %v356
  %489 = vmatpush.bf16.msra.mxu0 %v348
  %490 = vmatpush.bf16.msra.mxu0 %v340
  %491 = vmatpush.bf16.msra.mxu0 %v332
  %492 = vmatpush.bf16.msra.mxu0 %v324
  %493 = vmatpush.bf16.msra.mxu0 %v316
  %494 = vmatpush.bf16.msra.mxu0 %v308
  %495 = vmatpush.bf16.msra.mxu0 %v300
  %496 = vmatmul.bf16.gmra.mxu0 %v38
  %v497 = vpop.f32.mrf.mxu0
  %v498 = vpop.f32.mrf.mxu0
  %v499 = vadd.f32 0.0, %v498
  %500 = vdwg.mxu0
  %501 = vmatpush.bf16.msra.mxu0 %v357
  %502 = vmatpush.bf16.msra.mxu0 %v349
  %503 = vmatpush.bf16.msra.mxu0 %v341
  %504 = vmatpush.bf16.msra.mxu0 %v333
  %505 = vmatpush.bf16.msra.mxu0 %v325
  %506 = vmatpush.bf16.msra.mxu0 %v317
  %507 = vmatpush.bf16.msra.mxu0 %v309
  %508 = vmatpush.bf16.msra.mxu0 %v301
  %509 = vmatmul.bf16.gmra.mxu0 %v38
  %v510 = vpop.f32.mrf.mxu0
  %v511 = vpop.f32.mrf.mxu0
  %v512 = vadd.f32 0.0, %v511
  %513 = vdwg.mxu0
  %514 = vmatpush.bf16.msra.mxu0 %v358
  %515 = vmatpush.bf16.msra.mxu0 %v350
  %516 = vmatpush.bf16.msra.mxu0 %v342
  %517 = vmatpush.bf16.msra.mxu0 %v334
  %518 = vmatpush.bf16.msra.mxu0 %v326
  %519 = vmatpush.bf16.msra.mxu0 %v318
  %520 = vmatpush.bf16.msra.mxu0 %v310
  %521 = vmatpush.bf16.msra.mxu0 %v302
  %522 = vmatmul.bf16.gmra.mxu0 %v38
  %v523 = vpop.f32.mrf.mxu0
  %v524 = vpop.f32.mrf.mxu0
  %v525 = vadd.f32 0.0, %v524
  %526 = vdwg.mxu0
  %v527 = vld [vmem:[%s0] sm:$0xff]
  %v528 = vld [vmem:[%s0 + $0x8] sm:$0xff]
  %v529 = vld [vmem:[%s0 + $0x10] sm:$0xff]
  %v530 = vld [vmem:[%s0 + $0x18] sm:$0xff]
  %v531 = vadd.f32 %v527, %v433
  %v532 = vadd.f32 %v528, %v446
  %v533 = vadd.f32 %v529, %v459
  %v534 = vadd.f32 %v530, %v472
  %s535 = scalar_lea.vmem %s0, 448
  %v536 = vld [vmem:[%s535 + $0x20] sm:$0xff]
  %v537 = vld [vmem:[%s535 + $0x28] sm:$0xff]
  %v538 = vld [vmem:[%s535 + $0x30] sm:$0xff]
  %v539 = vld [vmem:[%s535 + $0x38] sm:$0xff]
  %v540 = vadd.f32 %v536, %v486
  %v541 = vadd.f32 %v537, %v499
  %v542 = vadd.f32 %v538, %v512
  %v543 = vadd.f32 %v539, %v525
  %v544 = vxor.u32 %v531, 2147483648
  %v545 = vxor.u32 %v540, 2147483648
  %v546 = vmul.f32 %v544, 1.442695
  %v547 = vpow.pop %v546
  %v548 = vmul.f32 %v545, 1.442695
  %v549 = vpow.pop %v548
  %v550 = vadd.f32 %v547, 1.0
  %v551 = vadd.f32 %v549, 1.0
  %v552 = vrcp.pop %v550
  %v553 = vmul.f32 %v550, %v552
  %v554 = vsub.f32 1.0, %v553
  %v555 = vmul.f32 %v552, %v554
  %v556 = vadd.f32 %v552, %v555
  %vm557 = vweird.f32 %v550
  %vm558 = vweird.f32 %v552
  %vm559 = vmor %vm557, %vm558
  %v560 = vsel %vm559, %v552, %v556
  %v561 = vand.u32 2147483647, %v550
  %vm562 = vcmp.eq.f32.partialorder %v561, 8.507059e+37
  %v563 = vand.u32 %v550, 2147483648
  %v564 = vor.u32 1.1754944e-38, %v563
  %v565 = vsel %vm562, %v564, %v560
  %v566 = vmul.f32 1.0, %v565
  %v567 = vrcp.pop %v551
  %v568 = vmul.f32 %v551, %v567
  %v569 = vsub.f32 1.0, %v568
  %v570 = vmul.f32 %v567, %v569
  %v571 = vadd.f32 %v567, %v570
  %vm572 = vweird.f32 %v551
  %vm573 = vweird.f32 %v567
  %vm574 = vmor %vm572, %vm573
  %v575 = vsel %vm574, %v567, %v571
  %v576 = vand.u32 2147483647, %v551
  %vm577 = vcmp.eq.f32.partialorder %v576, 8.507059e+37
  %v578 = vand.u32 %v551, 2147483648
  %v579 = vor.u32 1.1754944e-38, %v578
  %v580 = vsel %vm577, %v579, %v575
  %v581 = vmul.f32 1.0, %v580
  %v582 = vxor.u32 %v532, 2147483648
  %v583 = vxor.u32 %v541, 2147483648
  %v584 = vmul.f32 %v582, 1.442695
  %v585 = vpow.pop %v584
  %v586 = vmul.f32 %v583, 1.442695
  %v587 = vpow.pop %v586
  %v588 = vadd.f32 %v585, 1.0
  %v589 = vadd.f32 %v587, 1.0
  %v590 = vrcp.pop %v588
  %v591 = vmul.f32 %v588, %v590
  %v592 = vsub.f32 1.0, %v591
  %v593 = vmul.f32 %v590, %v592
  %v594 = vadd.f32 %v590, %v593
  %vm595 = vweird.f32 %v588
  %vm596 = vweird.f32 %v590
  %vm597 = vmor %vm595, %vm596
  %v598 = vsel %vm597, %v590, %v594
  %v599 = vand.u32 2147483647, %v588
  %vm600 = vcmp.eq.f32.partialorder %v599, 8.507059e+37
  %v601 = vand.u32 %v588, 2147483648
  %v602 = vor.u32 1.1754944e-38, %v601
  %v603 = vsel %vm600, %v602, %v598
  %v604 = vmul.f32 1.0, %v603
  %v605 = vrcp.pop %v589
  %v606 = vmul.f32 %v589, %v605
  %v607 = vsub.f32 1.0, %v606
  %v608 = vmul.f32 %v605, %v607
  %v609 = vadd.f32 %v605, %v608
  %vm610 = vweird.f32 %v589
  %vm611 = vweird.f32 %v605
  %vm612 = vmor %vm610, %vm611
  %v613 = vsel %vm612, %v605, %v609
  %v614 = vand.u32 2147483647, %v589
  %vm615 = vcmp.eq.f32.partialorder %v614, 8.507059e+37
  %v616 = vand.u32 %v589, 2147483648
  %v617 = vor.u32 1.1754944e-38, %v616
  %v618 = vsel %vm615, %v617, %v613
  %v619 = vmul.f32 1.0, %v618
  %v620 = vtanh.pop %v533
  %v621 = vtanh.pop %v542
  %v622 = vxor.u32 %v534, 2147483648
  %v623 = vxor.u32 %v543, 2147483648
  %v624 = vmul.f32 %v622, 1.442695
  %v625 = vpow.pop %v624
  %v626 = vmul.f32 %v623, 1.442695
  %v627 = vpow.pop %v626
  %v628 = vadd.f32 %v625, 1.0
  %v629 = vadd.f32 %v627, 1.0
  %v630 = vrcp.pop %v628
  %v631 = vmul.f32 %v628, %v630
  %v632 = vsub.f32 1.0, %v631
  %v633 = vmul.f32 %v630, %v632
  %v634 = vadd.f32 %v630, %v633
  %vm635 = vweird.f32 %v628
  %vm636 = vweird.f32 %v630
  %vm637 = vmor %vm635, %vm636
  %v638 = vsel %vm637, %v630, %v634
  %v639 = vand.u32 2147483647, %v628
  %vm640 = vcmp.eq.f32.partialorder %v639, 8.507059e+37
  %v641 = vand.u32 %v628, 2147483648
  %v642 = vor.u32 1.1754944e-38, %v641
  %v643 = vsel %vm640, %v642, %v638
  %v644 = vmul.f32 1.0, %v643
  %v645 = vrcp.pop %v629
  %v646 = vmul.f32 %v629, %v645
  %v647 = vsub.f32 1.0, %v646
  %v648 = vmul.f32 %v645, %v647
  %v649 = vadd.f32 %v645, %v648
  %vm650 = vweird.f32 %v629
  %vm651 = vweird.f32 %v645
  %vm652 = vmor %vm650, %vm651
  %v653 = vsel %vm652, %v645, %v649
  %v654 = vand.u32 2147483647, %v629
  %vm655 = vcmp.eq.f32.partialorder %v654, 8.507059e+37
  %v656 = vand.u32 %v629, 2147483648
  %v657 = vor.u32 1.1754944e-38, %v656
  %v658 = vsel %vm655, %v657, %v653
  %v659 = vmul.f32 1.0, %v658
  %v660 = vmul.f32 %v604, %v35
  %v661 = vmul.f32 %v619, %v37
  %v662 = vmul.f32 %v566, %v620
  %v663 = vmul.f32 %v581, %v621
  %v664 = vadd.f32 %v660, %v662
  %v665 = vadd.f32 %v661, %v663
  %v666 = vtanh.pop %v664
  %v667 = vtanh.pop %v665
  %v668 = vmul.f32 %v644, %v666
  %v669 = vmul.f32 %v659, %v667
  %670 = vst [vmem:[#allocation2] sm:$0xff] %v668
  %s671 = scalar_lea.vmem [#allocation2], 112
  %672 = vst [vmem:[%s671 + $0x8] sm:$0xff] %v669
  %v673 = vpack.c.bf16 %v669, %v668
  %v674 = vld [vmem:[%s2] sm:$0xff]
  %v675 = vld [vmem:[%s2 + $0x8] sm:$0xff]
  %v676 = vld [vmem:[%s2 + $0x10] sm:$0xff]
  %v677 = vld [vmem:[%s2 + $0x18] sm:$0xff]
  %v678 = vld [vmem:[%s2 + $0x20] sm:$0xff]
  %v679 = vld [vmem:[%s2 + $0x28] sm:$0xff]
  %v680 = vld [vmem:[%s2 + $0x30] sm:$0xff]
  %v681 = vld [vmem:[%s2 + $0x38] sm:$0xff]
  %v682 = vld [vmem:[%s2 + $0x40] sm:$0xff]
  %v683 = vld [vmem:[%s2 + $0x48] sm:$0xff]
  %v684 = vld [vmem:[%s2 + $0x50] sm:$0xff]
  %v685 = vld [vmem:[%s2 + $0x58] sm:$0xff]
  %v686 = vld [vmem:[%s2 + $0x60] sm:$0xff]
  %v687 = vld [vmem:[%s2 + $0x68] sm:$0xff]
  %v688 = vld [vmem:[%s2 + $0x70] sm:$0xff]
  %v689 = vld [vmem:[%s2 + $0x78] sm:$0xff]
  %v690 = vld [vmem:[%s2 + $0x80] sm:$0xff]
  %v691 = vld [vmem:[%s2 + $0x88] sm:$0xff]
  %v692 = vld [vmem:[%s2 + $0x90] sm:$0xff]
  %v693 = vld [vmem:[%s2 + $0x98] sm:$0xff]
  %v694 = vld [vmem:[%s2 + $0xa0] sm:$0xff]
  %v695 = vld [vmem:[%s2 + $0xa8] sm:$0xff]
  %v696 = vld [vmem:[%s2 + $0xb0] sm:$0xff]
  %v697 = vld [vmem:[%s2 + $0xb8] sm:$0xff]
  %v698 = vld [vmem:[%s2 + $0xc0] sm:$0xff]
  %v699 = vld [vmem:[%s2 + $0xc8] sm:$0xff]
  %v700 = vld [vmem:[%s2 + $0xd0] sm:$0xff]
  %v701 = vld [vmem:[%s2 + $0xd8] sm:$0xff]
  %v702 = vld [vmem:[%s2 + $0xe0] sm:$0xff]
  %v703 = vld [vmem:[%s2 + $0xe8] sm:$0xff]
  %v704 = vld [vmem:[%s2 + $0xf0] sm:$0xff]
  %v705 = vld [vmem:[%s2 + $0xf8] sm:$0xff]
  %v706 = vld [vmem:[%s2 + $0x100] sm:$0xff]
  %v707 = vld [vmem:[%s2 + $0x108] sm:$0xff]
  %v708 = vld [vmem:[%s2 + $0x110] sm:$0xff]
  %v709 = vld [vmem:[%s2 + $0x118] sm:$0xff]
  %v710 = vld [vmem:[%s2 + $0x120] sm:$0xff]
  %v711 = vld [vmem:[%s2 + $0x128] sm:$0xff]
  %v712 = vld [vmem:[%s2 + $0x130] sm:$0xff]
  %v713 = vld [vmem:[%s2 + $0x138] sm:$0xff]
  %v714 = vld [vmem:[%s2 + $0x140] sm:$0xff]
  %v715 = vld [vmem:[%s2 + $0x148] sm:$0xff]
  %v716 = vld [vmem:[%s2 + $0x150] sm:$0xff]
  %v717 = vld [vmem:[%s2 + $0x158] sm:$0xff]
  %v718 = vld [vmem:[%s2 + $0x160] sm:$0xff]
  %v719 = vld [vmem:[%s2 + $0x168] sm:$0xff]
  %v720 = vld [vmem:[%s2 + $0x170] sm:$0xff]
  %v721 = vld [vmem:[%s2 + $0x178] sm:$0xff]
  %v722 = vld [vmem:[%s2 + $0x180] sm:$0xff]
  %v723 = vld [vmem:[%s2 + $0x188] sm:$0xff]
  %v724 = vld [vmem:[%s2 + $0x190] sm:$0xff]
  %v725 = vld [vmem:[%s2 + $0x198] sm:$0xff]
  %v726 = vld [vmem:[%s2 + $0x1a0] sm:$0xff]
  %v727 = vld [vmem:[%s2 + $0x1a8] sm:$0xff]
  %v728 = vld [vmem:[%s2 + $0x1b0] sm:$0xff]
  %v729 = vld [vmem:[%s2 + $0x1b8] sm:$0xff]
  %v730 = vld [vmem:[%s2 + $0x1c0] sm:$0xff]
  %v731 = vld [vmem:[%s2 + $0x1c8] sm:$0xff]
  %v732 = vld [vmem:[%s2 + $0x1d0] sm:$0xff]
  %v733 = vld [vmem:[%s2 + $0x1d8] sm:$0xff]
  %v734 = vld [vmem:[%s2 + $0x1e0] sm:$0xff]
  %v735 = vld [vmem:[%s2 + $0x1e8] sm:$0xff]
  %v736 = vld [vmem:[%s2 + $0x1f0] sm:$0xff]
  %v737 = vld [vmem:[%s2 + $0x1f8] sm:$0xff]
  %v802 = vunpack.c.l.b16 %v674
  %v803 = vunpack.c.h.b16 %v674
  %v804 = vunpack.c.l.b16 %v675
  %v805 = vunpack.c.h.b16 %v675
  %v806 = vunpack.c.l.b16 %v676
  %v807 = vunpack.c.h.b16 %v676
  %v808 = vunpack.c.l.b16 %v677
  %v809 = vunpack.c.h.b16 %v677
  %v810 = vunpack.c.l.b16 %v678
  %v811 = vunpack.c.h.b16 %v678
  %v812 = vunpack.c.l.b16 %v679
  %v813 = vunpack.c.h.b16 %v679
  %v814 = vunpack.c.l.b16 %v680
  %v815 = vunpack.c.h.b16 %v680
  %v816 = vunpack.c.l.b16 %v681
  %v817 = vunpack.c.h.b16 %v681
  %v818 = vunpack.c.l.b16 %v682
  %v819 = vunpack.c.h.b16 %v682
  %v820 = vunpack.c.l.b16 %v683
  %v821 = vunpack.c.h.b16 %v683
  %v822 = vunpack.c.l.b16 %v684
  %v823 = vunpack.c.h.b16 %v684
  %v824 = vunpack.c.l.b16 %v685
  %v825 = vunpack.c.h.b16 %v685
  %v826 = vunpack.c.l.b16 %v686
  %v827 = vunpack.c.h.b16 %v686
  %v828 = vunpack.c.l.b16 %v687
  %v829 = vunpack.c.h.b16 %v687
  %v830 = vunpack.c.l.b16 %v688
  %v831 = vunpack.c.h.b16 %v688
  %v832 = vunpack.c.l.b16 %v689
  %v833 = vunpack.c.h.b16 %v689
  %v834 = vunpack.c.l.b16 %v690
  %v835 = vunpack.c.h.b16 %v690
  %v836 = vunpack.c.l.b16 %v691
  %v837 = vunpack.c.h.b16 %v691
  %v838 = vunpack.c.l.b16 %v692
  %v839 = vunpack.c.h.b16 %v692
  %v840 = vunpack.c.l.b16 %v693
  %v841 = vunpack.c.h.b16 %v693
  %v842 = vunpack.c.l.b16 %v694
  %v843 = vunpack.c.h.b16 %v694
  %v844 = vunpack.c.l.b16 %v695
  %v845 = vunpack.c.h.b16 %v695
  %v846 = vunpack.c.l.b16 %v696
  %v847 = vunpack.c.h.b16 %v696
  %v848 = vunpack.c.l.b16 %v697
  %v849 = vunpack.c.h.b16 %v697
  %v850 = vunpack.c.l.b16 %v698
  %v851 = vunpack.c.h.b16 %v698
  %v852 = vunpack.c.l.b16 %v699
  %v853 = vunpack.c.h.b16 %v699
  %v854 = vunpack.c.l.b16 %v700
  %v855 = vunpack.c.h.b16 %v700
  %v856 = vunpack.c.l.b16 %v701
  %v857 = vunpack.c.h.b16 %v701
  %v858 = vunpack.c.l.b16 %v702
  %v859 = vunpack.c.h.b16 %v702
  %v860 = vunpack.c.l.b16 %v703
  %v861 = vunpack.c.h.b16 %v703
  %v862 = vunpack.c.l.b16 %v704
  %v863 = vunpack.c.h.b16 %v704
  %v864 = vunpack.c.l.b16 %v705
  %v865 = vunpack.c.h.b16 %v705
  %v866 = vunpack.c.l.b16 %v706
  %v867 = vunpack.c.h.b16 %v706
  %v868 = vunpack.c.l.b16 %v707
  %v869 = vunpack.c.h.b16 %v707
  %v870 = vunpack.c.l.b16 %v708
  %v871 = vunpack.c.h.b16 %v708
  %v872 = vunpack.c.l.b16 %v709
  %v873 = vunpack.c.h.b16 %v709
  %v874 = vunpack.c.l.b16 %v710
  %v875 = vunpack.c.h.b16 %v710
  %v876 = vunpack.c.l.b16 %v711
  %v877 = vunpack.c.h.b16 %v711
  %v878 = vunpack.c.l.b16 %v712
  %v879 = vunpack.c.h.b16 %v712
  %v880 = vunpack.c.l.b16 %v713
  %v881 = vunpack.c.h.b16 %v713
  %v882 = vunpack.c.l.b16 %v714
  %v883 = vunpack.c.h.b16 %v714
  %v884 = vunpack.c.l.b16 %v715
  %v885 = vunpack.c.h.b16 %v715
  %v886 = vunpack.c.l.b16 %v716
  %v887 = vunpack.c.h.b16 %v716
  %v888 = vunpack.c.l.b16 %v717
  %v889 = vunpack.c.h.b16 %v717
  %v890 = vunpack.c.l.b16 %v718
  %v891 = vunpack.c.h.b16 %v718
  %v892 = vunpack.c.l.b16 %v719
  %v893 = vunpack.c.h.b16 %v719
  %v894 = vunpack.c.l.b16 %v720
  %v895 = vunpack.c.h.b16 %v720
  %v896 = vunpack.c.l.b16 %v721
  %v897 = vunpack.c.h.b16 %v721
  %v898 = vunpack.c.l.b16 %v722
  %v899 = vunpack.c.h.b16 %v722
  %v900 = vunpack.c.l.b16 %v723
  %v901 = vunpack.c.h.b16 %v723
  %v902 = vunpack.c.l.b16 %v724
  %v903 = vunpack.c.h.b16 %v724
  %v904 = vunpack.c.l.b16 %v725
  %v905 = vunpack.c.h.b16 %v725
  %v906 = vunpack.c.l.b16 %v726
  %v907 = vunpack.c.h.b16 %v726
  %v908 = vunpack.c.l.b16 %v727
  %v909 = vunpack.c.h.b16 %v727
  %v910 = vunpack.c.l.b16 %v728
  %v911 = vunpack.c.h.b16 %v728
  %v912 = vunpack.c.l.b16 %v729
  %v913 = vunpack.c.h.b16 %v729
  %v914 = vunpack.c.l.b16 %v730
  %v915 = vunpack.c.h.b16 %v730
  %v916 = vunpack.c.l.b16 %v731
  %v917 = vunpack.c.h.b16 %v731
  %v918 = vunpack.c.l.b16 %v732
  %v919 = vunpack.c.h.b16 %v732
  %v920 = vunpack.c.l.b16 %v733
  %v921 = vunpack.c.h.b16 %v733
  %v922 = vunpack.c.l.b16 %v734
  %v923 = vunpack.c.h.b16 %v734
  %v924 = vunpack.c.l.b16 %v735
  %v925 = vunpack.c.h.b16 %v735
  %v926 = vunpack.c.l.b16 %v736
  %v927 = vunpack.c.h.b16 %v736
  %v928 = vunpack.c.l.b16 %v737
  %v929 = vunpack.c.h.b16 %v737
  %v930 = vpack.c.b16 %v810, %v802
  %v931 = vpack.c.b16 %v811, %v803
  %v932 = vpack.c.b16 %v812, %v804
  %v933 = vpack.c.b16 %v813, %v805
  %v934 = vpack.c.b16 %v814, %v806
  %v935 = vpack.c.b16 %v815, %v807
  %v936 = vpack.c.b16 %v816, %v808
  %v937 = vpack.c.b16 %v817, %v809
  %v938 = vpack.c.b16 %v826, %v818
  %v939 = vpack.c.b16 %v827, %v819
  %v940 = vpack.c.b16 %v828, %v820
  %v941 = vpack.c.b16 %v829, %v821
  %v942 = vpack.c.b16 %v830, %v822
  %v943 = vpack.c.b16 %v831, %v823
  %v944 = vpack.c.b16 %v832, %v824
  %v945 = vpack.c.b16 %v833, %v825
  %v946 = vpack.c.b16 %v842, %v834
  %v947 = vpack.c.b16 %v843, %v835
  %v948 = vpack.c.b16 %v844, %v836
  %v949 = vpack.c.b16 %v845, %v837
  %v950 = vpack.c.b16 %v846, %v838
  %v951 = vpack.c.b16 %v847, %v839
  %v952 = vpack.c.b16 %v848, %v840
  %v953 = vpack.c.b16 %v849, %v841
  %v954 = vpack.c.b16 %v858, %v850
  %v955 = vpack.c.b16 %v859, %v851
  %v956 = vpack.c.b16 %v860, %v852
  %v957 = vpack.c.b16 %v861, %v853
  %v958 = vpack.c.b16 %v862, %v854
  %v959 = vpack.c.b16 %v863, %v855
  %v960 = vpack.c.b16 %v864, %v856
  %v961 = vpack.c.b16 %v865, %v857
  %v962 = vpack.c.b16 %v874, %v866
  %v963 = vpack.c.b16 %v875, %v867
  %v964 = vpack.c.b16 %v876, %v868
  %v965 = vpack.c.b16 %v877, %v869
  %v966 = vpack.c.b16 %v878, %v870
  %v967 = vpack.c.b16 %v879, %v871
  %v968 = vpack.c.b16 %v880, %v872
  %v969 = vpack.c.b16 %v881, %v873
  %v970 = vpack.c.b16 %v890, %v882
  %v971 = vpack.c.b16 %v891, %v883
  %v972 = vpack.c.b16 %v892, %v884
  %v973 = vpack.c.b16 %v893, %v885
  %v974 = vpack.c.b16 %v894, %v886
  %v975 = vpack.c.b16 %v895, %v887
  %v976 = vpack.c.b16 %v896, %v888
  %v977 = vpack.c.b16 %v897, %v889
  %v978 = vpack.c.b16 %v906, %v898
  %v979 = vpack.c.b16 %v907, %v899
  %v980 = vpack.c.b16 %v908, %v900
  %v981 = vpack.c.b16 %v909, %v901
  %v982 = vpack.c.b16 %v910, %v902
  %v983 = vpack.c.b16 %v911, %v903
  %v984 = vpack.c.b16 %v912, %v904
  %v985 = vpack.c.b16 %v913, %v905
  %v986 = vpack.c.b16 %v922, %v914
  %v987 = vpack.c.b16 %v923, %v915
  %v988 = vpack.c.b16 %v924, %v916
  %v989 = vpack.c.b16 %v925, %v917
  %v990 = vpack.c.b16 %v926, %v918
  %v991 = vpack.c.b16 %v927, %v919
  %v992 = vpack.c.b16 %v928, %v920
  %v993 = vpack.c.b16 %v929, %v921
  %1058 = vmatpush.bf16.msra.mxu0 %v986
  %1059 = vmatpush.bf16.msra.mxu0 %v978
  %1060 = vmatpush.bf16.msra.mxu0 %v970
  %1061 = vmatpush.bf16.msra.mxu0 %v962
  %1062 = vmatpush.bf16.msra.mxu0 %v954
  %1063 = vmatpush.bf16.msra.mxu0 %v946
  %1064 = vmatpush.bf16.msra.mxu0 %v938
  %1065 = vmatpush.bf16.msra.mxu0 %v930
  %1066 = vmatmul.bf16.gmra.mxu0 %v673
  %v1067 = vpop.f32.mrf.mxu0
  %v1068 = vadd.f32 0.0, %v1067
  %v1069 = vpop.f32.mrf.mxu0
  %1070 = vdwg.mxu0
  %1071 = vmatpush.bf16.msra.mxu0 %v987
  %1072 = vmatpush.bf16.msra.mxu0 %v979
  %1073 = vmatpush.bf16.msra.mxu0 %v971
  %1074 = vmatpush.bf16.msra.mxu0 %v963
  %1075 = vmatpush.bf16.msra.mxu0 %v955
  %1076 = vmatpush.bf16.msra.mxu0 %v947
  %1077 = vmatpush.bf16.msra.mxu0 %v939
  %1078 = vmatpush.bf16.msra.mxu0 %v931
  %1079 = vmatmul.bf16.gmra.mxu0 %v673
  %v1080 = vpop.f32.mrf.mxu0
  %v1081 = vadd.f32 0.0, %v1080
  %v1082 = vpop.f32.mrf.mxu0
  %1083 = vdwg.mxu0
  %1084 = vmatpush.bf16.msra.mxu0 %v988
  %1085 = vmatpush.bf16.msra.mxu0 %v980
  %1086 = vmatpush.bf16.msra.mxu0 %v972
  %1087 = vmatpush.bf16.msra.mxu0 %v964
  %1088 = vmatpush.bf16.msra.mxu0 %v956
  %1089 = vmatpush.bf16.msra.mxu0 %v948
  %1090 = vmatpush.bf16.msra.mxu0 %v940
  %1091 = vmatpush.bf16.msra.mxu0 %v932
  %1092 = vmatmul.bf16.gmra.mxu0 %v673
  %v1093 = vpop.f32.mrf.mxu0
  %v1094 = vadd.f32 0.0, %v1093
  %v1095 = vpop.f32.mrf.mxu0
  %1096 = vdwg.mxu0
  %1097 = vmatpush.bf16.msra.mxu0 %v989
  %1098 = vmatpush.bf16.msra.mxu0 %v981
  %1099 = vmatpush.bf16.msra.mxu0 %v973
  %1100 = vmatpush.bf16.msra.mxu0 %v965
  %1101 = vmatpush.bf16.msra.mxu0 %v957
  %1102 = vmatpush.bf16.msra.mxu0 %v949
  %1103 = vmatpush.bf16.msra.mxu0 %v941
  %1104 = vmatpush.bf16.msra.mxu0 %v933
  %1105 = vmatmul.bf16.gmra.mxu0 %v673
  %v1106 = vpop.f32.mrf.mxu0
  %v1107 = vadd.f32 0.0, %v1106
  %v1108 = vpop.f32.mrf.mxu0
  %1109 = vdwg.mxu0
  %1110 = vmatpush.bf16.msra.mxu0 %v990
  %1111 = vmatpush.bf16.msra.mxu0 %v982
  %1112 = vmatpush.bf16.msra.mxu0 %v974
  %1113 = vmatpush.bf16.msra.mxu0 %v966
  %1114 = vmatpush.bf16.msra.mxu0 %v958
  %1115 = vmatpush.bf16.msra.mxu0 %v950
  %1116 = vmatpush.bf16.msra.mxu0 %v942
  %1117 = vmatpush.bf16.msra.mxu0 %v934
  %1118 = vmatmul.bf16.gmra.mxu0 %v673
  %v1119 = vpop.f32.mrf.mxu0
  %v1120 = vpop.f32.mrf.mxu0
  %v1121 = vadd.f32 0.0, %v1120
  %1122 = vdwg.mxu0
  %1123 = vmatpush.bf16.msra.mxu0 %v991
  %1124 = vmatpush.bf16.msra.mxu0 %v983
  %1125 = vmatpush.bf16.msra.mxu0 %v975
  %1126 = vmatpush.bf16.msra.mxu0 %v967
  %1127 = vmatpush.bf16.msra.mxu0 %v959
  %1128 = vmatpush.bf16.msra.mxu0 %v951
  %1129 = vmatpush.bf16.msra.mxu0 %v943
  %1130 = vmatpush.bf16.msra.mxu0 %v935
  %1131 = vmatmul.bf16.gmra.mxu0 %v673
  %v1132 = vpop.f32.mrf.mxu0
  %v1133 = vpop.f32.mrf.mxu0
  %v1134 = vadd.f32 0.0, %v1133
  %1135 = vdwg.mxu0
  %1136 = vmatpush.bf16.msra.mxu0 %v992
  %1137 = vmatpush.bf16.msra.mxu0 %v984
  %1138 = vmatpush.bf16.msra.mxu0 %v976
  %1139 = vmatpush.bf16.msra.mxu0 %v968
  %1140 = vmatpush.bf16.msra.mxu0 %v960
  %1141 = vmatpush.bf16.msra.mxu0 %v952
  %1142 = vmatpush.bf16.msra.mxu0 %v944
  %1143 = vmatpush.bf16.msra.mxu0 %v936
  %1144 = vmatmul.bf16.gmra.mxu0 %v673
  %v1145 = vpop.f32.mrf.mxu0
  %v1146 = vpop.f32.mrf.mxu0
  %v1147 = vadd.f32 0.0, %v1146
  %1148 = vdwg.mxu0
  %1149 = vmatpush.bf16.msra.mxu0 %v993
  %1150 = vmatpush.bf16.msra.mxu0 %v985
  %1151 = vmatpush.bf16.msra.mxu0 %v977
  %1152 = vmatpush.bf16.msra.mxu0 %v969
  %1153 = vmatpush.bf16.msra.mxu0 %v961
  %1154 = vmatpush.bf16.msra.mxu0 %v953
  %1155 = vmatpush.bf16.msra.mxu0 %v945
  %1156 = vmatpush.bf16.msra.mxu0 %v937
  %1157 = vmatmul.bf16.gmra.mxu0 %v673
  %v1158 = vpop.f32.mrf.mxu0
  %v1159 = vpop.f32.mrf.mxu0
  %v1160 = vadd.f32 0.0, %v1159
  %1161 = vdwg.mxu0
  %s1162 = scalar_lea.vmem %s0, 64
  %v1163 = vld [vmem:[%s1162] sm:$0xff]
  %v1164 = vld [vmem:[%s1162 + $0x8] sm:$0xff]
  %v1165 = vld [vmem:[%s1162 + $0x10] sm:$0xff]
  %v1166 = vld [vmem:[%s1162 + $0x18] sm:$0xff]
  %v1167 = vadd.f32 %v1163, %v1068
  %v1168 = vadd.f32 %v1164, %v1081
  %v1169 = vadd.f32 %v1165, %v1094
  %v1170 = vadd.f32 %v1166, %v1107
  %s1171 = scalar_lea.vmem %s0, 384
  %v1172 = vld [vmem:[%s1171 + $0x20] sm:$0xff]
  %v1173 = vld [vmem:[%s1171 + $0x28] sm:$0xff]
  %v1174 = vld [vmem:[%s1171 + $0x30] sm:$0xff]
  %v1175 = vld [vmem:[%s1171 + $0x38] sm:$0xff]
  %v1176 = vadd.f32 %v1172, %v1121
  %v1177 = vadd.f32 %v1173, %v1134
  %v1178 = vadd.f32 %v1174, %v1147
  %v1179 = vadd.f32 %v1175, %v1160
  %v1180 = vxor.u32 %v1167, 2147483648
  %v1181 = vxor.u32 %v1176, 2147483648
  %v1182 = vmul.f32 %v1180, 1.442695
  %v1183 = vpow.pop %v1182
  %v1184 = vmul.f32 %v1181, 1.442695
  %v1185 = vpow.pop %v1184
  %v1186 = vadd.f32 %v1183, 1.0
  %v1187 = vadd.f32 %v1185, 1.0
  %v1188 = vrcp.pop %v1186
  %v1189 = vmul.f32 %v1186, %v1188
  %v1190 = vsub.f32 1.0, %v1189
  %v1191 = vmul.f32 %v1188, %v1190
  %v1192 = vadd.f32 %v1188, %v1191
  %vm1193 = vweird.f32 %v1186
  %vm1194 = vweird.f32 %v1188
  %vm1195 = vmor %vm1193, %vm1194
  %v1196 = vsel %vm1195, %v1188, %v1192
  %v1197 = vand.u32 2147483647, %v1186
  %vm1198 = vcmp.eq.f32.partialorder %v1197, 8.507059e+37
  %v1199 = vand.u32 %v1186, 2147483648
  %v1200 = vor.u32 1.1754944e-38, %v1199
  %v1201 = vsel %vm1198, %v1200, %v1196
  %v1202 = vmul.f32 1.0, %v1201
  %v1203 = vrcp.pop %v1187
  %v1204 = vmul.f32 %v1187, %v1203
  %v1205 = vsub.f32 1.0, %v1204
  %v1206 = vmul.f32 %v1203, %v1205
  %v1207 = vadd.f32 %v1203, %v1206
  %vm1208 = vweird.f32 %v1187
  %vm1209 = vweird.f32 %v1203
  %vm1210 = vmor %vm1208, %vm1209
  %v1211 = vsel %vm1210, %v1203, %v1207
  %v1212 = vand.u32 2147483647, %v1187
  %vm1213 = vcmp.eq.f32.partialorder %v1212, 8.507059e+37
  %v1214 = vand.u32 %v1187, 2147483648
  %v1215 = vor.u32 1.1754944e-38, %v1214
  %v1216 = vsel %vm1213, %v1215, %v1211
  %v1217 = vmul.f32 1.0, %v1216
  %v1218 = vxor.u32 %v1168, 2147483648
  %v1219 = vxor.u32 %v1177, 2147483648
  %v1220 = vmul.f32 %v1218, 1.442695
  %v1221 = vpow.pop %v1220
  %v1222 = vmul.f32 %v1219, 1.442695
  %v1223 = vpow.pop %v1222
  %v1224 = vadd.f32 %v1221, 1.0
  %v1225 = vadd.f32 %v1223, 1.0
  %v1226 = vrcp.pop %v1224
  %v1227 = vmul.f32 %v1224, %v1226
  %v1228 = vsub.f32 1.0, %v1227
  %v1229 = vmul.f32 %v1226, %v1228
  %v1230 = vadd.f32 %v1226, %v1229
  %vm1231 = vweird.f32 %v1224
  %vm1232 = vweird.f32 %v1226
  %vm1233 = vmor %vm1231, %vm1232
  %v1234 = vsel %vm1233, %v1226, %v1230
  %v1235 = vand.u32 2147483647, %v1224
  %vm1236 = vcmp.eq.f32.partialorder %v1235, 8.507059e+37
  %v1237 = vand.u32 %v1224, 2147483648
  %v1238 = vor.u32 1.1754944e-38, %v1237
  %v1239 = vsel %vm1236, %v1238, %v1234
  %v1240 = vmul.f32 1.0, %v1239
  %v1241 = vrcp.pop %v1225
  %v1242 = vmul.f32 %v1225, %v1241
  %v1243 = vsub.f32 1.0, %v1242
  %v1244 = vmul.f32 %v1241, %v1243
  %v1245 = vadd.f32 %v1241, %v1244
  %vm1246 = vweird.f32 %v1225
  %vm1247 = vweird.f32 %v1241
  %vm1248 = vmor %vm1246, %vm1247
  %v1249 = vsel %vm1248, %v1241, %v1245
  %v1250 = vand.u32 2147483647, %v1225
  %vm1251 = vcmp.eq.f32.partialorder %v1250, 8.507059e+37
  %v1252 = vand.u32 %v1225, 2147483648
  %v1253 = vor.u32 1.1754944e-38, %v1252
  %v1254 = vsel %vm1251, %v1253, %v1249
  %v1255 = vmul.f32 1.0, %v1254
  %v1256 = vtanh.pop %v1169
  %v1257 = vtanh.pop %v1178
  %v1258 = vxor.u32 %v1170, 2147483648
  %v1259 = vxor.u32 %v1179, 2147483648
  %v1260 = vmul.f32 %v1258, 1.442695
  %v1261 = vpow.pop %v1260
  %v1262 = vmul.f32 %v1259, 1.442695
  %v1263 = vpow.pop %v1262
  %v1264 = vadd.f32 %v1261, 1.0
  %v1265 = vadd.f32 %v1263, 1.0
  %v1266 = vrcp.pop %v1264
  %v1267 = vmul.f32 %v1264, %v1266
  %v1268 = vsub.f32 1.0, %v1267
  %v1269 = vmul.f32 %v1266, %v1268
  %v1270 = vadd.f32 %v1266, %v1269
  %vm1271 = vweird.f32 %v1264
  %vm1272 = vweird.f32 %v1266
  %vm1273 = vmor %vm1271, %vm1272
  %v1274 = vsel %vm1273, %v1266, %v1270
  %v1275 = vand.u32 2147483647, %v1264
  %vm1276 = vcmp.eq.f32.partialorder %v1275, 8.507059e+37
  %v1277 = vand.u32 %v1264, 2147483648
  %v1278 = vor.u32 1.1754944e-38, %v1277
  %v1279 = vsel %vm1276, %v1278, %v1274
  %v1280 = vmul.f32 1.0, %v1279
  %v1281 = vrcp.pop %v1265
  %v1282 = vmul.f32 %v1265, %v1281
  %v1283 = vsub.f32 1.0, %v1282
  %v1284 = vmul.f32 %v1281, %v1283
  %v1285 = vadd.f32 %v1281, %v1284
  %vm1286 = vweird.f32 %v1265
  %vm1287 = vweird.f32 %v1281
  %vm1288 = vmor %vm1286, %vm1287
  %v1289 = vsel %vm1288, %v1281, %v1285
  %v1290 = vand.u32 2147483647, %v1265
  %vm1291 = vcmp.eq.f32.partialorder %v1290, 8.507059e+37
  %v1292 = vand.u32 %v1265, 2147483648
  %v1293 = vor.u32 1.1754944e-38, %v1292
  %v1294 = vsel %vm1291, %v1293, %v1289
  %v1295 = vmul.f32 1.0, %v1294
  %v1296 = vmul.f32 %v1240, %v664
  %v1297 = vmul.f32 %v1255, %v665
  %v1298 = vmul.f32 %v1202, %v1256
  %v1299 = vmul.f32 %v1217, %v1257
  %v1300 = vadd.f32 %v1296, %v1298
  %v1301 = vadd.f32 %v1297, %v1299
  %v1302 = vtanh.pop %v1300
  %v1303 = vtanh.pop %v1301
  %v1304 = vmul.f32 %v1280, %v1302
  %v1305 = vmul.f32 %v1295, %v1303
  %s1306 = scalar_lea.vmem [#allocation2], 16
  %1307 = vst [vmem:[%s1306] sm:$0xff] %v1304
  %s1308 = scalar_lea.vmem [#allocation2], 96
  %1309 = vst [vmem:[%s1308 + $0x8] sm:$0xff] %v1305
  %v1310 = vpack.c.bf16 %v1305, %v1304
  %v1311 = vld [vmem:[%s2] sm:$0xff]
  %v1312 = vld [vmem:[%s2 + $0x8] sm:$0xff]
  %v1313 = vld [vmem:[%s2 + $0x10] sm:$0xff]
  %v1314 = vld [vmem:[%s2 + $0x18] sm:$0xff]
  %v1315 = vld [vmem:[%s2 + $0x20] sm:$0xff]
  %v1316 = vld [vmem:[%s2 + $0x28] sm:$0xff]
  %v1317 = vld [vmem:[%s2 + $0x30] sm:$0xff]
  %v1318 = vld [vmem:[%s2 + $0x38] sm:$0xff]
  %v1319 = vld [vmem:[%s2 + $0x40] sm:$0xff]
  %v1320 = vld [vmem:[%s2 + $0x48] sm:$0xff]
  %v1321 = vld [vmem:[%s2 + $0x50] sm:$0xff]
  %v1322 = vld [vmem:[%s2 + $0x58] sm:$0xff]
  %v1323 = vld [vmem:[%s2 + $0x60] sm:$0xff]
  %v1324 = vld [vmem:[%s2 + $0x68] sm:$0xff]
  %v1325 = vld [vmem:[%s2 + $0x70] sm:$0xff]
  %v1326 = vld [vmem:[%s2 + $0x78] sm:$0xff]
  %v1327 = vld [vmem:[%s2 + $0x80] sm:$0xff]
  %v1328 = vld [vmem:[%s2 + $0x88] sm:$0xff]
  %v1329 = vld [vmem:[%s2 + $0x90] sm:$0xff]
  %v1330 = vld [vmem:[%s2 + $0x98] sm:$0xff]
  %v1331 = vld [vmem:[%s2 + $0xa0] sm:$0xff]
  %v1332 = vld [vmem:[%s2 + $0xa8] sm:$0xff]
  %v1333 = vld [vmem:[%s2 + $0xb0] sm:$0xff]
  %v1334 = vld [vmem:[%s2 + $0xb8] sm:$0xff]
  %v1335 = vld [vmem:[%s2 + $0xc0] sm:$0xff]
  %v1336 = vld [vmem:[%s2 + $0xc8] sm:$0xff]
  %v1337 = vld [vmem:[%s2 + $0xd0] sm:$0xff]
  %v1338 = vld [vmem:[%s2 + $0xd8] sm:$0xff]
  %v1339 = vld [vmem:[%s2 + $0xe0] sm:$0xff]
  %v1340 = vld [vmem:[%s2 + $0xe8] sm:$0xff]
  %v1341 = vld [vmem:[%s2 + $0xf0] sm:$0xff]
  %v1342 = vld [vmem:[%s2 + $0xf8] sm:$0xff]
  %v1343 = vld [vmem:[%s2 + $0x100] sm:$0xff]
  %v1344 = vld [vmem:[%s2 + $0x108] sm:$0xff]
  %v1345 = vld [vmem:[%s2 + $0x110] sm:$0xff]
  %v1346 = vld [vmem:[%s2 + $0x118] sm:$0xff]
  %v1347 = vld [vmem:[%s2 + $0x120] sm:$0xff]
  %v1348 = vld [vmem:[%s2 + $0x128] sm:$0xff]
  %v1349 = vld [vmem:[%s2 + $0x130] sm:$0xff]
  %v1350 = vld [vmem:[%s2 + $0x138] sm:$0xff]
  %v1351 = vld [vmem:[%s2 + $0x140] sm:$0xff]
  %v1352 = vld [vmem:[%s2 + $0x148] sm:$0xff]
  %v1353 = vld [vmem:[%s2 + $0x150] sm:$0xff]
  %v1354 = vld [vmem:[%s2 + $0x158] sm:$0xff]
  %v1355 = vld [vmem:[%s2 + $0x160] sm:$0xff]
  %v1356 = vld [vmem:[%s2 + $0x168] sm:$0xff]
  %v1357 = vld [vmem:[%s2 + $0x170] sm:$0xff]
  %v1358 = vld [vmem:[%s2 + $0x178] sm:$0xff]
  %v1359 = vld [vmem:[%s2 + $0x180] sm:$0xff]
  %v1360 = vld [vmem:[%s2 + $0x188] sm:$0xff]
  %v1361 = vld [vmem:[%s2 + $0x190] sm:$0xff]
  %v1362 = vld [vmem:[%s2 + $0x198] sm:$0xff]
  %v1363 = vld [vmem:[%s2 + $0x1a0] sm:$0xff]
  %v1364 = vld [vmem:[%s2 + $0x1a8] sm:$0xff]
  %v1365 = vld [vmem:[%s2 + $0x1b0] sm:$0xff]
  %v1366 = vld [vmem:[%s2 + $0x1b8] sm:$0xff]
  %v1367 = vld [vmem:[%s2 + $0x1c0] sm:$0xff]
  %v1368 = vld [vmem:[%s2 + $0x1c8] sm:$0xff]
  %v1369 = vld [vmem:[%s2 + $0x1d0] sm:$0xff]
  %v1370 = vld [vmem:[%s2 + $0x1d8] sm:$0xff]
  %v1371 = vld [vmem:[%s2 + $0x1e0] sm:$0xff]
  %v1372 = vld [vmem:[%s2 + $0x1e8] sm:$0xff]
  %v1373 = vld [vmem:[%s2 + $0x1f0] sm:$0xff]
  %v1374 = vld [vmem:[%s2 + $0x1f8] sm:$0xff]
  %v1439 = vunpack.c.l.b16 %v1311
  %v1440 = vunpack.c.h.b16 %v1311
  %v1441 = vunpack.c.l.b16 %v1312
  %v1442 = vunpack.c.h.b16 %v1312
  %v1443 = vunpack.c.l.b16 %v1313
  %v1444 = vunpack.c.h.b16 %v1313
  %v1445 = vunpack.c.l.b16 %v1314
  %v1446 = vunpack.c.h.b16 %v1314
  %v1447 = vunpack.c.l.b16 %v1315
  %v1448 = vunpack.c.h.b16 %v1315
  %v1449 = vunpack.c.l.b16 %v1316
  %v1450 = vunpack.c.h.b16 %v1316
  %v1451 = vunpack.c.l.b16 %v1317
  %v1452 = vunpack.c.h.b16 %v1317
  %v1453 = vunpack.c.l.b16 %v1318
  %v1454 = vunpack.c.h.b16 %v1318
  %v1455 = vunpack.c.l.b16 %v1319
  %v1456 = vunpack.c.h.b16 %v1319
  %v1457 = vunpack.c.l.b16 %v1320
  %v1458 = vunpack.c.h.b16 %v1320
  %v1459 = vunpack.c.l.b16 %v1321
  %v1460 = vunpack.c.h.b16 %v1321
  %v1461 = vunpack.c.l.b16 %v1322
  %v1462 = vunpack.c.h.b16 %v1322
  %v1463 = vunpack.c.l.b16 %v1323
  %v1464 = vunpack.c.h.b16 %v1323
  %v1465 = vunpack.c.l.b16 %v1324
  %v1466 = vunpack.c.h.b16 %v1324
  %v1467 = vunpack.c.l.b16 %v1325
  %v1468 = vunpack.c.h.b16 %v1325
  %v1469 = vunpack.c.l.b16 %v1326
  %v1470 = vunpack.c.h.b16 %v1326
  %v1471 = vunpack.c.l.b16 %v1327
  %v1472 = vunpack.c.h.b16 %v1327
  %v1473 = vunpack.c.l.b16 %v1328
  %v1474 = vunpack.c.h.b16 %v1328
  %v1475 = vunpack.c.l.b16 %v1329
  %v1476 = vunpack.c.h.b16 %v1329
  %v1477 = vunpack.c.l.b16 %v1330
  %v1478 = vunpack.c.h.b16 %v1330
  %v1479 = vunpack.c.l.b16 %v1331
  %v1480 = vunpack.c.h.b16 %v1331
  %v1481 = vunpack.c.l.b16 %v1332
  %v1482 = vunpack.c.h.b16 %v1332
  %v1483 = vunpack.c.l.b16 %v1333
  %v1484 = vunpack.c.h.b16 %v1333
  %v1485 = vunpack.c.l.b16 %v1334
  %v1486 = vunpack.c.h.b16 %v1334
  %v1487 = vunpack.c.l.b16 %v1335
  %v1488 = vunpack.c.h.b16 %v1335
  %v1489 = vunpack.c.l.b16 %v1336
  %v1490 = vunpack.c.h.b16 %v1336
  %v1491 = vunpack.c.l.b16 %v1337
  %v1492 = vunpack.c.h.b16 %v1337
  %v1493 = vunpack.c.l.b16 %v1338
  %v1494 = vunpack.c.h.b16 %v1338
  %v1495 = vunpack.c.l.b16 %v1339
  %v1496 = vunpack.c.h.b16 %v1339
  %v1497 = vunpack.c.l.b16 %v1340
  %v1498 = vunpack.c.h.b16 %v1340
  %v1499 = vunpack.c.l.b16 %v1341
  %v1500 = vunpack.c.h.b16 %v1341
  %v1501 = vunpack.c.l.b16 %v1342
  %v1502 = vunpack.c.h.b16 %v1342
  %v1503 = vunpack.c.l.b16 %v1343
  %v1504 = vunpack.c.h.b16 %v1343
  %v1505 = vunpack.c.l.b16 %v1344
  %v1506 = vunpack.c.h.b16 %v1344
  %v1507 = vunpack.c.l.b16 %v1345
  %v1508 = vunpack.c.h.b16 %v1345
  %v1509 = vunpack.c.l.b16 %v1346
  %v1510 = vunpack.c.h.b16 %v1346
  %v1511 = vunpack.c.l.b16 %v1347
  %v1512 = vunpack.c.h.b16 %v1347
  %v1513 = vunpack.c.l.b16 %v1348
  %v1514 = vunpack.c.h.b16 %v1348
  %v1515 = vunpack.c.l.b16 %v1349
  %v1516 = vunpack.c.h.b16 %v1349
  %v1517 = vunpack.c.l.b16 %v1350
  %v1518 = vunpack.c.h.b16 %v1350
  %v1519 = vunpack.c.l.b16 %v1351
  %v1520 = vunpack.c.h.b16 %v1351
  %v1521 = vunpack.c.l.b16 %v1352
  %v1522 = vunpack.c.h.b16 %v1352
  %v1523 = vunpack.c.l.b16 %v1353
  %v1524 = vunpack.c.h.b16 %v1353
  %v1525 = vunpack.c.l.b16 %v1354
  %v1526 = vunpack.c.h.b16 %v1354
  %v1527 = vunpack.c.l.b16 %v1355
  %v1528 = vunpack.c.h.b16 %v1355
  %v1529 = vunpack.c.l.b16 %v1356
  %v1530 = vunpack.c.h.b16 %v1356
  %v1531 = vunpack.c.l.b16 %v1357
  %v1532 = vunpack.c.h.b16 %v1357
  %v1533 = vunpack.c.l.b16 %v1358
  %v1534 = vunpack.c.h.b16 %v1358
  %v1535 = vunpack.c.l.b16 %v1359
  %v1536 = vunpack.c.h.b16 %v1359
  %v1537 = vunpack.c.l.b16 %v1360
  %v1538 = vunpack.c.h.b16 %v1360
  %v1539 = vunpack.c.l.b16 %v1361
  %v1540 = vunpack.c.h.b16 %v1361
  %v1541 = vunpack.c.l.b16 %v1362
  %v1542 = vunpack.c.h.b16 %v1362
  %v1543 = vunpack.c.l.b16 %v1363
  %v1544 = vunpack.c.h.b16 %v1363
  %v1545 = vunpack.c.l.b16 %v1364
  %v1546 = vunpack.c.h.b16 %v1364
  %v1547 = vunpack.c.l.b16 %v1365
  %v1548 = vunpack.c.h.b16 %v1365
  %v1549 = vunpack.c.l.b16 %v1366
  %v1550 = vunpack.c.h.b16 %v1366
  %v1551 = vunpack.c.l.b16 %v1367
  %v1552 = vunpack.c.h.b16 %v1367
  %v1553 = vunpack.c.l.b16 %v1368
  %v1554 = vunpack.c.h.b16 %v1368
  %v1555 = vunpack.c.l.b16 %v1369
  %v1556 = vunpack.c.h.b16 %v1369
  %v1557 = vunpack.c.l.b16 %v1370
  %v1558 = vunpack.c.h.b16 %v1370
  %v1559 = vunpack.c.l.b16 %v1371
  %v1560 = vunpack.c.h.b16 %v1371
  %v1561 = vunpack.c.l.b16 %v1372
  %v1562 = vunpack.c.h.b16 %v1372
  %v1563 = vunpack.c.l.b16 %v1373
  %v1564 = vunpack.c.h.b16 %v1373
  %v1565 = vunpack.c.l.b16 %v1374
  %v1566 = vunpack.c.h.b16 %v1374
  %v1567 = vpack.c.b16 %v1447, %v1439
  %v1568 = vpack.c.b16 %v1448, %v1440
  %v1569 = vpack.c.b16 %v1449, %v1441
  %v1570 = vpack.c.b16 %v1450, %v1442
  %v1571 = vpack.c.b16 %v1451, %v1443
  %v1572 = vpack.c.b16 %v1452, %v1444
  %v1573 = vpack.c.b16 %v1453, %v1445
  %v1574 = vpack.c.b16 %v1454, %v1446
  %v1575 = vpack.c.b16 %v1463, %v1455
  %v1576 = vpack.c.b16 %v1464, %v1456
  %v1577 = vpack.c.b16 %v1465, %v1457
  %v1578 = vpack.c.b16 %v1466, %v1458
  %v1579 = vpack.c.b16 %v1467, %v1459
  %v1580 = vpack.c.b16 %v1468, %v1460
  %v1581 = vpack.c.b16 %v1469, %v1461
  %v1582 = vpack.c.b16 %v1470, %v1462
  %v1583 = vpack.c.b16 %v1479, %v1471
  %v1584 = vpack.c.b16 %v1480, %v1472
  %v1585 = vpack.c.b16 %v1481, %v1473
  %v1586 = vpack.c.b16 %v1482, %v1474
  %v1587 = vpack.c.b16 %v1483, %v1475
  %v1588 = vpack.c.b16 %v1484, %v1476
  %v1589 = vpack.c.b16 %v1485, %v1477
  %v1590 = vpack.c.b16 %v1486, %v1478
  %v1591 = vpack.c.b16 %v1495, %v1487
  %v1592 = vpack.c.b16 %v1496, %v1488
  %v1593 = vpack.c.b16 %v1497, %v1489
  %v1594 = vpack.c.b16 %v1498, %v1490
  %v1595 = vpack.c.b16 %v1499, %v1491
  %v1596 = vpack.c.b16 %v1500, %v1492
  %v1597 = vpack.c.b16 %v1501, %v1493
  %v1598 = vpack.c.b16 %v1502, %v1494
  %v1599 = vpack.c.b16 %v1511, %v1503
  %v1600 = vpack.c.b16 %v1512, %v1504
  %v1601 = vpack.c.b16 %v1513, %v1505
  %v1602 = vpack.c.b16 %v1514, %v1506
  %v1603 = vpack.c.b16 %v1515, %v1507
  %v1604 = vpack.c.b16 %v1516, %v1508
  %v1605 = vpack.c.b16 %v1517, %v1509
  %v1606 = vpack.c.b16 %v1518, %v1510
  %v1607 = vpack.c.b16 %v1527, %v1519
  %v1608 = vpack.c.b16 %v1528, %v1520
  %v1609 = vpack.c.b16 %v1529, %v1521
  %v1610 = vpack.c.b16 %v1530, %v1522
  %v1611 = vpack.c.b16 %v1531, %v1523
  %v1612 = vpack.c.b16 %v1532, %v1524
  %v1613 = vpack.c.b16 %v1533, %v1525
  %v1614 = vpack.c.b16 %v1534, %v1526
  %v1615 = vpack.c.b16 %v1543, %v1535
  %v1616 = vpack.c.b16 %v1544, %v1536
  %v1617 = vpack.c.b16 %v1545, %v1537
  %v1618 = vpack.c.b16 %v1546, %v1538
  %v1619 = vpack.c.b16 %v1547, %v1539
  %v1620 = vpack.c.b16 %v1548, %v1540
  %v1621 = vpack.c.b16 %v1549, %v1541
  %v1622 = vpack.c.b16 %v1550, %v1542
  %v1623 = vpack.c.b16 %v1559, %v1551
  %v1624 = vpack.c.b16 %v1560, %v1552
  %v1625 = vpack.c.b16 %v1561, %v1553
  %v1626 = vpack.c.b16 %v1562, %v1554
  %v1627 = vpack.c.b16 %v1563, %v1555
  %v1628 = vpack.c.b16 %v1564, %v1556
  %v1629 = vpack.c.b16 %v1565, %v1557
  %v1630 = vpack.c.b16 %v1566, %v1558
  %1695 = vmatpush.bf16.msra.mxu0 %v1623
  %1696 = vmatpush.bf16.msra.mxu0 %v1615
  %1697 = vmatpush.bf16.msra.mxu0 %v1607
  %1698 = vmatpush.bf16.msra.mxu0 %v1599
  %1699 = vmatpush.bf16.msra.mxu0 %v1591
  %1700 = vmatpush.bf16.msra.mxu0 %v1583
  %1701 = vmatpush.bf16.msra.mxu0 %v1575
  %1702 = vmatpush.bf16.msra.mxu0 %v1567
  %1703 = vmatmul.bf16.gmra.mxu0 %v1310
  %v1704 = vpop.f32.mrf.mxu0
  %v1705 = vadd.f32 0.0, %v1704
  %v1706 = vpop.f32.mrf.mxu0
  %1707 = vdwg.mxu0
  %1708 = vmatpush.bf16.msra.mxu0 %v1624
  %1709 = vmatpush.bf16.msra.mxu0 %v1616
  %1710 = vmatpush.bf16.msra.mxu0 %v1608
  %1711 = vmatpush.bf16.msra.mxu0 %v1600
  %1712 = vmatpush.bf16.msra.mxu0 %v1592
  %1713 = vmatpush.bf16.msra.mxu0 %v1584
  %1714 = vmatpush.bf16.msra.mxu0 %v1576
  %1715 = vmatpush.bf16.msra.mxu0 %v1568
  %1716 = vmatmul.bf16.gmra.mxu0 %v1310
  %v1717 = vpop.f32.mrf.mxu0
  %v1718 = vadd.f32 0.0, %v1717
  %v1719 = vpop.f32.mrf.mxu0
  %1720 = vdwg.mxu0
  %1721 = vmatpush.bf16.msra.mxu0 %v1625
  %1722 = vmatpush.bf16.msra.mxu0 %v1617
  %1723 = vmatpush.bf16.msra.mxu0 %v1609
  %1724 = vmatpush.bf16.msra.mxu0 %v1601
  %1725 = vmatpush.bf16.msra.mxu0 %v1593
  %1726 = vmatpush.bf16.msra.mxu0 %v1585
  %1727 = vmatpush.bf16.msra.mxu0 %v1577
  %1728 = vmatpush.bf16.msra.mxu0 %v1569
  %1729 = vmatmul.bf16.gmra.mxu0 %v1310
  %v1730 = vpop.f32.mrf.mxu0
  %v1731 = vadd.f32 0.0, %v1730
  %v1732 = vpop.f32.mrf.mxu0
  %1733 = vdwg.mxu0
  %1734 = vmatpush.bf16.msra.mxu0 %v1626
  %1735 = vmatpush.bf16.msra.mxu0 %v1618
  %1736 = vmatpush.bf16.msra.mxu0 %v1610
  %1737 = vmatpush.bf16.msra.mxu0 %v1602
  %1738 = vmatpush.bf16.msra.mxu0 %v1594
  %1739 = vmatpush.bf16.msra.mxu0 %v1586
  %1740 = vmatpush.bf16.msra.mxu0 %v1578
  %1741 = vmatpush.bf16.msra.mxu0 %v1570
  %1742 = vmatmul.bf16.gmra.mxu0 %v1310
  %v1743 = vpop.f32.mrf.mxu0
  %v1744 = vadd.f32 0.0, %v1743
  %v1745 = vpop.f32.mrf.mxu0
  %1746 = vdwg.mxu0
  %1747 = vmatpush.bf16.msra.mxu0 %v1627
  %1748 = vmatpush.bf16.msra.mxu0 %v1619
  %1749 = vmatpush.bf16.msra.mxu0 %v1611
  %1750 = vmatpush.bf16.msra.mxu0 %v1603
  %1751 = vmatpush.bf16.msra.mxu0 %v1595
  %1752 = vmatpush.bf16.msra.mxu0 %v1587
  %1753 = vmatpush.bf16.msra.mxu0 %v1579
  %1754 = vmatpush.bf16.msra.mxu0 %v1571
  %1755 = vmatmul.bf16.gmra.mxu0 %v1310
  %v1756 = vpop.f32.mrf.mxu0
  %v1757 = vpop.f32.mrf.mxu0
  %v1758 = vadd.f32 0.0, %v1757
  %1759 = vdwg.mxu0
  %1760 = vmatpush.bf16.msra.mxu0 %v1628
  %1761 = vmatpush.bf16.msra.mxu0 %v1620
  %1762 = vmatpush.bf16.msra.mxu0 %v1612
  %1763 = vmatpush.bf16.msra.mxu0 %v1604
  %1764 = vmatpush.bf16.msra.mxu0 %v1596
  %1765 = vmatpush.bf16.msra.mxu0 %v1588
  %1766 = vmatpush.bf16.msra.mxu0 %v1580
  %1767 = vmatpush.bf16.msra.mxu0 %v1572
  %1768 = vmatmul.bf16.gmra.mxu0 %v1310
  %v1769 = vpop.f32.mrf.mxu0
  %v1770 = vpop.f32.mrf.mxu0
  %v1771 = vadd.f32 0.0, %v1770
  %1772 = vdwg.mxu0
  %1773 = vmatpush.bf16.msra.mxu0 %v1629
  %1774 = vmatpush.bf16.msra.mxu0 %v1621
  %1775 = vmatpush.bf16.msra.mxu0 %v1613
  %1776 = vmatpush.bf16.msra.mxu0 %v1605
  %1777 = vmatpush.bf16.msra.mxu0 %v1597
  %1778 = vmatpush.bf16.msra.mxu0 %v1589
  %1779 = vmatpush.bf16.msra.mxu0 %v1581
  %1780 = vmatpush.bf16.msra.mxu0 %v1573
  %1781 = vmatmul.bf16.gmra.mxu0 %v1310
  %v1782 = vpop.f32.mrf.mxu0
  %v1783 = vpop.f32.mrf.mxu0
  %v1784 = vadd.f32 0.0, %v1783
  %1785 = vdwg.mxu0
  %1786 = vmatpush.bf16.msra.mxu0 %v1630
  %1787 = vmatpush.bf16.msra.mxu0 %v1622
  %1788 = vmatpush.bf16.msra.mxu0 %v1614
  %1789 = vmatpush.bf16.msra.mxu0 %v1606
  %1790 = vmatpush.bf16.msra.mxu0 %v1598
  %1791 = vmatpush.bf16.msra.mxu0 %v1590
  %1792 = vmatpush.bf16.msra.mxu0 %v1582
  %1793 = vmatpush.bf16.msra.mxu0 %v1574
  %1794 = vmatmul.bf16.gmra.mxu0 %v1310
  %v1795 = vpop.f32.mrf.mxu0
  %v1796 = vpop.f32.mrf.mxu0
  %v1797 = vadd.f32 0.0, %v1796
  %1798 = vdwg.mxu0
  %s1799 = scalar_lea.vmem %s0, 128
  %v1800 = vld [vmem:[%s1799] sm:$0xff]
  %v1801 = vld [vmem:[%s1799 + $0x8] sm:$0xff]
  %v1802 = vld [vmem:[%s1799 + $0x10] sm:$0xff]
  %v1803 = vld [vmem:[%s1799 + $0x18] sm:$0xff]
  %v1804 = vadd.f32 %v1800, %v1705
  %v1805 = vadd.f32 %v1801, %v1718
  %v1806 = vadd.f32 %v1802, %v1731
  %v1807 = vadd.f32 %v1803, %v1744
  %s1808 = scalar_lea.vmem %s0, 320
  %v1809 = vld [vmem:[%s1808 + $0x20] sm:$0xff]
  %v1810 = vld [vmem:[%s1808 + $0x28] sm:$0xff]
  %v1811 = vld [vmem:[%s1808 + $0x30] sm:$0xff]
  %v1812 = vld [vmem:[%s1808 + $0x38] sm:$0xff]
  %v1813 = vadd.f32 %v1809, %v1758
  %v1814 = vadd.f32 %v1810, %v1771
  %v1815 = vadd.f32 %v1811, %v1784
  %v1816 = vadd.f32 %v1812, %v1797
  %v1817 = vxor.u32 %v1804, 2147483648
  %v1818 = vxor.u32 %v1813, 2147483648
  %v1819 = vmul.f32 %v1817, 1.442695
  %v1820 = vpow.pop %v1819
  %v1821 = vmul.f32 %v1818, 1.442695
  %v1822 = vpow.pop %v1821
  %v1823 = vadd.f32 %v1820, 1.0
  %v1824 = vadd.f32 %v1822, 1.0
  %v1825 = vrcp.pop %v1823
  %v1826 = vmul.f32 %v1823, %v1825
  %v1827 = vsub.f32 1.0, %v1826
  %v1828 = vmul.f32 %v1825, %v1827
  %v1829 = vadd.f32 %v1825, %v1828
  %vm1830 = vweird.f32 %v1823
  %vm1831 = vweird.f32 %v1825
  %vm1832 = vmor %vm1830, %vm1831
  %v1833 = vsel %vm1832, %v1825, %v1829
  %v1834 = vand.u32 2147483647, %v1823
  %vm1835 = vcmp.eq.f32.partialorder %v1834, 8.507059e+37
  %v1836 = vand.u32 %v1823, 2147483648
  %v1837 = vor.u32 1.1754944e-38, %v1836
  %v1838 = vsel %vm1835, %v1837, %v1833
  %v1839 = vmul.f32 1.0, %v1838
  %v1840 = vrcp.pop %v1824
  %v1841 = vmul.f32 %v1824, %v1840
  %v1842 = vsub.f32 1.0, %v1841
  %v1843 = vmul.f32 %v1840, %v1842
  %v1844 = vadd.f32 %v1840, %v1843
  %vm1845 = vweird.f32 %v1824
  %vm1846 = vweird.f32 %v1840
  %vm1847 = vmor %vm1845, %vm1846
  %v1848 = vsel %vm1847, %v1840, %v1844
  %v1849 = vand.u32 2147483647, %v1824
  %vm1850 = vcmp.eq.f32.partialorder %v1849, 8.507059e+37
  %v1851 = vand.u32 %v1824, 2147483648
  %v1852 = vor.u32 1.1754944e-38, %v1851
  %v1853 = vsel %vm1850, %v1852, %v1848
  %v1854 = vmul.f32 1.0, %v1853
  %v1855 = vxor.u32 %v1805, 2147483648
  %v1856 = vxor.u32 %v1814, 2147483648
  %v1857 = vmul.f32 %v1855, 1.442695
  %v1858 = vpow.pop %v1857
  %v1859 = vmul.f32 %v1856, 1.442695
  %v1860 = vpow.pop %v1859
  %v1861 = vadd.f32 %v1858, 1.0
  %v1862 = vadd.f32 %v1860, 1.0
  %v1863 = vrcp.pop %v1861
  %v1864 = vmul.f32 %v1861, %v1863
  %v1865 = vsub.f32 1.0, %v1864
  %v1866 = vmul.f32 %v1863, %v1865
  %v1867 = vadd.f32 %v1863, %v1866
  %vm1868 = vweird.f32 %v1861
  %vm1869 = vweird.f32 %v1863
  %vm1870 = vmor %vm1868, %vm1869
  %v1871 = vsel %vm1870, %v1863, %v1867
  %v1872 = vand.u32 2147483647, %v1861
  %vm1873 = vcmp.eq.f32.partialorder %v1872, 8.507059e+37
  %v1874 = vand.u32 %v1861, 2147483648
  %v1875 = vor.u32 1.1754944e-38, %v1874
  %v1876 = vsel %vm1873, %v1875, %v1871
  %v1877 = vmul.f32 1.0, %v1876
  %v1878 = vrcp.pop %v1862
  %v1879 = vmul.f32 %v1862, %v1878
  %v1880 = vsub.f32 1.0, %v1879
  %v1881 = vmul.f32 %v1878, %v1880
  %v1882 = vadd.f32 %v1878, %v1881
  %vm1883 = vweird.f32 %v1862
  %vm1884 = vweird.f32 %v1878
  %vm1885 = vmor %vm1883, %vm1884
  %v1886 = vsel %vm1885, %v1878, %v1882
  %v1887 = vand.u32 2147483647, %v1862
  %vm1888 = vcmp.eq.f32.partialorder %v1887, 8.507059e+37
  %v1889 = vand.u32 %v1862, 2147483648
  %v1890 = vor.u32 1.1754944e-38, %v1889
  %v1891 = vsel %vm1888, %v1890, %v1886
  %v1892 = vmul.f32 1.0, %v1891
  %v1893 = vtanh.pop %v1806
  %v1894 = vtanh.pop %v1815
  %v1895 = vxor.u32 %v1807, 2147483648
  %v1896 = vxor.u32 %v1816, 2147483648
  %v1897 = vmul.f32 %v1895, 1.442695
  %v1898 = vpow.pop %v1897
  %v1899 = vmul.f32 %v1896, 1.442695
  %v1900 = vpow.pop %v1899
  %v1901 = vadd.f32 %v1898, 1.0
  %v1902 = vadd.f32 %v1900, 1.0
  %v1903 = vrcp.pop %v1901
  %v1904 = vmul.f32 %v1901, %v1903
  %v1905 = vsub.f32 1.0, %v1904
  %v1906 = vmul.f32 %v1903, %v1905
  %v1907 = vadd.f32 %v1903, %v1906
  %vm1908 = vweird.f32 %v1901
  %vm1909 = vweird.f32 %v1903
  %vm1910 = vmor %vm1908, %vm1909
  %v1911 = vsel %vm1910, %v1903, %v1907
  %v1912 = vand.u32 2147483647, %v1901
  %vm1913 = vcmp.eq.f32.partialorder %v1912, 8.507059e+37
  %v1914 = vand.u32 %v1901, 2147483648
  %v1915 = vor.u32 1.1754944e-38, %v1914
  %v1916 = vsel %vm1913, %v1915, %v1911
  %v1917 = vmul.f32 1.0, %v1916
  %v1918 = vrcp.pop %v1902
  %v1919 = vmul.f32 %v1902, %v1918
  %v1920 = vsub.f32 1.0, %v1919
  %v1921 = vmul.f32 %v1918, %v1920
  %v1922 = vadd.f32 %v1918, %v1921
  %vm1923 = vweird.f32 %v1902
  %vm1924 = vweird.f32 %v1918
  %vm1925 = vmor %vm1923, %vm1924
  %v1926 = vsel %vm1925, %v1918, %v1922
  %v1927 = vand.u32 2147483647, %v1902
  %vm1928 = vcmp.eq.f32.partialorder %v1927, 8.507059e+37
  %v1929 = vand.u32 %v1902, 2147483648
  %v1930 = vor.u32 1.1754944e-38, %v1929
  %v1931 = vsel %vm1928, %v1930, %v1926
  %v1932 = vmul.f32 1.0, %v1931
  %v1933 = vmul.f32 %v1877, %v1300
  %v1934 = vmul.f32 %v1892, %v1301
  %v1935 = vmul.f32 %v1839, %v1893
  %v1936 = vmul.f32 %v1854, %v1894
  %v1937 = vadd.f32 %v1933, %v1935
  %v1938 = vadd.f32 %v1934, %v1936
  %v1939 = vtanh.pop %v1937
  %v1940 = vtanh.pop %v1938
  %v1941 = vmul.f32 %v1917, %v1939
  %v1942 = vmul.f32 %v1932, %v1940
  %s1943 = scalar_lea.vmem [#allocation2], 32
  %1944 = vst [vmem:[%s1943] sm:$0xff] %v1941
  %s1945 = scalar_lea.vmem [#allocation2], 80
  %1946 = vst [vmem:[%s1945 + $0x8] sm:$0xff] %v1942
  %v1947 = vpack.c.bf16 %v1942, %v1941
  %v1948 = vld [vmem:[%s2] sm:$0xff]
  %v1949 = vld [vmem:[%s2 + $0x8] sm:$0xff]
  %v1950 = vld [vmem:[%s2 + $0x10] sm:$0xff]
  %v1951 = vld [vmem:[%s2 + $0x18] sm:$0xff]
  %v1952 = vld [vmem:[%s2 + $0x20] sm:$0xff]
  %v1953 = vld [vmem:[%s2 + $0x28] sm:$0xff]
  %v1954 = vld [vmem:[%s2 + $0x30] sm:$0xff]
  %v1955 = vld [vmem:[%s2 + $0x38] sm:$0xff]
  %v1956 = vld [vmem:[%s2 + $0x40] sm:$0xff]
  %v1957 = vld [vmem:[%s2 + $0x48] sm:$0xff]
  %v1958 = vld [vmem:[%s2 + $0x50] sm:$0xff]
  %v1959 = vld [vmem:[%s2 + $0x58] sm:$0xff]
  %v1960 = vld [vmem:[%s2 + $0x60] sm:$0xff]
  %v1961 = vld [vmem:[%s2 + $0x68] sm:$0xff]
  %v1962 = vld [vmem:[%s2 + $0x70] sm:$0xff]
  %v1963 = vld [vmem:[%s2 + $0x78] sm:$0xff]
  %v1964 = vld [vmem:[%s2 + $0x80] sm:$0xff]
  %v1965 = vld [vmem:[%s2 + $0x88] sm:$0xff]
  %v1966 = vld [vmem:[%s2 + $0x90] sm:$0xff]
  %v1967 = vld [vmem:[%s2 + $0x98] sm:$0xff]
  %v1968 = vld [vmem:[%s2 + $0xa0] sm:$0xff]
  %v1969 = vld [vmem:[%s2 + $0xa8] sm:$0xff]
  %v1970 = vld [vmem:[%s2 + $0xb0] sm:$0xff]
  %v1971 = vld [vmem:[%s2 + $0xb8] sm:$0xff]
  %v1972 = vld [vmem:[%s2 + $0xc0] sm:$0xff]
  %v1973 = vld [vmem:[%s2 + $0xc8] sm:$0xff]
  %v1974 = vld [vmem:[%s2 + $0xd0] sm:$0xff]
  %v1975 = vld [vmem:[%s2 + $0xd8] sm:$0xff]
  %v1976 = vld [vmem:[%s2 + $0xe0] sm:$0xff]
  %v1977 = vld [vmem:[%s2 + $0xe8] sm:$0xff]
  %v1978 = vld [vmem:[%s2 + $0xf0] sm:$0xff]
  %v1979 = vld [vmem:[%s2 + $0xf8] sm:$0xff]
  %v1980 = vld [vmem:[%s2 + $0x100] sm:$0xff]
  %v1981 = vld [vmem:[%s2 + $0x108] sm:$0xff]
  %v1982 = vld [vmem:[%s2 + $0x110] sm:$0xff]
  %v1983 = vld [vmem:[%s2 + $0x118] sm:$0xff]
  %v1984 = vld [vmem:[%s2 + $0x120] sm:$0xff]
  %v1985 = vld [vmem:[%s2 + $0x128] sm:$0xff]
  %v1986 = vld [vmem:[%s2 + $0x130] sm:$0xff]
  %v1987 = vld [vmem:[%s2 + $0x138] sm:$0xff]
  %v1988 = vld [vmem:[%s2 + $0x140] sm:$0xff]
  %v1989 = vld [vmem:[%s2 + $0x148] sm:$0xff]
  %v1990 = vld [vmem:[%s2 + $0x150] sm:$0xff]
  %v1991 = vld [vmem:[%s2 + $0x158] sm:$0xff]
  %v1992 = vld [vmem:[%s2 + $0x160] sm:$0xff]
  %v1993 = vld [vmem:[%s2 + $0x168] sm:$0xff]
  %v1994 = vld [vmem:[%s2 + $0x170] sm:$0xff]
  %v1995 = vld [vmem:[%s2 + $0x178] sm:$0xff]
  %v1996 = vld [vmem:[%s2 + $0x180] sm:$0xff]
  %v1997 = vld [vmem:[%s2 + $0x188] sm:$0xff]
  %v1998 = vld [vmem:[%s2 + $0x190] sm:$0xff]
  %v1999 = vld [vmem:[%s2 + $0x198] sm:$0xff]
  %v2000 = vld [vmem:[%s2 + $0x1a0] sm:$0xff]
  %v2001 = vld [vmem:[%s2 + $0x1a8] sm:$0xff]
  %v2002 = vld [vmem:[%s2 + $0x1b0] sm:$0xff]
  %v2003 = vld [vmem:[%s2 + $0x1b8] sm:$0xff]
  %v2004 = vld [vmem:[%s2 + $0x1c0] sm:$0xff]
  %v2005 = vld [vmem:[%s2 + $0x1c8] sm:$0xff]
  %v2006 = vld [vmem:[%s2 + $0x1d0] sm:$0xff]
  %v2007 = vld [vmem:[%s2 + $0x1d8] sm:$0xff]
  %v2008 = vld [vmem:[%s2 + $0x1e0] sm:$0xff]
  %v2009 = vld [vmem:[%s2 + $0x1e8] sm:$0xff]
  %v2010 = vld [vmem:[%s2 + $0x1f0] sm:$0xff]
  %v2011 = vld [vmem:[%s2 + $0x1f8] sm:$0xff]
  %v2076 = vunpack.c.l.b16 %v1948
  %v2077 = vunpack.c.h.b16 %v1948
  %v2078 = vunpack.c.l.b16 %v1949
  %v2079 = vunpack.c.h.b16 %v1949
  %v2080 = vunpack.c.l.b16 %v1950
  %v2081 = vunpack.c.h.b16 %v1950
  %v2082 = vunpack.c.l.b16 %v1951
  %v2083 = vunpack.c.h.b16 %v1951
  %v2084 = vunpack.c.l.b16 %v1952
  %v2085 = vunpack.c.h.b16 %v1952
  %v2086 = vunpack.c.l.b16 %v1953
  %v2087 = vunpack.c.h.b16 %v1953
  %v2088 = vunpack.c.l.b16 %v1954
  %v2089 = vunpack.c.h.b16 %v1954
  %v2090 = vunpack.c.l.b16 %v1955
  %v2091 = vunpack.c.h.b16 %v1955
  %v2092 = vunpack.c.l.b16 %v1956
  %v2093 = vunpack.c.h.b16 %v1956
  %v2094 = vunpack.c.l.b16 %v1957
  %v2095 = vunpack.c.h.b16 %v1957
  %v2096 = vunpack.c.l.b16 %v1958
  %v2097 = vunpack.c.h.b16 %v1958
  %v2098 = vunpack.c.l.b16 %v1959
  %v2099 = vunpack.c.h.b16 %v1959
  %v2100 = vunpack.c.l.b16 %v1960
  %v2101 = vunpack.c.h.b16 %v1960
  %v2102 = vunpack.c.l.b16 %v1961
  %v2103 = vunpack.c.h.b16 %v1961
  %v2104 = vunpack.c.l.b16 %v1962
  %v2105 = vunpack.c.h.b16 %v1962
  %v2106 = vunpack.c.l.b16 %v1963
  %v2107 = vunpack.c.h.b16 %v1963
  %v2108 = vunpack.c.l.b16 %v1964
  %v2109 = vunpack.c.h.b16 %v1964
  %v2110 = vunpack.c.l.b16 %v1965
  %v2111 = vunpack.c.h.b16 %v1965
  %v2112 = vunpack.c.l.b16 %v1966
  %v2113 = vunpack.c.h.b16 %v1966
  %v2114 = vunpack.c.l.b16 %v1967
  %v2115 = vunpack.c.h.b16 %v1967
  %v2116 = vunpack.c.l.b16 %v1968
  %v2117 = vunpack.c.h.b16 %v1968
  %v2118 = vunpack.c.l.b16 %v1969
  %v2119 = vunpack.c.h.b16 %v1969
  %v2120 = vunpack.c.l.b16 %v1970
  %v2121 = vunpack.c.h.b16 %v1970
  %v2122 = vunpack.c.l.b16 %v1971
  %v2123 = vunpack.c.h.b16 %v1971
  %v2124 = vunpack.c.l.b16 %v1972
  %v2125 = vunpack.c.h.b16 %v1972
  %v2126 = vunpack.c.l.b16 %v1973
  %v2127 = vunpack.c.h.b16 %v1973
  %v2128 = vunpack.c.l.b16 %v1974
  %v2129 = vunpack.c.h.b16 %v1974
  %v2130 = vunpack.c.l.b16 %v1975
  %v2131 = vunpack.c.h.b16 %v1975
  %v2132 = vunpack.c.l.b16 %v1976
  %v2133 = vunpack.c.h.b16 %v1976
  %v2134 = vunpack.c.l.b16 %v1977
  %v2135 = vunpack.c.h.b16 %v1977
  %v2136 = vunpack.c.l.b16 %v1978
  %v2137 = vunpack.c.h.b16 %v1978
  %v2138 = vunpack.c.l.b16 %v1979
  %v2139 = vunpack.c.h.b16 %v1979
  %v2140 = vunpack.c.l.b16 %v1980
  %v2141 = vunpack.c.h.b16 %v1980
  %v2142 = vunpack.c.l.b16 %v1981
  %v2143 = vunpack.c.h.b16 %v1981
  %v2144 = vunpack.c.l.b16 %v1982
  %v2145 = vunpack.c.h.b16 %v1982
  %v2146 = vunpack.c.l.b16 %v1983
  %v2147 = vunpack.c.h.b16 %v1983
  %v2148 = vunpack.c.l.b16 %v1984
  %v2149 = vunpack.c.h.b16 %v1984
  %v2150 = vunpack.c.l.b16 %v1985
  %v2151 = vunpack.c.h.b16 %v1985
  %v2152 = vunpack.c.l.b16 %v1986
  %v2153 = vunpack.c.h.b16 %v1986
  %v2154 = vunpack.c.l.b16 %v1987
  %v2155 = vunpack.c.h.b16 %v1987
  %v2156 = vunpack.c.l.b16 %v1988
  %v2157 = vunpack.c.h.b16 %v1988
  %v2158 = vunpack.c.l.b16 %v1989
  %v2159 = vunpack.c.h.b16 %v1989
  %v2160 = vunpack.c.l.b16 %v1990
  %v2161 = vunpack.c.h.b16 %v1990
  %v2162 = vunpack.c.l.b16 %v1991
  %v2163 = vunpack.c.h.b16 %v1991
  %v2164 = vunpack.c.l.b16 %v1992
  %v2165 = vunpack.c.h.b16 %v1992
  %v2166 = vunpack.c.l.b16 %v1993
  %v2167 = vunpack.c.h.b16 %v1993
  %v2168 = vunpack.c.l.b16 %v1994
  %v2169 = vunpack.c.h.b16 %v1994
  %v2170 = vunpack.c.l.b16 %v1995
  %v2171 = vunpack.c.h.b16 %v1995
  %v2172 = vunpack.c.l.b16 %v1996
  %v2173 = vunpack.c.h.b16 %v1996
  %v2174 = vunpack.c.l.b16 %v1997
  %v2175 = vunpack.c.h.b16 %v1997
  %v2176 = vunpack.c.l.b16 %v1998
  %v2177 = vunpack.c.h.b16 %v1998
  %v2178 = vunpack.c.l.b16 %v1999
  %v2179 = vunpack.c.h.b16 %v1999
  %v2180 = vunpack.c.l.b16 %v2000
  %v2181 = vunpack.c.h.b16 %v2000
  %v2182 = vunpack.c.l.b16 %v2001
  %v2183 = vunpack.c.h.b16 %v2001
  %v2184 = vunpack.c.l.b16 %v2002
  %v2185 = vunpack.c.h.b16 %v2002
  %v2186 = vunpack.c.l.b16 %v2003
  %v2187 = vunpack.c.h.b16 %v2003
  %v2188 = vunpack.c.l.b16 %v2004
  %v2189 = vunpack.c.h.b16 %v2004
  %v2190 = vunpack.c.l.b16 %v2005
  %v2191 = vunpack.c.h.b16 %v2005
  %v2192 = vunpack.c.l.b16 %v2006
  %v2193 = vunpack.c.h.b16 %v2006
  %v2194 = vunpack.c.l.b16 %v2007
  %v2195 = vunpack.c.h.b16 %v2007
  %v2196 = vunpack.c.l.b16 %v2008
  %v2197 = vunpack.c.h.b16 %v2008
  %v2198 = vunpack.c.l.b16 %v2009
  %v2199 = vunpack.c.h.b16 %v2009
  %v2200 = vunpack.c.l.b16 %v2010
  %v2201 = vunpack.c.h.b16 %v2010
  %v2202 = vunpack.c.l.b16 %v2011
  %v2203 = vunpack.c.h.b16 %v2011
  %v2204 = vpack.c.b16 %v2084, %v2076
  %v2205 = vpack.c.b16 %v2085, %v2077
  %v2206 = vpack.c.b16 %v2086, %v2078
  %v2207 = vpack.c.b16 %v2087, %v2079
  %v2208 = vpack.c.b16 %v2088, %v2080
  %v2209 = vpack.c.b16 %v2089, %v2081
  %v2210 = vpack.c.b16 %v2090, %v2082
  %v2211 = vpack.c.b16 %v2091, %v2083
  %v2212 = vpack.c.b16 %v2100, %v2092
  %v2213 = vpack.c.b16 %v2101, %v2093
  %v2214 = vpack.c.b16 %v2102, %v2094
  %v2215 = vpack.c.b16 %v2103, %v2095
  %v2216 = vpack.c.b16 %v2104, %v2096
  %v2217 = vpack.c.b16 %v2105, %v2097
  %v2218 = vpack.c.b16 %v2106, %v2098
  %v2219 = vpack.c.b16 %v2107, %v2099
  %v2220 = vpack.c.b16 %v2116, %v2108
  %v2221 = vpack.c.b16 %v2117, %v2109
  %v2222 = vpack.c.b16 %v2118, %v2110
  %v2223 = vpack.c.b16 %v2119, %v2111
  %v2224 = vpack.c.b16 %v2120, %v2112
  %v2225 = vpack.c.b16 %v2121, %v2113
  %v2226 = vpack.c.b16 %v2122, %v2114
  %v2227 = vpack.c.b16 %v2123, %v2115
  %v2228 = vpack.c.b16 %v2132, %v2124
  %v2229 = vpack.c.b16 %v2133, %v2125
  %v2230 = vpack.c.b16 %v2134, %v2126
  %v2231 = vpack.c.b16 %v2135, %v2127
  %v2232 = vpack.c.b16 %v2136, %v2128
  %v2233 = vpack.c.b16 %v2137, %v2129
  %v2234 = vpack.c.b16 %v2138, %v2130
  %v2235 = vpack.c.b16 %v2139, %v2131
  %v2236 = vpack.c.b16 %v2148, %v2140
  %v2237 = vpack.c.b16 %v2149, %v2141
  %v2238 = vpack.c.b16 %v2150, %v2142
  %v2239 = vpack.c.b16 %v2151, %v2143
  %v2240 = vpack.c.b16 %v2152, %v2144
  %v2241 = vpack.c.b16 %v2153, %v2145
  %v2242 = vpack.c.b16 %v2154, %v2146
  %v2243 = vpack.c.b16 %v2155, %v2147
  %v2244 = vpack.c.b16 %v2164, %v2156
  %v2245 = vpack.c.b16 %v2165, %v2157
  %v2246 = vpack.c.b16 %v2166, %v2158
  %v2247 = vpack.c.b16 %v2167, %v2159
  %v2248 = vpack.c.b16 %v2168, %v2160
  %v2249 = vpack.c.b16 %v2169, %v2161
  %v2250 = vpack.c.b16 %v2170, %v2162
  %v2251 = vpack.c.b16 %v2171, %v2163
  %v2252 = vpack.c.b16 %v2180, %v2172
  %v2253 = vpack.c.b16 %v2181, %v2173
  %v2254 = vpack.c.b16 %v2182, %v2174
  %v2255 = vpack.c.b16 %v2183, %v2175
  %v2256 = vpack.c.b16 %v2184, %v2176
  %v2257 = vpack.c.b16 %v2185, %v2177
  %v2258 = vpack.c.b16 %v2186, %v2178
  %v2259 = vpack.c.b16 %v2187, %v2179
  %v2260 = vpack.c.b16 %v2196, %v2188
  %v2261 = vpack.c.b16 %v2197, %v2189
  %v2262 = vpack.c.b16 %v2198, %v2190
  %v2263 = vpack.c.b16 %v2199, %v2191
  %v2264 = vpack.c.b16 %v2200, %v2192
  %v2265 = vpack.c.b16 %v2201, %v2193
  %v2266 = vpack.c.b16 %v2202, %v2194
  %v2267 = vpack.c.b16 %v2203, %v2195
  %2332 = vmatpush.bf16.msra.mxu0 %v2260
  %2333 = vmatpush.bf16.msra.mxu0 %v2252
  %2334 = vmatpush.bf16.msra.mxu0 %v2244
  %2335 = vmatpush.bf16.msra.mxu0 %v2236
  %2336 = vmatpush.bf16.msra.mxu0 %v2228
  %2337 = vmatpush.bf16.msra.mxu0 %v2220
  %2338 = vmatpush.bf16.msra.mxu0 %v2212
  %2339 = vmatpush.bf16.msra.mxu0 %v2204
  %2340 = vmatmul.bf16.gmra.mxu0 %v1947
  %v2341 = vpop.f32.mrf.mxu0
  %v2342 = vadd.f32 0.0, %v2341
  %v2343 = vpop.f32.mrf.mxu0
  %2344 = vdwg.mxu0
  %2345 = vmatpush.bf16.msra.mxu0 %v2261
  %2346 = vmatpush.bf16.msra.mxu0 %v2253
  %2347 = vmatpush.bf16.msra.mxu0 %v2245
  %2348 = vmatpush.bf16.msra.mxu0 %v2237
  %2349 = vmatpush.bf16.msra.mxu0 %v2229
  %2350 = vmatpush.bf16.msra.mxu0 %v2221
  %2351 = vmatpush.bf16.msra.mxu0 %v2213
  %2352 = vmatpush.bf16.msra.mxu0 %v2205
  %2353 = vmatmul.bf16.gmra.mxu0 %v1947
  %v2354 = vpop.f32.mrf.mxu0
  %v2355 = vadd.f32 0.0, %v2354
  %v2356 = vpop.f32.mrf.mxu0
  %2357 = vdwg.mxu0
  %2358 = vmatpush.bf16.msra.mxu0 %v2262
  %2359 = vmatpush.bf16.msra.mxu0 %v2254
  %2360 = vmatpush.bf16.msra.mxu0 %v2246
  %2361 = vmatpush.bf16.msra.mxu0 %v2238
  %2362 = vmatpush.bf16.msra.mxu0 %v2230
  %2363 = vmatpush.bf16.msra.mxu0 %v2222
  %2364 = vmatpush.bf16.msra.mxu0 %v2214
  %2365 = vmatpush.bf16.msra.mxu0 %v2206
  %2366 = vmatmul.bf16.gmra.mxu0 %v1947
  %v2367 = vpop.f32.mrf.mxu0
  %v2368 = vadd.f32 0.0, %v2367
  %v2369 = vpop.f32.mrf.mxu0
  %2370 = vdwg.mxu0
  %2371 = vmatpush.bf16.msra.mxu0 %v2263
  %2372 = vmatpush.bf16.msra.mxu0 %v2255
  %2373 = vmatpush.bf16.msra.mxu0 %v2247
  %2374 = vmatpush.bf16.msra.mxu0 %v2239
  %2375 = vmatpush.bf16.msra.mxu0 %v2231
  %2376 = vmatpush.bf16.msra.mxu0 %v2223
  %2377 = vmatpush.bf16.msra.mxu0 %v2215
  %2378 = vmatpush.bf16.msra.mxu0 %v2207
  %2379 = vmatmul.bf16.gmra.mxu0 %v1947
  %v2380 = vpop.f32.mrf.mxu0
  %v2381 = vadd.f32 0.0, %v2380
  %v2382 = vpop.f32.mrf.mxu0
  %2383 = vdwg.mxu0
  %2384 = vmatpush.bf16.msra.mxu0 %v2264
  %2385 = vmatpush.bf16.msra.mxu0 %v2256
  %2386 = vmatpush.bf16.msra.mxu0 %v2248
  %2387 = vmatpush.bf16.msra.mxu0 %v2240
  %2388 = vmatpush.bf16.msra.mxu0 %v2232
  %2389 = vmatpush.bf16.msra.mxu0 %v2224
  %2390 = vmatpush.bf16.msra.mxu0 %v2216
  %2391 = vmatpush.bf16.msra.mxu0 %v2208
  %2392 = vmatmul.bf16.gmra.mxu0 %v1947
  %v2393 = vpop.f32.mrf.mxu0
  %v2394 = vpop.f32.mrf.mxu0
  %v2395 = vadd.f32 0.0, %v2394
  %2396 = vdwg.mxu0
  %2397 = vmatpush.bf16.msra.mxu0 %v2265
  %2398 = vmatpush.bf16.msra.mxu0 %v2257
  %2399 = vmatpush.bf16.msra.mxu0 %v2249
  %2400 = vmatpush.bf16.msra.mxu0 %v2241
  %2401 = vmatpush.bf16.msra.mxu0 %v2233
  %2402 = vmatpush.bf16.msra.mxu0 %v2225
  %2403 = vmatpush.bf16.msra.mxu0 %v2217
  %2404 = vmatpush.bf16.msra.mxu0 %v2209
  %2405 = vmatmul.bf16.gmra.mxu0 %v1947
  %v2406 = vpop.f32.mrf.mxu0
  %v2407 = vpop.f32.mrf.mxu0
  %v2408 = vadd.f32 0.0, %v2407
  %2409 = vdwg.mxu0
  %2410 = vmatpush.bf16.msra.mxu0 %v2266
  %2411 = vmatpush.bf16.msra.mxu0 %v2258
  %2412 = vmatpush.bf16.msra.mxu0 %v2250
  %2413 = vmatpush.bf16.msra.mxu0 %v2242
  %2414 = vmatpush.bf16.msra.mxu0 %v2234
  %2415 = vmatpush.bf16.msra.mxu0 %v2226
  %2416 = vmatpush.bf16.msra.mxu0 %v2218
  %2417 = vmatpush.bf16.msra.mxu0 %v2210
  %2418 = vmatmul.bf16.gmra.mxu0 %v1947
  %v2419 = vpop.f32.mrf.mxu0
  %v2420 = vpop.f32.mrf.mxu0
  %v2421 = vadd.f32 0.0, %v2420
  %2422 = vdwg.mxu0
  %2423 = vmatpush.bf16.msra.mxu0 %v2267
  %2424 = vmatpush.bf16.msra.mxu0 %v2259
  %2425 = vmatpush.bf16.msra.mxu0 %v2251
  %2426 = vmatpush.bf16.msra.mxu0 %v2243
  %2427 = vmatpush.bf16.msra.mxu0 %v2235
  %2428 = vmatpush.bf16.msra.mxu0 %v2227
  %2429 = vmatpush.bf16.msra.mxu0 %v2219
  %2430 = vmatpush.bf16.msra.mxu0 %v2211
  %2431 = vmatmul.bf16.gmra.mxu0 %v1947
  %v2432 = vpop.f32.mrf.mxu0
  %v2433 = vpop.f32.mrf.mxu0
  %v2434 = vadd.f32 0.0, %v2433
  %2435 = vdwg.mxu0
  %s2436 = scalar_lea.vmem %s0, 192
  %v2437 = vld [vmem:[%s2436] sm:$0xff]
  %v2438 = vld [vmem:[%s2436 + $0x8] sm:$0xff]
  %v2439 = vld [vmem:[%s2436 + $0x10] sm:$0xff]
  %v2440 = vld [vmem:[%s2436 + $0x18] sm:$0xff]
  %v2441 = vadd.f32 %v2437, %v2342
  %v2442 = vadd.f32 %v2438, %v2355
  %v2443 = vadd.f32 %v2439, %v2368
  %v2444 = vadd.f32 %v2440, %v2381
  %s2445 = scalar_lea.vmem %s0, 256
  %v2446 = vld [vmem:[%s2445 + $0x20] sm:$0xff]
  %v2447 = vld [vmem:[%s2445 + $0x28] sm:$0xff]
  %v2448 = vld [vmem:[%s2445 + $0x30] sm:$0xff]
  %v2449 = vld [vmem:[%s2445 + $0x38] sm:$0xff]
  %v2450 = vadd.f32 %v2446, %v2395
  %v2451 = vadd.f32 %v2447, %v2408
  %v2452 = vadd.f32 %v2448, %v2421
  %v2453 = vadd.f32 %v2449, %v2434
  %v2454 = vxor.u32 %v2441, 2147483648
  %v2455 = vxor.u32 %v2450, 2147483648
  %v2456 = vmul.f32 %v2454, 1.442695
  %v2457 = vpow.pop %v2456
  %v2458 = vmul.f32 %v2455, 1.442695
  %v2459 = vpow.pop %v2458
  %v2460 = vadd.f32 %v2457, 1.0
  %v2461 = vadd.f32 %v2459, 1.0
  %v2462 = vrcp.pop %v2460
  %v2463 = vmul.f32 %v2460, %v2462
  %v2464 = vsub.f32 1.0, %v2463
  %v2465 = vmul.f32 %v2462, %v2464
  %v2466 = vadd.f32 %v2462, %v2465
  %vm2467 = vweird.f32 %v2460
  %vm2468 = vweird.f32 %v2462
  %vm2469 = vmor %vm2467, %vm2468
  %v2470 = vsel %vm2469, %v2462, %v2466
  %v2471 = vand.u32 2147483647, %v2460
  %vm2472 = vcmp.eq.f32.partialorder %v2471, 8.507059e+37
  %v2473 = vand.u32 %v2460, 2147483648
  %v2474 = vor.u32 1.1754944e-38, %v2473
  %v2475 = vsel %vm2472, %v2474, %v2470
  %v2476 = vmul.f32 1.0, %v2475
  %v2477 = vrcp.pop %v2461
  %v2478 = vmul.f32 %v2461, %v2477
  %v2479 = vsub.f32 1.0, %v2478
  %v2480 = vmul.f32 %v2477, %v2479
  %v2481 = vadd.f32 %v2477, %v2480
  %vm2482 = vweird.f32 %v2461
  %vm2483 = vweird.f32 %v2477
  %vm2484 = vmor %vm2482, %vm2483
  %v2485 = vsel %vm2484, %v2477, %v2481
  %v2486 = vand.u32 2147483647, %v2461
  %vm2487 = vcmp.eq.f32.partialorder %v2486, 8.507059e+37
  %v2488 = vand.u32 %v2461, 2147483648
  %v2489 = vor.u32 1.1754944e-38, %v2488
  %v2490 = vsel %vm2487, %v2489, %v2485
  %v2491 = vmul.f32 1.0, %v2490
  %v2492 = vxor.u32 %v2442, 2147483648
  %v2493 = vxor.u32 %v2451, 2147483648
  %v2494 = vmul.f32 %v2492, 1.442695
  %v2495 = vpow.pop %v2494
  %v2496 = vmul.f32 %v2493, 1.442695
  %v2497 = vpow.pop %v2496
  %v2498 = vadd.f32 %v2495, 1.0
  %v2499 = vadd.f32 %v2497, 1.0
  %v2500 = vrcp.pop %v2498
  %v2501 = vmul.f32 %v2498, %v2500
  %v2502 = vsub.f32 1.0, %v2501
  %v2503 = vmul.f32 %v2500, %v2502
  %v2504 = vadd.f32 %v2500, %v2503
  %vm2505 = vweird.f32 %v2498
  %vm2506 = vweird.f32 %v2500
  %vm2507 = vmor %vm2505, %vm2506
  %v2508 = vsel %vm2507, %v2500, %v2504
  %v2509 = vand.u32 2147483647, %v2498
  %vm2510 = vcmp.eq.f32.partialorder %v2509, 8.507059e+37
  %v2511 = vand.u32 %v2498, 2147483648
  %v2512 = vor.u32 1.1754944e-38, %v2511
  %v2513 = vsel %vm2510, %v2512, %v2508
  %v2514 = vmul.f32 1.0, %v2513
  %v2515 = vrcp.pop %v2499
  %v2516 = vmul.f32 %v2499, %v2515
  %v2517 = vsub.f32 1.0, %v2516
  %v2518 = vmul.f32 %v2515, %v2517
  %v2519 = vadd.f32 %v2515, %v2518
  %vm2520 = vweird.f32 %v2499
  %vm2521 = vweird.f32 %v2515
  %vm2522 = vmor %vm2520, %vm2521
  %v2523 = vsel %vm2522, %v2515, %v2519
  %v2524 = vand.u32 2147483647, %v2499
  %vm2525 = vcmp.eq.f32.partialorder %v2524, 8.507059e+37
  %v2526 = vand.u32 %v2499, 2147483648
  %v2527 = vor.u32 1.1754944e-38, %v2526
  %v2528 = vsel %vm2525, %v2527, %v2523
  %v2529 = vmul.f32 1.0, %v2528
  %v2530 = vtanh.pop %v2443
  %v2531 = vtanh.pop %v2452
  %v2532 = vxor.u32 %v2444, 2147483648
  %v2533 = vxor.u32 %v2453, 2147483648
  %v2534 = vmul.f32 %v2532, 1.442695
  %v2535 = vpow.pop %v2534
  %v2536 = vmul.f32 %v2533, 1.442695
  %v2537 = vpow.pop %v2536
  %v2538 = vadd.f32 %v2535, 1.0
  %v2539 = vadd.f32 %v2537, 1.0
  %v2540 = vrcp.pop %v2538
  %v2541 = vmul.f32 %v2538, %v2540
  %v2542 = vsub.f32 1.0, %v2541
  %v2543 = vmul.f32 %v2540, %v2542
  %v2544 = vadd.f32 %v2540, %v2543
  %vm2545 = vweird.f32 %v2538
  %vm2546 = vweird.f32 %v2540
  %vm2547 = vmor %vm2545, %vm2546
  %v2548 = vsel %vm2547, %v2540, %v2544
  %v2549 = vand.u32 2147483647, %v2538
  %vm2550 = vcmp.eq.f32.partialorder %v2549, 8.507059e+37
  %v2551 = vand.u32 %v2538, 2147483648
  %v2552 = vor.u32 1.1754944e-38, %v2551
  %v2553 = vsel %vm2550, %v2552, %v2548
  %v2554 = vmul.f32 1.0, %v2553
  %v2555 = vrcp.pop %v2539
  %v2556 = vmul.f32 %v2539, %v2555
  %v2557 = vsub.f32 1.0, %v2556
  %v2558 = vmul.f32 %v2555, %v2557
  %v2559 = vadd.f32 %v2555, %v2558
  %vm2560 = vweird.f32 %v2539
  %vm2561 = vweird.f32 %v2555
  %vm2562 = vmor %vm2560, %vm2561
  %v2563 = vsel %vm2562, %v2555, %v2559
  %v2564 = vand.u32 2147483647, %v2539
  %vm2565 = vcmp.eq.f32.partialorder %v2564, 8.507059e+37
  %v2566 = vand.u32 %v2539, 2147483648
  %v2567 = vor.u32 1.1754944e-38, %v2566
  %v2568 = vsel %vm2565, %v2567, %v2563
  %v2569 = vmul.f32 1.0, %v2568
  %v2570 = vmul.f32 %v2514, %v1937
  %v2571 = vmul.f32 %v2529, %v1938
  %v2572 = vmul.f32 %v2476, %v2530
  %v2573 = vmul.f32 %v2491, %v2531
  %v2574 = vadd.f32 %v2570, %v2572
  %v2575 = vadd.f32 %v2571, %v2573
  %v2576 = vtanh.pop %v2574
  %v2577 = vtanh.pop %v2575
  %v2578 = vmul.f32 %v2554, %v2576
  %v2579 = vmul.f32 %v2569, %v2577
  %s2580 = scalar_lea.vmem [#allocation2], 48
  %2581 = vst [vmem:[%s2580] sm:$0xff] %v2578
  %s2582 = scalar_lea.vmem [#allocation2], 64
  %2583 = vst [vmem:[%s2582 + $0x8] sm:$0xff] %v2579
  %v2584 = vpack.c.bf16 %v2579, %v2578
  %v2585 = vld [vmem:[%s2] sm:$0xff]
  %v2586 = vld [vmem:[%s2 + $0x8] sm:$0xff]
  %v2587 = vld [vmem:[%s2 + $0x10] sm:$0xff]
  %v2588 = vld [vmem:[%s2 + $0x18] sm:$0xff]
  %v2589 = vld [vmem:[%s2 + $0x20] sm:$0xff]
  %v2590 = vld [vmem:[%s2 + $0x28] sm:$0xff]
  %v2591 = vld [vmem:[%s2 + $0x30] sm:$0xff]
  %v2592 = vld [vmem:[%s2 + $0x38] sm:$0xff]
  %v2593 = vld [vmem:[%s2 + $0x40] sm:$0xff]
  %v2594 = vld [vmem:[%s2 + $0x48] sm:$0xff]
  %v2595 = vld [vmem:[%s2 + $0x50] sm:$0xff]
  %v2596 = vld [vmem:[%s2 + $0x58] sm:$0xff]
  %v2597 = vld [vmem:[%s2 + $0x60] sm:$0xff]
  %v2598 = vld [vmem:[%s2 + $0x68] sm:$0xff]
  %v2599 = vld [vmem:[%s2 + $0x70] sm:$0xff]
  %v2600 = vld [vmem:[%s2 + $0x78] sm:$0xff]
  %v2601 = vld [vmem:[%s2 + $0x80] sm:$0xff]
  %v2602 = vld [vmem:[%s2 + $0x88] sm:$0xff]
  %v2603 = vld [vmem:[%s2 + $0x90] sm:$0xff]
  %v2604 = vld [vmem:[%s2 + $0x98] sm:$0xff]
  %v2605 = vld [vmem:[%s2 + $0xa0] sm:$0xff]
  %v2606 = vld [vmem:[%s2 + $0xa8] sm:$0xff]
  %v2607 = vld [vmem:[%s2 + $0xb0] sm:$0xff]
  %v2608 = vld [vmem:[%s2 + $0xb8] sm:$0xff]
  %v2609 = vld [vmem:[%s2 + $0xc0] sm:$0xff]
  %v2610 = vld [vmem:[%s2 + $0xc8] sm:$0xff]
  %v2611 = vld [vmem:[%s2 + $0xd0] sm:$0xff]
  %v2612 = vld [vmem:[%s2 + $0xd8] sm:$0xff]
  %v2613 = vld [vmem:[%s2 + $0xe0] sm:$0xff]
  %v2614 = vld [vmem:[%s2 + $0xe8] sm:$0xff]
  %v2615 = vld [vmem:[%s2 + $0xf0] sm:$0xff]
  %v2616 = vld [vmem:[%s2 + $0xf8] sm:$0xff]
  %v2617 = vld [vmem:[%s2 + $0x100] sm:$0xff]
  %v2618 = vld [vmem:[%s2 + $0x108] sm:$0xff]
  %v2619 = vld [vmem:[%s2 + $0x110] sm:$0xff]
  %v2620 = vld [vmem:[%s2 + $0x118] sm:$0xff]
  %v2621 = vld [vmem:[%s2 + $0x120] sm:$0xff]
  %v2622 = vld [vmem:[%s2 + $0x128] sm:$0xff]
  %v2623 = vld [vmem:[%s2 + $0x130] sm:$0xff]
  %v2624 = vld [vmem:[%s2 + $0x138] sm:$0xff]
  %v2625 = vld [vmem:[%s2 + $0x140] sm:$0xff]
  %v2626 = vld [vmem:[%s2 + $0x148] sm:$0xff]
  %v2627 = vld [vmem:[%s2 + $0x150] sm:$0xff]
  %v2628 = vld [vmem:[%s2 + $0x158] sm:$0xff]
  %v2629 = vld [vmem:[%s2 + $0x160] sm:$0xff]
  %v2630 = vld [vmem:[%s2 + $0x168] sm:$0xff]
  %v2631 = vld [vmem:[%s2 + $0x170] sm:$0xff]
  %v2632 = vld [vmem:[%s2 + $0x178] sm:$0xff]
  %v2633 = vld [vmem:[%s2 + $0x180] sm:$0xff]
  %v2634 = vld [vmem:[%s2 + $0x188] sm:$0xff]
  %v2635 = vld [vmem:[%s2 + $0x190] sm:$0xff]
  %v2636 = vld [vmem:[%s2 + $0x198] sm:$0xff]
  %v2637 = vld [vmem:[%s2 + $0x1a0] sm:$0xff]
  %v2638 = vld [vmem:[%s2 + $0x1a8] sm:$0xff]
  %v2639 = vld [vmem:[%s2 + $0x1b0] sm:$0xff]
  %v2640 = vld [vmem:[%s2 + $0x1b8] sm:$0xff]
  %v2641 = vld [vmem:[%s2 + $0x1c0] sm:$0xff]
  %v2642 = vld [vmem:[%s2 + $0x1c8] sm:$0xff]
  %v2643 = vld [vmem:[%s2 + $0x1d0] sm:$0xff]
  %v2644 = vld [vmem:[%s2 + $0x1d8] sm:$0xff]
  %v2645 = vld [vmem:[%s2 + $0x1e0] sm:$0xff]
  %v2646 = vld [vmem:[%s2 + $0x1e8] sm:$0xff]
  %v2647 = vld [vmem:[%s2 + $0x1f0] sm:$0xff]
  %v2648 = vld [vmem:[%s2 + $0x1f8] sm:$0xff]
  %v2713 = vunpack.c.l.b16 %v2585
  %v2714 = vunpack.c.h.b16 %v2585
  %v2715 = vunpack.c.l.b16 %v2586
  %v2716 = vunpack.c.h.b16 %v2586
  %v2717 = vunpack.c.l.b16 %v2587
  %v2718 = vunpack.c.h.b16 %v2587
  %v2719 = vunpack.c.l.b16 %v2588
  %v2720 = vunpack.c.h.b16 %v2588
  %v2721 = vunpack.c.l.b16 %v2589
  %v2722 = vunpack.c.h.b16 %v2589
  %v2723 = vunpack.c.l.b16 %v2590
  %v2724 = vunpack.c.h.b16 %v2590
  %v2725 = vunpack.c.l.b16 %v2591
  %v2726 = vunpack.c.h.b16 %v2591
  %v2727 = vunpack.c.l.b16 %v2592
  %v2728 = vunpack.c.h.b16 %v2592
  %v2729 = vunpack.c.l.b16 %v2593
  %v2730 = vunpack.c.h.b16 %v2593
  %v2731 = vunpack.c.l.b16 %v2594
  %v2732 = vunpack.c.h.b16 %v2594
  %v2733 = vunpack.c.l.b16 %v2595
  %v2734 = vunpack.c.h.b16 %v2595
  %v2735 = vunpack.c.l.b16 %v2596
  %v2736 = vunpack.c.h.b16 %v2596
  %v2737 = vunpack.c.l.b16 %v2597
  %v2738 = vunpack.c.h.b16 %v2597
  %v2739 = vunpack.c.l.b16 %v2598
  %v2740 = vunpack.c.h.b16 %v2598
  %v2741 = vunpack.c.l.b16 %v2599
  %v2742 = vunpack.c.h.b16 %v2599
  %v2743 = vunpack.c.l.b16 %v2600
  %v2744 = vunpack.c.h.b16 %v2600
  %v2745 = vunpack.c.l.b16 %v2601
  %v2746 = vunpack.c.h.b16 %v2601
  %v2747 = vunpack.c.l.b16 %v2602
  %v2748 = vunpack.c.h.b16 %v2602
  %v2749 = vunpack.c.l.b16 %v2603
  %v2750 = vunpack.c.h.b16 %v2603
  %v2751 = vunpack.c.l.b16 %v2604
  %v2752 = vunpack.c.h.b16 %v2604
  %v2753 = vunpack.c.l.b16 %v2605
  %v2754 = vunpack.c.h.b16 %v2605
  %v2755 = vunpack.c.l.b16 %v2606
  %v2756 = vunpack.c.h.b16 %v2606
  %v2757 = vunpack.c.l.b16 %v2607
  %v2758 = vunpack.c.h.b16 %v2607
  %v2759 = vunpack.c.l.b16 %v2608
  %v2760 = vunpack.c.h.b16 %v2608
  %v2761 = vunpack.c.l.b16 %v2609
  %v2762 = vunpack.c.h.b16 %v2609
  %v2763 = vunpack.c.l.b16 %v2610
  %v2764 = vunpack.c.h.b16 %v2610
  %v2765 = vunpack.c.l.b16 %v2611
  %v2766 = vunpack.c.h.b16 %v2611
  %v2767 = vunpack.c.l.b16 %v2612
  %v2768 = vunpack.c.h.b16 %v2612
  %v2769 = vunpack.c.l.b16 %v2613
  %v2770 = vunpack.c.h.b16 %v2613
  %v2771 = vunpack.c.l.b16 %v2614
  %v2772 = vunpack.c.h.b16 %v2614
  %v2773 = vunpack.c.l.b16 %v2615
  %v2774 = vunpack.c.h.b16 %v2615
  %v2775 = vunpack.c.l.b16 %v2616
  %v2776 = vunpack.c.h.b16 %v2616
  %v2777 = vunpack.c.l.b16 %v2617
  %v2778 = vunpack.c.h.b16 %v2617
  %v2779 = vunpack.c.l.b16 %v2618
  %v2780 = vunpack.c.h.b16 %v2618
  %v2781 = vunpack.c.l.b16 %v2619
  %v2782 = vunpack.c.h.b16 %v2619
  %v2783 = vunpack.c.l.b16 %v2620
  %v2784 = vunpack.c.h.b16 %v2620
  %v2785 = vunpack.c.l.b16 %v2621
  %v2786 = vunpack.c.h.b16 %v2621
  %v2787 = vunpack.c.l.b16 %v2622
  %v2788 = vunpack.c.h.b16 %v2622
  %v2789 = vunpack.c.l.b16 %v2623
  %v2790 = vunpack.c.h.b16 %v2623
  %v2791 = vunpack.c.l.b16 %v2624
  %v2792 = vunpack.c.h.b16 %v2624
  %v2793 = vunpack.c.l.b16 %v2625
  %v2794 = vunpack.c.h.b16 %v2625
  %v2795 = vunpack.c.l.b16 %v2626
  %v2796 = vunpack.c.h.b16 %v2626
  %v2797 = vunpack.c.l.b16 %v2627
  %v2798 = vunpack.c.h.b16 %v2627
  %v2799 = vunpack.c.l.b16 %v2628
  %v2800 = vunpack.c.h.b16 %v2628
  %v2801 = vunpack.c.l.b16 %v2629
  %v2802 = vunpack.c.h.b16 %v2629
  %v2803 = vunpack.c.l.b16 %v2630
  %v2804 = vunpack.c.h.b16 %v2630
  %v2805 = vunpack.c.l.b16 %v2631
  %v2806 = vunpack.c.h.b16 %v2631
  %v2807 = vunpack.c.l.b16 %v2632
  %v2808 = vunpack.c.h.b16 %v2632
  %v2809 = vunpack.c.l.b16 %v2633
  %v2810 = vunpack.c.h.b16 %v2633
  %v2811 = vunpack.c.l.b16 %v2634
  %v2812 = vunpack.c.h.b16 %v2634
  %v2813 = vunpack.c.l.b16 %v2635
  %v2814 = vunpack.c.h.b16 %v2635
  %v2815 = vunpack.c.l.b16 %v2636
  %v2816 = vunpack.c.h.b16 %v2636
  %v2817 = vunpack.c.l.b16 %v2637
  %v2818 = vunpack.c.h.b16 %v2637
  %v2819 = vunpack.c.l.b16 %v2638
  %v2820 = vunpack.c.h.b16 %v2638
  %v2821 = vunpack.c.l.b16 %v2639
  %v2822 = vunpack.c.h.b16 %v2639
  %v2823 = vunpack.c.l.b16 %v2640
  %v2824 = vunpack.c.h.b16 %v2640
  %v2825 = vunpack.c.l.b16 %v2641
  %v2826 = vunpack.c.h.b16 %v2641
  %v2827 = vunpack.c.l.b16 %v2642
  %v2828 = vunpack.c.h.b16 %v2642
  %v2829 = vunpack.c.l.b16 %v2643
  %v2830 = vunpack.c.h.b16 %v2643
  %v2831 = vunpack.c.l.b16 %v2644
  %v2832 = vunpack.c.h.b16 %v2644
  %v2833 = vunpack.c.l.b16 %v2645
  %v2834 = vunpack.c.h.b16 %v2645
  %v2835 = vunpack.c.l.b16 %v2646
  %v2836 = vunpack.c.h.b16 %v2646
  %v2837 = vunpack.c.l.b16 %v2647
  %v2838 = vunpack.c.h.b16 %v2647
  %v2839 = vunpack.c.l.b16 %v2648
  %v2840 = vunpack.c.h.b16 %v2648
  %v2841 = vpack.c.b16 %v2721, %v2713
  %v2842 = vpack.c.b16 %v2722, %v2714
  %v2843 = vpack.c.b16 %v2723, %v2715
  %v2844 = vpack.c.b16 %v2724, %v2716
  %v2845 = vpack.c.b16 %v2725, %v2717
  %v2846 = vpack.c.b16 %v2726, %v2718
  %v2847 = vpack.c.b16 %v2727, %v2719
  %v2848 = vpack.c.b16 %v2728, %v2720
  %v2849 = vpack.c.b16 %v2737, %v2729
  %v2850 = vpack.c.b16 %v2738, %v2730
  %v2851 = vpack.c.b16 %v2739, %v2731
  %v2852 = vpack.c.b16 %v2740, %v2732
  %v2853 = vpack.c.b16 %v2741, %v2733
  %v2854 = vpack.c.b16 %v2742, %v2734
  %v2855 = vpack.c.b16 %v2743, %v2735
  %v2856 = vpack.c.b16 %v2744, %v2736
  %v2857 = vpack.c.b16 %v2753, %v2745
  %v2858 = vpack.c.b16 %v2754, %v2746
  %v2859 = vpack.c.b16 %v2755, %v2747
  %v2860 = vpack.c.b16 %v2756, %v2748
  %v2861 = vpack.c.b16 %v2757, %v2749
  %v2862 = vpack.c.b16 %v2758, %v2750
  %v2863 = vpack.c.b16 %v2759, %v2751
  %v2864 = vpack.c.b16 %v2760, %v2752
  %v2865 = vpack.c.b16 %v2769, %v2761
  %v2866 = vpack.c.b16 %v2770, %v2762
  %v2867 = vpack.c.b16 %v2771, %v2763
  %v2868 = vpack.c.b16 %v2772, %v2764
  %v2869 = vpack.c.b16 %v2773, %v2765
  %v2870 = vpack.c.b16 %v2774, %v2766
  %v2871 = vpack.c.b16 %v2775, %v2767
  %v2872 = vpack.c.b16 %v2776, %v2768
  %v2873 = vpack.c.b16 %v2785, %v2777
  %v2874 = vpack.c.b16 %v2786, %v2778
  %v2875 = vpack.c.b16 %v2787, %v2779
  %v2876 = vpack.c.b16 %v2788, %v2780
  %v2877 = vpack.c.b16 %v2789, %v2781
  %v2878 = vpack.c.b16 %v2790, %v2782
  %v2879 = vpack.c.b16 %v2791, %v2783
  %v2880 = vpack.c.b16 %v2792, %v2784
  %v2881 = vpack.c.b16 %v2801, %v2793
  %v2882 = vpack.c.b16 %v2802, %v2794
  %v2883 = vpack.c.b16 %v2803, %v2795
  %v2884 = vpack.c.b16 %v2804, %v2796
  %v2885 = vpack.c.b16 %v2805, %v2797
  %v2886 = vpack.c.b16 %v2806, %v2798
  %v2887 = vpack.c.b16 %v2807, %v2799
  %v2888 = vpack.c.b16 %v2808, %v2800
  %v2889 = vpack.c.b16 %v2817, %v2809
  %v2890 = vpack.c.b16 %v2818, %v2810
  %v2891 = vpack.c.b16 %v2819, %v2811
  %v2892 = vpack.c.b16 %v2820, %v2812
  %v2893 = vpack.c.b16 %v2821, %v2813
  %v2894 = vpack.c.b16 %v2822, %v2814
  %v2895 = vpack.c.b16 %v2823, %v2815
  %v2896 = vpack.c.b16 %v2824, %v2816
  %v2897 = vpack.c.b16 %v2833, %v2825
  %v2898 = vpack.c.b16 %v2834, %v2826
  %v2899 = vpack.c.b16 %v2835, %v2827
  %v2900 = vpack.c.b16 %v2836, %v2828
  %v2901 = vpack.c.b16 %v2837, %v2829
  %v2902 = vpack.c.b16 %v2838, %v2830
  %v2903 = vpack.c.b16 %v2839, %v2831
  %v2904 = vpack.c.b16 %v2840, %v2832
  %2969 = vmatpush.bf16.msra.mxu0 %v2897
  %2970 = vmatpush.bf16.msra.mxu0 %v2889
  %2971 = vmatpush.bf16.msra.mxu0 %v2881
  %2972 = vmatpush.bf16.msra.mxu0 %v2873
  %2973 = vmatpush.bf16.msra.mxu0 %v2865
  %2974 = vmatpush.bf16.msra.mxu0 %v2857
  %2975 = vmatpush.bf16.msra.mxu0 %v2849
  %2976 = vmatpush.bf16.msra.mxu0 %v2841
  %2977 = vmatmul.bf16.gmra.mxu0 %v2584
  %v2978 = vpop.f32.mrf.mxu0
  %v2979 = vadd.f32 0.0, %v2978
  %v2980 = vpop.f32.mrf.mxu0
  %2981 = vdwg.mxu0
  %2982 = vmatpush.bf16.msra.mxu0 %v2898
  %2983 = vmatpush.bf16.msra.mxu0 %v2890
  %2984 = vmatpush.bf16.msra.mxu0 %v2882
  %2985 = vmatpush.bf16.msra.mxu0 %v2874
  %2986 = vmatpush.bf16.msra.mxu0 %v2866
  %2987 = vmatpush.bf16.msra.mxu0 %v2858
  %2988 = vmatpush.bf16.msra.mxu0 %v2850
  %2989 = vmatpush.bf16.msra.mxu0 %v2842
  %2990 = vmatmul.bf16.gmra.mxu0 %v2584
  %v2991 = vpop.f32.mrf.mxu0
  %v2992 = vadd.f32 0.0, %v2991
  %v2993 = vpop.f32.mrf.mxu0
  %2994 = vdwg.mxu0
  %2995 = vmatpush.bf16.msra.mxu0 %v2899
  %2996 = vmatpush.bf16.msra.mxu0 %v2891
  %2997 = vmatpush.bf16.msra.mxu0 %v2883
  %2998 = vmatpush.bf16.msra.mxu0 %v2875
  %2999 = vmatpush.bf16.msra.mxu0 %v2867
  %3000 = vmatpush.bf16.msra.mxu0 %v2859
  %3001 = vmatpush.bf16.msra.mxu0 %v2851
  %3002 = vmatpush.bf16.msra.mxu0 %v2843
  %3003 = vmatmul.bf16.gmra.mxu0 %v2584
  %v3004 = vpop.f32.mrf.mxu0
  %v3005 = vadd.f32 0.0, %v3004
  %v3006 = vpop.f32.mrf.mxu0
  %3007 = vdwg.mxu0
  %3008 = vmatpush.bf16.msra.mxu0 %v2900
  %3009 = vmatpush.bf16.msra.mxu0 %v2892
  %3010 = vmatpush.bf16.msra.mxu0 %v2884
  %3011 = vmatpush.bf16.msra.mxu0 %v2876
  %3012 = vmatpush.bf16.msra.mxu0 %v2868
  %3013 = vmatpush.bf16.msra.mxu0 %v2860
  %3014 = vmatpush.bf16.msra.mxu0 %v2852
  %3015 = vmatpush.bf16.msra.mxu0 %v2844
  %3016 = vmatmul.bf16.gmra.mxu0 %v2584
  %v3017 = vpop.f32.mrf.mxu0
  %v3018 = vadd.f32 0.0, %v3017
  %v3019 = vpop.f32.mrf.mxu0
  %3020 = vdwg.mxu0
  %3021 = vmatpush.bf16.msra.mxu0 %v2901
  %3022 = vmatpush.bf16.msra.mxu0 %v2893
  %3023 = vmatpush.bf16.msra.mxu0 %v2885
  %3024 = vmatpush.bf16.msra.mxu0 %v2877
  %3025 = vmatpush.bf16.msra.mxu0 %v2869
  %3026 = vmatpush.bf16.msra.mxu0 %v2861
  %3027 = vmatpush.bf16.msra.mxu0 %v2853
  %3028 = vmatpush.bf16.msra.mxu0 %v2845
  %3029 = vmatmul.bf16.gmra.mxu0 %v2584
  %v3030 = vpop.f32.mrf.mxu0
  %v3031 = vpop.f32.mrf.mxu0
  %v3032 = vadd.f32 0.0, %v3031
  %3033 = vdwg.mxu0
  %3034 = vmatpush.bf16.msra.mxu0 %v2902
  %3035 = vmatpush.bf16.msra.mxu0 %v2894
  %3036 = vmatpush.bf16.msra.mxu0 %v2886
  %3037 = vmatpush.bf16.msra.mxu0 %v2878
  %3038 = vmatpush.bf16.msra.mxu0 %v2870
  %3039 = vmatpush.bf16.msra.mxu0 %v2862
  %3040 = vmatpush.bf16.msra.mxu0 %v2854
  %3041 = vmatpush.bf16.msra.mxu0 %v2846
  %3042 = vmatmul.bf16.gmra.mxu0 %v2584
  %v3043 = vpop.f32.mrf.mxu0
  %v3044 = vpop.f32.mrf.mxu0
  %v3045 = vadd.f32 0.0, %v3044
  %3046 = vdwg.mxu0
  %3047 = vmatpush.bf16.msra.mxu0 %v2903
  %3048 = vmatpush.bf16.msra.mxu0 %v2895
  %3049 = vmatpush.bf16.msra.mxu0 %v2887
  %3050 = vmatpush.bf16.msra.mxu0 %v2879
  %3051 = vmatpush.bf16.msra.mxu0 %v2871
  %3052 = vmatpush.bf16.msra.mxu0 %v2863
  %3053 = vmatpush.bf16.msra.mxu0 %v2855
  %3054 = vmatpush.bf16.msra.mxu0 %v2847
  %3055 = vmatmul.bf16.gmra.mxu0 %v2584
  %v3056 = vpop.f32.mrf.mxu0
  %v3057 = vpop.f32.mrf.mxu0
  %v3058 = vadd.f32 0.0, %v3057
  %3059 = vdwg.mxu0
  %3060 = vmatpush.bf16.msra.mxu0 %v2904
  %3061 = vmatpush.bf16.msra.mxu0 %v2896
  %3062 = vmatpush.bf16.msra.mxu0 %v2888
  %3063 = vmatpush.bf16.msra.mxu0 %v2880
  %3064 = vmatpush.bf16.msra.mxu0 %v2872
  %3065 = vmatpush.bf16.msra.mxu0 %v2864
  %3066 = vmatpush.bf16.msra.mxu0 %v2856
  %3067 = vmatpush.bf16.msra.mxu0 %v2848
  %3068 = vmatmul.bf16.gmra.mxu0 %v2584
  %v3069 = vpop.f32.mrf.mxu0
  %v3070 = vpop.f32.mrf.mxu0
  %v3071 = vadd.f32 0.0, %v3070
  %3072 = vdwg.mxu0
  %v3073 = vld [vmem:[%s2445] sm:$0xff]
  %v3074 = vld [vmem:[%s2445 + $0x8] sm:$0xff]
  %v3075 = vld [vmem:[%s2445 + $0x10] sm:$0xff]
  %v3076 = vld [vmem:[%s2445 + $0x18] sm:$0xff]
  %v3077 = vadd.f32 %v3073, %v2979
  %v3078 = vadd.f32 %v3074, %v2992
  %v3079 = vadd.f32 %v3075, %v3005
  %v3080 = vadd.f32 %v3076, %v3018
  %v3081 = vld [vmem:[%s2436 + $0x20] sm:$0xff]
  %v3082 = vld [vmem:[%s2436 + $0x28] sm:$0xff]
  %v3083 = vld [vmem:[%s2436 + $0x30] sm:$0xff]
  %v3084 = vld [vmem:[%s2436 + $0x38] sm:$0xff]
  %v3085 = vadd.f32 %v3081, %v3032
  %v3086 = vadd.f32 %v3082, %v3045
  %v3087 = vadd.f32 %v3083, %v3058
  %v3088 = vadd.f32 %v3084, %v3071
  %v3089 = vxor.u32 %v3077, 2147483648
  %v3090 = vxor.u32 %v3085, 2147483648
  %v3091 = vmul.f32 %v3089, 1.442695
  %v3092 = vpow.pop %v3091
  %v3093 = vmul.f32 %v3090, 1.442695
  %v3094 = vpow.pop %v3093
  %v3095 = vadd.f32 %v3092, 1.0
  %v3096 = vadd.f32 %v3094, 1.0
  %v3097 = vrcp.pop %v3095
  %v3098 = vmul.f32 %v3095, %v3097
  %v3099 = vsub.f32 1.0, %v3098
  %v3100 = vmul.f32 %v3097, %v3099
  %v3101 = vadd.f32 %v3097, %v3100
  %vm3102 = vweird.f32 %v3095
  %vm3103 = vweird.f32 %v3097
  %vm3104 = vmor %vm3102, %vm3103
  %v3105 = vsel %vm3104, %v3097, %v3101
  %v3106 = vand.u32 2147483647, %v3095
  %vm3107 = vcmp.eq.f32.partialorder %v3106, 8.507059e+37
  %v3108 = vand.u32 %v3095, 2147483648
  %v3109 = vor.u32 1.1754944e-38, %v3108
  %v3110 = vsel %vm3107, %v3109, %v3105
  %v3111 = vmul.f32 1.0, %v3110
  %v3112 = vrcp.pop %v3096
  %v3113 = vmul.f32 %v3096, %v3112
  %v3114 = vsub.f32 1.0, %v3113
  %v3115 = vmul.f32 %v3112, %v3114
  %v3116 = vadd.f32 %v3112, %v3115
  %vm3117 = vweird.f32 %v3096
  %vm3118 = vweird.f32 %v3112
  %vm3119 = vmor %vm3117, %vm3118
  %v3120 = vsel %vm3119, %v3112, %v3116
  %v3121 = vand.u32 2147483647, %v3096
  %vm3122 = vcmp.eq.f32.partialorder %v3121, 8.507059e+37
  %v3123 = vand.u32 %v3096, 2147483648
  %v3124 = vor.u32 1.1754944e-38, %v3123
  %v3125 = vsel %vm3122, %v3124, %v3120
  %v3126 = vmul.f32 1.0, %v3125
  %v3127 = vxor.u32 %v3078, 2147483648
  %v3128 = vxor.u32 %v3086, 2147483648
  %v3129 = vmul.f32 %v3127, 1.442695
  %v3130 = vpow.pop %v3129
  %v3131 = vmul.f32 %v3128, 1.442695
  %v3132 = vpow.pop %v3131
  %v3133 = vadd.f32 %v3130, 1.0
  %v3134 = vadd.f32 %v3132, 1.0
  %v3135 = vrcp.pop %v3133
  %v3136 = vmul.f32 %v3133, %v3135
  %v3137 = vsub.f32 1.0, %v3136
  %v3138 = vmul.f32 %v3135, %v3137
  %v3139 = vadd.f32 %v3135, %v3138
  %vm3140 = vweird.f32 %v3133
  %vm3141 = vweird.f32 %v3135
  %vm3142 = vmor %vm3140, %vm3141
  %v3143 = vsel %vm3142, %v3135, %v3139
  %v3144 = vand.u32 2147483647, %v3133
  %vm3145 = vcmp.eq.f32.partialorder %v3144, 8.507059e+37
  %v3146 = vand.u32 %v3133, 2147483648
  %v3147 = vor.u32 1.1754944e-38, %v3146
  %v3148 = vsel %vm3145, %v3147, %v3143
  %v3149 = vmul.f32 1.0, %v3148
  %v3150 = vrcp.pop %v3134
  %v3151 = vmul.f32 %v3134, %v3150
  %v3152 = vsub.f32 1.0, %v3151
  %v3153 = vmul.f32 %v3150, %v3152
  %v3154 = vadd.f32 %v3150, %v3153
  %vm3155 = vweird.f32 %v3134
  %vm3156 = vweird.f32 %v3150
  %vm3157 = vmor %vm3155, %vm3156
  %v3158 = vsel %vm3157, %v3150, %v3154
  %v3159 = vand.u32 2147483647, %v3134
  %vm3160 = vcmp.eq.f32.partialorder %v3159, 8.507059e+37
  %v3161 = vand.u32 %v3134, 2147483648
  %v3162 = vor.u32 1.1754944e-38, %v3161
  %v3163 = vsel %vm3160, %v3162, %v3158
  %v3164 = vmul.f32 1.0, %v3163
  %v3165 = vtanh.pop %v3079
  %v3166 = vtanh.pop %v3087
  %v3167 = vxor.u32 %v3080, 2147483648
  %v3168 = vxor.u32 %v3088, 2147483648
  %v3169 = vmul.f32 %v3167, 1.442695
  %v3170 = vpow.pop %v3169
  %v3171 = vmul.f32 %v3168, 1.442695
  %v3172 = vpow.pop %v3171
  %v3173 = vadd.f32 %v3170, 1.0
  %v3174 = vadd.f32 %v3172, 1.0
  %v3175 = vrcp.pop %v3173
  %v3176 = vmul.f32 %v3173, %v3175
  %v3177 = vsub.f32 1.0, %v3176
  %v3178 = vmul.f32 %v3175, %v3177
  %v3179 = vadd.f32 %v3175, %v3178
  %vm3180 = vweird.f32 %v3173
  %vm3181 = vweird.f32 %v3175
  %vm3182 = vmor %vm3180, %vm3181
  %v3183 = vsel %vm3182, %v3175, %v3179
  %v3184 = vand.u32 2147483647, %v3173
  %vm3185 = vcmp.eq.f32.partialorder %v3184, 8.507059e+37
  %v3186 = vand.u32 %v3173, 2147483648
  %v3187 = vor.u32 1.1754944e-38, %v3186
  %v3188 = vsel %vm3185, %v3187, %v3183
  %v3189 = vmul.f32 1.0, %v3188
  %v3190 = vrcp.pop %v3174
  %v3191 = vmul.f32 %v3174, %v3190
  %v3192 = vsub.f32 1.0, %v3191
  %v3193 = vmul.f32 %v3190, %v3192
  %v3194 = vadd.f32 %v3190, %v3193
  %vm3195 = vweird.f32 %v3174
  %vm3196 = vweird.f32 %v3190
  %vm3197 = vmor %vm3195, %vm3196
  %v3198 = vsel %vm3197, %v3190, %v3194
  %v3199 = vand.u32 2147483647, %v3174
  %vm3200 = vcmp.eq.f32.partialorder %v3199, 8.507059e+37
  %v3201 = vand.u32 %v3174, 2147483648
  %v3202 = vor.u32 1.1754944e-38, %v3201
  %v3203 = vsel %vm3200, %v3202, %v3198
  %v3204 = vmul.f32 1.0, %v3203
  %v3205 = vmul.f32 %v3149, %v2574
  %v3206 = vmul.f32 %v3164, %v2575
  %v3207 = vmul.f32 %v3111, %v3165
  %v3208 = vmul.f32 %v3126, %v3166
  %v3209 = vadd.f32 %v3205, %v3207
  %v3210 = vadd.f32 %v3206, %v3208
  %v3211 = vtanh.pop %v3209
  %v3212 = vtanh.pop %v3210
  %v3213 = vmul.f32 %v3189, %v3211
  %v3214 = vmul.f32 %v3204, %v3212
  %3215 = vst [vmem:[%s2582] sm:$0xff] %v3213
  %3216 = vst [vmem:[%s2580 + $0x8] sm:$0xff] %v3214
  %v3217 = vpack.c.bf16 %v3214, %v3213
  %v3218 = vld [vmem:[%s2] sm:$0xff]
  %v3219 = vld [vmem:[%s2 + $0x8] sm:$0xff]
  %v3220 = vld [vmem:[%s2 + $0x10] sm:$0xff]
  %v3221 = vld [vmem:[%s2 + $0x18] sm:$0xff]
  %v3222 = vld [vmem:[%s2 + $0x20] sm:$0xff]
  %v3223 = vld [vmem:[%s2 + $0x28] sm:$0xff]
  %v3224 = vld [vmem:[%s2 + $0x30] sm:$0xff]
  %v3225 = vld [vmem:[%s2 + $0x38] sm:$0xff]
  %v3226 = vld [vmem:[%s2 + $0x40] sm:$0xff]
  %v3227 = vld [vmem:[%s2 + $0x48] sm:$0xff]
  %v3228 = vld [vmem:[%s2 + $0x50] sm:$0xff]
  %v3229 = vld [vmem:[%s2 + $0x58] sm:$0xff]
  %v3230 = vld [vmem:[%s2 + $0x60] sm:$0xff]
  %v3231 = vld [vmem:[%s2 + $0x68] sm:$0xff]
  %v3232 = vld [vmem:[%s2 + $0x70] sm:$0xff]
  %v3233 = vld [vmem:[%s2 + $0x78] sm:$0xff]
  %v3234 = vld [vmem:[%s2 + $0x80] sm:$0xff]
  %v3235 = vld [vmem:[%s2 + $0x88] sm:$0xff]
  %v3236 = vld [vmem:[%s2 + $0x90] sm:$0xff]
  %v3237 = vld [vmem:[%s2 + $0x98] sm:$0xff]
  %v3238 = vld [vmem:[%s2 + $0xa0] sm:$0xff]
  %v3239 = vld [vmem:[%s2 + $0xa8] sm:$0xff]
  %v3240 = vld [vmem:[%s2 + $0xb0] sm:$0xff]
  %v3241 = vld [vmem:[%s2 + $0xb8] sm:$0xff]
  %v3242 = vld [vmem:[%s2 + $0xc0] sm:$0xff]
  %v3243 = vld [vmem:[%s2 + $0xc8] sm:$0xff]
  %v3244 = vld [vmem:[%s2 + $0xd0] sm:$0xff]
  %v3245 = vld [vmem:[%s2 + $0xd8] sm:$0xff]
  %v3246 = vld [vmem:[%s2 + $0xe0] sm:$0xff]
  %v3247 = vld [vmem:[%s2 + $0xe8] sm:$0xff]
  %v3248 = vld [vmem:[%s2 + $0xf0] sm:$0xff]
  %v3249 = vld [vmem:[%s2 + $0xf8] sm:$0xff]
  %v3250 = vld [vmem:[%s2 + $0x100] sm:$0xff]
  %v3251 = vld [vmem:[%s2 + $0x108] sm:$0xff]
  %v3252 = vld [vmem:[%s2 + $0x110] sm:$0xff]
  %v3253 = vld [vmem:[%s2 + $0x118] sm:$0xff]
  %v3254 = vld [vmem:[%s2 + $0x120] sm:$0xff]
  %v3255 = vld [vmem:[%s2 + $0x128] sm:$0xff]
  %v3256 = vld [vmem:[%s2 + $0x130] sm:$0xff]
  %v3257 = vld [vmem:[%s2 + $0x138] sm:$0xff]
  %v3258 = vld [vmem:[%s2 + $0x140] sm:$0xff]
  %v3259 = vld [vmem:[%s2 + $0x148] sm:$0xff]
  %v3260 = vld [vmem:[%s2 + $0x150] sm:$0xff]
  %v3261 = vld [vmem:[%s2 + $0x158] sm:$0xff]
  %v3262 = vld [vmem:[%s2 + $0x160] sm:$0xff]
  %v3263 = vld [vmem:[%s2 + $0x168] sm:$0xff]
  %v3264 = vld [vmem:[%s2 + $0x170] sm:$0xff]
  %v3265 = vld [vmem:[%s2 + $0x178] sm:$0xff]
  %v3266 = vld [vmem:[%s2 + $0x180] sm:$0xff]
  %v3267 = vld [vmem:[%s2 + $0x188] sm:$0xff]
  %v3268 = vld [vmem:[%s2 + $0x190] sm:$0xff]
  %v3269 = vld [vmem:[%s2 + $0x198] sm:$0xff]
  %v3270 = vld [vmem:[%s2 + $0x1a0] sm:$0xff]
  %v3271 = vld [vmem:[%s2 + $0x1a8] sm:$0xff]
  %v3272 = vld [vmem:[%s2 + $0x1b0] sm:$0xff]
  %v3273 = vld [vmem:[%s2 + $0x1b8] sm:$0xff]
  %v3274 = vld [vmem:[%s2 + $0x1c0] sm:$0xff]
  %v3275 = vld [vmem:[%s2 + $0x1c8] sm:$0xff]
  %v3276 = vld [vmem:[%s2 + $0x1d0] sm:$0xff]
  %v3277 = vld [vmem:[%s2 + $0x1d8] sm:$0xff]
  %v3278 = vld [vmem:[%s2 + $0x1e0] sm:$0xff]
  %v3279 = vld [vmem:[%s2 + $0x1e8] sm:$0xff]
  %v3280 = vld [vmem:[%s2 + $0x1f0] sm:$0xff]
  %v3281 = vld [vmem:[%s2 + $0x1f8] sm:$0xff]
  %v3346 = vunpack.c.l.b16 %v3218
  %v3347 = vunpack.c.h.b16 %v3218
  %v3348 = vunpack.c.l.b16 %v3219
  %v3349 = vunpack.c.h.b16 %v3219
  %v3350 = vunpack.c.l.b16 %v3220
  %v3351 = vunpack.c.h.b16 %v3220
  %v3352 = vunpack.c.l.b16 %v3221
  %v3353 = vunpack.c.h.b16 %v3221
  %v3354 = vunpack.c.l.b16 %v3222
  %v3355 = vunpack.c.h.b16 %v3222
  %v3356 = vunpack.c.l.b16 %v3223
  %v3357 = vunpack.c.h.b16 %v3223
  %v3358 = vunpack.c.l.b16 %v3224
  %v3359 = vunpack.c.h.b16 %v3224
  %v3360 = vunpack.c.l.b16 %v3225
  %v3361 = vunpack.c.h.b16 %v3225
  %v3362 = vunpack.c.l.b16 %v3226
  %v3363 = vunpack.c.h.b16 %v3226
  %v3364 = vunpack.c.l.b16 %v3227
  %v3365 = vunpack.c.h.b16 %v3227
  %v3366 = vunpack.c.l.b16 %v3228
  %v3367 = vunpack.c.h.b16 %v3228
  %v3368 = vunpack.c.l.b16 %v3229
  %v3369 = vunpack.c.h.b16 %v3229
  %v3370 = vunpack.c.l.b16 %v3230
  %v3371 = vunpack.c.h.b16 %v3230
  %v3372 = vunpack.c.l.b16 %v3231
  %v3373 = vunpack.c.h.b16 %v3231
  %v3374 = vunpack.c.l.b16 %v3232
  %v3375 = vunpack.c.h.b16 %v3232
  %v3376 = vunpack.c.l.b16 %v3233
  %v3377 = vunpack.c.h.b16 %v3233
  %v3378 = vunpack.c.l.b16 %v3234
  %v3379 = vunpack.c.h.b16 %v3234
  %v3380 = vunpack.c.l.b16 %v3235
  %v3381 = vunpack.c.h.b16 %v3235
  %v3382 = vunpack.c.l.b16 %v3236
  %v3383 = vunpack.c.h.b16 %v3236
  %v3384 = vunpack.c.l.b16 %v3237
  %v3385 = vunpack.c.h.b16 %v3237
  %v3386 = vunpack.c.l.b16 %v3238
  %v3387 = vunpack.c.h.b16 %v3238
  %v3388 = vunpack.c.l.b16 %v3239
  %v3389 = vunpack.c.h.b16 %v3239
  %v3390 = vunpack.c.l.b16 %v3240
  %v3391 = vunpack.c.h.b16 %v3240
  %v3392 = vunpack.c.l.b16 %v3241
  %v3393 = vunpack.c.h.b16 %v3241
  %v3394 = vunpack.c.l.b16 %v3242
  %v3395 = vunpack.c.h.b16 %v3242
  %v3396 = vunpack.c.l.b16 %v3243
  %v3397 = vunpack.c.h.b16 %v3243
  %v3398 = vunpack.c.l.b16 %v3244
  %v3399 = vunpack.c.h.b16 %v3244
  %v3400 = vunpack.c.l.b16 %v3245
  %v3401 = vunpack.c.h.b16 %v3245
  %v3402 = vunpack.c.l.b16 %v3246
  %v3403 = vunpack.c.h.b16 %v3246
  %v3404 = vunpack.c.l.b16 %v3247
  %v3405 = vunpack.c.h.b16 %v3247
  %v3406 = vunpack.c.l.b16 %v3248
  %v3407 = vunpack.c.h.b16 %v3248
  %v3408 = vunpack.c.l.b16 %v3249
  %v3409 = vunpack.c.h.b16 %v3249
  %v3410 = vunpack.c.l.b16 %v3250
  %v3411 = vunpack.c.h.b16 %v3250
  %v3412 = vunpack.c.l.b16 %v3251
  %v3413 = vunpack.c.h.b16 %v3251
  %v3414 = vunpack.c.l.b16 %v3252
  %v3415 = vunpack.c.h.b16 %v3252
  %v3416 = vunpack.c.l.b16 %v3253
  %v3417 = vunpack.c.h.b16 %v3253
  %v3418 = vunpack.c.l.b16 %v3254
  %v3419 = vunpack.c.h.b16 %v3254
  %v3420 = vunpack.c.l.b16 %v3255
  %v3421 = vunpack.c.h.b16 %v3255
  %v3422 = vunpack.c.l.b16 %v3256
  %v3423 = vunpack.c.h.b16 %v3256
  %v3424 = vunpack.c.l.b16 %v3257
  %v3425 = vunpack.c.h.b16 %v3257
  %v3426 = vunpack.c.l.b16 %v3258
  %v3427 = vunpack.c.h.b16 %v3258
  %v3428 = vunpack.c.l.b16 %v3259
  %v3429 = vunpack.c.h.b16 %v3259
  %v3430 = vunpack.c.l.b16 %v3260
  %v3431 = vunpack.c.h.b16 %v3260
  %v3432 = vunpack.c.l.b16 %v3261
  %v3433 = vunpack.c.h.b16 %v3261
  %v3434 = vunpack.c.l.b16 %v3262
  %v3435 = vunpack.c.h.b16 %v3262
  %v3436 = vunpack.c.l.b16 %v3263
  %v3437 = vunpack.c.h.b16 %v3263
  %v3438 = vunpack.c.l.b16 %v3264
  %v3439 = vunpack.c.h.b16 %v3264
  %v3440 = vunpack.c.l.b16 %v3265
  %v3441 = vunpack.c.h.b16 %v3265
  %v3442 = vunpack.c.l.b16 %v3266
  %v3443 = vunpack.c.h.b16 %v3266
  %v3444 = vunpack.c.l.b16 %v3267
  %v3445 = vunpack.c.h.b16 %v3267
  %v3446 = vunpack.c.l.b16 %v3268
  %v3447 = vunpack.c.h.b16 %v3268
  %v3448 = vunpack.c.l.b16 %v3269
  %v3449 = vunpack.c.h.b16 %v3269
  %v3450 = vunpack.c.l.b16 %v3270
  %v3451 = vunpack.c.h.b16 %v3270
  %v3452 = vunpack.c.l.b16 %v3271
  %v3453 = vunpack.c.h.b16 %v3271
  %v3454 = vunpack.c.l.b16 %v3272
  %v3455 = vunpack.c.h.b16 %v3272
  %v3456 = vunpack.c.l.b16 %v3273
  %v3457 = vunpack.c.h.b16 %v3273
  %v3458 = vunpack.c.l.b16 %v3274
  %v3459 = vunpack.c.h.b16 %v3274
  %v3460 = vunpack.c.l.b16 %v3275
  %v3461 = vunpack.c.h.b16 %v3275
  %v3462 = vunpack.c.l.b16 %v3276
  %v3463 = vunpack.c.h.b16 %v3276
  %v3464 = vunpack.c.l.b16 %v3277
  %v3465 = vunpack.c.h.b16 %v3277
  %v3466 = vunpack.c.l.b16 %v3278
  %v3467 = vunpack.c.h.b16 %v3278
  %v3468 = vunpack.c.l.b16 %v3279
  %v3469 = vunpack.c.h.b16 %v3279
  %v3470 = vunpack.c.l.b16 %v3280
  %v3471 = vunpack.c.h.b16 %v3280
  %v3472 = vunpack.c.l.b16 %v3281
  %v3473 = vunpack.c.h.b16 %v3281
  %v3474 = vpack.c.b16 %v3354, %v3346
  %v3475 = vpack.c.b16 %v3355, %v3347
  %v3476 = vpack.c.b16 %v3356, %v3348
  %v3477 = vpack.c.b16 %v3357, %v3349
  %v3478 = vpack.c.b16 %v3358, %v3350
  %v3479 = vpack.c.b16 %v3359, %v3351
  %v3480 = vpack.c.b16 %v3360, %v3352
  %v3481 = vpack.c.b16 %v3361, %v3353
  %v3482 = vpack.c.b16 %v3370, %v3362
  %v3483 = vpack.c.b16 %v3371, %v3363
  %v3484 = vpack.c.b16 %v3372, %v3364
  %v3485 = vpack.c.b16 %v3373, %v3365
  %v3486 = vpack.c.b16 %v3374, %v3366
  %v3487 = vpack.c.b16 %v3375, %v3367
  %v3488 = vpack.c.b16 %v3376, %v3368
  %v3489 = vpack.c.b16 %v3377, %v3369
  %v3490 = vpack.c.b16 %v3386, %v3378
  %v3491 = vpack.c.b16 %v3387, %v3379
  %v3492 = vpack.c.b16 %v3388, %v3380
  %v3493 = vpack.c.b16 %v3389, %v3381
  %v3494 = vpack.c.b16 %v3390, %v3382
  %v3495 = vpack.c.b16 %v3391, %v3383
  %v3496 = vpack.c.b16 %v3392, %v3384
  %v3497 = vpack.c.b16 %v3393, %v3385
  %v3498 = vpack.c.b16 %v3402, %v3394
  %v3499 = vpack.c.b16 %v3403, %v3395
  %v3500 = vpack.c.b16 %v3404, %v3396
  %v3501 = vpack.c.b16 %v3405, %v3397
  %v3502 = vpack.c.b16 %v3406, %v3398
  %v3503 = vpack.c.b16 %v3407, %v3399
  %v3504 = vpack.c.b16 %v3408, %v3400
  %v3505 = vpack.c.b16 %v3409, %v3401
  %v3506 = vpack.c.b16 %v3418, %v3410
  %v3507 = vpack.c.b16 %v3419, %v3411
  %v3508 = vpack.c.b16 %v3420, %v3412
  %v3509 = vpack.c.b16 %v3421, %v3413
  %v3510 = vpack.c.b16 %v3422, %v3414
  %v3511 = vpack.c.b16 %v3423, %v3415
  %v3512 = vpack.c.b16 %v3424, %v3416
  %v3513 = vpack.c.b16 %v3425, %v3417
  %v3514 = vpack.c.b16 %v3434, %v3426
  %v3515 = vpack.c.b16 %v3435, %v3427
  %v3516 = vpack.c.b16 %v3436, %v3428
  %v3517 = vpack.c.b16 %v3437, %v3429
  %v3518 = vpack.c.b16 %v3438, %v3430
  %v3519 = vpack.c.b16 %v3439, %v3431
  %v3520 = vpack.c.b16 %v3440, %v3432
  %v3521 = vpack.c.b16 %v3441, %v3433
  %v3522 = vpack.c.b16 %v3450, %v3442
  %v3523 = vpack.c.b16 %v3451, %v3443
  %v3524 = vpack.c.b16 %v3452, %v3444
  %v3525 = vpack.c.b16 %v3453, %v3445
  %v3526 = vpack.c.b16 %v3454, %v3446
  %v3527 = vpack.c.b16 %v3455, %v3447
  %v3528 = vpack.c.b16 %v3456, %v3448
  %v3529 = vpack.c.b16 %v3457, %v3449
  %v3530 = vpack.c.b16 %v3466, %v3458
  %v3531 = vpack.c.b16 %v3467, %v3459
  %v3532 = vpack.c.b16 %v3468, %v3460
  %v3533 = vpack.c.b16 %v3469, %v3461
  %v3534 = vpack.c.b16 %v3470, %v3462
  %v3535 = vpack.c.b16 %v3471, %v3463
  %v3536 = vpack.c.b16 %v3472, %v3464
  %v3537 = vpack.c.b16 %v3473, %v3465
  %3602 = vmatpush.bf16.msra.mxu0 %v3530
  %3603 = vmatpush.bf16.msra.mxu0 %v3522
  %3604 = vmatpush.bf16.msra.mxu0 %v3514
  %3605 = vmatpush.bf16.msra.mxu0 %v3506
  %3606 = vmatpush.bf16.msra.mxu0 %v3498
  %3607 = vmatpush.bf16.msra.mxu0 %v3490
  %3608 = vmatpush.bf16.msra.mxu0 %v3482
  %3609 = vmatpush.bf16.msra.mxu0 %v3474
  %3610 = vmatmul.bf16.gmra.mxu0 %v3217
  %v3611 = vpop.f32.mrf.mxu0
  %v3612 = vadd.f32 0.0, %v3611
  %v3613 = vpop.f32.mrf.mxu0
  %3614 = vdwg.mxu0
  %3615 = vmatpush.bf16.msra.mxu0 %v3531
  %3616 = vmatpush.bf16.msra.mxu0 %v3523
  %3617 = vmatpush.bf16.msra.mxu0 %v3515
  %3618 = vmatpush.bf16.msra.mxu0 %v3507
  %3619 = vmatpush.bf16.msra.mxu0 %v3499
  %3620 = vmatpush.bf16.msra.mxu0 %v3491
  %3621 = vmatpush.bf16.msra.mxu0 %v3483
  %3622 = vmatpush.bf16.msra.mxu0 %v3475
  %3623 = vmatmul.bf16.gmra.mxu0 %v3217
  %v3624 = vpop.f32.mrf.mxu0
  %v3625 = vadd.f32 0.0, %v3624
  %v3626 = vpop.f32.mrf.mxu0
  %3627 = vdwg.mxu0
  %3628 = vmatpush.bf16.msra.mxu0 %v3532
  %3629 = vmatpush.bf16.msra.mxu0 %v3524
  %3630 = vmatpush.bf16.msra.mxu0 %v3516
  %3631 = vmatpush.bf16.msra.mxu0 %v3508
  %3632 = vmatpush.bf16.msra.mxu0 %v3500
  %3633 = vmatpush.bf16.msra.mxu0 %v3492
  %3634 = vmatpush.bf16.msra.mxu0 %v3484
  %3635 = vmatpush.bf16.msra.mxu0 %v3476
  %3636 = vmatmul.bf16.gmra.mxu0 %v3217
  %v3637 = vpop.f32.mrf.mxu0
  %v3638 = vadd.f32 0.0, %v3637
  %v3639 = vpop.f32.mrf.mxu0
  %3640 = vdwg.mxu0
  %3641 = vmatpush.bf16.msra.mxu0 %v3533
  %3642 = vmatpush.bf16.msra.mxu0 %v3525
  %3643 = vmatpush.bf16.msra.mxu0 %v3517
  %3644 = vmatpush.bf16.msra.mxu0 %v3509
  %3645 = vmatpush.bf16.msra.mxu0 %v3501
  %3646 = vmatpush.bf16.msra.mxu0 %v3493
  %3647 = vmatpush.bf16.msra.mxu0 %v3485
  %3648 = vmatpush.bf16.msra.mxu0 %v3477
  %3649 = vmatmul.bf16.gmra.mxu0 %v3217
  %v3650 = vpop.f32.mrf.mxu0
  %v3651 = vadd.f32 0.0, %v3650
  %v3652 = vpop.f32.mrf.mxu0
  %3653 = vdwg.mxu0
  %3654 = vmatpush.bf16.msra.mxu0 %v3534
  %3655 = vmatpush.bf16.msra.mxu0 %v3526
  %3656 = vmatpush.bf16.msra.mxu0 %v3518
  %3657 = vmatpush.bf16.msra.mxu0 %v3510
  %3658 = vmatpush.bf16.msra.mxu0 %v3502
  %3659 = vmatpush.bf16.msra.mxu0 %v3494
  %3660 = vmatpush.bf16.msra.mxu0 %v3486
  %3661 = vmatpush.bf16.msra.mxu0 %v3478
  %3662 = vmatmul.bf16.gmra.mxu0 %v3217
  %v3663 = vpop.f32.mrf.mxu0
  %v3664 = vpop.f32.mrf.mxu0
  %v3665 = vadd.f32 0.0, %v3664
  %3666 = vdwg.mxu0
  %3667 = vmatpush.bf16.msra.mxu0 %v3535
  %3668 = vmatpush.bf16.msra.mxu0 %v3527
  %3669 = vmatpush.bf16.msra.mxu0 %v3519
  %3670 = vmatpush.bf16.msra.mxu0 %v3511
  %3671 = vmatpush.bf16.msra.mxu0 %v3503
  %3672 = vmatpush.bf16.msra.mxu0 %v3495
  %3673 = vmatpush.bf16.msra.mxu0 %v3487
  %3674 = vmatpush.bf16.msra.mxu0 %v3479
  %3675 = vmatmul.bf16.gmra.mxu0 %v3217
  %v3676 = vpop.f32.mrf.mxu0
  %v3677 = vpop.f32.mrf.mxu0
  %v3678 = vadd.f32 0.0, %v3677
  %3679 = vdwg.mxu0
  %3680 = vmatpush.bf16.msra.mxu0 %v3536
  %3681 = vmatpush.bf16.msra.mxu0 %v3528
  %3682 = vmatpush.bf16.msra.mxu0 %v3520
  %3683 = vmatpush.bf16.msra.mxu0 %v3512
  %3684 = vmatpush.bf16.msra.mxu0 %v3504
  %3685 = vmatpush.bf16.msra.mxu0 %v3496
  %3686 = vmatpush.bf16.msra.mxu0 %v3488
  %3687 = vmatpush.bf16.msra.mxu0 %v3480
  %3688 = vmatmul.bf16.gmra.mxu0 %v3217
  %v3689 = vpop.f32.mrf.mxu0
  %v3690 = vpop.f32.mrf.mxu0
  %v3691 = vadd.f32 0.0, %v3690
  %3692 = vdwg.mxu0
  %3693 = vmatpush.bf16.msra.mxu0 %v3537
  %3694 = vmatpush.bf16.msra.mxu0 %v3529
  %3695 = vmatpush.bf16.msra.mxu0 %v3521
  %3696 = vmatpush.bf16.msra.mxu0 %v3513
  %3697 = vmatpush.bf16.msra.mxu0 %v3505
  %3698 = vmatpush.bf16.msra.mxu0 %v3497
  %3699 = vmatpush.bf16.msra.mxu0 %v3489
  %3700 = vmatpush.bf16.msra.mxu0 %v3481
  %3701 = vmatmul.bf16.gmra.mxu0 %v3217
  %v3702 = vpop.f32.mrf.mxu0
  %v3703 = vpop.f32.mrf.mxu0
  %v3704 = vadd.f32 0.0, %v3703
  %3705 = vdwg.mxu0
  %v3706 = vld [vmem:[%s1808] sm:$0xff]
  %v3707 = vld [vmem:[%s1808 + $0x8] sm:$0xff]
  %v3708 = vld [vmem:[%s1808 + $0x10] sm:$0xff]
  %v3709 = vld [vmem:[%s1808 + $0x18] sm:$0xff]
  %v3710 = vadd.f32 %v3706, %v3612
  %v3711 = vadd.f32 %v3707, %v3625
  %v3712 = vadd.f32 %v3708, %v3638
  %v3713 = vadd.f32 %v3709, %v3651
  %v3714 = vld [vmem:[%s1799 + $0x20] sm:$0xff]
  %v3715 = vld [vmem:[%s1799 + $0x28] sm:$0xff]
  %v3716 = vld [vmem:[%s1799 + $0x30] sm:$0xff]
  %v3717 = vld [vmem:[%s1799 + $0x38] sm:$0xff]
  %v3718 = vadd.f32 %v3714, %v3665
  %v3719 = vadd.f32 %v3715, %v3678
  %v3720 = vadd.f32 %v3716, %v3691
  %v3721 = vadd.f32 %v3717, %v3704
  %v3722 = vxor.u32 %v3710, 2147483648
  %v3723 = vxor.u32 %v3718, 2147483648
  %v3724 = vmul.f32 %v3722, 1.442695
  %v3725 = vpow.pop %v3724
  %v3726 = vmul.f32 %v3723, 1.442695
  %v3727 = vpow.pop %v3726
  %v3728 = vadd.f32 %v3725, 1.0
  %v3729 = vadd.f32 %v3727, 1.0
  %v3730 = vrcp.pop %v3728
  %v3731 = vmul.f32 %v3728, %v3730
  %v3732 = vsub.f32 1.0, %v3731
  %v3733 = vmul.f32 %v3730, %v3732
  %v3734 = vadd.f32 %v3730, %v3733
  %vm3735 = vweird.f32 %v3728
  %vm3736 = vweird.f32 %v3730
  %vm3737 = vmor %vm3735, %vm3736
  %v3738 = vsel %vm3737, %v3730, %v3734
  %v3739 = vand.u32 2147483647, %v3728
  %vm3740 = vcmp.eq.f32.partialorder %v3739, 8.507059e+37
  %v3741 = vand.u32 %v3728, 2147483648
  %v3742 = vor.u32 1.1754944e-38, %v3741
  %v3743 = vsel %vm3740, %v3742, %v3738
  %v3744 = vmul.f32 1.0, %v3743
  %v3745 = vrcp.pop %v3729
  %v3746 = vmul.f32 %v3729, %v3745
  %v3747 = vsub.f32 1.0, %v3746
  %v3748 = vmul.f32 %v3745, %v3747
  %v3749 = vadd.f32 %v3745, %v3748
  %vm3750 = vweird.f32 %v3729
  %vm3751 = vweird.f32 %v3745
  %vm3752 = vmor %vm3750, %vm3751
  %v3753 = vsel %vm3752, %v3745, %v3749
  %v3754 = vand.u32 2147483647, %v3729
  %vm3755 = vcmp.eq.f32.partialorder %v3754, 8.507059e+37
  %v3756 = vand.u32 %v3729, 2147483648
  %v3757 = vor.u32 1.1754944e-38, %v3756
  %v3758 = vsel %vm3755, %v3757, %v3753
  %v3759 = vmul.f32 1.0, %v3758
  %v3760 = vxor.u32 %v3711, 2147483648
  %v3761 = vxor.u32 %v3719, 2147483648
  %v3762 = vmul.f32 %v3760, 1.442695
  %v3763 = vpow.pop %v3762
  %v3764 = vmul.f32 %v3761, 1.442695
  %v3765 = vpow.pop %v3764
  %v3766 = vadd.f32 %v3763, 1.0
  %v3767 = vadd.f32 %v3765, 1.0
  %v3768 = vrcp.pop %v3766
  %v3769 = vmul.f32 %v3766, %v3768
  %v3770 = vsub.f32 1.0, %v3769
  %v3771 = vmul.f32 %v3768, %v3770
  %v3772 = vadd.f32 %v3768, %v3771
  %vm3773 = vweird.f32 %v3766
  %vm3774 = vweird.f32 %v3768
  %vm3775 = vmor %vm3773, %vm3774
  %v3776 = vsel %vm3775, %v3768, %v3772
  %v3777 = vand.u32 2147483647, %v3766
  %vm3778 = vcmp.eq.f32.partialorder %v3777, 8.507059e+37
  %v3779 = vand.u32 %v3766, 2147483648
  %v3780 = vor.u32 1.1754944e-38, %v3779
  %v3781 = vsel %vm3778, %v3780, %v3776
  %v3782 = vmul.f32 1.0, %v3781
  %v3783 = vrcp.pop %v3767
  %v3784 = vmul.f32 %v3767, %v3783
  %v3785 = vsub.f32 1.0, %v3784
  %v3786 = vmul.f32 %v3783, %v3785
  %v3787 = vadd.f32 %v3783, %v3786
  %vm3788 = vweird.f32 %v3767
  %vm3789 = vweird.f32 %v3783
  %vm3790 = vmor %vm3788, %vm3789
  %v3791 = vsel %vm3790, %v3783, %v3787
  %v3792 = vand.u32 2147483647, %v3767
  %vm3793 = vcmp.eq.f32.partialorder %v3792, 8.507059e+37
  %v3794 = vand.u32 %v3767, 2147483648
  %v3795 = vor.u32 1.1754944e-38, %v3794
  %v3796 = vsel %vm3793, %v3795, %v3791
  %v3797 = vmul.f32 1.0, %v3796
  %v3798 = vtanh.pop %v3712
  %v3799 = vtanh.pop %v3720
  %v3800 = vxor.u32 %v3713, 2147483648
  %v3801 = vxor.u32 %v3721, 2147483648
  %v3802 = vmul.f32 %v3800, 1.442695
  %v3803 = vpow.pop %v3802
  %v3804 = vmul.f32 %v3801, 1.442695
  %v3805 = vpow.pop %v3804
  %v3806 = vadd.f32 %v3803, 1.0
  %v3807 = vadd.f32 %v3805, 1.0
  %v3808 = vrcp.pop %v3806
  %v3809 = vmul.f32 %v3806, %v3808
  %v3810 = vsub.f32 1.0, %v3809
  %v3811 = vmul.f32 %v3808, %v3810
  %v3812 = vadd.f32 %v3808, %v3811
  %vm3813 = vweird.f32 %v3806
  %vm3814 = vweird.f32 %v3808
  %vm3815 = vmor %vm3813, %vm3814
  %v3816 = vsel %vm3815, %v3808, %v3812
  %v3817 = vand.u32 2147483647, %v3806
  %vm3818 = vcmp.eq.f32.partialorder %v3817, 8.507059e+37
  %v3819 = vand.u32 %v3806, 2147483648
  %v3820 = vor.u32 1.1754944e-38, %v3819
  %v3821 = vsel %vm3818, %v3820, %v3816
  %v3822 = vmul.f32 1.0, %v3821
  %v3823 = vrcp.pop %v3807
  %v3824 = vmul.f32 %v3807, %v3823
  %v3825 = vsub.f32 1.0, %v3824
  %v3826 = vmul.f32 %v3823, %v3825
  %v3827 = vadd.f32 %v3823, %v3826
  %vm3828 = vweird.f32 %v3807
  %vm3829 = vweird.f32 %v3823
  %vm3830 = vmor %vm3828, %vm3829
  %v3831 = vsel %vm3830, %v3823, %v3827
  %v3832 = vand.u32 2147483647, %v3807
  %vm3833 = vcmp.eq.f32.partialorder %v3832, 8.507059e+37
  %v3834 = vand.u32 %v3807, 2147483648
  %v3835 = vor.u32 1.1754944e-38, %v3834
  %v3836 = vsel %vm3833, %v3835, %v3831
  %v3837 = vmul.f32 1.0, %v3836
  %v3838 = vmul.f32 %v3782, %v3209
  %v3839 = vmul.f32 %v3797, %v3210
  %v3840 = vmul.f32 %v3744, %v3798
  %v3841 = vmul.f32 %v3759, %v3799
  %v3842 = vadd.f32 %v3838, %v3840
  %v3843 = vadd.f32 %v3839, %v3841
  %v3844 = vtanh.pop %v3842
  %v3845 = vtanh.pop %v3843
  %v3846 = vmul.f32 %v3822, %v3844
  %v3847 = vmul.f32 %v3837, %v3845
  %3848 = vst [vmem:[%s1945] sm:$0xff] %v3846
  %3849 = vst [vmem:[%s1943 + $0x8] sm:$0xff] %v3847
  %v3850 = vpack.c.bf16 %v3847, %v3846
  %v3851 = vld [vmem:[%s2] sm:$0xff]
  %v3852 = vld [vmem:[%s2 + $0x8] sm:$0xff]
  %v3853 = vld [vmem:[%s2 + $0x10] sm:$0xff]
  %v3854 = vld [vmem:[%s2 + $0x18] sm:$0xff]
  %v3855 = vld [vmem:[%s2 + $0x20] sm:$0xff]
  %v3856 = vld [vmem:[%s2 + $0x28] sm:$0xff]
  %v3857 = vld [vmem:[%s2 + $0x30] sm:$0xff]
  %v3858 = vld [vmem:[%s2 + $0x38] sm:$0xff]
  %v3859 = vld [vmem:[%s2 + $0x40] sm:$0xff]
  %v3860 = vld [vmem:[%s2 + $0x48] sm:$0xff]
  %v3861 = vld [vmem:[%s2 + $0x50] sm:$0xff]
  %v3862 = vld [vmem:[%s2 + $0x58] sm:$0xff]
  %v3863 = vld [vmem:[%s2 + $0x60] sm:$0xff]
  %v3864 = vld [vmem:[%s2 + $0x68] sm:$0xff]
  %v3865 = vld [vmem:[%s2 + $0x70] sm:$0xff]
  %v3866 = vld [vmem:[%s2 + $0x78] sm:$0xff]
  %v3867 = vld [vmem:[%s2 + $0x80] sm:$0xff]
  %v3868 = vld [vmem:[%s2 + $0x88] sm:$0xff]
  %v3869 = vld [vmem:[%s2 + $0x90] sm:$0xff]
  %v3870 = vld [vmem:[%s2 + $0x98] sm:$0xff]
  %v3871 = vld [vmem:[%s2 + $0xa0] sm:$0xff]
  %v3872 = vld [vmem:[%s2 + $0xa8] sm:$0xff]
  %v3873 = vld [vmem:[%s2 + $0xb0] sm:$0xff]
  %v3874 = vld [vmem:[%s2 + $0xb8] sm:$0xff]
  %v3875 = vld [vmem:[%s2 + $0xc0] sm:$0xff]
  %v3876 = vld [vmem:[%s2 + $0xc8] sm:$0xff]
  %v3877 = vld [vmem:[%s2 + $0xd0] sm:$0xff]
  %v3878 = vld [vmem:[%s2 + $0xd8] sm:$0xff]
  %v3879 = vld [vmem:[%s2 + $0xe0] sm:$0xff]
  %v3880 = vld [vmem:[%s2 + $0xe8] sm:$0xff]
  %v3881 = vld [vmem:[%s2 + $0xf0] sm:$0xff]
  %v3882 = vld [vmem:[%s2 + $0xf8] sm:$0xff]
  %v3883 = vld [vmem:[%s2 + $0x100] sm:$0xff]
  %v3884 = vld [vmem:[%s2 + $0x108] sm:$0xff]
  %v3885 = vld [vmem:[%s2 + $0x110] sm:$0xff]
  %v3886 = vld [vmem:[%s2 + $0x118] sm:$0xff]
  %v3887 = vld [vmem:[%s2 + $0x120] sm:$0xff]
  %v3888 = vld [vmem:[%s2 + $0x128] sm:$0xff]
  %v3889 = vld [vmem:[%s2 + $0x130] sm:$0xff]
  %v3890 = vld [vmem:[%s2 + $0x138] sm:$0xff]
  %v3891 = vld [vmem:[%s2 + $0x140] sm:$0xff]
  %v3892 = vld [vmem:[%s2 + $0x148] sm:$0xff]
  %v3893 = vld [vmem:[%s2 + $0x150] sm:$0xff]
  %v3894 = vld [vmem:[%s2 + $0x158] sm:$0xff]
  %v3895 = vld [vmem:[%s2 + $0x160] sm:$0xff]
  %v3896 = vld [vmem:[%s2 + $0x168] sm:$0xff]
  %v3897 = vld [vmem:[%s2 + $0x170] sm:$0xff]
  %v3898 = vld [vmem:[%s2 + $0x178] sm:$0xff]
  %v3899 = vld [vmem:[%s2 + $0x180] sm:$0xff]
  %v3900 = vld [vmem:[%s2 + $0x188] sm:$0xff]
  %v3901 = vld [vmem:[%s2 + $0x190] sm:$0xff]
  %v3902 = vld [vmem:[%s2 + $0x198] sm:$0xff]
  %v3903 = vld [vmem:[%s2 + $0x1a0] sm:$0xff]
  %v3904 = vld [vmem:[%s2 + $0x1a8] sm:$0xff]
  %v3905 = vld [vmem:[%s2 + $0x1b0] sm:$0xff]
  %v3906 = vld [vmem:[%s2 + $0x1b8] sm:$0xff]
  %v3907 = vld [vmem:[%s2 + $0x1c0] sm:$0xff]
  %v3908 = vld [vmem:[%s2 + $0x1c8] sm:$0xff]
  %v3909 = vld [vmem:[%s2 + $0x1d0] sm:$0xff]
  %v3910 = vld [vmem:[%s2 + $0x1d8] sm:$0xff]
  %v3911 = vld [vmem:[%s2 + $0x1e0] sm:$0xff]
  %v3912 = vld [vmem:[%s2 + $0x1e8] sm:$0xff]
  %v3913 = vld [vmem:[%s2 + $0x1f0] sm:$0xff]
  %v3914 = vld [vmem:[%s2 + $0x1f8] sm:$0xff]
  %v3979 = vunpack.c.l.b16 %v3851
  %v3980 = vunpack.c.h.b16 %v3851
  %v3981 = vunpack.c.l.b16 %v3852
  %v3982 = vunpack.c.h.b16 %v3852
  %v3983 = vunpack.c.l.b16 %v3853
  %v3984 = vunpack.c.h.b16 %v3853
  %v3985 = vunpack.c.l.b16 %v3854
  %v3986 = vunpack.c.h.b16 %v3854
  %v3987 = vunpack.c.l.b16 %v3855
  %v3988 = vunpack.c.h.b16 %v3855
  %v3989 = vunpack.c.l.b16 %v3856
  %v3990 = vunpack.c.h.b16 %v3856
  %v3991 = vunpack.c.l.b16 %v3857
  %v3992 = vunpack.c.h.b16 %v3857
  %v3993 = vunpack.c.l.b16 %v3858
  %v3994 = vunpack.c.h.b16 %v3858
  %v3995 = vunpack.c.l.b16 %v3859
  %v3996 = vunpack.c.h.b16 %v3859
  %v3997 = vunpack.c.l.b16 %v3860
  %v3998 = vunpack.c.h.b16 %v3860
  %v3999 = vunpack.c.l.b16 %v3861
  %v4000 = vunpack.c.h.b16 %v3861
  %v4001 = vunpack.c.l.b16 %v3862
  %v4002 = vunpack.c.h.b16 %v3862
  %v4003 = vunpack.c.l.b16 %v3863
  %v4004 = vunpack.c.h.b16 %v3863
  %v4005 = vunpack.c.l.b16 %v3864
  %v4006 = vunpack.c.h.b16 %v3864
  %v4007 = vunpack.c.l.b16 %v3865
  %v4008 = vunpack.c.h.b16 %v3865
  %v4009 = vunpack.c.l.b16 %v3866
  %v4010 = vunpack.c.h.b16 %v3866
  %v4011 = vunpack.c.l.b16 %v3867
  %v4012 = vunpack.c.h.b16 %v3867
  %v4013 = vunpack.c.l.b16 %v3868
  %v4014 = vunpack.c.h.b16 %v3868
  %v4015 = vunpack.c.l.b16 %v3869
  %v4016 = vunpack.c.h.b16 %v3869
  %v4017 = vunpack.c.l.b16 %v3870
  %v4018 = vunpack.c.h.b16 %v3870
  %v4019 = vunpack.c.l.b16 %v3871
  %v4020 = vunpack.c.h.b16 %v3871
  %v4021 = vunpack.c.l.b16 %v3872
  %v4022 = vunpack.c.h.b16 %v3872
  %v4023 = vunpack.c.l.b16 %v3873
  %v4024 = vunpack.c.h.b16 %v3873
  %v4025 = vunpack.c.l.b16 %v3874
  %v4026 = vunpack.c.h.b16 %v3874
  %v4027 = vunpack.c.l.b16 %v3875
  %v4028 = vunpack.c.h.b16 %v3875
  %v4029 = vunpack.c.l.b16 %v3876
  %v4030 = vunpack.c.h.b16 %v3876
  %v4031 = vunpack.c.l.b16 %v3877
  %v4032 = vunpack.c.h.b16 %v3877
  %v4033 = vunpack.c.l.b16 %v3878
  %v4034 = vunpack.c.h.b16 %v3878
  %v4035 = vunpack.c.l.b16 %v3879
  %v4036 = vunpack.c.h.b16 %v3879
  %v4037 = vunpack.c.l.b16 %v3880
  %v4038 = vunpack.c.h.b16 %v3880
  %v4039 = vunpack.c.l.b16 %v3881
  %v4040 = vunpack.c.h.b16 %v3881
  %v4041 = vunpack.c.l.b16 %v3882
  %v4042 = vunpack.c.h.b16 %v3882
  %v4043 = vunpack.c.l.b16 %v3883
  %v4044 = vunpack.c.h.b16 %v3883
  %v4045 = vunpack.c.l.b16 %v3884
  %v4046 = vunpack.c.h.b16 %v3884
  %v4047 = vunpack.c.l.b16 %v3885
  %v4048 = vunpack.c.h.b16 %v3885
  %v4049 = vunpack.c.l.b16 %v3886
  %v4050 = vunpack.c.h.b16 %v3886
  %v4051 = vunpack.c.l.b16 %v3887
  %v4052 = vunpack.c.h.b16 %v3887
  %v4053 = vunpack.c.l.b16 %v3888
  %v4054 = vunpack.c.h.b16 %v3888
  %v4055 = vunpack.c.l.b16 %v3889
  %v4056 = vunpack.c.h.b16 %v3889
  %v4057 = vunpack.c.l.b16 %v3890
  %v4058 = vunpack.c.h.b16 %v3890
  %v4059 = vunpack.c.l.b16 %v3891
  %v4060 = vunpack.c.h.b16 %v3891
  %v4061 = vunpack.c.l.b16 %v3892
  %v4062 = vunpack.c.h.b16 %v3892
  %v4063 = vunpack.c.l.b16 %v3893
  %v4064 = vunpack.c.h.b16 %v3893
  %v4065 = vunpack.c.l.b16 %v3894
  %v4066 = vunpack.c.h.b16 %v3894
  %v4067 = vunpack.c.l.b16 %v3895
  %v4068 = vunpack.c.h.b16 %v3895
  %v4069 = vunpack.c.l.b16 %v3896
  %v4070 = vunpack.c.h.b16 %v3896
  %v4071 = vunpack.c.l.b16 %v3897
  %v4072 = vunpack.c.h.b16 %v3897
  %v4073 = vunpack.c.l.b16 %v3898
  %v4074 = vunpack.c.h.b16 %v3898
  %v4075 = vunpack.c.l.b16 %v3899
  %v4076 = vunpack.c.h.b16 %v3899
  %v4077 = vunpack.c.l.b16 %v3900
  %v4078 = vunpack.c.h.b16 %v3900
  %v4079 = vunpack.c.l.b16 %v3901
  %v4080 = vunpack.c.h.b16 %v3901
  %v4081 = vunpack.c.l.b16 %v3902
  %v4082 = vunpack.c.h.b16 %v3902
  %v4083 = vunpack.c.l.b16 %v3903
  %v4084 = vunpack.c.h.b16 %v3903
  %v4085 = vunpack.c.l.b16 %v3904
  %v4086 = vunpack.c.h.b16 %v3904
  %v4087 = vunpack.c.l.b16 %v3905
  %v4088 = vunpack.c.h.b16 %v3905
  %v4089 = vunpack.c.l.b16 %v3906
  %v4090 = vunpack.c.h.b16 %v3906
  %v4091 = vunpack.c.l.b16 %v3907
  %v4092 = vunpack.c.h.b16 %v3907
  %v4093 = vunpack.c.l.b16 %v3908
  %v4094 = vunpack.c.h.b16 %v3908
  %v4095 = vunpack.c.l.b16 %v3909
  %v4096 = vunpack.c.h.b16 %v3909
  %v4097 = vunpack.c.l.b16 %v3910
  %v4098 = vunpack.c.h.b16 %v3910
  %v4099 = vunpack.c.l.b16 %v3911
  %v4100 = vunpack.c.h.b16 %v3911
  %v4101 = vunpack.c.l.b16 %v3912
  %v4102 = vunpack.c.h.b16 %v3912
  %v4103 = vunpack.c.l.b16 %v3913
  %v4104 = vunpack.c.h.b16 %v3913
  %v4105 = vunpack.c.l.b16 %v3914
  %v4106 = vunpack.c.h.b16 %v3914
  %v4107 = vpack.c.b16 %v3987, %v3979
  %v4108 = vpack.c.b16 %v3988, %v3980
  %v4109 = vpack.c.b16 %v3989, %v3981
  %v4110 = vpack.c.b16 %v3990, %v3982
  %v4111 = vpack.c.b16 %v3991, %v3983
  %v4112 = vpack.c.b16 %v3992, %v3984
  %v4113 = vpack.c.b16 %v3993, %v3985
  %v4114 = vpack.c.b16 %v3994, %v3986
  %v4115 = vpack.c.b16 %v4003, %v3995
  %v4116 = vpack.c.b16 %v4004, %v3996
  %v4117 = vpack.c.b16 %v4005, %v3997
  %v4118 = vpack.c.b16 %v4006, %v3998
  %v4119 = vpack.c.b16 %v4007, %v3999
  %v4120 = vpack.c.b16 %v4008, %v4000
  %v4121 = vpack.c.b16 %v4009, %v4001
  %v4122 = vpack.c.b16 %v4010, %v4002
  %v4123 = vpack.c.b16 %v4019, %v4011
  %v4124 = vpack.c.b16 %v4020, %v4012
  %v4125 = vpack.c.b16 %v4021, %v4013
  %v4126 = vpack.c.b16 %v4022, %v4014
  %v4127 = vpack.c.b16 %v4023, %v4015
  %v4128 = vpack.c.b16 %v4024, %v4016
  %v4129 = vpack.c.b16 %v4025, %v4017
  %v4130 = vpack.c.b16 %v4026, %v4018
  %v4131 = vpack.c.b16 %v4035, %v4027
  %v4132 = vpack.c.b16 %v4036, %v4028
  %v4133 = vpack.c.b16 %v4037, %v4029
  %v4134 = vpack.c.b16 %v4038, %v4030
  %v4135 = vpack.c.b16 %v4039, %v4031
  %v4136 = vpack.c.b16 %v4040, %v4032
  %v4137 = vpack.c.b16 %v4041, %v4033
  %v4138 = vpack.c.b16 %v4042, %v4034
  %v4139 = vpack.c.b16 %v4051, %v4043
  %v4140 = vpack.c.b16 %v4052, %v4044
  %v4141 = vpack.c.b16 %v4053, %v4045
  %v4142 = vpack.c.b16 %v4054, %v4046
  %v4143 = vpack.c.b16 %v4055, %v4047
  %v4144 = vpack.c.b16 %v4056, %v4048
  %v4145 = vpack.c.b16 %v4057, %v4049
  %v4146 = vpack.c.b16 %v4058, %v4050
  %v4147 = vpack.c.b16 %v4067, %v4059
  %v4148 = vpack.c.b16 %v4068, %v4060
  %v4149 = vpack.c.b16 %v4069, %v4061
  %v4150 = vpack.c.b16 %v4070, %v4062
  %v4151 = vpack.c.b16 %v4071, %v4063
  %v4152 = vpack.c.b16 %v4072, %v4064
  %v4153 = vpack.c.b16 %v4073, %v4065
  %v4154 = vpack.c.b16 %v4074, %v4066
  %v4155 = vpack.c.b16 %v4083, %v4075
  %v4156 = vpack.c.b16 %v4084, %v4076
  %v4157 = vpack.c.b16 %v4085, %v4077
  %v4158 = vpack.c.b16 %v4086, %v4078
  %v4159 = vpack.c.b16 %v4087, %v4079
  %v4160 = vpack.c.b16 %v4088, %v4080
  %v4161 = vpack.c.b16 %v4089, %v4081
  %v4162 = vpack.c.b16 %v4090, %v4082
  %v4163 = vpack.c.b16 %v4099, %v4091
  %v4164 = vpack.c.b16 %v4100, %v4092
  %v4165 = vpack.c.b16 %v4101, %v4093
  %v4166 = vpack.c.b16 %v4102, %v4094
  %v4167 = vpack.c.b16 %v4103, %v4095
  %v4168 = vpack.c.b16 %v4104, %v4096
  %v4169 = vpack.c.b16 %v4105, %v4097
  %v4170 = vpack.c.b16 %v4106, %v4098
  %4235 = vmatpush.bf16.msra.mxu0 %v4163
  %4236 = vmatpush.bf16.msra.mxu0 %v4155
  %4237 = vmatpush.bf16.msra.mxu0 %v4147
  %4238 = vmatpush.bf16.msra.mxu0 %v4139
  %4239 = vmatpush.bf16.msra.mxu0 %v4131
  %4240 = vmatpush.bf16.msra.mxu0 %v4123
  %4241 = vmatpush.bf16.msra.mxu0 %v4115
  %4242 = vmatpush.bf16.msra.mxu0 %v4107
  %4243 = vmatmul.bf16.gmra.mxu0 %v3850
  %v4244 = vpop.f32.mrf.mxu0
  %v4245 = vadd.f32 0.0, %v4244
  %v4246 = vpop.f32.mrf.mxu0
  %4247 = vdwg.mxu0
  %4248 = vmatpush.bf16.msra.mxu0 %v4164
  %4249 = vmatpush.bf16.msra.mxu0 %v4156
  %4250 = vmatpush.bf16.msra.mxu0 %v4148
  %4251 = vmatpush.bf16.msra.mxu0 %v4140
  %4252 = vmatpush.bf16.msra.mxu0 %v4132
  %4253 = vmatpush.bf16.msra.mxu0 %v4124
  %4254 = vmatpush.bf16.msra.mxu0 %v4116
  %4255 = vmatpush.bf16.msra.mxu0 %v4108
  %4256 = vmatmul.bf16.gmra.mxu0 %v3850
  %v4257 = vpop.f32.mrf.mxu0
  %v4258 = vadd.f32 0.0, %v4257
  %v4259 = vpop.f32.mrf.mxu0
  %4260 = vdwg.mxu0
  %4261 = vmatpush.bf16.msra.mxu0 %v4165
  %4262 = vmatpush.bf16.msra.mxu0 %v4157
  %4263 = vmatpush.bf16.msra.mxu0 %v4149
  %4264 = vmatpush.bf16.msra.mxu0 %v4141
  %4265 = vmatpush.bf16.msra.mxu0 %v4133
  %4266 = vmatpush.bf16.msra.mxu0 %v4125
  %4267 = vmatpush.bf16.msra.mxu0 %v4117
  %4268 = vmatpush.bf16.msra.mxu0 %v4109
  %4269 = vmatmul.bf16.gmra.mxu0 %v3850
  %v4270 = vpop.f32.mrf.mxu0
  %v4271 = vadd.f32 0.0, %v4270
  %v4272 = vpop.f32.mrf.mxu0
  %4273 = vdwg.mxu0
  %4274 = vmatpush.bf16.msra.mxu0 %v4166
  %4275 = vmatpush.bf16.msra.mxu0 %v4158
  %4276 = vmatpush.bf16.msra.mxu0 %v4150
  %4277 = vmatpush.bf16.msra.mxu0 %v4142
  %4278 = vmatpush.bf16.msra.mxu0 %v4134
  %4279 = vmatpush.bf16.msra.mxu0 %v4126
  %4280 = vmatpush.bf16.msra.mxu0 %v4118
  %4281 = vmatpush.bf16.msra.mxu0 %v4110
  %4282 = vmatmul.bf16.gmra.mxu0 %v3850
  %v4283 = vpop.f32.mrf.mxu0
  %v4284 = vadd.f32 0.0, %v4283
  %v4285 = vpop.f32.mrf.mxu0
  %4286 = vdwg.mxu0
  %4287 = vmatpush.bf16.msra.mxu0 %v4167
  %4288 = vmatpush.bf16.msra.mxu0 %v4159
  %4289 = vmatpush.bf16.msra.mxu0 %v4151
  %4290 = vmatpush.bf16.msra.mxu0 %v4143
  %4291 = vmatpush.bf16.msra.mxu0 %v4135
  %4292 = vmatpush.bf16.msra.mxu0 %v4127
  %4293 = vmatpush.bf16.msra.mxu0 %v4119
  %4294 = vmatpush.bf16.msra.mxu0 %v4111
  %4295 = vmatmul.bf16.gmra.mxu0 %v3850
  %v4296 = vpop.f32.mrf.mxu0
  %v4297 = vpop.f32.mrf.mxu0
  %v4298 = vadd.f32 0.0, %v4297
  %4299 = vdwg.mxu0
  %4300 = vmatpush.bf16.msra.mxu0 %v4168
  %4301 = vmatpush.bf16.msra.mxu0 %v4160
  %4302 = vmatpush.bf16.msra.mxu0 %v4152
  %4303 = vmatpush.bf16.msra.mxu0 %v4144
  %4304 = vmatpush.bf16.msra.mxu0 %v4136
  %4305 = vmatpush.bf16.msra.mxu0 %v4128
  %4306 = vmatpush.bf16.msra.mxu0 %v4120
  %4307 = vmatpush.bf16.msra.mxu0 %v4112
  %4308 = vmatmul.bf16.gmra.mxu0 %v3850
  %v4309 = vpop.f32.mrf.mxu0
  %v4310 = vpop.f32.mrf.mxu0
  %v4311 = vadd.f32 0.0, %v4310
  %4312 = vdwg.mxu0
  %4313 = vmatpush.bf16.msra.mxu0 %v4169
  %4314 = vmatpush.bf16.msra.mxu0 %v4161
  %4315 = vmatpush.bf16.msra.mxu0 %v4153
  %4316 = vmatpush.bf16.msra.mxu0 %v4145
  %4317 = vmatpush.bf16.msra.mxu0 %v4137
  %4318 = vmatpush.bf16.msra.mxu0 %v4129
  %4319 = vmatpush.bf16.msra.mxu0 %v4121
  %4320 = vmatpush.bf16.msra.mxu0 %v4113
  %4321 = vmatmul.bf16.gmra.mxu0 %v3850
  %v4322 = vpop.f32.mrf.mxu0
  %v4323 = vpop.f32.mrf.mxu0
  %v4324 = vadd.f32 0.0, %v4323
  %4325 = vdwg.mxu0
  %4326 = vmatpush.bf16.msra.mxu0 %v4170
  %4327 = vmatpush.bf16.msra.mxu0 %v4162
  %4328 = vmatpush.bf16.msra.mxu0 %v4154
  %4329 = vmatpush.bf16.msra.mxu0 %v4146
  %4330 = vmatpush.bf16.msra.mxu0 %v4138
  %4331 = vmatpush.bf16.msra.mxu0 %v4130
  %4332 = vmatpush.bf16.msra.mxu0 %v4122
  %4333 = vmatpush.bf16.msra.mxu0 %v4114
  %4334 = vmatmul.bf16.gmra.mxu0 %v3850
  %v4335 = vpop.f32.mrf.mxu0
  %v4336 = vpop.f32.mrf.mxu0
  %v4337 = vadd.f32 0.0, %v4336
  %4338 = vdwg.mxu0
  %v4339 = vld [vmem:[%s1171] sm:$0xff]
  %v4340 = vld [vmem:[%s1171 + $0x8] sm:$0xff]
  %v4341 = vld [vmem:[%s1171 + $0x10] sm:$0xff]
  %v4342 = vld [vmem:[%s1171 + $0x18] sm:$0xff]
  %v4343 = vadd.f32 %v4339, %v4245
  %v4344 = vadd.f32 %v4340, %v4258
  %v4345 = vadd.f32 %v4341, %v4271
  %v4346 = vadd.f32 %v4342, %v4284
  %v4347 = vld [vmem:[%s1162 + $0x20] sm:$0xff]
  %v4348 = vld [vmem:[%s1162 + $0x28] sm:$0xff]
  %v4349 = vld [vmem:[%s1162 + $0x30] sm:$0xff]
  %v4350 = vld [vmem:[%s1162 + $0x38] sm:$0xff]
  %v4351 = vadd.f32 %v4347, %v4298
  %v4352 = vadd.f32 %v4348, %v4311
  %v4353 = vadd.f32 %v4349, %v4324
  %v4354 = vadd.f32 %v4350, %v4337
  %v4355 = vxor.u32 %v4343, 2147483648
  %v4356 = vxor.u32 %v4351, 2147483648
  %v4357 = vmul.f32 %v4355, 1.442695
  %v4358 = vpow.pop %v4357
  %v4359 = vmul.f32 %v4356, 1.442695
  %v4360 = vpow.pop %v4359
  %v4361 = vadd.f32 %v4358, 1.0
  %v4362 = vadd.f32 %v4360, 1.0
  %v4363 = vrcp.pop %v4361
  %v4364 = vmul.f32 %v4361, %v4363
  %v4365 = vsub.f32 1.0, %v4364
  %v4366 = vmul.f32 %v4363, %v4365
  %v4367 = vadd.f32 %v4363, %v4366
  %vm4368 = vweird.f32 %v4361
  %vm4369 = vweird.f32 %v4363
  %vm4370 = vmor %vm4368, %vm4369
  %v4371 = vsel %vm4370, %v4363, %v4367
  %v4372 = vand.u32 2147483647, %v4361
  %vm4373 = vcmp.eq.f32.partialorder %v4372, 8.507059e+37
  %v4374 = vand.u32 %v4361, 2147483648
  %v4375 = vor.u32 1.1754944e-38, %v4374
  %v4376 = vsel %vm4373, %v4375, %v4371
  %v4377 = vmul.f32 1.0, %v4376
  %v4378 = vrcp.pop %v4362
  %v4379 = vmul.f32 %v4362, %v4378
  %v4380 = vsub.f32 1.0, %v4379
  %v4381 = vmul.f32 %v4378, %v4380
  %v4382 = vadd.f32 %v4378, %v4381
  %vm4383 = vweird.f32 %v4362
  %vm4384 = vweird.f32 %v4378
  %vm4385 = vmor %vm4383, %vm4384
  %v4386 = vsel %vm4385, %v4378, %v4382
  %v4387 = vand.u32 2147483647, %v4362
  %vm4388 = vcmp.eq.f32.partialorder %v4387, 8.507059e+37
  %v4389 = vand.u32 %v4362, 2147483648
  %v4390 = vor.u32 1.1754944e-38, %v4389
  %v4391 = vsel %vm4388, %v4390, %v4386
  %v4392 = vmul.f32 1.0, %v4391
  %v4393 = vxor.u32 %v4344, 2147483648
  %v4394 = vxor.u32 %v4352, 2147483648
  %v4395 = vmul.f32 %v4393, 1.442695
  %v4396 = vpow.pop %v4395
  %v4397 = vmul.f32 %v4394, 1.442695
  %v4398 = vpow.pop %v4397
  %v4399 = vadd.f32 %v4396, 1.0
  %v4400 = vadd.f32 %v4398, 1.0
  %v4401 = vrcp.pop %v4399
  %v4402 = vmul.f32 %v4399, %v4401
  %v4403 = vsub.f32 1.0, %v4402
  %v4404 = vmul.f32 %v4401, %v4403
  %v4405 = vadd.f32 %v4401, %v4404
  %vm4406 = vweird.f32 %v4399
  %vm4407 = vweird.f32 %v4401
  %vm4408 = vmor %vm4406, %vm4407
  %v4409 = vsel %vm4408, %v4401, %v4405
  %v4410 = vand.u32 2147483647, %v4399
  %vm4411 = vcmp.eq.f32.partialorder %v4410, 8.507059e+37
  %v4412 = vand.u32 %v4399, 2147483648
  %v4413 = vor.u32 1.1754944e-38, %v4412
  %v4414 = vsel %vm4411, %v4413, %v4409
  %v4415 = vmul.f32 1.0, %v4414
  %v4416 = vrcp.pop %v4400
  %v4417 = vmul.f32 %v4400, %v4416
  %v4418 = vsub.f32 1.0, %v4417
  %v4419 = vmul.f32 %v4416, %v4418
  %v4420 = vadd.f32 %v4416, %v4419
  %vm4421 = vweird.f32 %v4400
  %vm4422 = vweird.f32 %v4416
  %vm4423 = vmor %vm4421, %vm4422
  %v4424 = vsel %vm4423, %v4416, %v4420
  %v4425 = vand.u32 2147483647, %v4400
  %vm4426 = vcmp.eq.f32.partialorder %v4425, 8.507059e+37
  %v4427 = vand.u32 %v4400, 2147483648
  %v4428 = vor.u32 1.1754944e-38, %v4427
  %v4429 = vsel %vm4426, %v4428, %v4424
  %v4430 = vmul.f32 1.0, %v4429
  %v4431 = vtanh.pop %v4345
  %v4432 = vtanh.pop %v4353
  %v4433 = vxor.u32 %v4346, 2147483648
  %v4434 = vxor.u32 %v4354, 2147483648
  %v4435 = vmul.f32 %v4433, 1.442695
  %v4436 = vpow.pop %v4435
  %v4437 = vmul.f32 %v4434, 1.442695
  %v4438 = vpow.pop %v4437
  %v4439 = vadd.f32 %v4436, 1.0
  %v4440 = vadd.f32 %v4438, 1.0
  %v4441 = vrcp.pop %v4439
  %v4442 = vmul.f32 %v4439, %v4441
  %v4443 = vsub.f32 1.0, %v4442
  %v4444 = vmul.f32 %v4441, %v4443
  %v4445 = vadd.f32 %v4441, %v4444
  %vm4446 = vweird.f32 %v4439
  %vm4447 = vweird.f32 %v4441
  %vm4448 = vmor %vm4446, %vm4447
  %v4449 = vsel %vm4448, %v4441, %v4445
  %v4450 = vand.u32 2147483647, %v4439
  %vm4451 = vcmp.eq.f32.partialorder %v4450, 8.507059e+37
  %v4452 = vand.u32 %v4439, 2147483648
  %v4453 = vor.u32 1.1754944e-38, %v4452
  %v4454 = vsel %vm4451, %v4453, %v4449
  %v4455 = vmul.f32 1.0, %v4454
  %v4456 = vrcp.pop %v4440
  %v4457 = vmul.f32 %v4440, %v4456
  %v4458 = vsub.f32 1.0, %v4457
  %v4459 = vmul.f32 %v4456, %v4458
  %v4460 = vadd.f32 %v4456, %v4459
  %vm4461 = vweird.f32 %v4440
  %vm4462 = vweird.f32 %v4456
  %vm4463 = vmor %vm4461, %vm4462
  %v4464 = vsel %vm4463, %v4456, %v4460
  %v4465 = vand.u32 2147483647, %v4440
  %vm4466 = vcmp.eq.f32.partialorder %v4465, 8.507059e+37
  %v4467 = vand.u32 %v4440, 2147483648
  %v4468 = vor.u32 1.1754944e-38, %v4467
  %v4469 = vsel %vm4466, %v4468, %v4464
  %v4470 = vmul.f32 1.0, %v4469
  %v4471 = vmul.f32 %v4415, %v3842
  %v4472 = vmul.f32 %v4430, %v3843
  %v4473 = vmul.f32 %v4377, %v4431
  %v4474 = vmul.f32 %v4392, %v4432
  %v4475 = vadd.f32 %v4471, %v4473
  %v4476 = vadd.f32 %v4472, %v4474
  %v4477 = vtanh.pop %v4475
  %v4478 = vtanh.pop %v4476
  %v4479 = vmul.f32 %v4455, %v4477
  %v4480 = vmul.f32 %v4470, %v4478
  %4481 = vst [vmem:[%s1308] sm:$0xff] %v4479
  %4482 = vst [vmem:[%s1306 + $0x8] sm:$0xff] %v4480
  %v4483 = vpack.c.bf16 %v4480, %v4479
  %v4484 = vld [vmem:[%s2] sm:$0xff]
  %v4485 = vld [vmem:[%s2 + $0x8] sm:$0xff]
  %v4486 = vld [vmem:[%s2 + $0x10] sm:$0xff]
  %v4487 = vld [vmem:[%s2 + $0x18] sm:$0xff]
  %v4488 = vld [vmem:[%s2 + $0x20] sm:$0xff]
  %v4489 = vld [vmem:[%s2 + $0x28] sm:$0xff]
  %v4490 = vld [vmem:[%s2 + $0x30] sm:$0xff]
  %v4491 = vld [vmem:[%s2 + $0x38] sm:$0xff]
  %v4492 = vld [vmem:[%s2 + $0x40] sm:$0xff]
  %v4493 = vld [vmem:[%s2 + $0x48] sm:$0xff]
  %v4494 = vld [vmem:[%s2 + $0x50] sm:$0xff]
  %v4495 = vld [vmem:[%s2 + $0x58] sm:$0xff]
  %v4496 = vld [vmem:[%s2 + $0x60] sm:$0xff]
  %v4497 = vld [vmem:[%s2 + $0x68] sm:$0xff]
  %v4498 = vld [vmem:[%s2 + $0x70] sm:$0xff]
  %v4499 = vld [vmem:[%s2 + $0x78] sm:$0xff]
  %v4500 = vld [vmem:[%s2 + $0x80] sm:$0xff]
  %v4501 = vld [vmem:[%s2 + $0x88] sm:$0xff]
  %v4502 = vld [vmem:[%s2 + $0x90] sm:$0xff]
  %v4503 = vld [vmem:[%s2 + $0x98] sm:$0xff]
  %v4504 = vld [vmem:[%s2 + $0xa0] sm:$0xff]
  %v4505 = vld [vmem:[%s2 + $0xa8] sm:$0xff]
  %v4506 = vld [vmem:[%s2 + $0xb0] sm:$0xff]
  %v4507 = vld [vmem:[%s2 + $0xb8] sm:$0xff]
  %v4508 = vld [vmem:[%s2 + $0xc0] sm:$0xff]
  %v4509 = vld [vmem:[%s2 + $0xc8] sm:$0xff]
  %v4510 = vld [vmem:[%s2 + $0xd0] sm:$0xff]
  %v4511 = vld [vmem:[%s2 + $0xd8] sm:$0xff]
  %v4512 = vld [vmem:[%s2 + $0xe0] sm:$0xff]
  %v4513 = vld [vmem:[%s2 + $0xe8] sm:$0xff]
  %v4514 = vld [vmem:[%s2 + $0xf0] sm:$0xff]
  %v4515 = vld [vmem:[%s2 + $0xf8] sm:$0xff]
  %v4516 = vld [vmem:[%s2 + $0x100] sm:$0xff]
  %v4517 = vld [vmem:[%s2 + $0x108] sm:$0xff]
  %v4518 = vld [vmem:[%s2 + $0x110] sm:$0xff]
  %v4519 = vld [vmem:[%s2 + $0x118] sm:$0xff]
  %v4520 = vld [vmem:[%s2 + $0x120] sm:$0xff]
  %v4521 = vld [vmem:[%s2 + $0x128] sm:$0xff]
  %v4522 = vld [vmem:[%s2 + $0x130] sm:$0xff]
  %v4523 = vld [vmem:[%s2 + $0x138] sm:$0xff]
  %v4524 = vld [vmem:[%s2 + $0x140] sm:$0xff]
  %v4525 = vld [vmem:[%s2 + $0x148] sm:$0xff]
  %v4526 = vld [vmem:[%s2 + $0x150] sm:$0xff]
  %v4527 = vld [vmem:[%s2 + $0x158] sm:$0xff]
  %v4528 = vld [vmem:[%s2 + $0x160] sm:$0xff]
  %v4529 = vld [vmem:[%s2 + $0x168] sm:$0xff]
  %v4530 = vld [vmem:[%s2 + $0x170] sm:$0xff]
  %v4531 = vld [vmem:[%s2 + $0x178] sm:$0xff]
  %v4532 = vld [vmem:[%s2 + $0x180] sm:$0xff]
  %v4533 = vld [vmem:[%s2 + $0x188] sm:$0xff]
  %v4534 = vld [vmem:[%s2 + $0x190] sm:$0xff]
  %v4535 = vld [vmem:[%s2 + $0x198] sm:$0xff]
  %v4536 = vld [vmem:[%s2 + $0x1a0] sm:$0xff]
  %v4537 = vld [vmem:[%s2 + $0x1a8] sm:$0xff]
  %v4538 = vld [vmem:[%s2 + $0x1b0] sm:$0xff]
  %v4539 = vld [vmem:[%s2 + $0x1b8] sm:$0xff]
  %v4540 = vld [vmem:[%s2 + $0x1c0] sm:$0xff]
  %v4541 = vld [vmem:[%s2 + $0x1c8] sm:$0xff]
  %v4542 = vld [vmem:[%s2 + $0x1d0] sm:$0xff]
  %v4543 = vld [vmem:[%s2 + $0x1d8] sm:$0xff]
  %v4544 = vld [vmem:[%s2 + $0x1e0] sm:$0xff]
  %v4545 = vld [vmem:[%s2 + $0x1e8] sm:$0xff]
  %v4546 = vld [vmem:[%s2 + $0x1f0] sm:$0xff]
  %v4547 = vld [vmem:[%s2 + $0x1f8] sm:$0xff]
  %v4612 = vunpack.c.l.b16 %v4484
  %v4613 = vunpack.c.h.b16 %v4484
  %v4614 = vunpack.c.l.b16 %v4485
  %v4615 = vunpack.c.h.b16 %v4485
  %v4616 = vunpack.c.l.b16 %v4486
  %v4617 = vunpack.c.h.b16 %v4486
  %v4618 = vunpack.c.l.b16 %v4487
  %v4619 = vunpack.c.h.b16 %v4487
  %v4620 = vunpack.c.l.b16 %v4488
  %v4621 = vunpack.c.h.b16 %v4488
  %v4622 = vunpack.c.l.b16 %v4489
  %v4623 = vunpack.c.h.b16 %v4489
  %v4624 = vunpack.c.l.b16 %v4490
  %v4625 = vunpack.c.h.b16 %v4490
  %v4626 = vunpack.c.l.b16 %v4491
  %v4627 = vunpack.c.h.b16 %v4491
  %v4628 = vunpack.c.l.b16 %v4492
  %v4629 = vunpack.c.h.b16 %v4492
  %v4630 = vunpack.c.l.b16 %v4493
  %v4631 = vunpack.c.h.b16 %v4493
  %v4632 = vunpack.c.l.b16 %v4494
  %v4633 = vunpack.c.h.b16 %v4494
  %v4634 = vunpack.c.l.b16 %v4495
  %v4635 = vunpack.c.h.b16 %v4495
  %v4636 = vunpack.c.l.b16 %v4496
  %v4637 = vunpack.c.h.b16 %v4496
  %v4638 = vunpack.c.l.b16 %v4497
  %v4639 = vunpack.c.h.b16 %v4497
  %v4640 = vunpack.c.l.b16 %v4498
  %v4641 = vunpack.c.h.b16 %v4498
  %v4642 = vunpack.c.l.b16 %v4499
  %v4643 = vunpack.c.h.b16 %v4499
  %v4644 = vunpack.c.l.b16 %v4500
  %v4645 = vunpack.c.h.b16 %v4500
  %v4646 = vunpack.c.l.b16 %v4501
  %v4647 = vunpack.c.h.b16 %v4501
  %v4648 = vunpack.c.l.b16 %v4502
  %v4649 = vunpack.c.h.b16 %v4502
  %v4650 = vunpack.c.l.b16 %v4503
  %v4651 = vunpack.c.h.b16 %v4503
  %v4652 = vunpack.c.l.b16 %v4504
  %v4653 = vunpack.c.h.b16 %v4504
  %v4654 = vunpack.c.l.b16 %v4505
  %v4655 = vunpack.c.h.b16 %v4505
  %v4656 = vunpack.c.l.b16 %v4506
  %v4657 = vunpack.c.h.b16 %v4506
  %v4658 = vunpack.c.l.b16 %v4507
  %v4659 = vunpack.c.h.b16 %v4507
  %v4660 = vunpack.c.l.b16 %v4508
  %v4661 = vunpack.c.h.b16 %v4508
  %v4662 = vunpack.c.l.b16 %v4509
  %v4663 = vunpack.c.h.b16 %v4509
  %v4664 = vunpack.c.l.b16 %v4510
  %v4665 = vunpack.c.h.b16 %v4510
  %v4666 = vunpack.c.l.b16 %v4511
  %v4667 = vunpack.c.h.b16 %v4511
  %v4668 = vunpack.c.l.b16 %v4512
  %v4669 = vunpack.c.h.b16 %v4512
  %v4670 = vunpack.c.l.b16 %v4513
  %v4671 = vunpack.c.h.b16 %v4513
  %v4672 = vunpack.c.l.b16 %v4514
  %v4673 = vunpack.c.h.b16 %v4514
  %v4674 = vunpack.c.l.b16 %v4515
  %v4675 = vunpack.c.h.b16 %v4515
  %v4676 = vunpack.c.l.b16 %v4516
  %v4677 = vunpack.c.h.b16 %v4516
  %v4678 = vunpack.c.l.b16 %v4517
  %v4679 = vunpack.c.h.b16 %v4517
  %v4680 = vunpack.c.l.b16 %v4518
  %v4681 = vunpack.c.h.b16 %v4518
  %v4682 = vunpack.c.l.b16 %v4519
  %v4683 = vunpack.c.h.b16 %v4519
  %v4684 = vunpack.c.l.b16 %v4520
  %v4685 = vunpack.c.h.b16 %v4520
  %v4686 = vunpack.c.l.b16 %v4521
  %v4687 = vunpack.c.h.b16 %v4521
  %v4688 = vunpack.c.l.b16 %v4522
  %v4689 = vunpack.c.h.b16 %v4522
  %v4690 = vunpack.c.l.b16 %v4523
  %v4691 = vunpack.c.h.b16 %v4523
  %v4692 = vunpack.c.l.b16 %v4524
  %v4693 = vunpack.c.h.b16 %v4524
  %v4694 = vunpack.c.l.b16 %v4525
  %v4695 = vunpack.c.h.b16 %v4525
  %v4696 = vunpack.c.l.b16 %v4526
  %v4697 = vunpack.c.h.b16 %v4526
  %v4698 = vunpack.c.l.b16 %v4527
  %v4699 = vunpack.c.h.b16 %v4527
  %v4700 = vunpack.c.l.b16 %v4528
  %v4701 = vunpack.c.h.b16 %v4528
  %v4702 = vunpack.c.l.b16 %v4529
  %v4703 = vunpack.c.h.b16 %v4529
  %v4704 = vunpack.c.l.b16 %v4530
  %v4705 = vunpack.c.h.b16 %v4530
  %v4706 = vunpack.c.l.b16 %v4531
  %v4707 = vunpack.c.h.b16 %v4531
  %v4708 = vunpack.c.l.b16 %v4532
  %v4709 = vunpack.c.h.b16 %v4532
  %v4710 = vunpack.c.l.b16 %v4533
  %v4711 = vunpack.c.h.b16 %v4533
  %v4712 = vunpack.c.l.b16 %v4534
  %v4713 = vunpack.c.h.b16 %v4534
  %v4714 = vunpack.c.l.b16 %v4535
  %v4715 = vunpack.c.h.b16 %v4535
  %v4716 = vunpack.c.l.b16 %v4536
  %v4717 = vunpack.c.h.b16 %v4536
  %v4718 = vunpack.c.l.b16 %v4537
  %v4719 = vunpack.c.h.b16 %v4537
  %v4720 = vunpack.c.l.b16 %v4538
  %v4721 = vunpack.c.h.b16 %v4538
  %v4722 = vunpack.c.l.b16 %v4539
  %v4723 = vunpack.c.h.b16 %v4539
  %v4724 = vunpack.c.l.b16 %v4540
  %v4725 = vunpack.c.h.b16 %v4540
  %v4726 = vunpack.c.l.b16 %v4541
  %v4727 = vunpack.c.h.b16 %v4541
  %v4728 = vunpack.c.l.b16 %v4542
  %v4729 = vunpack.c.h.b16 %v4542
  %v4730 = vunpack.c.l.b16 %v4543
  %v4731 = vunpack.c.h.b16 %v4543
  %v4732 = vunpack.c.l.b16 %v4544
  %v4733 = vunpack.c.h.b16 %v4544
  %v4734 = vunpack.c.l.b16 %v4545
  %v4735 = vunpack.c.h.b16 %v4545
  %v4736 = vunpack.c.l.b16 %v4546
  %v4737 = vunpack.c.h.b16 %v4546
  %v4738 = vunpack.c.l.b16 %v4547
  %v4739 = vunpack.c.h.b16 %v4547
  %v4740 = vpack.c.b16 %v4620, %v4612
  %v4741 = vpack.c.b16 %v4621, %v4613
  %v4742 = vpack.c.b16 %v4622, %v4614
  %v4743 = vpack.c.b16 %v4623, %v4615
  %v4744 = vpack.c.b16 %v4624, %v4616
  %v4745 = vpack.c.b16 %v4625, %v4617
  %v4746 = vpack.c.b16 %v4626, %v4618
  %v4747 = vpack.c.b16 %v4627, %v4619
  %v4748 = vpack.c.b16 %v4636, %v4628
  %v4749 = vpack.c.b16 %v4637, %v4629
  %v4750 = vpack.c.b16 %v4638, %v4630
  %v4751 = vpack.c.b16 %v4639, %v4631
  %v4752 = vpack.c.b16 %v4640, %v4632
  %v4753 = vpack.c.b16 %v4641, %v4633
  %v4754 = vpack.c.b16 %v4642, %v4634
  %v4755 = vpack.c.b16 %v4643, %v4635
  %v4756 = vpack.c.b16 %v4652, %v4644
  %v4757 = vpack.c.b16 %v4653, %v4645
  %v4758 = vpack.c.b16 %v4654, %v4646
  %v4759 = vpack.c.b16 %v4655, %v4647
  %v4760 = vpack.c.b16 %v4656, %v4648
  %v4761 = vpack.c.b16 %v4657, %v4649
  %v4762 = vpack.c.b16 %v4658, %v4650
  %v4763 = vpack.c.b16 %v4659, %v4651
  %v4764 = vpack.c.b16 %v4668, %v4660
  %v4765 = vpack.c.b16 %v4669, %v4661
  %v4766 = vpack.c.b16 %v4670, %v4662
  %v4767 = vpack.c.b16 %v4671, %v4663
  %v4768 = vpack.c.b16 %v4672, %v4664
  %v4769 = vpack.c.b16 %v4673, %v4665
  %v4770 = vpack.c.b16 %v4674, %v4666
  %v4771 = vpack.c.b16 %v4675, %v4667
  %v4772 = vpack.c.b16 %v4684, %v4676
  %v4773 = vpack.c.b16 %v4685, %v4677
  %v4774 = vpack.c.b16 %v4686, %v4678
  %v4775 = vpack.c.b16 %v4687, %v4679
  %v4776 = vpack.c.b16 %v4688, %v4680
  %v4777 = vpack.c.b16 %v4689, %v4681
  %v4778 = vpack.c.b16 %v4690, %v4682
  %v4779 = vpack.c.b16 %v4691, %v4683
  %v4780 = vpack.c.b16 %v4700, %v4692
  %v4781 = vpack.c.b16 %v4701, %v4693
  %v4782 = vpack.c.b16 %v4702, %v4694
  %v4783 = vpack.c.b16 %v4703, %v4695
  %v4784 = vpack.c.b16 %v4704, %v4696
  %v4785 = vpack.c.b16 %v4705, %v4697
  %v4786 = vpack.c.b16 %v4706, %v4698
  %v4787 = vpack.c.b16 %v4707, %v4699
  %v4788 = vpack.c.b16 %v4716, %v4708
  %v4789 = vpack.c.b16 %v4717, %v4709
  %v4790 = vpack.c.b16 %v4718, %v4710
  %v4791 = vpack.c.b16 %v4719, %v4711
  %v4792 = vpack.c.b16 %v4720, %v4712
  %v4793 = vpack.c.b16 %v4721, %v4713
  %v4794 = vpack.c.b16 %v4722, %v4714
  %v4795 = vpack.c.b16 %v4723, %v4715
  %v4796 = vpack.c.b16 %v4732, %v4724
  %v4797 = vpack.c.b16 %v4733, %v4725
  %v4798 = vpack.c.b16 %v4734, %v4726
  %v4799 = vpack.c.b16 %v4735, %v4727
  %v4800 = vpack.c.b16 %v4736, %v4728
  %v4801 = vpack.c.b16 %v4737, %v4729
  %v4802 = vpack.c.b16 %v4738, %v4730
  %v4803 = vpack.c.b16 %v4739, %v4731
  %4868 = vmatpush.bf16.msra.mxu0 %v4796
  %4869 = vmatpush.bf16.msra.mxu0 %v4788
  %4870 = vmatpush.bf16.msra.mxu0 %v4780
  %4871 = vmatpush.bf16.msra.mxu0 %v4772
  %4872 = vmatpush.bf16.msra.mxu0 %v4764
  %4873 = vmatpush.bf16.msra.mxu0 %v4756
  %4874 = vmatpush.bf16.msra.mxu0 %v4748
  %4875 = vmatpush.bf16.msra.mxu0 %v4740
  %4876 = vmatmul.bf16.gmra.mxu0 %v4483
  %v4877 = vpop.f32.mrf.mxu0
  %v4878 = vadd.f32 0.0, %v4877
  %v4879 = vpop.f32.mrf.mxu0
  %4880 = vdwg.mxu0
  %4881 = vmatpush.bf16.msra.mxu0 %v4797
  %4882 = vmatpush.bf16.msra.mxu0 %v4789
  %4883 = vmatpush.bf16.msra.mxu0 %v4781
  %4884 = vmatpush.bf16.msra.mxu0 %v4773
  %4885 = vmatpush.bf16.msra.mxu0 %v4765
  %4886 = vmatpush.bf16.msra.mxu0 %v4757
  %4887 = vmatpush.bf16.msra.mxu0 %v4749
  %4888 = vmatpush.bf16.msra.mxu0 %v4741
  %4889 = vmatmul.bf16.gmra.mxu0 %v4483
  %v4890 = vpop.f32.mrf.mxu0
  %v4891 = vadd.f32 0.0, %v4890
  %v4892 = vpop.f32.mrf.mxu0
  %4893 = vdwg.mxu0
  %4894 = vmatpush.bf16.msra.mxu0 %v4798
  %4895 = vmatpush.bf16.msra.mxu0 %v4790
  %4896 = vmatpush.bf16.msra.mxu0 %v4782
  %4897 = vmatpush.bf16.msra.mxu0 %v4774
  %4898 = vmatpush.bf16.msra.mxu0 %v4766
  %4899 = vmatpush.bf16.msra.mxu0 %v4758
  %4900 = vmatpush.bf16.msra.mxu0 %v4750
  %4901 = vmatpush.bf16.msra.mxu0 %v4742
  %4902 = vmatmul.bf16.gmra.mxu0 %v4483
  %v4903 = vpop.f32.mrf.mxu0
  %v4904 = vadd.f32 0.0, %v4903
  %v4905 = vpop.f32.mrf.mxu0
  %4906 = vdwg.mxu0
  %4907 = vmatpush.bf16.msra.mxu0 %v4799
  %4908 = vmatpush.bf16.msra.mxu0 %v4791
  %4909 = vmatpush.bf16.msra.mxu0 %v4783
  %4910 = vmatpush.bf16.msra.mxu0 %v4775
  %4911 = vmatpush.bf16.msra.mxu0 %v4767
  %4912 = vmatpush.bf16.msra.mxu0 %v4759
  %4913 = vmatpush.bf16.msra.mxu0 %v4751
  %4914 = vmatpush.bf16.msra.mxu0 %v4743
  %4915 = vmatmul.bf16.gmra.mxu0 %v4483
  %v4916 = vpop.f32.mrf.mxu0
  %v4917 = vadd.f32 0.0, %v4916
  %v4918 = vpop.f32.mrf.mxu0
  %4919 = vdwg.mxu0
  %4920 = vmatpush.bf16.msra.mxu0 %v4800
  %4921 = vmatpush.bf16.msra.mxu0 %v4792
  %4922 = vmatpush.bf16.msra.mxu0 %v4784
  %4923 = vmatpush.bf16.msra.mxu0 %v4776
  %4924 = vmatpush.bf16.msra.mxu0 %v4768
  %4925 = vmatpush.bf16.msra.mxu0 %v4760
  %4926 = vmatpush.bf16.msra.mxu0 %v4752
  %4927 = vmatpush.bf16.msra.mxu0 %v4744
  %4928 = vmatmul.bf16.gmra.mxu0 %v4483
  %v4929 = vpop.f32.mrf.mxu0
  %v4930 = vpop.f32.mrf.mxu0
  %v4931 = vadd.f32 0.0, %v4930
  %4932 = vdwg.mxu0
  %4933 = vmatpush.bf16.msra.mxu0 %v4801
  %4934 = vmatpush.bf16.msra.mxu0 %v4793
  %4935 = vmatpush.bf16.msra.mxu0 %v4785
  %4936 = vmatpush.bf16.msra.mxu0 %v4777
  %4937 = vmatpush.bf16.msra.mxu0 %v4769
  %4938 = vmatpush.bf16.msra.mxu0 %v4761
  %4939 = vmatpush.bf16.msra.mxu0 %v4753
  %4940 = vmatpush.bf16.msra.mxu0 %v4745
  %4941 = vmatmul.bf16.gmra.mxu0 %v4483
  %v4942 = vpop.f32.mrf.mxu0
  %v4943 = vpop.f32.mrf.mxu0
  %v4944 = vadd.f32 0.0, %v4943
  %4945 = vdwg.mxu0
  %4946 = vmatpush.bf16.msra.mxu0 %v4802
  %4947 = vmatpush.bf16.msra.mxu0 %v4794
  %4948 = vmatpush.bf16.msra.mxu0 %v4786
  %4949 = vmatpush.bf16.msra.mxu0 %v4778
  %4950 = vmatpush.bf16.msra.mxu0 %v4770
  %4951 = vmatpush.bf16.msra.mxu0 %v4762
  %4952 = vmatpush.bf16.msra.mxu0 %v4754
  %4953 = vmatpush.bf16.msra.mxu0 %v4746
  %4954 = vmatmul.bf16.gmra.mxu0 %v4483
  %v4955 = vpop.f32.mrf.mxu0
  %v4956 = vpop.f32.mrf.mxu0
  %v4957 = vadd.f32 0.0, %v4956
  %4958 = vdwg.mxu0
  %4959 = vmatpush.bf16.msra.mxu0 %v4803
  %4960 = vmatpush.bf16.msra.mxu0 %v4795
  %4961 = vmatpush.bf16.msra.mxu0 %v4787
  %4962 = vmatpush.bf16.msra.mxu0 %v4779
  %4963 = vmatpush.bf16.msra.mxu0 %v4771
  %4964 = vmatpush.bf16.msra.mxu0 %v4763
  %4965 = vmatpush.bf16.msra.mxu0 %v4755
  %4966 = vmatpush.bf16.msra.mxu0 %v4747
  %4967 = vmatmul.bf16.gmra.mxu0 %v4483
  %v4968 = vpop.f32.mrf.mxu0
  %v4969 = vpop.f32.mrf.mxu0
  %v4970 = vadd.f32 0.0, %v4969
  %4971 = vdwg.mxu0
  %v4972 = vld [vmem:[%s535] sm:$0xff]
  %v4973 = vld [vmem:[%s535 + $0x8] sm:$0xff]
  %v4974 = vld [vmem:[%s535 + $0x10] sm:$0xff]
  %v4975 = vld [vmem:[%s535 + $0x18] sm:$0xff]
  %v4976 = vadd.f32 %v4972, %v4878
  %v4977 = vadd.f32 %v4973, %v4891
  %v4978 = vadd.f32 %v4974, %v4904
  %v4979 = vadd.f32 %v4975, %v4917
  %v4980 = vld [vmem:[%s0 + $0x20] sm:$0xff]
  %v4981 = vld [vmem:[%s0 + $0x28] sm:$0xff]
  %v4982 = vld [vmem:[%s0 + $0x30] sm:$0xff]
  %v4983 = vld [vmem:[%s0 + $0x38] sm:$0xff]
  %v4984 = vadd.f32 %v4980, %v4931
  %v4985 = vadd.f32 %v4981, %v4944
  %v4986 = vadd.f32 %v4982, %v4957
  %v4987 = vadd.f32 %v4983, %v4970
  %v4988 = vxor.u32 %v4976, 2147483648
  %v4989 = vxor.u32 %v4984, 2147483648
  %v4990 = vmul.f32 %v4988, 1.442695
  %v4991 = vpow.pop %v4990
  %v4992 = vmul.f32 %v4989, 1.442695
  %v4993 = vpow.pop %v4992
  %v4994 = vadd.f32 %v4991, 1.0
  %v4995 = vadd.f32 %v4993, 1.0
  %v4996 = vrcp.pop %v4994
  %v4997 = vmul.f32 %v4994, %v4996
  %v4998 = vsub.f32 1.0, %v4997
  %v4999 = vmul.f32 %v4996, %v4998
  %v5000 = vadd.f32 %v4996, %v4999
  %vm5001 = vweird.f32 %v4994
  %vm5002 = vweird.f32 %v4996
  %vm5003 = vmor %vm5001, %vm5002
  %v5004 = vsel %vm5003, %v4996, %v5000
  %v5005 = vand.u32 2147483647, %v4994
  %vm5006 = vcmp.eq.f32.partialorder %v5005, 8.507059e+37
  %v5007 = vand.u32 %v4994, 2147483648
  %v5008 = vor.u32 1.1754944e-38, %v5007
  %v5009 = vsel %vm5006, %v5008, %v5004
  %v5010 = vmul.f32 1.0, %v5009
  %v5011 = vrcp.pop %v4995
  %v5012 = vmul.f32 %v4995, %v5011
  %v5013 = vsub.f32 1.0, %v5012
  %v5014 = vmul.f32 %v5011, %v5013
  %v5015 = vadd.f32 %v5011, %v5014
  %vm5016 = vweird.f32 %v4995
  %vm5017 = vweird.f32 %v5011
  %vm5018 = vmor %vm5016, %vm5017
  %v5019 = vsel %vm5018, %v5011, %v5015
  %v5020 = vand.u32 2147483647, %v4995
  %vm5021 = vcmp.eq.f32.partialorder %v5020, 8.507059e+37
  %v5022 = vand.u32 %v4995, 2147483648
  %v5023 = vor.u32 1.1754944e-38, %v5022
  %v5024 = vsel %vm5021, %v5023, %v5019
  %v5025 = vmul.f32 1.0, %v5024
  %v5026 = vxor.u32 %v4977, 2147483648
  %v5027 = vxor.u32 %v4985, 2147483648
  %v5028 = vmul.f32 %v5026, 1.442695
  %v5029 = vpow.pop %v5028
  %v5030 = vmul.f32 %v5027, 1.442695
  %v5031 = vpow.pop %v5030
  %v5032 = vadd.f32 %v5029, 1.0
  %v5033 = vadd.f32 %v5031, 1.0
  %v5034 = vrcp.pop %v5032
  %v5035 = vmul.f32 %v5032, %v5034
  %v5036 = vsub.f32 1.0, %v5035
  %v5037 = vmul.f32 %v5034, %v5036
  %v5038 = vadd.f32 %v5034, %v5037
  %vm5039 = vweird.f32 %v5032
  %vm5040 = vweird.f32 %v5034
  %vm5041 = vmor %vm5039, %vm5040
  %v5042 = vsel %vm5041, %v5034, %v5038
  %v5043 = vand.u32 2147483647, %v5032
  %vm5044 = vcmp.eq.f32.partialorder %v5043, 8.507059e+37
  %v5045 = vand.u32 %v5032, 2147483648
  %v5046 = vor.u32 1.1754944e-38, %v5045
  %v5047 = vsel %vm5044, %v5046, %v5042
  %v5048 = vmul.f32 1.0, %v5047
  %v5049 = vrcp.pop %v5033
  %v5050 = vmul.f32 %v5033, %v5049
  %v5051 = vsub.f32 1.0, %v5050
  %v5052 = vmul.f32 %v5049, %v5051
  %v5053 = vadd.f32 %v5049, %v5052
  %vm5054 = vweird.f32 %v5033
  %vm5055 = vweird.f32 %v5049
  %vm5056 = vmor %vm5054, %vm5055
  %v5057 = vsel %vm5056, %v5049, %v5053
  %v5058 = vand.u32 2147483647, %v5033
  %vm5059 = vcmp.eq.f32.partialorder %v5058, 8.507059e+37
  %v5060 = vand.u32 %v5033, 2147483648
  %v5061 = vor.u32 1.1754944e-38, %v5060
  %v5062 = vsel %vm5059, %v5061, %v5057
  %v5063 = vmul.f32 1.0, %v5062
  %v5064 = vtanh.pop %v4978
  %v5065 = vtanh.pop %v4986
  %v5066 = vxor.u32 %v4979, 2147483648
  %v5067 = vxor.u32 %v4987, 2147483648
  %v5068 = vmul.f32 %v5066, 1.442695
  %v5069 = vpow.pop %v5068
  %v5070 = vmul.f32 %v5067, 1.442695
  %v5071 = vpow.pop %v5070
  %v5072 = vadd.f32 %v5069, 1.0
  %v5073 = vadd.f32 %v5071, 1.0
  %v5074 = vrcp.pop %v5072
  %v5075 = vmul.f32 %v5072, %v5074
  %v5076 = vsub.f32 1.0, %v5075
  %v5077 = vmul.f32 %v5074, %v5076
  %v5078 = vadd.f32 %v5074, %v5077
  %vm5079 = vweird.f32 %v5072
  %vm5080 = vweird.f32 %v5074
  %vm5081 = vmor %vm5079, %vm5080
  %v5082 = vsel %vm5081, %v5074, %v5078
  %v5083 = vand.u32 2147483647, %v5072
  %vm5084 = vcmp.eq.f32.partialorder %v5083, 8.507059e+37
  %v5085 = vand.u32 %v5072, 2147483648
  %v5086 = vor.u32 1.1754944e-38, %v5085
  %v5087 = vsel %vm5084, %v5086, %v5082
  %v5088 = vmul.f32 1.0, %v5087
  %v5089 = vrcp.pop %v5073
  %v5090 = vmul.f32 %v5073, %v5089
  %v5091 = vsub.f32 1.0, %v5090
  %v5092 = vmul.f32 %v5089, %v5091
  %v5093 = vadd.f32 %v5089, %v5092
  %vm5094 = vweird.f32 %v5073
  %vm5095 = vweird.f32 %v5089
  %vm5096 = vmor %vm5094, %vm5095
  %v5097 = vsel %vm5096, %v5089, %v5093
  %v5098 = vand.u32 2147483647, %v5073
  %vm5099 = vcmp.eq.f32.partialorder %v5098, 8.507059e+37
  %v5100 = vand.u32 %v5073, 2147483648
  %v5101 = vor.u32 1.1754944e-38, %v5100
  %v5102 = vsel %vm5099, %v5101, %v5097
  %v5103 = vmul.f32 1.0, %v5102
  %v5104 = vmul.f32 %v5048, %v4475
  %v5105 = vmul.f32 %v5063, %v4476
  %v5106 = vmul.f32 %v5010, %v5064
  %v5107 = vmul.f32 %v5025, %v5065
  %v5108 = vadd.f32 %v5104, %v5106
  %v5109 = vadd.f32 %v5105, %v5107
  %v5110 = vtanh.pop %v5108
  %v5111 = vtanh.pop %v5109
  %v5112 = vmul.f32 %v5088, %v5110
  %v5113 = vmul.f32 %v5103, %v5111
  %5114 = vst [vmem:[%s671] sm:$0xff] %v5112
  %5115 = vst [vmem:[#allocation2 + $0x8] sm:$0xff] %v5113
  %v5116 = vld [vmem:[#allocation2] sm:$0xff]
  %v5117 = vld [vmem:[#allocation2 + $0x8] sm:$0xff]
  %v5118 = vld [vmem:[#allocation2 + $0x10] sm:$0xff]
  %v5119 = vld [vmem:[#allocation2 + $0x18] sm:$0xff]
  %v5120 = vld [vmem:[#allocation2 + $0x20] sm:$0xff]
  %v5121 = vld [vmem:[#allocation2 + $0x28] sm:$0xff]
  %v5122 = vld [vmem:[#allocation2 + $0x30] sm:$0xff]
  %v5123 = vld [vmem:[#allocation2 + $0x38] sm:$0xff]
  %v5124 = vld [vmem:[#allocation2 + $0x40] sm:$0xff]
  %v5125 = vld [vmem:[#allocation2 + $0x48] sm:$0xff]
  %v5126 = vld [vmem:[#allocation2 + $0x50] sm:$0xff]
  %v5127 = vld [vmem:[#allocation2 + $0x58] sm:$0xff]
  %v5128 = vld [vmem:[#allocation2 + $0x60] sm:$0xff]
  %v5129 = vld [vmem:[#allocation2 + $0x68] sm:$0xff]
  %v5130 = vld [vmem:[#allocation2 + $0x70] sm:$0xff]
  %v5131 = vld [vmem:[#allocation2 + $0x78] sm:$0xff]
  %v5132 = vpack.c.bf16 %v5118, %v5116
  %v5133 = vpack.c.bf16 %v5119, %v5117
  %v5134 = vpack.c.bf16 %v5122, %v5120
  %v5135 = vpack.c.bf16 %v5123, %v5121
  %v5136 = vpack.c.bf16 %v5126, %v5124
  %v5137 = vpack.c.bf16 %v5127, %v5125
  %v5138 = vpack.c.bf16 %v5130, %v5128
  %v5139 = vpack.c.bf16 %v5131, %v5129
  %v5140 = vld [vmem:[%s1] sm:$0xff]
  %v5141 = vld [vmem:[%s1 + $0x8] sm:$0xff]
  %v5142 = vld [vmem:[%s1 + $0x10] sm:$0xff]
  %v5143 = vld [vmem:[%s1 + $0x18] sm:$0xff]
  %v5144 = vld [vmem:[%s1 + $0x20] sm:$0xff]
  %v5145 = vld [vmem:[%s1 + $0x28] sm:$0xff]
  %v5146 = vld [vmem:[%s1 + $0x30] sm:$0xff]
  %v5147 = vld [vmem:[%s1 + $0x38] sm:$0xff]
  %v5148 = vld [vmem:[%s1 + $0x40] sm:$0xff]
  %v5149 = vld [vmem:[%s1 + $0x48] sm:$0xff]
  %v5150 = vld [vmem:[%s1 + $0x50] sm:$0xff]
  %v5151 = vld [vmem:[%s1 + $0x58] sm:$0xff]
  %v5152 = vld [vmem:[%s1 + $0x60] sm:$0xff]
  %v5153 = vld [vmem:[%s1 + $0x68] sm:$0xff]
  %v5154 = vld [vmem:[%s1 + $0x70] sm:$0xff]
  %v5155 = vld [vmem:[%s1 + $0x78] sm:$0xff]
  %v5156 = vld [vmem:[%s1 + $0x80] sm:$0xff]
  %v5157 = vld [vmem:[%s1 + $0x88] sm:$0xff]
  %v5158 = vld [vmem:[%s1 + $0x90] sm:$0xff]
  %v5159 = vld [vmem:[%s1 + $0x98] sm:$0xff]
  %v5160 = vld [vmem:[%s1 + $0xa0] sm:$0xff]
  %v5161 = vld [vmem:[%s1 + $0xa8] sm:$0xff]
  %v5162 = vld [vmem:[%s1 + $0xb0] sm:$0xff]
  %v5163 = vld [vmem:[%s1 + $0xb8] sm:$0xff]
  %v5164 = vld [vmem:[%s1 + $0xc0] sm:$0xff]
  %v5165 = vld [vmem:[%s1 + $0xc8] sm:$0xff]
  %v5166 = vld [vmem:[%s1 + $0xd0] sm:$0xff]
  %v5167 = vld [vmem:[%s1 + $0xd8] sm:$0xff]
  %v5168 = vld [vmem:[%s1 + $0xe0] sm:$0xff]
  %v5169 = vld [vmem:[%s1 + $0xe8] sm:$0xff]
  %v5170 = vld [vmem:[%s1 + $0xf0] sm:$0xff]
  %v5171 = vld [vmem:[%s1 + $0xf8] sm:$0xff]
  %v5172 = vld [vmem:[%s1 + $0x100] sm:$0xff]
  %v5173 = vld [vmem:[%s1 + $0x108] sm:$0xff]
  %v5174 = vld [vmem:[%s1 + $0x110] sm:$0xff]
  %v5175 = vld [vmem:[%s1 + $0x118] sm:$0xff]
  %v5176 = vld [vmem:[%s1 + $0x120] sm:$0xff]
  %v5177 = vld [vmem:[%s1 + $0x128] sm:$0xff]
  %v5178 = vld [vmem:[%s1 + $0x130] sm:$0xff]
  %v5179 = vld [vmem:[%s1 + $0x138] sm:$0xff]
  %v5180 = vld [vmem:[%s1 + $0x140] sm:$0xff]
  %v5181 = vld [vmem:[%s1 + $0x148] sm:$0xff]
  %v5182 = vld [vmem:[%s1 + $0x150] sm:$0xff]
  %v5183 = vld [vmem:[%s1 + $0x158] sm:$0xff]
  %v5184 = vld [vmem:[%s1 + $0x160] sm:$0xff]
  %v5185 = vld [vmem:[%s1 + $0x168] sm:$0xff]
  %v5186 = vld [vmem:[%s1 + $0x170] sm:$0xff]
  %v5187 = vld [vmem:[%s1 + $0x178] sm:$0xff]
  %v5188 = vld [vmem:[%s1 + $0x180] sm:$0xff]
  %v5189 = vld [vmem:[%s1 + $0x188] sm:$0xff]
  %v5190 = vld [vmem:[%s1 + $0x190] sm:$0xff]
  %v5191 = vld [vmem:[%s1 + $0x198] sm:$0xff]
  %v5192 = vld [vmem:[%s1 + $0x1a0] sm:$0xff]
  %v5193 = vld [vmem:[%s1 + $0x1a8] sm:$0xff]
  %v5194 = vld [vmem:[%s1 + $0x1b0] sm:$0xff]
  %v5195 = vld [vmem:[%s1 + $0x1b8] sm:$0xff]
  %v5196 = vld [vmem:[%s1 + $0x1c0] sm:$0xff]
  %v5197 = vld [vmem:[%s1 + $0x1c8] sm:$0xff]
  %v5198 = vld [vmem:[%s1 + $0x1d0] sm:$0xff]
  %v5199 = vld [vmem:[%s1 + $0x1d8] sm:$0xff]
  %v5200 = vld [vmem:[%s1 + $0x1e0] sm:$0xff]
  %v5201 = vld [vmem:[%s1 + $0x1e8] sm:$0xff]
  %v5202 = vld [vmem:[%s1 + $0x1f0] sm:$0xff]
  %v5203 = vld [vmem:[%s1 + $0x1f8] sm:$0xff]
  %v5204 = vld [vmem:[%s1 + $0x200] sm:$0xff]
  %v5205 = vld [vmem:[%s1 + $0x208] sm:$0xff]
  %v5206 = vld [vmem:[%s1 + $0x210] sm:$0xff]
  %v5207 = vld [vmem:[%s1 + $0x218] sm:$0xff]
  %v5208 = vld [vmem:[%s1 + $0x220] sm:$0xff]
  %v5209 = vld [vmem:[%s1 + $0x228] sm:$0xff]
  %v5210 = vld [vmem:[%s1 + $0x230] sm:$0xff]
  %v5211 = vld [vmem:[%s1 + $0x238] sm:$0xff]
  %v5212 = vld [vmem:[%s1 + $0x240] sm:$0xff]
  %v5213 = vld [vmem:[%s1 + $0x248] sm:$0xff]
  %v5214 = vld [vmem:[%s1 + $0x250] sm:$0xff]
  %v5215 = vld [vmem:[%s1 + $0x258] sm:$0xff]
  %v5216 = vld [vmem:[%s1 + $0x260] sm:$0xff]
  %v5217 = vld [vmem:[%s1 + $0x268] sm:$0xff]
  %v5218 = vld [vmem:[%s1 + $0x270] sm:$0xff]
  %v5219 = vld [vmem:[%s1 + $0x278] sm:$0xff]
  %v5220 = vld [vmem:[%s1 + $0x280] sm:$0xff]
  %v5221 = vld [vmem:[%s1 + $0x288] sm:$0xff]
  %v5222 = vld [vmem:[%s1 + $0x290] sm:$0xff]
  %v5223 = vld [vmem:[%s1 + $0x298] sm:$0xff]
  %v5224 = vld [vmem:[%s1 + $0x2a0] sm:$0xff]
  %v5225 = vld [vmem:[%s1 + $0x2a8] sm:$0xff]
  %v5226 = vld [vmem:[%s1 + $0x2b0] sm:$0xff]
  %v5227 = vld [vmem:[%s1 + $0x2b8] sm:$0xff]
  %v5228 = vld [vmem:[%s1 + $0x2c0] sm:$0xff]
  %v5229 = vld [vmem:[%s1 + $0x2c8] sm:$0xff]
  %v5230 = vld [vmem:[%s1 + $0x2d0] sm:$0xff]
  %v5231 = vld [vmem:[%s1 + $0x2d8] sm:$0xff]
  %v5232 = vld [vmem:[%s1 + $0x2e0] sm:$0xff]
  %v5233 = vld [vmem:[%s1 + $0x2e8] sm:$0xff]
  %v5234 = vld [vmem:[%s1 + $0x2f0] sm:$0xff]
  %v5235 = vld [vmem:[%s1 + $0x2f8] sm:$0xff]
  %v5236 = vld [vmem:[%s1 + $0x300] sm:$0xff]
  %v5237 = vld [vmem:[%s1 + $0x308] sm:$0xff]
  %v5238 = vld [vmem:[%s1 + $0x310] sm:$0xff]
  %v5239 = vld [vmem:[%s1 + $0x318] sm:$0xff]
  %v5240 = vld [vmem:[%s1 + $0x320] sm:$0xff]
  %v5241 = vld [vmem:[%s1 + $0x328] sm:$0xff]
  %v5242 = vld [vmem:[%s1 + $0x330] sm:$0xff]
  %v5243 = vld [vmem:[%s1 + $0x338] sm:$0xff]
  %v5244 = vld [vmem:[%s1 + $0x340] sm:$0xff]
  %v5245 = vld [vmem:[%s1 + $0x348] sm:$0xff]
  %v5246 = vld [vmem:[%s1 + $0x350] sm:$0xff]
  %v5247 = vld [vmem:[%s1 + $0x358] sm:$0xff]
  %v5248 = vld [vmem:[%s1 + $0x360] sm:$0xff]
  %v5249 = vld [vmem:[%s1 + $0x368] sm:$0xff]
  %v5250 = vld [vmem:[%s1 + $0x370] sm:$0xff]
  %v5251 = vld [vmem:[%s1 + $0x378] sm:$0xff]
  %v5252 = vld [vmem:[%s1 + $0x380] sm:$0xff]
  %v5253 = vld [vmem:[%s1 + $0x388] sm:$0xff]
  %v5254 = vld [vmem:[%s1 + $0x390] sm:$0xff]
  %v5255 = vld [vmem:[%s1 + $0x398] sm:$0xff]
  %v5256 = vld [vmem:[%s1 + $0x3a0] sm:$0xff]
  %v5257 = vld [vmem:[%s1 + $0x3a8] sm:$0xff]
  %v5258 = vld [vmem:[%s1 + $0x3b0] sm:$0xff]
  %v5259 = vld [vmem:[%s1 + $0x3b8] sm:$0xff]
  %v5260 = vld [vmem:[%s1 + $0x3c0] sm:$0xff]
  %v5261 = vld [vmem:[%s1 + $0x3c8] sm:$0xff]
  %v5262 = vld [vmem:[%s1 + $0x3d0] sm:$0xff]
  %v5263 = vld [vmem:[%s1 + $0x3d8] sm:$0xff]
  %v5264 = vld [vmem:[%s1 + $0x3e0] sm:$0xff]
  %v5265 = vld [vmem:[%s1 + $0x3e8] sm:$0xff]
  %v5266 = vld [vmem:[%s1 + $0x3f0] sm:$0xff]
  %v5267 = vld [vmem:[%s1 + $0x3f8] sm:$0xff]
  %v5268 = vld [vmem:[%s4] sm:$0xff]
  %v5270 = vperm.slane %v5268, 0
  %v5271 = vperm.slane %v5268, 1
  %v5272 = vperm.slane %v5268, 2
  %v5273 = vperm.slane %v5268, 3
  %v5274 = vperm.slane %v5268, 4
  %v5275 = vperm.slane %v5268, 5
  %v5276 = vperm.slane %v5268, 6
  %v5277 = vperm.slane %v5268, 7
  %v5414 = vunpack.c.l.b16 %v5140
  %v5415 = vunpack.c.h.b16 %v5140
  %v5416 = vunpack.c.l.b16 %v5141
  %v5417 = vunpack.c.h.b16 %v5141
  %v5418 = vunpack.c.l.b16 %v5142
  %v5419 = vunpack.c.h.b16 %v5142
  %v5420 = vunpack.c.l.b16 %v5143
  %v5421 = vunpack.c.h.b16 %v5143
  %v5422 = vunpack.c.l.b16 %v5144
  %v5423 = vunpack.c.h.b16 %v5144
  %v5424 = vunpack.c.l.b16 %v5145
  %v5425 = vunpack.c.h.b16 %v5145
  %v5426 = vunpack.c.l.b16 %v5146
  %v5427 = vunpack.c.h.b16 %v5146
  %v5428 = vunpack.c.l.b16 %v5147
  %v5429 = vunpack.c.h.b16 %v5147
  %v5430 = vunpack.c.l.b16 %v5148
  %v5431 = vunpack.c.h.b16 %v5148
  %v5432 = vunpack.c.l.b16 %v5149
  %v5433 = vunpack.c.h.b16 %v5149
  %v5434 = vunpack.c.l.b16 %v5150
  %v5435 = vunpack.c.h.b16 %v5150
  %v5436 = vunpack.c.l.b16 %v5151
  %v5437 = vunpack.c.h.b16 %v5151
  %v5438 = vunpack.c.l.b16 %v5152
  %v5439 = vunpack.c.h.b16 %v5152
  %v5440 = vunpack.c.l.b16 %v5153
  %v5441 = vunpack.c.h.b16 %v5153
  %v5442 = vunpack.c.l.b16 %v5154
  %v5443 = vunpack.c.h.b16 %v5154
  %v5444 = vunpack.c.l.b16 %v5155
  %v5445 = vunpack.c.h.b16 %v5155
  %v5446 = vunpack.c.l.b16 %v5156
  %v5447 = vunpack.c.h.b16 %v5156
  %v5448 = vunpack.c.l.b16 %v5157
  %v5449 = vunpack.c.h.b16 %v5157
  %v5450 = vunpack.c.l.b16 %v5158
  %v5451 = vunpack.c.h.b16 %v5158
  %v5452 = vunpack.c.l.b16 %v5159
  %v5453 = vunpack.c.h.b16 %v5159
  %v5454 = vunpack.c.l.b16 %v5160
  %v5455 = vunpack.c.h.b16 %v5160
  %v5456 = vunpack.c.l.b16 %v5161
  %v5457 = vunpack.c.h.b16 %v5161
  %v5458 = vunpack.c.l.b16 %v5162
  %v5459 = vunpack.c.h.b16 %v5162
  %v5460 = vunpack.c.l.b16 %v5163
  %v5461 = vunpack.c.h.b16 %v5163
  %v5462 = vunpack.c.l.b16 %v5164
  %v5463 = vunpack.c.h.b16 %v5164
  %v5464 = vunpack.c.l.b16 %v5165
  %v5465 = vunpack.c.h.b16 %v5165
  %v5466 = vunpack.c.l.b16 %v5166
  %v5467 = vunpack.c.h.b16 %v5166
  %v5468 = vunpack.c.l.b16 %v5167
  %v5469 = vunpack.c.h.b16 %v5167
  %v5470 = vunpack.c.l.b16 %v5168
  %v5471 = vunpack.c.h.b16 %v5168
  %v5472 = vunpack.c.l.b16 %v5169
  %v5473 = vunpack.c.h.b16 %v5169
  %v5474 = vunpack.c.l.b16 %v5170
  %v5475 = vunpack.c.h.b16 %v5170
  %v5476 = vunpack.c.l.b16 %v5171
  %v5477 = vunpack.c.h.b16 %v5171
  %v5478 = vunpack.c.l.b16 %v5172
  %v5479 = vunpack.c.h.b16 %v5172
  %v5480 = vunpack.c.l.b16 %v5173
  %v5481 = vunpack.c.h.b16 %v5173
  %v5482 = vunpack.c.l.b16 %v5174
  %v5483 = vunpack.c.h.b16 %v5174
  %v5484 = vunpack.c.l.b16 %v5175
  %v5485 = vunpack.c.h.b16 %v5175
  %v5486 = vunpack.c.l.b16 %v5176
  %v5487 = vunpack.c.h.b16 %v5176
  %v5488 = vunpack.c.l.b16 %v5177
  %v5489 = vunpack.c.h.b16 %v5177
  %v5490 = vunpack.c.l.b16 %v5178
  %v5491 = vunpack.c.h.b16 %v5178
  %v5492 = vunpack.c.l.b16 %v5179
  %v5493 = vunpack.c.h.b16 %v5179
  %v5494 = vunpack.c.l.b16 %v5180
  %v5495 = vunpack.c.h.b16 %v5180
  %v5496 = vunpack.c.l.b16 %v5181
  %v5497 = vunpack.c.h.b16 %v5181
  %v5498 = vunpack.c.l.b16 %v5182
  %v5499 = vunpack.c.h.b16 %v5182
  %v5500 = vunpack.c.l.b16 %v5183
  %v5501 = vunpack.c.h.b16 %v5183
  %v5502 = vunpack.c.l.b16 %v5184
  %v5503 = vunpack.c.h.b16 %v5184
  %v5504 = vunpack.c.l.b16 %v5185
  %v5505 = vunpack.c.h.b16 %v5185
  %v5506 = vunpack.c.l.b16 %v5186
  %v5507 = vunpack.c.h.b16 %v5186
  %v5508 = vunpack.c.l.b16 %v5187
  %v5509 = vunpack.c.h.b16 %v5187
  %v5510 = vunpack.c.l.b16 %v5188
  %v5511 = vunpack.c.h.b16 %v5188
  %v5512 = vunpack.c.l.b16 %v5189
  %v5513 = vunpack.c.h.b16 %v5189
  %v5514 = vunpack.c.l.b16 %v5190
  %v5515 = vunpack.c.h.b16 %v5190
  %v5516 = vunpack.c.l.b16 %v5191
  %v5517 = vunpack.c.h.b16 %v5191
  %v5518 = vunpack.c.l.b16 %v5192
  %v5519 = vunpack.c.h.b16 %v5192
  %v5520 = vunpack.c.l.b16 %v5193
  %v5521 = vunpack.c.h.b16 %v5193
  %v5522 = vunpack.c.l.b16 %v5194
  %v5523 = vunpack.c.h.b16 %v5194
  %v5524 = vunpack.c.l.b16 %v5195
  %v5525 = vunpack.c.h.b16 %v5195
  %v5526 = vunpack.c.l.b16 %v5196
  %v5527 = vunpack.c.h.b16 %v5196
  %v5528 = vunpack.c.l.b16 %v5197
  %v5529 = vunpack.c.h.b16 %v5197
  %v5530 = vunpack.c.l.b16 %v5198
  %v5531 = vunpack.c.h.b16 %v5198
  %v5532 = vunpack.c.l.b16 %v5199
  %v5533 = vunpack.c.h.b16 %v5199
  %v5534 = vunpack.c.l.b16 %v5200
  %v5535 = vunpack.c.h.b16 %v5200
  %v5536 = vunpack.c.l.b16 %v5201
  %v5537 = vunpack.c.h.b16 %v5201
  %v5538 = vunpack.c.l.b16 %v5202
  %v5539 = vunpack.c.h.b16 %v5202
  %v5540 = vunpack.c.l.b16 %v5203
  %v5541 = vunpack.c.h.b16 %v5203
  %v5542 = vunpack.c.l.b16 %v5204
  %v5543 = vunpack.c.h.b16 %v5204
  %v5544 = vunpack.c.l.b16 %v5205
  %v5545 = vunpack.c.h.b16 %v5205
  %v5546 = vunpack.c.l.b16 %v5206
  %v5547 = vunpack.c.h.b16 %v5206
  %v5548 = vunpack.c.l.b16 %v5207
  %v5549 = vunpack.c.h.b16 %v5207
  %v5550 = vunpack.c.l.b16 %v5208
  %v5551 = vunpack.c.h.b16 %v5208
  %v5552 = vunpack.c.l.b16 %v5209
  %v5553 = vunpack.c.h.b16 %v5209
  %v5554 = vunpack.c.l.b16 %v5210
  %v5555 = vunpack.c.h.b16 %v5210
  %v5556 = vunpack.c.l.b16 %v5211
  %v5557 = vunpack.c.h.b16 %v5211
  %v5558 = vunpack.c.l.b16 %v5212
  %v5559 = vunpack.c.h.b16 %v5212
  %v5560 = vunpack.c.l.b16 %v5213
  %v5561 = vunpack.c.h.b16 %v5213
  %v5562 = vunpack.c.l.b16 %v5214
  %v5563 = vunpack.c.h.b16 %v5214
  %v5564 = vunpack.c.l.b16 %v5215
  %v5565 = vunpack.c.h.b16 %v5215
  %v5566 = vunpack.c.l.b16 %v5216
  %v5567 = vunpack.c.h.b16 %v5216
  %v5568 = vunpack.c.l.b16 %v5217
  %v5569 = vunpack.c.h.b16 %v5217
  %v5570 = vunpack.c.l.b16 %v5218
  %v5571 = vunpack.c.h.b16 %v5218
  %v5572 = vunpack.c.l.b16 %v5219
  %v5573 = vunpack.c.h.b16 %v5219
  %v5574 = vunpack.c.l.b16 %v5220
  %v5575 = vunpack.c.h.b16 %v5220
  %v5576 = vunpack.c.l.b16 %v5221
  %v5577 = vunpack.c.h.b16 %v5221
  %v5578 = vunpack.c.l.b16 %v5222
  %v5579 = vunpack.c.h.b16 %v5222
  %v5580 = vunpack.c.l.b16 %v5223
  %v5581 = vunpack.c.h.b16 %v5223
  %v5582 = vunpack.c.l.b16 %v5224
  %v5583 = vunpack.c.h.b16 %v5224
  %v5584 = vunpack.c.l.b16 %v5225
  %v5585 = vunpack.c.h.b16 %v5225
  %v5586 = vunpack.c.l.b16 %v5226
  %v5587 = vunpack.c.h.b16 %v5226
  %v5588 = vunpack.c.l.b16 %v5227
  %v5589 = vunpack.c.h.b16 %v5227
  %v5590 = vunpack.c.l.b16 %v5228
  %v5591 = vunpack.c.h.b16 %v5228
  %v5592 = vunpack.c.l.b16 %v5229
  %v5593 = vunpack.c.h.b16 %v5229
  %v5594 = vunpack.c.l.b16 %v5230
  %v5595 = vunpack.c.h.b16 %v5230
  %v5596 = vunpack.c.l.b16 %v5231
  %v5597 = vunpack.c.h.b16 %v5231
  %v5598 = vunpack.c.l.b16 %v5232
  %v5599 = vunpack.c.h.b16 %v5232
  %v5600 = vunpack.c.l.b16 %v5233
  %v5601 = vunpack.c.h.b16 %v5233
  %v5602 = vunpack.c.l.b16 %v5234
  %v5603 = vunpack.c.h.b16 %v5234
  %v5604 = vunpack.c.l.b16 %v5235
  %v5605 = vunpack.c.h.b16 %v5235
  %v5606 = vunpack.c.l.b16 %v5236
  %v5607 = vunpack.c.h.b16 %v5236
  %v5608 = vunpack.c.l.b16 %v5237
  %v5609 = vunpack.c.h.b16 %v5237
  %v5610 = vunpack.c.l.b16 %v5238
  %v5611 = vunpack.c.h.b16 %v5238
  %v5612 = vunpack.c.l.b16 %v5239
  %v5613 = vunpack.c.h.b16 %v5239
  %v5614 = vunpack.c.l.b16 %v5240
  %v5615 = vunpack.c.h.b16 %v5240
  %v5616 = vunpack.c.l.b16 %v5241
  %v5617 = vunpack.c.h.b16 %v5241
  %v5618 = vunpack.c.l.b16 %v5242
  %v5619 = vunpack.c.h.b16 %v5242
  %v5620 = vunpack.c.l.b16 %v5243
  %v5621 = vunpack.c.h.b16 %v5243
  %v5622 = vunpack.c.l.b16 %v5244
  %v5623 = vunpack.c.h.b16 %v5244
  %v5624 = vunpack.c.l.b16 %v5245
  %v5625 = vunpack.c.h.b16 %v5245
  %v5626 = vunpack.c.l.b16 %v5246
  %v5627 = vunpack.c.h.b16 %v5246
  %v5628 = vunpack.c.l.b16 %v5247
  %v5629 = vunpack.c.h.b16 %v5247
  %v5630 = vunpack.c.l.b16 %v5248
  %v5631 = vunpack.c.h.b16 %v5248
  %v5632 = vunpack.c.l.b16 %v5249
  %v5633 = vunpack.c.h.b16 %v5249
  %v5634 = vunpack.c.l.b16 %v5250
  %v5635 = vunpack.c.h.b16 %v5250
  %v5636 = vunpack.c.l.b16 %v5251
  %v5637 = vunpack.c.h.b16 %v5251
  %v5638 = vunpack.c.l.b16 %v5252
  %v5639 = vunpack.c.h.b16 %v5252
  %v5640 = vunpack.c.l.b16 %v5253
  %v5641 = vunpack.c.h.b16 %v5253
  %v5642 = vunpack.c.l.b16 %v5254
  %v5643 = vunpack.c.h.b16 %v5254
  %v5644 = vunpack.c.l.b16 %v5255
  %v5645 = vunpack.c.h.b16 %v5255
  %v5646 = vunpack.c.l.b16 %v5256
  %v5647 = vunpack.c.h.b16 %v5256
  %v5648 = vunpack.c.l.b16 %v5257
  %v5649 = vunpack.c.h.b16 %v5257
  %v5650 = vunpack.c.l.b16 %v5258
  %v5651 = vunpack.c.h.b16 %v5258
  %v5652 = vunpack.c.l.b16 %v5259
  %v5653 = vunpack.c.h.b16 %v5259
  %v5654 = vunpack.c.l.b16 %v5260
  %v5655 = vunpack.c.h.b16 %v5260
  %v5656 = vunpack.c.l.b16 %v5261
  %v5657 = vunpack.c.h.b16 %v5261
  %v5658 = vunpack.c.l.b16 %v5262
  %v5659 = vunpack.c.h.b16 %v5262
  %v5660 = vunpack.c.l.b16 %v5263
  %v5661 = vunpack.c.h.b16 %v5263
  %v5662 = vunpack.c.l.b16 %v5264
  %v5663 = vunpack.c.h.b16 %v5264
  %v5664 = vunpack.c.l.b16 %v5265
  %v5665 = vunpack.c.h.b16 %v5265
  %v5666 = vunpack.c.l.b16 %v5266
  %v5667 = vunpack.c.h.b16 %v5266
  %v5668 = vunpack.c.l.b16 %v5267
  %v5669 = vunpack.c.h.b16 %v5267
  %v5670 = vpack.c.b16 %v5422, %v5414
  %v5671 = vpack.c.b16 %v5423, %v5415
  %v5672 = vpack.c.b16 %v5424, %v5416
  %v5673 = vpack.c.b16 %v5425, %v5417
  %v5674 = vpack.c.b16 %v5426, %v5418
  %v5675 = vpack.c.b16 %v5427, %v5419
  %v5676 = vpack.c.b16 %v5428, %v5420
  %v5677 = vpack.c.b16 %v5429, %v5421
  %v5678 = vpack.c.b16 %v5438, %v5430
  %v5679 = vpack.c.b16 %v5439, %v5431
  %v5680 = vpack.c.b16 %v5440, %v5432
  %v5681 = vpack.c.b16 %v5441, %v5433
  %v5682 = vpack.c.b16 %v5442, %v5434
  %v5683 = vpack.c.b16 %v5443, %v5435
  %v5684 = vpack.c.b16 %v5444, %v5436
  %v5685 = vpack.c.b16 %v5445, %v5437
  %v5686 = vpack.c.b16 %v5454, %v5446
  %v5687 = vpack.c.b16 %v5455, %v5447
  %v5688 = vpack.c.b16 %v5456, %v5448
  %v5689 = vpack.c.b16 %v5457, %v5449
  %v5690 = vpack.c.b16 %v5458, %v5450
  %v5691 = vpack.c.b16 %v5459, %v5451
  %v5692 = vpack.c.b16 %v5460, %v5452
  %v5693 = vpack.c.b16 %v5461, %v5453
  %v5694 = vpack.c.b16 %v5470, %v5462
  %v5695 = vpack.c.b16 %v5471, %v5463
  %v5696 = vpack.c.b16 %v5472, %v5464
  %v5697 = vpack.c.b16 %v5473, %v5465
  %v5698 = vpack.c.b16 %v5474, %v5466
  %v5699 = vpack.c.b16 %v5475, %v5467
  %v5700 = vpack.c.b16 %v5476, %v5468
  %v5701 = vpack.c.b16 %v5477, %v5469
  %v5702 = vpack.c.b16 %v5486, %v5478
  %v5703 = vpack.c.b16 %v5487, %v5479
  %v5704 = vpack.c.b16 %v5488, %v5480
  %v5705 = vpack.c.b16 %v5489, %v5481
  %v5706 = vpack.c.b16 %v5490, %v5482
  %v5707 = vpack.c.b16 %v5491, %v5483
  %v5708 = vpack.c.b16 %v5492, %v5484
  %v5709 = vpack.c.b16 %v5493, %v5485
  %v5710 = vpack.c.b16 %v5502, %v5494
  %v5711 = vpack.c.b16 %v5503, %v5495
  %v5712 = vpack.c.b16 %v5504, %v5496
  %v5713 = vpack.c.b16 %v5505, %v5497
  %v5714 = vpack.c.b16 %v5506, %v5498
  %v5715 = vpack.c.b16 %v5507, %v5499
  %v5716 = vpack.c.b16 %v5508, %v5500
  %v5717 = vpack.c.b16 %v5509, %v5501
  %v5718 = vpack.c.b16 %v5518, %v5510
  %v5719 = vpack.c.b16 %v5519, %v5511
  %v5720 = vpack.c.b16 %v5520, %v5512
  %v5721 = vpack.c.b16 %v5521, %v5513
  %v5722 = vpack.c.b16 %v5522, %v5514
  %v5723 = vpack.c.b16 %v5523, %v5515
  %v5724 = vpack.c.b16 %v5524, %v5516
  %v5725 = vpack.c.b16 %v5525, %v5517
  %v5726 = vpack.c.b16 %v5534, %v5526
  %v5727 = vpack.c.b16 %v5535, %v5527
  %v5728 = vpack.c.b16 %v5536, %v5528
  %v5729 = vpack.c.b16 %v5537, %v5529
  %v5730 = vpack.c.b16 %v5538, %v5530
  %v5731 = vpack.c.b16 %v5539, %v5531
  %v5732 = vpack.c.b16 %v5540, %v5532
  %v5733 = vpack.c.b16 %v5541, %v5533
  %v5734 = vpack.c.b16 %v5550, %v5542
  %v5735 = vpack.c.b16 %v5551, %v5543
  %v5736 = vpack.c.b16 %v5552, %v5544
  %v5737 = vpack.c.b16 %v5553, %v5545
  %v5738 = vpack.c.b16 %v5554, %v5546
  %v5739 = vpack.c.b16 %v5555, %v5547
  %v5740 = vpack.c.b16 %v5556, %v5548
  %v5741 = vpack.c.b16 %v5557, %v5549
  %v5742 = vpack.c.b16 %v5566, %v5558
  %v5743 = vpack.c.b16 %v5567, %v5559
  %v5744 = vpack.c.b16 %v5568, %v5560
  %v5745 = vpack.c.b16 %v5569, %v5561
  %v5746 = vpack.c.b16 %v5570, %v5562
  %v5747 = vpack.c.b16 %v5571, %v5563
  %v5748 = vpack.c.b16 %v5572, %v5564
  %v5749 = vpack.c.b16 %v5573, %v5565
  %v5750 = vpack.c.b16 %v5582, %v5574
  %v5751 = vpack.c.b16 %v5583, %v5575
  %v5752 = vpack.c.b16 %v5584, %v5576
  %v5753 = vpack.c.b16 %v5585, %v5577
  %v5754 = vpack.c.b16 %v5586, %v5578
  %v5755 = vpack.c.b16 %v5587, %v5579
  %v5756 = vpack.c.b16 %v5588, %v5580
  %v5757 = vpack.c.b16 %v5589, %v5581
  %v5758 = vpack.c.b16 %v5598, %v5590
  %v5759 = vpack.c.b16 %v5599, %v5591
  %v5760 = vpack.c.b16 %v5600, %v5592
  %v5761 = vpack.c.b16 %v5601, %v5593
  %v5762 = vpack.c.b16 %v5602, %v5594
  %v5763 = vpack.c.b16 %v5603, %v5595
  %v5764 = vpack.c.b16 %v5604, %v5596
  %v5765 = vpack.c.b16 %v5605, %v5597
  %v5766 = vpack.c.b16 %v5614, %v5606
  %v5767 = vpack.c.b16 %v5615, %v5607
  %v5768 = vpack.c.b16 %v5616, %v5608
  %v5769 = vpack.c.b16 %v5617, %v5609
  %v5770 = vpack.c.b16 %v5618, %v5610
  %v5771 = vpack.c.b16 %v5619, %v5611
  %v5772 = vpack.c.b16 %v5620, %v5612
  %v5773 = vpack.c.b16 %v5621, %v5613
  %v5774 = vpack.c.b16 %v5630, %v5622
  %v5775 = vpack.c.b16 %v5631, %v5623
  %v5776 = vpack.c.b16 %v5632, %v5624
  %v5777 = vpack.c.b16 %v5633, %v5625
  %v5778 = vpack.c.b16 %v5634, %v5626
  %v5779 = vpack.c.b16 %v5635, %v5627
  %v5780 = vpack.c.b16 %v5636, %v5628
  %v5781 = vpack.c.b16 %v5637, %v5629
  %v5782 = vpack.c.b16 %v5646, %v5638
  %v5783 = vpack.c.b16 %v5647, %v5639
  %v5784 = vpack.c.b16 %v5648, %v5640
  %v5785 = vpack.c.b16 %v5649, %v5641
  %v5786 = vpack.c.b16 %v5650, %v5642
  %v5787 = vpack.c.b16 %v5651, %v5643
  %v5788 = vpack.c.b16 %v5652, %v5644
  %v5789 = vpack.c.b16 %v5653, %v5645
  %v5790 = vpack.c.b16 %v5662, %v5654
  %v5791 = vpack.c.b16 %v5663, %v5655
  %v5792 = vpack.c.b16 %v5664, %v5656
  %v5793 = vpack.c.b16 %v5665, %v5657
  %v5794 = vpack.c.b16 %v5666, %v5658
  %v5795 = vpack.c.b16 %v5667, %v5659
  %v5796 = vpack.c.b16 %v5668, %v5660
  %v5797 = vpack.c.b16 %v5669, %v5661
  %5926 = vmatpush.bf16.msra.mxu0 %v5726
  %5927 = vmatpush.bf16.msra.mxu0 %v5718
  %5928 = vmatpush.bf16.msra.mxu0 %v5710
  %5929 = vmatpush.bf16.msra.mxu0 %v5702
  %5930 = vmatpush.bf16.msra.mxu0 %v5694
  %5931 = vmatpush.bf16.msra.mxu0 %v5686
  %5932 = vmatpush.bf16.msra.mxu0 %v5678
  %5933 = vmatpush.bf16.msra.mxu0 %v5670
  %5934 = vmatmul.bf16.gmra.mxu0 %v5132
  %v5935 = vpop.f32.mrf.mxu0
  %v5936 = vadd.f32 %v5270, %v5935
  %v5937 = vpop.f32.mrf.mxu0
  %v5938 = vadd.f32 %v5270, %v5937
  %5939 = vmatmul.bf16.gmra.mxu0 %v5134
  %v5940 = vpop.f32.mrf.mxu0
  %v5941 = vadd.f32 %v5270, %v5940
  %v5942 = vpop.f32.mrf.mxu0
  %v5943 = vadd.f32 %v5270, %v5942
  %5944 = vmatmul.bf16.gmra.mxu0 %v5136
  %v5945 = vpop.f32.mrf.mxu0
  %v5946 = vadd.f32 %v5270, %v5945
  %v5947 = vpop.f32.mrf.mxu0
  %v5948 = vadd.f32 %v5270, %v5947
  %5949 = vmatmul.bf16.gmra.mxu0 %v5138
  %v5950 = vpop.f32.mrf.mxu0
  %v5951 = vadd.f32 %v5270, %v5950
  %v5952 = vpop.f32.mrf.mxu0
  %v5953 = vadd.f32 %v5270, %v5952
  %5954 = vdwg.mxu0
  %5955 = vmatpush.bf16.msra.mxu0 %v5790
  %5956 = vmatpush.bf16.msra.mxu0 %v5782
  %5957 = vmatpush.bf16.msra.mxu0 %v5774
  %5958 = vmatpush.bf16.msra.mxu0 %v5766
  %5959 = vmatpush.bf16.msra.mxu0 %v5758
  %5960 = vmatpush.bf16.msra.mxu0 %v5750
  %5961 = vmatpush.bf16.msra.mxu0 %v5742
  %5962 = vmatpush.bf16.msra.mxu0 %v5734
  %5963 = vmatmul.bf16.gmra.mxu0 %v5133
  %v5964 = vpop.f32.mrf.mxu0
  %v5965 = vadd.f32 %v5936, %v5964
  %v5966 = vpop.f32.mrf.mxu0
  %v5967 = vadd.f32 %v5938, %v5966
  %5968 = vmatmul.bf16.gmra.mxu0 %v5135
  %v5969 = vpop.f32.mrf.mxu0
  %v5970 = vadd.f32 %v5941, %v5969
  %v5971 = vpop.f32.mrf.mxu0
  %v5972 = vadd.f32 %v5943, %v5971
  %5973 = vmatmul.bf16.gmra.mxu0 %v5137
  %v5974 = vpop.f32.mrf.mxu0
  %v5975 = vadd.f32 %v5946, %v5974
  %v5976 = vpop.f32.mrf.mxu0
  %v5977 = vadd.f32 %v5948, %v5976
  %5978 = vmatmul.bf16.gmra.mxu0 %v5139
  %v5979 = vpop.f32.mrf.mxu0
  %v5980 = vadd.f32 %v5951, %v5979
  %v5981 = vpop.f32.mrf.mxu0
  %v5982 = vadd.f32 %v5953, %v5981
  %5983 = vdwg.mxu0
  %5984 = vmatpush.bf16.msra.mxu0 %v5727
  %5985 = vmatpush.bf16.msra.mxu0 %v5719
  %5986 = vmatpush.bf16.msra.mxu0 %v5711
  %5987 = vmatpush.bf16.msra.mxu0 %v5703
  %5988 = vmatpush.bf16.msra.mxu0 %v5695
  %5989 = vmatpush.bf16.msra.mxu0 %v5687
  %5990 = vmatpush.bf16.msra.mxu0 %v5679
  %5991 = vmatpush.bf16.msra.mxu0 %v5671
  %5992 = vmatmul.bf16.gmra.mxu0 %v5132
  %v5993 = vpop.f32.mrf.mxu0
  %v5994 = vadd.f32 %v5271, %v5993
  %v5995 = vpop.f32.mrf.mxu0
  %v5996 = vadd.f32 %v5271, %v5995
  %5997 = vmatmul.bf16.gmra.mxu0 %v5134
  %v5998 = vpop.f32.mrf.mxu0
  %v5999 = vadd.f32 %v5271, %v5998
  %v6000 = vpop.f32.mrf.mxu0
  %v6001 = vadd.f32 %v5271, %v6000
  %6002 = vmatmul.bf16.gmra.mxu0 %v5136
  %v6003 = vpop.f32.mrf.mxu0
  %v6004 = vadd.f32 %v5271, %v6003
  %v6005 = vpop.f32.mrf.mxu0
  %v6006 = vadd.f32 %v5271, %v6005
  %6007 = vmatmul.bf16.gmra.mxu0 %v5138
  %v6008 = vpop.f32.mrf.mxu0
  %v6009 = vadd.f32 %v5271, %v6008
  %v6010 = vpop.f32.mrf.mxu0
  %v6011 = vadd.f32 %v5271, %v6010
  %6012 = vdwg.mxu0
  %6013 = vmatpush.bf16.msra.mxu0 %v5791
  %6014 = vmatpush.bf16.msra.mxu0 %v5783
  %6015 = vmatpush.bf16.msra.mxu0 %v5775
  %6016 = vmatpush.bf16.msra.mxu0 %v5767
  %6017 = vmatpush.bf16.msra.mxu0 %v5759
  %6018 = vmatpush.bf16.msra.mxu0 %v5751
  %6019 = vmatpush.bf16.msra.mxu0 %v5743
  %6020 = vmatpush.bf16.msra.mxu0 %v5735
  %6021 = vmatmul.bf16.gmra.mxu0 %v5133
  %v6022 = vpop.f32.mrf.mxu0
  %v6023 = vadd.f32 %v5994, %v6022
  %v6024 = vpop.f32.mrf.mxu0
  %v6025 = vadd.f32 %v5996, %v6024
  %6026 = vmatmul.bf16.gmra.mxu0 %v5135
  %v6027 = vpop.f32.mrf.mxu0
  %v6028 = vadd.f32 %v5999, %v6027
  %v6029 = vpop.f32.mrf.mxu0
  %v6030 = vadd.f32 %v6001, %v6029
  %6031 = vmatmul.bf16.gmra.mxu0 %v5137
  %v6032 = vpop.f32.mrf.mxu0
  %v6033 = vadd.f32 %v6004, %v6032
  %v6034 = vpop.f32.mrf.mxu0
  %v6035 = vadd.f32 %v6006, %v6034
  %6036 = vmatmul.bf16.gmra.mxu0 %v5139
  %v6037 = vpop.f32.mrf.mxu0
  %v6038 = vadd.f32 %v6009, %v6037
  %v6039 = vpop.f32.mrf.mxu0
  %v6040 = vadd.f32 %v6011, %v6039
  %6041 = vdwg.mxu0
  %6042 = vmatpush.bf16.msra.mxu0 %v5728
  %6043 = vmatpush.bf16.msra.mxu0 %v5720
  %6044 = vmatpush.bf16.msra.mxu0 %v5712
  %6045 = vmatpush.bf16.msra.mxu0 %v5704
  %6046 = vmatpush.bf16.msra.mxu0 %v5696
  %6047 = vmatpush.bf16.msra.mxu0 %v5688
  %6048 = vmatpush.bf16.msra.mxu0 %v5680
  %6049 = vmatpush.bf16.msra.mxu0 %v5672
  %6050 = vmatmul.bf16.gmra.mxu0 %v5132
  %v6051 = vpop.f32.mrf.mxu0
  %v6052 = vadd.f32 %v5272, %v6051
  %v6053 = vpop.f32.mrf.mxu0
  %v6054 = vadd.f32 %v5272, %v6053
  %6055 = vmatmul.bf16.gmra.mxu0 %v5134
  %v6056 = vpop.f32.mrf.mxu0
  %v6057 = vadd.f32 %v5272, %v6056
  %v6058 = vpop.f32.mrf.mxu0
  %v6059 = vadd.f32 %v5272, %v6058
  %6060 = vmatmul.bf16.gmra.mxu0 %v5136
  %v6061 = vpop.f32.mrf.mxu0
  %v6062 = vadd.f32 %v5272, %v6061
  %v6063 = vpop.f32.mrf.mxu0
  %v6064 = vadd.f32 %v5272, %v6063
  %6065 = vmatmul.bf16.gmra.mxu0 %v5138
  %v6066 = vpop.f32.mrf.mxu0
  %v6067 = vadd.f32 %v5272, %v6066
  %v6068 = vpop.f32.mrf.mxu0
  %v6069 = vadd.f32 %v5272, %v6068
  %6070 = vdwg.mxu0
  %6071 = vmatpush.bf16.msra.mxu0 %v5792
  %6072 = vmatpush.bf16.msra.mxu0 %v5784
  %6073 = vmatpush.bf16.msra.mxu0 %v5776
  %6074 = vmatpush.bf16.msra.mxu0 %v5768
  %6075 = vmatpush.bf16.msra.mxu0 %v5760
  %6076 = vmatpush.bf16.msra.mxu0 %v5752
  %6077 = vmatpush.bf16.msra.mxu0 %v5744
  %6078 = vmatpush.bf16.msra.mxu0 %v5736
  %6079 = vmatmul.bf16.gmra.mxu0 %v5133
  %v6080 = vpop.f32.mrf.mxu0
  %v6081 = vadd.f32 %v6052, %v6080
  %v6082 = vpop.f32.mrf.mxu0
  %v6083 = vadd.f32 %v6054, %v6082
  %6084 = vmatmul.bf16.gmra.mxu0 %v5135
  %v6085 = vpop.f32.mrf.mxu0
  %v6086 = vadd.f32 %v6057, %v6085
  %v6087 = vpop.f32.mrf.mxu0
  %v6088 = vadd.f32 %v6059, %v6087
  %6089 = vmatmul.bf16.gmra.mxu0 %v5137
  %v6090 = vpop.f32.mrf.mxu0
  %v6091 = vadd.f32 %v6062, %v6090
  %v6092 = vpop.f32.mrf.mxu0
  %v6093 = vadd.f32 %v6064, %v6092
  %6094 = vmatmul.bf16.gmra.mxu0 %v5139
  %v6095 = vpop.f32.mrf.mxu0
  %v6096 = vadd.f32 %v6067, %v6095
  %v6097 = vpop.f32.mrf.mxu0
  %v6098 = vadd.f32 %v6069, %v6097
  %6099 = vdwg.mxu0
  %6100 = vmatpush.bf16.msra.mxu0 %v5729
  %6101 = vmatpush.bf16.msra.mxu0 %v5721
  %6102 = vmatpush.bf16.msra.mxu0 %v5713
  %6103 = vmatpush.bf16.msra.mxu0 %v5705
  %6104 = vmatpush.bf16.msra.mxu0 %v5697
  %6105 = vmatpush.bf16.msra.mxu0 %v5689
  %6106 = vmatpush.bf16.msra.mxu0 %v5681
  %6107 = vmatpush.bf16.msra.mxu0 %v5673
  %6108 = vmatmul.bf16.gmra.mxu0 %v5132
  %v6109 = vpop.f32.mrf.mxu0
  %v6110 = vadd.f32 %v5273, %v6109
  %v6111 = vpop.f32.mrf.mxu0
  %v6112 = vadd.f32 %v5273, %v6111
  %6113 = vmatmul.bf16.gmra.mxu0 %v5134
  %v6114 = vpop.f32.mrf.mxu0
  %v6115 = vadd.f32 %v5273, %v6114
  %v6116 = vpop.f32.mrf.mxu0
  %v6117 = vadd.f32 %v5273, %v6116
  %6118 = vmatmul.bf16.gmra.mxu0 %v5136
  %v6119 = vpop.f32.mrf.mxu0
  %v6120 = vadd.f32 %v5273, %v6119
  %v6121 = vpop.f32.mrf.mxu0
  %v6122 = vadd.f32 %v5273, %v6121
  %6123 = vmatmul.bf16.gmra.mxu0 %v5138
  %v6124 = vpop.f32.mrf.mxu0
  %v6125 = vadd.f32 %v5273, %v6124
  %v6126 = vpop.f32.mrf.mxu0
  %v6127 = vadd.f32 %v5273, %v6126
  %6128 = vdwg.mxu0
  %6129 = vmatpush.bf16.msra.mxu0 %v5793
  %6130 = vmatpush.bf16.msra.mxu0 %v5785
  %6131 = vmatpush.bf16.msra.mxu0 %v5777
  %6132 = vmatpush.bf16.msra.mxu0 %v5769
  %6133 = vmatpush.bf16.msra.mxu0 %v5761
  %6134 = vmatpush.bf16.msra.mxu0 %v5753
  %6135 = vmatpush.bf16.msra.mxu0 %v5745
  %6136 = vmatpush.bf16.msra.mxu0 %v5737
  %6137 = vmatmul.bf16.gmra.mxu0 %v5133
  %v6138 = vpop.f32.mrf.mxu0
  %v6139 = vadd.f32 %v6110, %v6138
  %v6140 = vpop.f32.mrf.mxu0
  %v6141 = vadd.f32 %v6112, %v6140
  %6142 = vmatmul.bf16.gmra.mxu0 %v5135
  %v6143 = vpop.f32.mrf.mxu0
  %v6144 = vadd.f32 %v6115, %v6143
  %v6145 = vpop.f32.mrf.mxu0
  %v6146 = vadd.f32 %v6117, %v6145
  %6147 = vmatmul.bf16.gmra.mxu0 %v5137
  %v6148 = vpop.f32.mrf.mxu0
  %v6149 = vadd.f32 %v6120, %v6148
  %v6150 = vpop.f32.mrf.mxu0
  %v6151 = vadd.f32 %v6122, %v6150
  %6152 = vmatmul.bf16.gmra.mxu0 %v5139
  %v6153 = vpop.f32.mrf.mxu0
  %v6154 = vadd.f32 %v6125, %v6153
  %v6155 = vpop.f32.mrf.mxu0
  %v6156 = vadd.f32 %v6127, %v6155
  %6157 = vdwg.mxu0
  %6158 = vmatpush.bf16.msra.mxu0 %v5730
  %6159 = vmatpush.bf16.msra.mxu0 %v5722
  %6160 = vmatpush.bf16.msra.mxu0 %v5714
  %6161 = vmatpush.bf16.msra.mxu0 %v5706
  %6162 = vmatpush.bf16.msra.mxu0 %v5698
  %6163 = vmatpush.bf16.msra.mxu0 %v5690
  %6164 = vmatpush.bf16.msra.mxu0 %v5682
  %6165 = vmatpush.bf16.msra.mxu0 %v5674
  %6166 = vmatmul.bf16.gmra.mxu0 %v5132
  %v6167 = vpop.f32.mrf.mxu0
  %v6168 = vadd.f32 %v5274, %v6167
  %v6169 = vpop.f32.mrf.mxu0
  %v6170 = vadd.f32 %v5274, %v6169
  %6171 = vmatmul.bf16.gmra.mxu0 %v5134
  %v6172 = vpop.f32.mrf.mxu0
  %v6173 = vadd.f32 %v5274, %v6172
  %v6174 = vpop.f32.mrf.mxu0
  %v6175 = vadd.f32 %v5274, %v6174
  %6176 = vmatmul.bf16.gmra.mxu0 %v5136
  %v6177 = vpop.f32.mrf.mxu0
  %v6178 = vadd.f32 %v5274, %v6177
  %v6179 = vpop.f32.mrf.mxu0
  %v6180 = vadd.f32 %v5274, %v6179
  %6181 = vmatmul.bf16.gmra.mxu0 %v5138
  %v6182 = vpop.f32.mrf.mxu0
  %v6183 = vadd.f32 %v5274, %v6182
  %v6184 = vpop.f32.mrf.mxu0
  %v6185 = vadd.f32 %v5274, %v6184
  %6186 = vdwg.mxu0
  %6187 = vmatpush.bf16.msra.mxu0 %v5794
  %6188 = vmatpush.bf16.msra.mxu0 %v5786
  %6189 = vmatpush.bf16.msra.mxu0 %v5778
  %6190 = vmatpush.bf16.msra.mxu0 %v5770
  %6191 = vmatpush.bf16.msra.mxu0 %v5762
  %6192 = vmatpush.bf16.msra.mxu0 %v5754
  %6193 = vmatpush.bf16.msra.mxu0 %v5746
  %6194 = vmatpush.bf16.msra.mxu0 %v5738
  %6195 = vmatmul.bf16.gmra.mxu0 %v5133
  %v6196 = vpop.f32.mrf.mxu0
  %v6197 = vadd.f32 %v6168, %v6196
  %v6198 = vpop.f32.mrf.mxu0
  %v6199 = vadd.f32 %v6170, %v6198
  %6200 = vmatmul.bf16.gmra.mxu0 %v5135
  %v6201 = vpop.f32.mrf.mxu0
  %v6202 = vadd.f32 %v6173, %v6201
  %v6203 = vpop.f32.mrf.mxu0
  %v6204 = vadd.f32 %v6175, %v6203
  %6205 = vmatmul.bf16.gmra.mxu0 %v5137
  %v6206 = vpop.f32.mrf.mxu0
  %v6207 = vadd.f32 %v6178, %v6206
  %v6208 = vpop.f32.mrf.mxu0
  %v6209 = vadd.f32 %v6180, %v6208
  %6210 = vmatmul.bf16.gmra.mxu0 %v5139
  %v6211 = vpop.f32.mrf.mxu0
  %v6212 = vadd.f32 %v6183, %v6211
  %v6213 = vpop.f32.mrf.mxu0
  %v6214 = vadd.f32 %v6185, %v6213
  %6215 = vdwg.mxu0
  %6216 = vmatpush.bf16.msra.mxu0 %v5731
  %6217 = vmatpush.bf16.msra.mxu0 %v5723
  %6218 = vmatpush.bf16.msra.mxu0 %v5715
  %6219 = vmatpush.bf16.msra.mxu0 %v5707
  %6220 = vmatpush.bf16.msra.mxu0 %v5699
  %6221 = vmatpush.bf16.msra.mxu0 %v5691
  %6222 = vmatpush.bf16.msra.mxu0 %v5683
  %6223 = vmatpush.bf16.msra.mxu0 %v5675
  %6224 = vmatmul.bf16.gmra.mxu0 %v5132
  %v6225 = vpop.f32.mrf.mxu0
  %v6226 = vadd.f32 %v5275, %v6225
  %v6227 = vpop.f32.mrf.mxu0
  %v6228 = vadd.f32 %v5275, %v6227
  %6229 = vmatmul.bf16.gmra.mxu0 %v5134
  %v6230 = vpop.f32.mrf.mxu0
  %v6231 = vadd.f32 %v5275, %v6230
  %v6232 = vpop.f32.mrf.mxu0
  %v6233 = vadd.f32 %v5275, %v6232
  %6234 = vmatmul.bf16.gmra.mxu0 %v5136
  %v6235 = vpop.f32.mrf.mxu0
  %v6236 = vadd.f32 %v5275, %v6235
  %v6237 = vpop.f32.mrf.mxu0
  %v6238 = vadd.f32 %v5275, %v6237
  %6239 = vmatmul.bf16.gmra.mxu0 %v5138
  %v6240 = vpop.f32.mrf.mxu0
  %v6241 = vadd.f32 %v5275, %v6240
  %v6242 = vpop.f32.mrf.mxu0
  %v6243 = vadd.f32 %v5275, %v6242
  %6244 = vdwg.mxu0
  %6245 = vmatpush.bf16.msra.mxu0 %v5795
  %6246 = vmatpush.bf16.msra.mxu0 %v5787
  %6247 = vmatpush.bf16.msra.mxu0 %v5779
  %6248 = vmatpush.bf16.msra.mxu0 %v5771
  %6249 = vmatpush.bf16.msra.mxu0 %v5763
  %6250 = vmatpush.bf16.msra.mxu0 %v5755
  %6251 = vmatpush.bf16.msra.mxu0 %v5747
  %6252 = vmatpush.bf16.msra.mxu0 %v5739
  %6253 = vmatmul.bf16.gmra.mxu0 %v5133
  %v6254 = vpop.f32.mrf.mxu0
  %v6255 = vadd.f32 %v6226, %v6254
  %v6256 = vpop.f32.mrf.mxu0
  %v6257 = vadd.f32 %v6228, %v6256
  %6258 = vmatmul.bf16.gmra.mxu0 %v5135
  %v6259 = vpop.f32.mrf.mxu0
  %v6260 = vadd.f32 %v6231, %v6259
  %v6261 = vpop.f32.mrf.mxu0
  %v6262 = vadd.f32 %v6233, %v6261
  %6263 = vmatmul.bf16.gmra.mxu0 %v5137
  %v6264 = vpop.f32.mrf.mxu0
  %v6265 = vadd.f32 %v6236, %v6264
  %v6266 = vpop.f32.mrf.mxu0
  %v6267 = vadd.f32 %v6238, %v6266
  %6268 = vmatmul.bf16.gmra.mxu0 %v5139
  %v6269 = vpop.f32.mrf.mxu0
  %v6270 = vadd.f32 %v6241, %v6269
  %v6271 = vpop.f32.mrf.mxu0
  %v6272 = vadd.f32 %v6243, %v6271
  %6273 = vdwg.mxu0
  %6274 = vmatpush.bf16.msra.mxu0 %v5732
  %6275 = vmatpush.bf16.msra.mxu0 %v5724
  %6276 = vmatpush.bf16.msra.mxu0 %v5716
  %6277 = vmatpush.bf16.msra.mxu0 %v5708
  %6278 = vmatpush.bf16.msra.mxu0 %v5700
  %6279 = vmatpush.bf16.msra.mxu0 %v5692
  %6280 = vmatpush.bf16.msra.mxu0 %v5684
  %6281 = vmatpush.bf16.msra.mxu0 %v5676
  %6282 = vmatmul.bf16.gmra.mxu0 %v5132
  %v6283 = vpop.f32.mrf.mxu0
  %v6284 = vadd.f32 %v5276, %v6283
  %v6285 = vpop.f32.mrf.mxu0
  %v6286 = vadd.f32 %v5276, %v6285
  %6287 = vmatmul.bf16.gmra.mxu0 %v5134
  %v6288 = vpop.f32.mrf.mxu0
  %v6289 = vadd.f32 %v5276, %v6288
  %v6290 = vpop.f32.mrf.mxu0
  %v6291 = vadd.f32 %v5276, %v6290
  %6292 = vmatmul.bf16.gmra.mxu0 %v5136
  %v6293 = vpop.f32.mrf.mxu0
  %v6294 = vadd.f32 %v5276, %v6293
  %v6295 = vpop.f32.mrf.mxu0
  %v6296 = vadd.f32 %v5276, %v6295
  %6297 = vmatmul.bf16.gmra.mxu0 %v5138
  %v6298 = vpop.f32.mrf.mxu0
  %v6299 = vadd.f32 %v5276, %v6298
  %v6300 = vpop.f32.mrf.mxu0
  %v6301 = vadd.f32 %v5276, %v6300
  %6302 = vdwg.mxu0
  %6303 = vmatpush.bf16.msra.mxu0 %v5796
  %6304 = vmatpush.bf16.msra.mxu0 %v5788
  %6305 = vmatpush.bf16.msra.mxu0 %v5780
  %6306 = vmatpush.bf16.msra.mxu0 %v5772
  %6307 = vmatpush.bf16.msra.mxu0 %v5764
  %6308 = vmatpush.bf16.msra.mxu0 %v5756
  %6309 = vmatpush.bf16.msra.mxu0 %v5748
  %6310 = vmatpush.bf16.msra.mxu0 %v5740
  %6311 = vmatmul.bf16.gmra.mxu0 %v5133
  %v6312 = vpop.f32.mrf.mxu0
  %v6313 = vadd.f32 %v6284, %v6312
  %v6314 = vpop.f32.mrf.mxu0
  %v6315 = vadd.f32 %v6286, %v6314
  %6316 = vmatmul.bf16.gmra.mxu0 %v5135
  %v6317 = vpop.f32.mrf.mxu0
  %v6318 = vadd.f32 %v6289, %v6317
  %v6319 = vpop.f32.mrf.mxu0
  %v6320 = vadd.f32 %v6291, %v6319
  %6321 = vmatmul.bf16.gmra.mxu0 %v5137
  %v6322 = vpop.f32.mrf.mxu0
  %v6323 = vadd.f32 %v6294, %v6322
  %v6324 = vpop.f32.mrf.mxu0
  %v6325 = vadd.f32 %v6296, %v6324
  %6326 = vmatmul.bf16.gmra.mxu0 %v5139
  %v6327 = vpop.f32.mrf.mxu0
  %v6328 = vadd.f32 %v6299, %v6327
  %v6329 = vpop.f32.mrf.mxu0
  %v6330 = vadd.f32 %v6301, %v6329
  %6331 = vdwg.mxu0
  %6332 = vmatpush.bf16.msra.mxu0 %v5733
  %6333 = vmatpush.bf16.msra.mxu0 %v5725
  %6334 = vmatpush.bf16.msra.mxu0 %v5717
  %6335 = vmatpush.bf16.msra.mxu0 %v5709
  %6336 = vmatpush.bf16.msra.mxu0 %v5701
  %6337 = vmatpush.bf16.msra.mxu0 %v5693
  %6338 = vmatpush.bf16.msra.mxu0 %v5685
  %6339 = vmatpush.bf16.msra.mxu0 %v5677
  %6340 = vmatmul.bf16.gmra.mxu0 %v5132
  %v6341 = vpop.f32.mrf.mxu0
  %v6342 = vadd.f32 %v5277, %v6341
  %v6343 = vpop.f32.mrf.mxu0
  %v6344 = vadd.f32 %v5277, %v6343
  %6345 = vmatmul.bf16.gmra.mxu0 %v5134
  %v6346 = vpop.f32.mrf.mxu0
  %v6347 = vadd.f32 %v5277, %v6346
  %v6348 = vpop.f32.mrf.mxu0
  %v6349 = vadd.f32 %v5277, %v6348
  %6350 = vmatmul.bf16.gmra.mxu0 %v5136
  %v6351 = vpop.f32.mrf.mxu0
  %v6352 = vadd.f32 %v5277, %v6351
  %v6353 = vpop.f32.mrf.mxu0
  %v6354 = vadd.f32 %v5277, %v6353
  %6355 = vmatmul.bf16.gmra.mxu0 %v5138
  %v6356 = vpop.f32.mrf.mxu0
  %v6357 = vadd.f32 %v5277, %v6356
  %v6358 = vpop.f32.mrf.mxu0
  %v6359 = vadd.f32 %v5277, %v6358
  %6360 = vdwg.mxu0
  %6361 = vmatpush.bf16.msra.mxu0 %v5797
  %6362 = vmatpush.bf16.msra.mxu0 %v5789
  %6363 = vmatpush.bf16.msra.mxu0 %v5781
  %6364 = vmatpush.bf16.msra.mxu0 %v5773
  %6365 = vmatpush.bf16.msra.mxu0 %v5765
  %6366 = vmatpush.bf16.msra.mxu0 %v5757
  %6367 = vmatpush.bf16.msra.mxu0 %v5749
  %6368 = vmatpush.bf16.msra.mxu0 %v5741
  %6369 = vmatmul.bf16.gmra.mxu0 %v5133
  %v6370 = vpop.f32.mrf.mxu0
  %v6371 = vadd.f32 %v6342, %v6370
  %v6372 = vpop.f32.mrf.mxu0
  %v6373 = vadd.f32 %v6344, %v6372
  %6374 = vmatmul.bf16.gmra.mxu0 %v5135
  %v6375 = vpop.f32.mrf.mxu0
  %v6376 = vadd.f32 %v6347, %v6375
  %v6377 = vpop.f32.mrf.mxu0
  %v6378 = vadd.f32 %v6349, %v6377
  %6379 = vmatmul.bf16.gmra.mxu0 %v5137
  %v6380 = vpop.f32.mrf.mxu0
  %v6381 = vadd.f32 %v6352, %v6380
  %v6382 = vpop.f32.mrf.mxu0
  %v6383 = vadd.f32 %v6354, %v6382
  %6384 = vmatmul.bf16.gmra.mxu0 %v5139
  %v6385 = vpop.f32.mrf.mxu0
  %v6386 = vadd.f32 %v6357, %v6385
  %v6387 = vpop.f32.mrf.mxu0
  %v6388 = vadd.f32 %v6359, %v6387
  %6389 = vdwg.mxu0
  %6390 = vst [vmem:[#allocation3] sm:$0xff] %v5965
  %6391 = vst [vmem:[#allocation3 + $0x8] sm:$0xff] %v6023
  %6392 = vst [vmem:[#allocation3 + $0x10] sm:$0xff] %v6081
  %6393 = vst [vmem:[#allocation3 + $0x18] sm:$0xff] %v6139
  %6394 = vst [vmem:[#allocation3 + $0x20] sm:$0xff] %v6197
  %6395 = vst [vmem:[#allocation3 + $0x28] sm:$0xff] %v6255
  %6396 = vst [vmem:[#allocation3 + $0x30] sm:$0xff] %v6313
  %6397 = vst [vmem:[#allocation3 + $0x38] sm:$0xff] %v6371
  %6398 = vst [vmem:[#allocation3 + $0x40] sm:$0xff] %v5967
  %6399 = vst [vmem:[#allocation3 + $0x48] sm:$0xff] %v6025
  %6400 = vst [vmem:[#allocation3 + $0x50] sm:$0xff] %v6083
  %6401 = vst [vmem:[#allocation3 + $0x58] sm:$0xff] %v6141
  %6402 = vst [vmem:[#allocation3 + $0x60] sm:$0xff] %v6199
  %6403 = vst [vmem:[#allocation3 + $0x68] sm:$0xff] %v6257
  %6404 = vst [vmem:[#allocation3 + $0x70] sm:$0xff] %v6315
  %6405 = vst [vmem:[#allocation3 + $0x78] sm:$0xff] %v6373
  %6406 = vst [vmem:[#allocation3 + $0x80] sm:$0xff] %v5970
  %6407 = vst [vmem:[#allocation3 + $0x88] sm:$0xff] %v6028
  %6408 = vst [vmem:[#allocation3 + $0x90] sm:$0xff] %v6086
  %6409 = vst [vmem:[#allocation3 + $0x98] sm:$0xff] %v6144
  %6410 = vst [vmem:[#allocation3 + $0xa0] sm:$0xff] %v6202
  %6411 = vst [vmem:[#allocation3 + $0xa8] sm:$0xff] %v6260
  %6412 = vst [vmem:[#allocation3 + $0xb0] sm:$0xff] %v6318
  %6413 = vst [vmem:[#allocation3 + $0xb8] sm:$0xff] %v6376
  %6414 = vst [vmem:[#allocation3 + $0xc0] sm:$0xff] %v5972
  %6415 = vst [vmem:[#allocation3 + $0xc8] sm:$0xff] %v6030
  %6416 = vst [vmem:[#allocation3 + $0xd0] sm:$0xff] %v6088
  %6417 = vst [vmem:[#allocation3 + $0xd8] sm:$0xff] %v6146
  %6418 = vst [vmem:[#allocation3 + $0xe0] sm:$0xff] %v6204
  %6419 = vst [vmem:[#allocation3 + $0xe8] sm:$0xff] %v6262
  %6420 = vst [vmem:[#allocation3 + $0xf0] sm:$0xff] %v6320
  %6421 = vst [vmem:[#allocation3 + $0xf8] sm:$0xff] %v6378
  %6422 = vst [vmem:[#allocation3 + $0x100] sm:$0xff] %v5975
  %6423 = vst [vmem:[#allocation3 + $0x108] sm:$0xff] %v6033
  %6424 = vst [vmem:[#allocation3 + $0x110] sm:$0xff] %v6091
  %6425 = vst [vmem:[#allocation3 + $0x118] sm:$0xff] %v6149
  %6426 = vst [vmem:[#allocation3 + $0x120] sm:$0xff] %v6207
  %6427 = vst [vmem:[#allocation3 + $0x128] sm:$0xff] %v6265
  %6428 = vst [vmem:[#allocation3 + $0x130] sm:$0xff] %v6323
  %6429 = vst [vmem:[#allocation3 + $0x138] sm:$0xff] %v6381
  %6430 = vst [vmem:[#allocation3 + $0x140] sm:$0xff] %v5977
  %6431 = vst [vmem:[#allocation3 + $0x148] sm:$0xff] %v6035
  %6432 = vst [vmem:[#allocation3 + $0x150] sm:$0xff] %v6093
  %6433 = vst [vmem:[#allocation3 + $0x158] sm:$0xff] %v6151
  %6434 = vst [vmem:[#allocation3 + $0x160] sm:$0xff] %v6209
  %6435 = vst [vmem:[#allocation3 + $0x168] sm:$0xff] %v6267
  %6436 = vst [vmem:[#allocation3 + $0x170] sm:$0xff] %v6325
  %6437 = vst [vmem:[#allocation3 + $0x178] sm:$0xff] %v6383
  %6438 = vst [vmem:[#allocation3 + $0x180] sm:$0xff] %v5980
  %6439 = vst [vmem:[#allocation3 + $0x188] sm:$0xff] %v6038
  %6440 = vst [vmem:[#allocation3 + $0x190] sm:$0xff] %v6096
  %6441 = vst [vmem:[#allocation3 + $0x198] sm:$0xff] %v6154
  %6442 = vst [vmem:[#allocation3 + $0x1a0] sm:$0xff] %v6212
  %6443 = vst [vmem:[#allocation3 + $0x1a8] sm:$0xff] %v6270
  %6444 = vst [vmem:[#allocation3 + $0x1b0] sm:$0xff] %v6328
  %6445 = vst [vmem:[#allocation3 + $0x1b8] sm:$0xff] %v6386
  %6446 = vst [vmem:[#allocation3 + $0x1c0] sm:$0xff] %v5982
  %6447 = vst [vmem:[#allocation3 + $0x1c8] sm:$0xff] %v6040
  %6448 = vst [vmem:[#allocation3 + $0x1d0] sm:$0xff] %v6098
  %6449 = vst [vmem:[#allocation3 + $0x1d8] sm:$0xff] %v6156
  %6450 = vst [vmem:[#allocation3 + $0x1e0] sm:$0xff] %v6214
  %6451 = vst [vmem:[#allocation3 + $0x1e8] sm:$0xff] %v6272
  %6452 = vst [vmem:[#allocation3 + $0x1f0] sm:$0xff] %v6330
  %6453 = vst [vmem:[#allocation3 + $0x1f8] sm:$0xff] %v6388
  %s6454 = scalar_lea.vmem %s5, 24
  %v6455 = vld [vmem:[%s6454] sm:$0xff]
  %v6456 = vpack.c.bf16 %v6455, %v6455
  %v6457 = vld [vmem:[%s3 + $0x10] sm:$0xff]
  %v6458 = vld [vmem:[%s3 + $0x18] sm:$0xff]
  %v6459 = vld [vmem:[%s3 + $0x30] sm:$0xff]
  %v6460 = vld [vmem:[%s3 + $0x38] sm:$0xff]
  %v6461 = vld [vmem:[%s3 + $0x50] sm:$0xff]
  %v6462 = vld [vmem:[%s3 + $0x58] sm:$0xff]
  %v6463 = vld [vmem:[%s3 + $0x70] sm:$0xff]
  %v6464 = vld [vmem:[%s3 + $0x78] sm:$0xff]
  %v6465 = vld [vmem:[%s3 + $0x90] sm:$0xff]
  %v6466 = vld [vmem:[%s3 + $0x98] sm:$0xff]
  %v6467 = vld [vmem:[%s3 + $0xb0] sm:$0xff]
  %v6468 = vld [vmem:[%s3 + $0xb8] sm:$0xff]
  %v6469 = vld [vmem:[%s3 + $0xd0] sm:$0xff]
  %v6470 = vld [vmem:[%s3 + $0xd8] sm:$0xff]
  %v6471 = vld [vmem:[%s3 + $0xf0] sm:$0xff]
  %v6472 = vld [vmem:[%s3 + $0xf8] sm:$0xff]
  %v6473 = vld [vmem:[%s3 + $0x110] sm:$0xff]
  %v6474 = vld [vmem:[%s3 + $0x118] sm:$0xff]
  %v6475 = vld [vmem:[%s3 + $0x130] sm:$0xff]
  %v6476 = vld [vmem:[%s3 + $0x138] sm:$0xff]
  %v6477 = vld [vmem:[%s3 + $0x150] sm:$0xff]
  %v6478 = vld [vmem:[%s3 + $0x158] sm:$0xff]
  %v6479 = vld [vmem:[%s3 + $0x170] sm:$0xff]
  %v6480 = vld [vmem:[%s3 + $0x178] sm:$0xff]
  %v6481 = vld [vmem:[%s3 + $0x190] sm:$0xff]
  %v6482 = vld [vmem:[%s3 + $0x198] sm:$0xff]
  %v6483 = vld [vmem:[%s3 + $0x1b0] sm:$0xff]
  %v6484 = vld [vmem:[%s3 + $0x1b8] sm:$0xff]
  %v6485 = vld [vmem:[%s3 + $0x1d0] sm:$0xff]
  %v6486 = vld [vmem:[%s3 + $0x1d8] sm:$0xff]
  %v6487 = vld [vmem:[%s3 + $0x1f0] sm:$0xff]
  %v6488 = vld [vmem:[%s3 + $0x1f8] sm:$0xff]
  %v6521 = vunpack.c.l.b16 %v6457
  %v6522 = vunpack.c.h.b16 %v6457
  %v6523 = vunpack.c.l.b16 %v6458
  %v6524 = vunpack.c.h.b16 %v6458
  %v6525 = vunpack.c.l.b16 %v6459
  %v6526 = vunpack.c.h.b16 %v6459
  %v6527 = vunpack.c.l.b16 %v6460
  %v6528 = vunpack.c.h.b16 %v6460
  %v6529 = vunpack.c.l.b16 %v6461
  %v6530 = vunpack.c.h.b16 %v6461
  %v6531 = vunpack.c.l.b16 %v6462
  %v6532 = vunpack.c.h.b16 %v6462
  %v6533 = vunpack.c.l.b16 %v6463
  %v6534 = vunpack.c.h.b16 %v6463
  %v6535 = vunpack.c.l.b16 %v6464
  %v6536 = vunpack.c.h.b16 %v6464
  %v6537 = vunpack.c.l.b16 %v6465
  %v6538 = vunpack.c.h.b16 %v6465
  %v6539 = vunpack.c.l.b16 %v6466
  %v6540 = vunpack.c.h.b16 %v6466
  %v6541 = vunpack.c.l.b16 %v6467
  %v6542 = vunpack.c.h.b16 %v6467
  %v6543 = vunpack.c.l.b16 %v6468
  %v6544 = vunpack.c.h.b16 %v6468
  %v6545 = vunpack.c.l.b16 %v6469
  %v6546 = vunpack.c.h.b16 %v6469
  %v6547 = vunpack.c.l.b16 %v6470
  %v6548 = vunpack.c.h.b16 %v6470
  %v6549 = vunpack.c.l.b16 %v6471
  %v6550 = vunpack.c.h.b16 %v6471
  %v6551 = vunpack.c.l.b16 %v6472
  %v6552 = vunpack.c.h.b16 %v6472
  %v6553 = vunpack.c.l.b16 %v6473
  %v6554 = vunpack.c.h.b16 %v6473
  %v6555 = vunpack.c.l.b16 %v6474
  %v6556 = vunpack.c.h.b16 %v6474
  %v6557 = vunpack.c.l.b16 %v6475
  %v6558 = vunpack.c.h.b16 %v6475
  %v6559 = vunpack.c.l.b16 %v6476
  %v6560 = vunpack.c.h.b16 %v6476
  %v6561 = vunpack.c.l.b16 %v6477
  %v6562 = vunpack.c.h.b16 %v6477
  %v6563 = vunpack.c.l.b16 %v6478
  %v6564 = vunpack.c.h.b16 %v6478
  %v6565 = vunpack.c.l.b16 %v6479
  %v6566 = vunpack.c.h.b16 %v6479
  %v6567 = vunpack.c.l.b16 %v6480
  %v6568 = vunpack.c.h.b16 %v6480
  %v6569 = vunpack.c.l.b16 %v6481
  %v6570 = vunpack.c.h.b16 %v6481
  %v6571 = vunpack.c.l.b16 %v6482
  %v6572 = vunpack.c.h.b16 %v6482
  %v6573 = vunpack.c.l.b16 %v6483
  %v6574 = vunpack.c.h.b16 %v6483
  %v6575 = vunpack.c.l.b16 %v6484
  %v6576 = vunpack.c.h.b16 %v6484
  %v6577 = vunpack.c.l.b16 %v6485
  %v6578 = vunpack.c.h.b16 %v6485
  %v6579 = vunpack.c.l.b16 %v6486
  %v6580 = vunpack.c.h.b16 %v6486
  %v6581 = vunpack.c.l.b16 %v6487
  %v6582 = vunpack.c.h.b16 %v6487
  %v6583 = vunpack.c.l.b16 %v6488
  %v6584 = vunpack.c.h.b16 %v6488
  %v6585 = vpack.c.b16 %v6525, %v6521
  %v6586 = vpack.c.b16 %v6526, %v6522
  %v6587 = vpack.c.b16 %v6527, %v6523
  %v6588 = vpack.c.b16 %v6528, %v6524
  %v6589 = vpack.c.b16 %v6533, %v6529
  %v6590 = vpack.c.b16 %v6534, %v6530
  %v6591 = vpack.c.b16 %v6535, %v6531
  %v6592 = vpack.c.b16 %v6536, %v6532
  %v6593 = vpack.c.b16 %v6541, %v6537
  %v6594 = vpack.c.b16 %v6542, %v6538
  %v6595 = vpack.c.b16 %v6543, %v6539
  %v6596 = vpack.c.b16 %v6544, %v6540
  %v6597 = vpack.c.b16 %v6549, %v6545
  %v6598 = vpack.c.b16 %v6550, %v6546
  %v6599 = vpack.c.b16 %v6551, %v6547
  %v6600 = vpack.c.b16 %v6552, %v6548
  %v6601 = vpack.c.b16 %v6557, %v6553
  %v6602 = vpack.c.b16 %v6558, %v6554
  %v6603 = vpack.c.b16 %v6559, %v6555
  %v6604 = vpack.c.b16 %v6560, %v6556
  %v6605 = vpack.c.b16 %v6565, %v6561
  %v6606 = vpack.c.b16 %v6566, %v6562
  %v6607 = vpack.c.b16 %v6567, %v6563
  %v6608 = vpack.c.b16 %v6568, %v6564
  %v6609 = vpack.c.b16 %v6573, %v6569
  %v6610 = vpack.c.b16 %v6574, %v6570
  %v6611 = vpack.c.b16 %v6575, %v6571
  %v6612 = vpack.c.b16 %v6576, %v6572
  %v6613 = vpack.c.b16 %v6581, %v6577
  %v6614 = vpack.c.b16 %v6582, %v6578
  %v6615 = vpack.c.b16 %v6583, %v6579
  %v6616 = vpack.c.b16 %v6584, %v6580
  %6649 = vmatpush.bf16.msra.mxu0 %v6613
  %6650 = vmatpush.bf16.msra.mxu0 %v6609
  %6651 = vmatpush.bf16.msra.mxu0 %v6605
  %6652 = vmatpush.bf16.msra.mxu0 %v6601
  %6653 = vmatpush.bf16.msra.mxu0 %v6597
  %6654 = vmatpush.bf16.msra.mxu0 %v6593
  %6655 = vmatpush.bf16.msra.mxu0 %v6589
  %6656 = vmatpush.bf16.msra.mxu0 %v6585
  %6657 = vmatmul.bf16.gmra.mxu0 %v6456
  %v6658 = vpop.f32.mrf.mxu0
  %v6659 = vadd.f32 0.0, %v6658
  %v6660 = vpop.f32.mrf.mxu0
  %6661 = vdwg.mxu0
  %6662 = vmatpush.bf16.msra.mxu0 %v6614
  %6663 = vmatpush.bf16.msra.mxu0 %v6610
  %6664 = vmatpush.bf16.msra.mxu0 %v6606
  %6665 = vmatpush.bf16.msra.mxu0 %v6602
  %6666 = vmatpush.bf16.msra.mxu0 %v6598
  %6667 = vmatpush.bf16.msra.mxu0 %v6594
  %6668 = vmatpush.bf16.msra.mxu0 %v6590
  %6669 = vmatpush.bf16.msra.mxu0 %v6586
  %6670 = vmatmul.bf16.gmra.mxu0 %v6456
  %v6671 = vpop.f32.mrf.mxu0
  %v6672 = vadd.f32 0.0, %v6671
  %v6673 = vpop.f32.mrf.mxu0
  %6674 = vdwg.mxu0
  %6675 = vmatpush.bf16.msra.mxu0 %v6615
  %6676 = vmatpush.bf16.msra.mxu0 %v6611
  %6677 = vmatpush.bf16.msra.mxu0 %v6607
  %6678 = vmatpush.bf16.msra.mxu0 %v6603
  %6679 = vmatpush.bf16.msra.mxu0 %v6599
  %6680 = vmatpush.bf16.msra.mxu0 %v6595
  %6681 = vmatpush.bf16.msra.mxu0 %v6591
  %6682 = vmatpush.bf16.msra.mxu0 %v6587
  %6683 = vmatmul.bf16.gmra.mxu0 %v6456
  %v6684 = vpop.f32.mrf.mxu0
  %v6685 = vadd.f32 0.0, %v6684
  %v6686 = vpop.f32.mrf.mxu0
  %6687 = vdwg.mxu0
  %6688 = vmatpush.bf16.msra.mxu0 %v6616
  %6689 = vmatpush.bf16.msra.mxu0 %v6612
  %6690 = vmatpush.bf16.msra.mxu0 %v6608
  %6691 = vmatpush.bf16.msra.mxu0 %v6604
  %6692 = vmatpush.bf16.msra.mxu0 %v6600
  %6693 = vmatpush.bf16.msra.mxu0 %v6596
  %6694 = vmatpush.bf16.msra.mxu0 %v6592
  %6695 = vmatpush.bf16.msra.mxu0 %v6588
  %6696 = vmatmul.bf16.gmra.mxu0 %v6456
  %v6697 = vpop.f32.mrf.mxu0
  %v6698 = vadd.f32 0.0, %v6697
  %v6699 = vpop.f32.mrf.mxu0
  %6700 = vdwg.mxu0
  %s6701 = scalar_lea.vmem [#allocation3], 448
  %v6702 = vld [vmem:[%s6701 + $0x20] sm:$0xff]
  %v6703 = vld [vmem:[%s6701 + $0x28] sm:$0xff]
  %v6704 = vld [vmem:[%s6701 + $0x30] sm:$0xff]
  %v6705 = vld [vmem:[%s6701 + $0x38] sm:$0xff]
  %v6706 = vadd.f32 %v6702, %v6659
  %v6707 = vadd.f32 %v6703, %v6672
  %v6708 = vadd.f32 %v6704, %v6685
  %v6709 = vadd.f32 %v6705, %v6698
  %s6710 = scalar_lea.vmem %s6, 24
  %v6711 = vld [vmem:[%s6710] sm:$0xff]
  %v6712 = vxor.u32 %v6706, 2147483648
  %v6713 = vmul.f32 %v6712, 1.442695
  %v6714 = vpow.pop %v6713
  %v6715 = vadd.f32 %v6714, 1.0
  %v6716 = vrcp.pop %v6715
  %v6717 = vmul.f32 %v6715, %v6716
  %v6718 = vsub.f32 1.0, %v6717
  %v6719 = vmul.f32 %v6716, %v6718
  %v6720 = vadd.f32 %v6716, %v6719
  %vm6721 = vweird.f32 %v6715
  %vm6722 = vweird.f32 %v6716
  %vm6723 = vmor %vm6721, %vm6722
  %v6724 = vsel %vm6723, %v6716, %v6720
  %v6725 = vand.u32 2147483647, %v6715
  %vm6726 = vcmp.eq.f32.partialorder %v6725, 8.507059e+37
  %v6727 = vand.u32 %v6715, 2147483648
  %v6728 = vor.u32 1.1754944e-38, %v6727
  %v6729 = vsel %vm6726, %v6728, %v6724
  %v6730 = vmul.f32 1.0, %v6729
  %v6731 = vxor.u32 %v6707, 2147483648
  %v6732 = vmul.f32 %v6731, 1.442695
  %v6733 = vpow.pop %v6732
  %v6734 = vadd.f32 %v6733, 1.0
  %v6735 = vrcp.pop %v6734
  %v6736 = vmul.f32 %v6734, %v6735
  %v6737 = vsub.f32 1.0, %v6736
  %v6738 = vmul.f32 %v6735, %v6737
  %v6739 = vadd.f32 %v6735, %v6738
  %vm6740 = vweird.f32 %v6734
  %vm6741 = vweird.f32 %v6735
  %vm6742 = vmor %vm6740, %vm6741
  %v6743 = vsel %vm6742, %v6735, %v6739
  %v6744 = vand.u32 2147483647, %v6734
  %vm6745 = vcmp.eq.f32.partialorder %v6744, 8.507059e+37
  %v6746 = vand.u32 %v6734, 2147483648
  %v6747 = vor.u32 1.1754944e-38, %v6746
  %v6748 = vsel %vm6745, %v6747, %v6743
  %v6749 = vmul.f32 1.0, %v6748
  %v6750 = vtanh.pop %v6708
  %v6751 = vxor.u32 %v6709, 2147483648
  %v6752 = vmul.f32 %v6751, 1.442695
  %v6753 = vpow.pop %v6752
  %v6754 = vadd.f32 %v6753, 1.0
  %v6755 = vrcp.pop %v6754
  %v6756 = vmul.f32 %v6754, %v6755
  %v6757 = vsub.f32 1.0, %v6756
  %v6758 = vmul.f32 %v6755, %v6757
  %v6759 = vadd.f32 %v6755, %v6758
  %vm6760 = vweird.f32 %v6754
  %vm6761 = vweird.f32 %v6755
  %vm6762 = vmor %vm6760, %vm6761
  %v6763 = vsel %vm6762, %v6755, %v6759
  %v6764 = vand.u32 2147483647, %v6754
  %vm6765 = vcmp.eq.f32.partialorder %v6764, 8.507059e+37
  %v6766 = vand.u32 %v6754, 2147483648
  %v6767 = vor.u32 1.1754944e-38, %v6766
  %v6768 = vsel %vm6765, %v6767, %v6763
  %v6769 = vmul.f32 1.0, %v6768
  %v6770 = vmul.f32 %v6749, %v6711
  %v6771 = vmul.f32 %v6730, %v6750
  %v6772 = vadd.f32 %v6770, %v6771
  %v6773 = vtanh.pop %v6772
  %v6774 = vmul.f32 %v6769, %v6773
  %s6775 = scalar_lea.vmem %s5, 16
  %v6776 = vld [vmem:[%s6775] sm:$0xff]
  %s6777 = scalar_lea.vmem %s6, 16
  %v6778 = vld [vmem:[%s6777] sm:$0xff]
  %v6779 = vpack.c.bf16 %v6776, %v6776
  %v6780 = vld [vmem:[%s3] sm:$0xff]
  %v6781 = vld [vmem:[%s3 + $0x8] sm:$0xff]
  %v6782 = vld [vmem:[%s3 + $0x20] sm:$0xff]
  %v6783 = vld [vmem:[%s3 + $0x28] sm:$0xff]
  %v6784 = vld [vmem:[%s3 + $0x40] sm:$0xff]
  %v6785 = vld [vmem:[%s3 + $0x48] sm:$0xff]
  %v6786 = vld [vmem:[%s3 + $0x60] sm:$0xff]
  %v6787 = vld [vmem:[%s3 + $0x68] sm:$0xff]
  %v6788 = vld [vmem:[%s3 + $0x80] sm:$0xff]
  %v6789 = vld [vmem:[%s3 + $0x88] sm:$0xff]
  %v6790 = vld [vmem:[%s3 + $0xa0] sm:$0xff]
  %v6791 = vld [vmem:[%s3 + $0xa8] sm:$0xff]
  %v6792 = vld [vmem:[%s3 + $0xc0] sm:$0xff]
  %v6793 = vld [vmem:[%s3 + $0xc8] sm:$0xff]
  %v6794 = vld [vmem:[%s3 + $0xe0] sm:$0xff]
  %v6795 = vld [vmem:[%s3 + $0xe8] sm:$0xff]
  %v6796 = vld [vmem:[%s3 + $0x100] sm:$0xff]
  %v6797 = vld [vmem:[%s3 + $0x108] sm:$0xff]
  %v6798 = vld [vmem:[%s3 + $0x120] sm:$0xff]
  %v6799 = vld [vmem:[%s3 + $0x128] sm:$0xff]
  %v6800 = vld [vmem:[%s3 + $0x140] sm:$0xff]
  %v6801 = vld [vmem:[%s3 + $0x148] sm:$0xff]
  %v6802 = vld [vmem:[%s3 + $0x160] sm:$0xff]
  %v6803 = vld [vmem:[%s3 + $0x168] sm:$0xff]
  %v6804 = vld [vmem:[%s3 + $0x180] sm:$0xff]
  %v6805 = vld [vmem:[%s3 + $0x188] sm:$0xff]
  %v6806 = vld [vmem:[%s3 + $0x1a0] sm:$0xff]
  %v6807 = vld [vmem:[%s3 + $0x1a8] sm:$0xff]
  %v6808 = vld [vmem:[%s3 + $0x1c0] sm:$0xff]
  %v6809 = vld [vmem:[%s3 + $0x1c8] sm:$0xff]
  %v6810 = vld [vmem:[%s3 + $0x1e0] sm:$0xff]
  %v6811 = vld [vmem:[%s3 + $0x1e8] sm:$0xff]
  %v6844 = vunpack.c.l.b16 %v6780
  %v6845 = vunpack.c.h.b16 %v6780
  %v6846 = vunpack.c.l.b16 %v6781
  %v6847 = vunpack.c.h.b16 %v6781
  %v6848 = vunpack.c.l.b16 %v6782
  %v6849 = vunpack.c.h.b16 %v6782
  %v6850 = vunpack.c.l.b16 %v6783
  %v6851 = vunpack.c.h.b16 %v6783
  %v6852 = vunpack.c.l.b16 %v6784
  %v6853 = vunpack.c.h.b16 %v6784
  %v6854 = vunpack.c.l.b16 %v6785
  %v6855 = vunpack.c.h.b16 %v6785
  %v6856 = vunpack.c.l.b16 %v6786
  %v6857 = vunpack.c.h.b16 %v6786
  %v6858 = vunpack.c.l.b16 %v6787
  %v6859 = vunpack.c.h.b16 %v6787
  %v6860 = vunpack.c.l.b16 %v6788
  %v6861 = vunpack.c.h.b16 %v6788
  %v6862 = vunpack.c.l.b16 %v6789
  %v6863 = vunpack.c.h.b16 %v6789
  %v6864 = vunpack.c.l.b16 %v6790
  %v6865 = vunpack.c.h.b16 %v6790
  %v6866 = vunpack.c.l.b16 %v6791
  %v6867 = vunpack.c.h.b16 %v6791
  %v6868 = vunpack.c.l.b16 %v6792
  %v6869 = vunpack.c.h.b16 %v6792
  %v6870 = vunpack.c.l.b16 %v6793
  %v6871 = vunpack.c.h.b16 %v6793
  %v6872 = vunpack.c.l.b16 %v6794
  %v6873 = vunpack.c.h.b16 %v6794
  %v6874 = vunpack.c.l.b16 %v6795
  %v6875 = vunpack.c.h.b16 %v6795
  %v6876 = vunpack.c.l.b16 %v6796
  %v6877 = vunpack.c.h.b16 %v6796
  %v6878 = vunpack.c.l.b16 %v6797
  %v6879 = vunpack.c.h.b16 %v6797
  %v6880 = vunpack.c.l.b16 %v6798
  %v6881 = vunpack.c.h.b16 %v6798
  %v6882 = vunpack.c.l.b16 %v6799
  %v6883 = vunpack.c.h.b16 %v6799
  %v6884 = vunpack.c.l.b16 %v6800
  %v6885 = vunpack.c.h.b16 %v6800
  %v6886 = vunpack.c.l.b16 %v6801
  %v6887 = vunpack.c.h.b16 %v6801
  %v6888 = vunpack.c.l.b16 %v6802
  %v6889 = vunpack.c.h.b16 %v6802
  %v6890 = vunpack.c.l.b16 %v6803
  %v6891 = vunpack.c.h.b16 %v6803
  %v6892 = vunpack.c.l.b16 %v6804
  %v6893 = vunpack.c.h.b16 %v6804
  %v6894 = vunpack.c.l.b16 %v6805
  %v6895 = vunpack.c.h.b16 %v6805
  %v6896 = vunpack.c.l.b16 %v6806
  %v6897 = vunpack.c.h.b16 %v6806
  %v6898 = vunpack.c.l.b16 %v6807
  %v6899 = vunpack.c.h.b16 %v6807
  %v6900 = vunpack.c.l.b16 %v6808
  %v6901 = vunpack.c.h.b16 %v6808
  %v6902 = vunpack.c.l.b16 %v6809
  %v6903 = vunpack.c.h.b16 %v6809
  %v6904 = vunpack.c.l.b16 %v6810
  %v6905 = vunpack.c.h.b16 %v6810
  %v6906 = vunpack.c.l.b16 %v6811
  %v6907 = vunpack.c.h.b16 %v6811
  %v6908 = vpack.c.b16 %v6848, %v6844
  %v6909 = vpack.c.b16 %v6849, %v6845
  %v6910 = vpack.c.b16 %v6850, %v6846
  %v6911 = vpack.c.b16 %v6851, %v6847
  %v6912 = vpack.c.b16 %v6856, %v6852
  %v6913 = vpack.c.b16 %v6857, %v6853
  %v6914 = vpack.c.b16 %v6858, %v6854
  %v6915 = vpack.c.b16 %v6859, %v6855
  %v6916 = vpack.c.b16 %v6864, %v6860
  %v6917 = vpack.c.b16 %v6865, %v6861
  %v6918 = vpack.c.b16 %v6866, %v6862
  %v6919 = vpack.c.b16 %v6867, %v6863
  %v6920 = vpack.c.b16 %v6872, %v6868
  %v6921 = vpack.c.b16 %v6873, %v6869
  %v6922 = vpack.c.b16 %v6874, %v6870
  %v6923 = vpack.c.b16 %v6875, %v6871
  %v6924 = vpack.c.b16 %v6880, %v6876
  %v6925 = vpack.c.b16 %v6881, %v6877
  %v6926 = vpack.c.b16 %v6882, %v6878
  %v6927 = vpack.c.b16 %v6883, %v6879
  %v6928 = vpack.c.b16 %v6888, %v6884
  %v6929 = vpack.c.b16 %v6889, %v6885
  %v6930 = vpack.c.b16 %v6890, %v6886
  %v6931 = vpack.c.b16 %v6891, %v6887
  %v6932 = vpack.c.b16 %v6896, %v6892
  %v6933 = vpack.c.b16 %v6897, %v6893
  %v6934 = vpack.c.b16 %v6898, %v6894
  %v6935 = vpack.c.b16 %v6899, %v6895
  %v6936 = vpack.c.b16 %v6904, %v6900
  %v6937 = vpack.c.b16 %v6905, %v6901
  %v6938 = vpack.c.b16 %v6906, %v6902
  %v6939 = vpack.c.b16 %v6907, %v6903
  %6972 = vmatpush.bf16.msra.mxu0 %v6936
  %6973 = vmatpush.bf16.msra.mxu0 %v6932
  %6974 = vmatpush.bf16.msra.mxu0 %v6928
  %6975 = vmatpush.bf16.msra.mxu0 %v6924
  %6976 = vmatpush.bf16.msra.mxu0 %v6920
  %6977 = vmatpush.bf16.msra.mxu0 %v6916
  %6978 = vmatpush.bf16.msra.mxu0 %v6912
  %6979 = vmatpush.bf16.msra.mxu0 %v6908
  %6980 = vmatmul.bf16.gmra.mxu0 %v6779
  %v6981 = vpop.f32.mrf.mxu0
  %v6982 = vadd.f32 0.0, %v6981
  %v6983 = vpop.f32.mrf.mxu0
  %6984 = vdwg.mxu0
  %6985 = vmatpush.bf16.msra.mxu0 %v6937
  %6986 = vmatpush.bf16.msra.mxu0 %v6933
  %6987 = vmatpush.bf16.msra.mxu0 %v6929
  %6988 = vmatpush.bf16.msra.mxu0 %v6925
  %6989 = vmatpush.bf16.msra.mxu0 %v6921
  %6990 = vmatpush.bf16.msra.mxu0 %v6917
  %6991 = vmatpush.bf16.msra.mxu0 %v6913
  %6992 = vmatpush.bf16.msra.mxu0 %v6909
  %6993 = vmatmul.bf16.gmra.mxu0 %v6779
  %v6994 = vpop.f32.mrf.mxu0
  %v6995 = vadd.f32 0.0, %v6994
  %v6996 = vpop.f32.mrf.mxu0
  %6997 = vdwg.mxu0
  %6998 = vmatpush.bf16.msra.mxu0 %v6938
  %6999 = vmatpush.bf16.msra.mxu0 %v6934
  %7000 = vmatpush.bf16.msra.mxu0 %v6930
  %7001 = vmatpush.bf16.msra.mxu0 %v6926
  %7002 = vmatpush.bf16.msra.mxu0 %v6922
  %7003 = vmatpush.bf16.msra.mxu0 %v6918
  %7004 = vmatpush.bf16.msra.mxu0 %v6914
  %7005 = vmatpush.bf16.msra.mxu0 %v6910
  %7006 = vmatmul.bf16.gmra.mxu0 %v6779
  %v7007 = vpop.f32.mrf.mxu0
  %v7008 = vadd.f32 0.0, %v7007
  %v7009 = vpop.f32.mrf.mxu0
  %7010 = vdwg.mxu0
  %7011 = vmatpush.bf16.msra.mxu0 %v6939
  %7012 = vmatpush.bf16.msra.mxu0 %v6935
  %7013 = vmatpush.bf16.msra.mxu0 %v6931
  %7014 = vmatpush.bf16.msra.mxu0 %v6927
  %7015 = vmatpush.bf16.msra.mxu0 %v6923
  %7016 = vmatpush.bf16.msra.mxu0 %v6919
  %7017 = vmatpush.bf16.msra.mxu0 %v6915
  %7018 = vmatpush.bf16.msra.mxu0 %v6911
  %7019 = vmatmul.bf16.gmra.mxu0 %v6779
  %v7020 = vpop.f32.mrf.mxu0
  %v7021 = vadd.f32 0.0, %v7020
  %v7022 = vpop.f32.mrf.mxu0
  %7023 = vdwg.mxu0
  %v7024 = vld [vmem:[#allocation3] sm:$0xff]
  %v7025 = vld [vmem:[#allocation3 + $0x8] sm:$0xff]
  %v7026 = vld [vmem:[#allocation3 + $0x10] sm:$0xff]
  %v7027 = vld [vmem:[#allocation3 + $0x18] sm:$0xff]
  %v7028 = vadd.f32 %v7024, %v6982
  %v7029 = vadd.f32 %v7025, %v6995
  %v7030 = vadd.f32 %v7026, %v7008
  %v7031 = vadd.f32 %v7027, %v7021
  %v7032 = vxor.u32 %v7028, 2147483648
  %v7033 = vmul.f32 %v7032, 1.442695
  %v7034 = vpow.pop %v7033
  %v7035 = vadd.f32 %v7034, 1.0
  %v7036 = vrcp.pop %v7035
  %v7037 = vmul.f32 %v7035, %v7036
  %v7038 = vsub.f32 1.0, %v7037
  %v7039 = vmul.f32 %v7036, %v7038
  %v7040 = vadd.f32 %v7036, %v7039
  %vm7041 = vweird.f32 %v7035
  %vm7042 = vweird.f32 %v7036
  %vm7043 = vmor %vm7041, %vm7042
  %v7044 = vsel %vm7043, %v7036, %v7040
  %v7045 = vand.u32 2147483647, %v7035
  %vm7046 = vcmp.eq.f32.partialorder %v7045, 8.507059e+37
  %v7047 = vand.u32 %v7035, 2147483648
  %v7048 = vor.u32 1.1754944e-38, %v7047
  %v7049 = vsel %vm7046, %v7048, %v7044
  %v7050 = vmul.f32 1.0, %v7049
  %v7051 = vxor.u32 %v7029, 2147483648
  %v7052 = vmul.f32 %v7051, 1.442695
  %v7053 = vpow.pop %v7052
  %v7054 = vadd.f32 %v7053, 1.0
  %v7055 = vrcp.pop %v7054
  %v7056 = vmul.f32 %v7054, %v7055
  %v7057 = vsub.f32 1.0, %v7056
  %v7058 = vmul.f32 %v7055, %v7057
  %v7059 = vadd.f32 %v7055, %v7058
  %vm7060 = vweird.f32 %v7054
  %vm7061 = vweird.f32 %v7055
  %vm7062 = vmor %vm7060, %vm7061
  %v7063 = vsel %vm7062, %v7055, %v7059
  %v7064 = vand.u32 2147483647, %v7054
  %vm7065 = vcmp.eq.f32.partialorder %v7064, 8.507059e+37
  %v7066 = vand.u32 %v7054, 2147483648
  %v7067 = vor.u32 1.1754944e-38, %v7066
  %v7068 = vsel %vm7065, %v7067, %v7063
  %v7069 = vmul.f32 1.0, %v7068
  %v7070 = vtanh.pop %v7030
  %v7071 = vxor.u32 %v7031, 2147483648
  %v7072 = vmul.f32 %v7071, 1.442695
  %v7073 = vpow.pop %v7072
  %v7074 = vadd.f32 %v7073, 1.0
  %v7075 = vrcp.pop %v7074
  %v7076 = vmul.f32 %v7074, %v7075
  %v7077 = vsub.f32 1.0, %v7076
  %v7078 = vmul.f32 %v7075, %v7077
  %v7079 = vadd.f32 %v7075, %v7078
  %vm7080 = vweird.f32 %v7074
  %vm7081 = vweird.f32 %v7075
  %vm7082 = vmor %vm7080, %vm7081
  %v7083 = vsel %vm7082, %v7075, %v7079
  %v7084 = vand.u32 2147483647, %v7074
  %vm7085 = vcmp.eq.f32.partialorder %v7084, 8.507059e+37
  %v7086 = vand.u32 %v7074, 2147483648
  %v7087 = vor.u32 1.1754944e-38, %v7086
  %v7088 = vsel %vm7085, %v7087, %v7083
  %v7089 = vmul.f32 1.0, %v7088
  %v7090 = vmul.f32 %v7069, %v6778
  %v7091 = vmul.f32 %v7050, %v7070
  %v7092 = vadd.f32 %v7090, %v7091
  %v7093 = vtanh.pop %v7092
  %v7094 = vmul.f32 %v7089, %v7093
  %v7095 = vpack.c.bf16 %v7094, %v7094
  %7096 = vmatpush.bf16.msra.mxu0 %v6936
  %7097 = vmatpush.bf16.msra.mxu0 %v6932
  %7098 = vmatpush.bf16.msra.mxu0 %v6928
  %7099 = vmatpush.bf16.msra.mxu0 %v6924
  %7100 = vmatpush.bf16.msra.mxu0 %v6920
  %7101 = vmatpush.bf16.msra.mxu0 %v6916
  %7102 = vmatpush.bf16.msra.mxu0 %v6912
  %7103 = vmatpush.bf16.msra.mxu0 %v6908
  %7104 = vmatmul.bf16.gmra.mxu0 %v7095
  %v7105 = vpop.f32.mrf.mxu0
  %v7106 = vadd.f32 0.0, %v7105
  %v7107 = vpop.f32.mrf.mxu0
  %7108 = vdwg.mxu0
  %7109 = vmatpush.bf16.msra.mxu0 %v6937
  %7110 = vmatpush.bf16.msra.mxu0 %v6933
  %7111 = vmatpush.bf16.msra.mxu0 %v6929
  %7112 = vmatpush.bf16.msra.mxu0 %v6925
  %7113 = vmatpush.bf16.msra.mxu0 %v6921
  %7114 = vmatpush.bf16.msra.mxu0 %v6917
  %7115 = vmatpush.bf16.msra.mxu0 %v6913
  %7116 = vmatpush.bf16.msra.mxu0 %v6909
  %7117 = vmatmul.bf16.gmra.mxu0 %v7095
  %v7118 = vpop.f32.mrf.mxu0
  %v7119 = vadd.f32 0.0, %v7118
  %v7120 = vpop.f32.mrf.mxu0
  %7121 = vdwg.mxu0
  %7122 = vmatpush.bf16.msra.mxu0 %v6938
  %7123 = vmatpush.bf16.msra.mxu0 %v6934
  %7124 = vmatpush.bf16.msra.mxu0 %v6930
  %7125 = vmatpush.bf16.msra.mxu0 %v6926
  %7126 = vmatpush.bf16.msra.mxu0 %v6922
  %7127 = vmatpush.bf16.msra.mxu0 %v6918
  %7128 = vmatpush.bf16.msra.mxu0 %v6914
  %7129 = vmatpush.bf16.msra.mxu0 %v6910
  %7130 = vmatmul.bf16.gmra.mxu0 %v7095
  %v7131 = vpop.f32.mrf.mxu0
  %v7132 = vadd.f32 0.0, %v7131
  %v7133 = vpop.f32.mrf.mxu0
  %7134 = vdwg.mxu0
  %7135 = vmatpush.bf16.msra.mxu0 %v6939
  %7136 = vmatpush.bf16.msra.mxu0 %v6935
  %7137 = vmatpush.bf16.msra.mxu0 %v6931
  %7138 = vmatpush.bf16.msra.mxu0 %v6927
  %7139 = vmatpush.bf16.msra.mxu0 %v6923
  %7140 = vmatpush.bf16.msra.mxu0 %v6919
  %7141 = vmatpush.bf16.msra.mxu0 %v6915
  %7142 = vmatpush.bf16.msra.mxu0 %v6911
  %7143 = vmatmul.bf16.gmra.mxu0 %v7095
  %v7144 = vpop.f32.mrf.mxu0
  %v7145 = vadd.f32 0.0, %v7144
  %v7146 = vpop.f32.mrf.mxu0
  %7147 = vdwg.mxu0
  %s7148 = scalar_lea.vmem [#allocation3], 64
  %v7149 = vld [vmem:[%s7148] sm:$0xff]
  %v7150 = vld [vmem:[%s7148 + $0x8] sm:$0xff]
  %v7151 = vld [vmem:[%s7148 + $0x10] sm:$0xff]
  %v7152 = vld [vmem:[%s7148 + $0x18] sm:$0xff]
  %v7153 = vadd.f32 %v7149, %v7106
  %v7154 = vadd.f32 %v7150, %v7119
  %v7155 = vadd.f32 %v7151, %v7132
  %v7156 = vadd.f32 %v7152, %v7145
  %v7157 = vxor.u32 %v7153, 2147483648
  %v7158 = vmul.f32 %v7157, 1.442695
  %v7159 = vpow.pop %v7158
  %v7160 = vadd.f32 %v7159, 1.0
  %v7161 = vrcp.pop %v7160
  %v7162 = vmul.f32 %v7160, %v7161
  %v7163 = vsub.f32 1.0, %v7162
  %v7164 = vmul.f32 %v7161, %v7163
  %v7165 = vadd.f32 %v7161, %v7164
  %vm7166 = vweird.f32 %v7160
  %vm7167 = vweird.f32 %v7161
  %vm7168 = vmor %vm7166, %vm7167
  %v7169 = vsel %vm7168, %v7161, %v7165
  %v7170 = vand.u32 2147483647, %v7160
  %vm7171 = vcmp.eq.f32.partialorder %v7170, 8.507059e+37
  %v7172 = vand.u32 %v7160, 2147483648
  %v7173 = vor.u32 1.1754944e-38, %v7172
  %v7174 = vsel %vm7171, %v7173, %v7169
  %v7175 = vmul.f32 1.0, %v7174
  %v7176 = vxor.u32 %v7154, 2147483648
  %v7177 = vmul.f32 %v7176, 1.442695
  %v7178 = vpow.pop %v7177
  %v7179 = vadd.f32 %v7178, 1.0
  %v7180 = vrcp.pop %v7179
  %v7181 = vmul.f32 %v7179, %v7180
  %v7182 = vsub.f32 1.0, %v7181
  %v7183 = vmul.f32 %v7180, %v7182
  %v7184 = vadd.f32 %v7180, %v7183
  %vm7185 = vweird.f32 %v7179
  %vm7186 = vweird.f32 %v7180
  %vm7187 = vmor %vm7185, %vm7186
  %v7188 = vsel %vm7187, %v7180, %v7184
  %v7189 = vand.u32 2147483647, %v7179
  %vm7190 = vcmp.eq.f32.partialorder %v7189, 8.507059e+37
  %v7191 = vand.u32 %v7179, 2147483648
  %v7192 = vor.u32 1.1754944e-38, %v7191
  %v7193 = vsel %vm7190, %v7192, %v7188
  %v7194 = vmul.f32 1.0, %v7193
  %v7195 = vtanh.pop %v7155
  %v7196 = vxor.u32 %v7156, 2147483648
  %v7197 = vmul.f32 %v7196, 1.442695
  %v7198 = vpow.pop %v7197
  %v7199 = vadd.f32 %v7198, 1.0
  %v7200 = vrcp.pop %v7199
  %v7201 = vmul.f32 %v7199, %v7200
  %v7202 = vsub.f32 1.0, %v7201
  %v7203 = vmul.f32 %v7200, %v7202
  %v7204 = vadd.f32 %v7200, %v7203
  %vm7205 = vweird.f32 %v7199
  %vm7206 = vweird.f32 %v7200
  %vm7207 = vmor %vm7205, %vm7206
  %v7208 = vsel %vm7207, %v7200, %v7204
  %v7209 = vand.u32 2147483647, %v7199
  %vm7210 = vcmp.eq.f32.partialorder %v7209, 8.507059e+37
  %v7211 = vand.u32 %v7199, 2147483648
  %v7212 = vor.u32 1.1754944e-38, %v7211
  %v7213 = vsel %vm7210, %v7212, %v7208
  %v7214 = vmul.f32 1.0, %v7213
  %v7215 = vmul.f32 %v7194, %v7092
  %v7216 = vmul.f32 %v7175, %v7195
  %v7217 = vadd.f32 %v7215, %v7216
  %v7218 = vtanh.pop %v7217
  %v7219 = vmul.f32 %v7214, %v7218
  %v7220 = vpack.c.bf16 %v7219, %v7219
  %7221 = vmatpush.bf16.msra.mxu0 %v6936
  %7222 = vmatpush.bf16.msra.mxu0 %v6932
  %7223 = vmatpush.bf16.msra.mxu0 %v6928
  %7224 = vmatpush.bf16.msra.mxu0 %v6924
  %7225 = vmatpush.bf16.msra.mxu0 %v6920
  %7226 = vmatpush.bf16.msra.mxu0 %v6916
  %7227 = vmatpush.bf16.msra.mxu0 %v6912
  %7228 = vmatpush.bf16.msra.mxu0 %v6908
  %7229 = vmatmul.bf16.gmra.mxu0 %v7220
  %v7230 = vpop.f32.mrf.mxu0
  %v7231 = vadd.f32 0.0, %v7230
  %v7232 = vpop.f32.mrf.mxu0
  %7233 = vdwg.mxu0
  %7234 = vmatpush.bf16.msra.mxu0 %v6937
  %7235 = vmatpush.bf16.msra.mxu0 %v6933
  %7236 = vmatpush.bf16.msra.mxu0 %v6929
  %7237 = vmatpush.bf16.msra.mxu0 %v6925
  %7238 = vmatpush.bf16.msra.mxu0 %v6921
  %7239 = vmatpush.bf16.msra.mxu0 %v6917
  %7240 = vmatpush.bf16.msra.mxu0 %v6913
  %7241 = vmatpush.bf16.msra.mxu0 %v6909
  %7242 = vmatmul.bf16.gmra.mxu0 %v7220
  %v7243 = vpop.f32.mrf.mxu0
  %v7244 = vadd.f32 0.0, %v7243
  %v7245 = vpop.f32.mrf.mxu0
  %7246 = vdwg.mxu0
  %7247 = vmatpush.bf16.msra.mxu0 %v6938
  %7248 = vmatpush.bf16.msra.mxu0 %v6934
  %7249 = vmatpush.bf16.msra.mxu0 %v6930
  %7250 = vmatpush.bf16.msra.mxu0 %v6926
  %7251 = vmatpush.bf16.msra.mxu0 %v6922
  %7252 = vmatpush.bf16.msra.mxu0 %v6918
  %7253 = vmatpush.bf16.msra.mxu0 %v6914
  %7254 = vmatpush.bf16.msra.mxu0 %v6910
  %7255 = vmatmul.bf16.gmra.mxu0 %v7220
  %v7256 = vpop.f32.mrf.mxu0
  %v7257 = vadd.f32 0.0, %v7256
  %v7258 = vpop.f32.mrf.mxu0
  %7259 = vdwg.mxu0
  %7260 = vmatpush.bf16.msra.mxu0 %v6939
  %7261 = vmatpush.bf16.msra.mxu0 %v6935
  %7262 = vmatpush.bf16.msra.mxu0 %v6931
  %7263 = vmatpush.bf16.msra.mxu0 %v6927
  %7264 = vmatpush.bf16.msra.mxu0 %v6923
  %7265 = vmatpush.bf16.msra.mxu0 %v6919
  %7266 = vmatpush.bf16.msra.mxu0 %v6915
  %7267 = vmatpush.bf16.msra.mxu0 %v6911
  %7268 = vmatmul.bf16.gmra.mxu0 %v7220
  %v7269 = vpop.f32.mrf.mxu0
  %v7270 = vadd.f32 0.0, %v7269
  %v7271 = vpop.f32.mrf.mxu0
  %7272 = vdwg.mxu0
  %s7273 = scalar_lea.vmem [#allocation3], 128
  %v7274 = vld [vmem:[%s7273] sm:$0xff]
  %v7275 = vld [vmem:[%s7273 + $0x8] sm:$0xff]
  %v7276 = vld [vmem:[%s7273 + $0x10] sm:$0xff]
  %v7277 = vld [vmem:[%s7273 + $0x18] sm:$0xff]
  %v7278 = vadd.f32 %v7274, %v7231
  %v7279 = vadd.f32 %v7275, %v7244
  %v7280 = vadd.f32 %v7276, %v7257
  %v7281 = vadd.f32 %v7277, %v7270
  %v7282 = vxor.u32 %v7278, 2147483648
  %v7283 = vmul.f32 %v7282, 1.442695
  %v7284 = vpow.pop %v7283
  %v7285 = vadd.f32 %v7284, 1.0
  %v7286 = vrcp.pop %v7285
  %v7287 = vmul.f32 %v7285, %v7286
  %v7288 = vsub.f32 1.0, %v7287
  %v7289 = vmul.f32 %v7286, %v7288
  %v7290 = vadd.f32 %v7286, %v7289
  %vm7291 = vweird.f32 %v7285
  %vm7292 = vweird.f32 %v7286
  %vm7293 = vmor %vm7291, %vm7292
  %v7294 = vsel %vm7293, %v7286, %v7290
  %v7295 = vand.u32 2147483647, %v7285
  %vm7296 = vcmp.eq.f32.partialorder %v7295, 8.507059e+37
  %v7297 = vand.u32 %v7285, 2147483648
  %v7298 = vor.u32 1.1754944e-38, %v7297
  %v7299 = vsel %vm7296, %v7298, %v7294
  %v7300 = vmul.f32 1.0, %v7299
  %v7301 = vxor.u32 %v7279, 2147483648
  %v7302 = vmul.f32 %v7301, 1.442695
  %v7303 = vpow.pop %v7302
  %v7304 = vadd.f32 %v7303, 1.0
  %v7305 = vrcp.pop %v7304
  %v7306 = vmul.f32 %v7304, %v7305
  %v7307 = vsub.f32 1.0, %v7306
  %v7308 = vmul.f32 %v7305, %v7307
  %v7309 = vadd.f32 %v7305, %v7308
  %vm7310 = vweird.f32 %v7304
  %vm7311 = vweird.f32 %v7305
  %vm7312 = vmor %vm7310, %vm7311
  %v7313 = vsel %vm7312, %v7305, %v7309
  %v7314 = vand.u32 2147483647, %v7304
  %vm7315 = vcmp.eq.f32.partialorder %v7314, 8.507059e+37
  %v7316 = vand.u32 %v7304, 2147483648
  %v7317 = vor.u32 1.1754944e-38, %v7316
  %v7318 = vsel %vm7315, %v7317, %v7313
  %v7319 = vmul.f32 1.0, %v7318
  %v7320 = vtanh.pop %v7280
  %v7321 = vxor.u32 %v7281, 2147483648
  %v7322 = vmul.f32 %v7321, 1.442695
  %v7323 = vpow.pop %v7322
  %v7324 = vadd.f32 %v7323, 1.0
  %v7325 = vrcp.pop %v7324
  %v7326 = vmul.f32 %v7324, %v7325
  %v7327 = vsub.f32 1.0, %v7326
  %v7328 = vmul.f32 %v7325, %v7327
  %v7329 = vadd.f32 %v7325, %v7328
  %vm7330 = vweird.f32 %v7324
  %vm7331 = vweird.f32 %v7325
  %vm7332 = vmor %vm7330, %vm7331
  %v7333 = vsel %vm7332, %v7325, %v7329
  %v7334 = vand.u32 2147483647, %v7324
  %vm7335 = vcmp.eq.f32.partialorder %v7334, 8.507059e+37
  %v7336 = vand.u32 %v7324, 2147483648
  %v7337 = vor.u32 1.1754944e-38, %v7336
  %v7338 = vsel %vm7335, %v7337, %v7333
  %v7339 = vmul.f32 1.0, %v7338
  %v7340 = vmul.f32 %v7319, %v7217
  %v7341 = vmul.f32 %v7300, %v7320
  %v7342 = vadd.f32 %v7340, %v7341
  %v7343 = vtanh.pop %v7342
  %v7344 = vmul.f32 %v7339, %v7343
  %v7345 = vpack.c.bf16 %v7344, %v7344
  %7346 = vmatpush.bf16.msra.mxu0 %v6936
  %7347 = vmatpush.bf16.msra.mxu0 %v6932
  %7348 = vmatpush.bf16.msra.mxu0 %v6928
  %7349 = vmatpush.bf16.msra.mxu0 %v6924
  %7350 = vmatpush.bf16.msra.mxu0 %v6920
  %7351 = vmatpush.bf16.msra.mxu0 %v6916
  %7352 = vmatpush.bf16.msra.mxu0 %v6912
  %7353 = vmatpush.bf16.msra.mxu0 %v6908
  %7354 = vmatmul.bf16.gmra.mxu0 %v7345
  %v7355 = vpop.f32.mrf.mxu0
  %v7356 = vadd.f32 0.0, %v7355
  %v7357 = vpop.f32.mrf.mxu0
  %7358 = vdwg.mxu0
  %7359 = vmatpush.bf16.msra.mxu0 %v6937
  %7360 = vmatpush.bf16.msra.mxu0 %v6933
  %7361 = vmatpush.bf16.msra.mxu0 %v6929
  %7362 = vmatpush.bf16.msra.mxu0 %v6925
  %7363 = vmatpush.bf16.msra.mxu0 %v6921
  %7364 = vmatpush.bf16.msra.mxu0 %v6917
  %7365 = vmatpush.bf16.msra.mxu0 %v6913
  %7366 = vmatpush.bf16.msra.mxu0 %v6909
  %7367 = vmatmul.bf16.gmra.mxu0 %v7345
  %v7368 = vpop.f32.mrf.mxu0
  %v7369 = vadd.f32 0.0, %v7368
  %v7370 = vpop.f32.mrf.mxu0
  %7371 = vdwg.mxu0
  %7372 = vmatpush.bf16.msra.mxu0 %v6938
  %7373 = vmatpush.bf16.msra.mxu0 %v6934
  %7374 = vmatpush.bf16.msra.mxu0 %v6930
  %7375 = vmatpush.bf16.msra.mxu0 %v6926
  %7376 = vmatpush.bf16.msra.mxu0 %v6922
  %7377 = vmatpush.bf16.msra.mxu0 %v6918
  %7378 = vmatpush.bf16.msra.mxu0 %v6914
  %7379 = vmatpush.bf16.msra.mxu0 %v6910
  %7380 = vmatmul.bf16.gmra.mxu0 %v7345
  %v7381 = vpop.f32.mrf.mxu0
  %v7382 = vadd.f32 0.0, %v7381
  %v7383 = vpop.f32.mrf.mxu0
  %7384 = vdwg.mxu0
  %7385 = vmatpush.bf16.msra.mxu0 %v6939
  %7386 = vmatpush.bf16.msra.mxu0 %v6935
  %7387 = vmatpush.bf16.msra.mxu0 %v6931
  %7388 = vmatpush.bf16.msra.mxu0 %v6927
  %7389 = vmatpush.bf16.msra.mxu0 %v6923
  %7390 = vmatpush.bf16.msra.mxu0 %v6919
  %7391 = vmatpush.bf16.msra.mxu0 %v6915
  %7392 = vmatpush.bf16.msra.mxu0 %v6911
  %7393 = vmatmul.bf16.gmra.mxu0 %v7345
  %v7394 = vpop.f32.mrf.mxu0
  %v7395 = vadd.f32 0.0, %v7394
  %v7396 = vpop.f32.mrf.mxu0
  %7397 = vdwg.mxu0
  %s7398 = scalar_lea.vmem [#allocation3], 192
  %v7399 = vld [vmem:[%s7398] sm:$0xff]
  %v7400 = vld [vmem:[%s7398 + $0x8] sm:$0xff]
  %v7401 = vld [vmem:[%s7398 + $0x10] sm:$0xff]
  %v7402 = vld [vmem:[%s7398 + $0x18] sm:$0xff]
  %v7403 = vadd.f32 %v7399, %v7356
  %v7404 = vadd.f32 %v7400, %v7369
  %v7405 = vadd.f32 %v7401, %v7382
  %v7406 = vadd.f32 %v7402, %v7395
  %v7407 = vxor.u32 %v7403, 2147483648
  %v7408 = vmul.f32 %v7407, 1.442695
  %v7409 = vpow.pop %v7408
  %v7410 = vadd.f32 %v7409, 1.0
  %v7411 = vrcp.pop %v7410
  %v7412 = vmul.f32 %v7410, %v7411
  %v7413 = vsub.f32 1.0, %v7412
  %v7414 = vmul.f32 %v7411, %v7413
  %v7415 = vadd.f32 %v7411, %v7414
  %vm7416 = vweird.f32 %v7410
  %vm7417 = vweird.f32 %v7411
  %vm7418 = vmor %vm7416, %vm7417
  %v7419 = vsel %vm7418, %v7411, %v7415
  %v7420 = vand.u32 2147483647, %v7410
  %vm7421 = vcmp.eq.f32.partialorder %v7420, 8.507059e+37
  %v7422 = vand.u32 %v7410, 2147483648
  %v7423 = vor.u32 1.1754944e-38, %v7422
  %v7424 = vsel %vm7421, %v7423, %v7419
  %v7425 = vmul.f32 1.0, %v7424
  %v7426 = vxor.u32 %v7404, 2147483648
  %v7427 = vmul.f32 %v7426, 1.442695
  %v7428 = vpow.pop %v7427
  %v7429 = vadd.f32 %v7428, 1.0
  %v7430 = vrcp.pop %v7429
  %v7431 = vmul.f32 %v7429, %v7430
  %v7432 = vsub.f32 1.0, %v7431
  %v7433 = vmul.f32 %v7430, %v7432
  %v7434 = vadd.f32 %v7430, %v7433
  %vm7435 = vweird.f32 %v7429
  %vm7436 = vweird.f32 %v7430
  %vm7437 = vmor %vm7435, %vm7436
  %v7438 = vsel %vm7437, %v7430, %v7434
  %v7439 = vand.u32 2147483647, %v7429
  %vm7440 = vcmp.eq.f32.partialorder %v7439, 8.507059e+37
  %v7441 = vand.u32 %v7429, 2147483648
  %v7442 = vor.u32 1.1754944e-38, %v7441
  %v7443 = vsel %vm7440, %v7442, %v7438
  %v7444 = vmul.f32 1.0, %v7443
  %v7445 = vtanh.pop %v7405
  %v7446 = vxor.u32 %v7406, 2147483648
  %v7447 = vmul.f32 %v7446, 1.442695
  %v7448 = vpow.pop %v7447
  %v7449 = vadd.f32 %v7448, 1.0
  %v7450 = vrcp.pop %v7449
  %v7451 = vmul.f32 %v7449, %v7450
  %v7452 = vsub.f32 1.0, %v7451
  %v7453 = vmul.f32 %v7450, %v7452
  %v7454 = vadd.f32 %v7450, %v7453
  %vm7455 = vweird.f32 %v7449
  %vm7456 = vweird.f32 %v7450
  %vm7457 = vmor %vm7455, %vm7456
  %v7458 = vsel %vm7457, %v7450, %v7454
  %v7459 = vand.u32 2147483647, %v7449
  %vm7460 = vcmp.eq.f32.partialorder %v7459, 8.507059e+37
  %v7461 = vand.u32 %v7449, 2147483648
  %v7462 = vor.u32 1.1754944e-38, %v7461
  %v7463 = vsel %vm7460, %v7462, %v7458
  %v7464 = vmul.f32 1.0, %v7463
  %v7465 = vmul.f32 %v7444, %v7342
  %v7466 = vmul.f32 %v7425, %v7445
  %v7467 = vadd.f32 %v7465, %v7466
  %v7468 = vtanh.pop %v7467
  %v7469 = vmul.f32 %v7464, %v7468
  %v7470 = vpack.c.bf16 %v7469, %v7469
  %7471 = vmatpush.bf16.msra.mxu0 %v6936
  %7472 = vmatpush.bf16.msra.mxu0 %v6932
  %7473 = vmatpush.bf16.msra.mxu0 %v6928
  %7474 = vmatpush.bf16.msra.mxu0 %v6924
  %7475 = vmatpush.bf16.msra.mxu0 %v6920
  %7476 = vmatpush.bf16.msra.mxu0 %v6916
  %7477 = vmatpush.bf16.msra.mxu0 %v6912
  %7478 = vmatpush.bf16.msra.mxu0 %v6908
  %7479 = vmatmul.bf16.gmra.mxu0 %v7470
  %v7480 = vpop.f32.mrf.mxu0
  %v7481 = vadd.f32 0.0, %v7480
  %v7482 = vpop.f32.mrf.mxu0
  %7483 = vdwg.mxu0
  %7484 = vmatpush.bf16.msra.mxu0 %v6937
  %7485 = vmatpush.bf16.msra.mxu0 %v6933
  %7486 = vmatpush.bf16.msra.mxu0 %v6929
  %7487 = vmatpush.bf16.msra.mxu0 %v6925
  %7488 = vmatpush.bf16.msra.mxu0 %v6921
  %7489 = vmatpush.bf16.msra.mxu0 %v6917
  %7490 = vmatpush.bf16.msra.mxu0 %v6913
  %7491 = vmatpush.bf16.msra.mxu0 %v6909
  %7492 = vmatmul.bf16.gmra.mxu0 %v7470
  %v7493 = vpop.f32.mrf.mxu0
  %v7494 = vadd.f32 0.0, %v7493
  %v7495 = vpop.f32.mrf.mxu0
  %7496 = vdwg.mxu0
  %7497 = vmatpush.bf16.msra.mxu0 %v6938
  %7498 = vmatpush.bf16.msra.mxu0 %v6934
  %7499 = vmatpush.bf16.msra.mxu0 %v6930
  %7500 = vmatpush.bf16.msra.mxu0 %v6926
  %7501 = vmatpush.bf16.msra.mxu0 %v6922
  %7502 = vmatpush.bf16.msra.mxu0 %v6918
  %7503 = vmatpush.bf16.msra.mxu0 %v6914
  %7504 = vmatpush.bf16.msra.mxu0 %v6910
  %7505 = vmatmul.bf16.gmra.mxu0 %v7470
  %v7506 = vpop.f32.mrf.mxu0
  %v7507 = vadd.f32 0.0, %v7506
  %v7508 = vpop.f32.mrf.mxu0
  %7509 = vdwg.mxu0
  %7510 = vmatpush.bf16.msra.mxu0 %v6939
  %7511 = vmatpush.bf16.msra.mxu0 %v6935
  %7512 = vmatpush.bf16.msra.mxu0 %v6931
  %7513 = vmatpush.bf16.msra.mxu0 %v6927
  %7514 = vmatpush.bf16.msra.mxu0 %v6923
  %7515 = vmatpush.bf16.msra.mxu0 %v6919
  %7516 = vmatpush.bf16.msra.mxu0 %v6915
  %7517 = vmatpush.bf16.msra.mxu0 %v6911
  %7518 = vmatmul.bf16.gmra.mxu0 %v7470
  %v7519 = vpop.f32.mrf.mxu0
  %v7520 = vadd.f32 0.0, %v7519
  %v7521 = vpop.f32.mrf.mxu0
  %7522 = vdwg.mxu0
  %s7523 = scalar_lea.vmem [#allocation3], 256
  %v7524 = vld [vmem:[%s7523] sm:$0xff]
  %v7525 = vld [vmem:[%s7523 + $0x8] sm:$0xff]
  %v7526 = vld [vmem:[%s7523 + $0x10] sm:$0xff]
  %v7527 = vld [vmem:[%s7523 + $0x18] sm:$0xff]
  %v7528 = vadd.f32 %v7524, %v7481
  %v7529 = vadd.f32 %v7525, %v7494
  %v7530 = vadd.f32 %v7526, %v7507
  %v7531 = vadd.f32 %v7527, %v7520
  %v7532 = vxor.u32 %v7528, 2147483648
  %v7533 = vmul.f32 %v7532, 1.442695
  %v7534 = vpow.pop %v7533
  %v7535 = vadd.f32 %v7534, 1.0
  %v7536 = vrcp.pop %v7535
  %v7537 = vmul.f32 %v7535, %v7536
  %v7538 = vsub.f32 1.0, %v7537
  %v7539 = vmul.f32 %v7536, %v7538
  %v7540 = vadd.f32 %v7536, %v7539
  %vm7541 = vweird.f32 %v7535
  %vm7542 = vweird.f32 %v7536
  %vm7543 = vmor %vm7541, %vm7542
  %v7544 = vsel %vm7543, %v7536, %v7540
  %v7545 = vand.u32 2147483647, %v7535
  %vm7546 = vcmp.eq.f32.partialorder %v7545, 8.507059e+37
  %v7547 = vand.u32 %v7535, 2147483648
  %v7548 = vor.u32 1.1754944e-38, %v7547
  %v7549 = vsel %vm7546, %v7548, %v7544
  %v7550 = vmul.f32 1.0, %v7549
  %v7551 = vxor.u32 %v7529, 2147483648
  %v7552 = vmul.f32 %v7551, 1.442695
  %v7553 = vpow.pop %v7552
  %v7554 = vadd.f32 %v7553, 1.0
  %v7555 = vrcp.pop %v7554
  %v7556 = vmul.f32 %v7554, %v7555
  %v7557 = vsub.f32 1.0, %v7556
  %v7558 = vmul.f32 %v7555, %v7557
  %v7559 = vadd.f32 %v7555, %v7558
  %vm7560 = vweird.f32 %v7554
  %vm7561 = vweird.f32 %v7555
  %vm7562 = vmor %vm7560, %vm7561
  %v7563 = vsel %vm7562, %v7555, %v7559
  %v7564 = vand.u32 2147483647, %v7554
  %vm7565 = vcmp.eq.f32.partialorder %v7564, 8.507059e+37
  %v7566 = vand.u32 %v7554, 2147483648
  %v7567 = vor.u32 1.1754944e-38, %v7566
  %v7568 = vsel %vm7565, %v7567, %v7563
  %v7569 = vmul.f32 1.0, %v7568
  %v7570 = vtanh.pop %v7530
  %v7571 = vxor.u32 %v7531, 2147483648
  %v7572 = vmul.f32 %v7571, 1.442695
  %v7573 = vpow.pop %v7572
  %v7574 = vadd.f32 %v7573, 1.0
  %v7575 = vrcp.pop %v7574
  %v7576 = vmul.f32 %v7574, %v7575
  %v7577 = vsub.f32 1.0, %v7576
  %v7578 = vmul.f32 %v7575, %v7577
  %v7579 = vadd.f32 %v7575, %v7578
  %vm7580 = vweird.f32 %v7574
  %vm7581 = vweird.f32 %v7575
  %vm7582 = vmor %vm7580, %vm7581
  %v7583 = vsel %vm7582, %v7575, %v7579
  %v7584 = vand.u32 2147483647, %v7574
  %vm7585 = vcmp.eq.f32.partialorder %v7584, 8.507059e+37
  %v7586 = vand.u32 %v7574, 2147483648
  %v7587 = vor.u32 1.1754944e-38, %v7586
  %v7588 = vsel %vm7585, %v7587, %v7583
  %v7589 = vmul.f32 1.0, %v7588
  %v7590 = vmul.f32 %v7569, %v7467
  %v7591 = vmul.f32 %v7550, %v7570
  %v7592 = vadd.f32 %v7590, %v7591
  %v7593 = vtanh.pop %v7592
  %v7594 = vmul.f32 %v7589, %v7593
  %v7595 = vpack.c.bf16 %v7594, %v7594
  %7596 = vmatpush.bf16.msra.mxu0 %v6936
  %7597 = vmatpush.bf16.msra.mxu0 %v6932
  %7598 = vmatpush.bf16.msra.mxu0 %v6928
  %7599 = vmatpush.bf16.msra.mxu0 %v6924
  %7600 = vmatpush.bf16.msra.mxu0 %v6920
  %7601 = vmatpush.bf16.msra.mxu0 %v6916
  %7602 = vmatpush.bf16.msra.mxu0 %v6912
  %7603 = vmatpush.bf16.msra.mxu0 %v6908
  %7604 = vmatmul.bf16.gmra.mxu0 %v7595
  %v7605 = vpop.f32.mrf.mxu0
  %v7606 = vadd.f32 0.0, %v7605
  %v7607 = vpop.f32.mrf.mxu0
  %7608 = vdwg.mxu0
  %7609 = vmatpush.bf16.msra.mxu0 %v6937
  %7610 = vmatpush.bf16.msra.mxu0 %v6933
  %7611 = vmatpush.bf16.msra.mxu0 %v6929
  %7612 = vmatpush.bf16.msra.mxu0 %v6925
  %7613 = vmatpush.bf16.msra.mxu0 %v6921
  %7614 = vmatpush.bf16.msra.mxu0 %v6917
  %7615 = vmatpush.bf16.msra.mxu0 %v6913
  %7616 = vmatpush.bf16.msra.mxu0 %v6909
  %7617 = vmatmul.bf16.gmra.mxu0 %v7595
  %v7618 = vpop.f32.mrf.mxu0
  %v7619 = vadd.f32 0.0, %v7618
  %v7620 = vpop.f32.mrf.mxu0
  %7621 = vdwg.mxu0
  %7622 = vmatpush.bf16.msra.mxu0 %v6938
  %7623 = vmatpush.bf16.msra.mxu0 %v6934
  %7624 = vmatpush.bf16.msra.mxu0 %v6930
  %7625 = vmatpush.bf16.msra.mxu0 %v6926
  %7626 = vmatpush.bf16.msra.mxu0 %v6922
  %7627 = vmatpush.bf16.msra.mxu0 %v6918
  %7628 = vmatpush.bf16.msra.mxu0 %v6914
  %7629 = vmatpush.bf16.msra.mxu0 %v6910
  %7630 = vmatmul.bf16.gmra.mxu0 %v7595
  %v7631 = vpop.f32.mrf.mxu0
  %v7632 = vadd.f32 0.0, %v7631
  %v7633 = vpop.f32.mrf.mxu0
  %7634 = vdwg.mxu0
  %7635 = vmatpush.bf16.msra.mxu0 %v6939
  %7636 = vmatpush.bf16.msra.mxu0 %v6935
  %7637 = vmatpush.bf16.msra.mxu0 %v6931
  %7638 = vmatpush.bf16.msra.mxu0 %v6927
  %7639 = vmatpush.bf16.msra.mxu0 %v6923
  %7640 = vmatpush.bf16.msra.mxu0 %v6919
  %7641 = vmatpush.bf16.msra.mxu0 %v6915
  %7642 = vmatpush.bf16.msra.mxu0 %v6911
  %7643 = vmatmul.bf16.gmra.mxu0 %v7595
  %v7644 = vpop.f32.mrf.mxu0
  %v7645 = vadd.f32 0.0, %v7644
  %v7646 = vpop.f32.mrf.mxu0
  %7647 = vdwg.mxu0
  %s7648 = scalar_lea.vmem [#allocation3], 320
  %v7649 = vld [vmem:[%s7648] sm:$0xff]
  %v7650 = vld [vmem:[%s7648 + $0x8] sm:$0xff]
  %v7651 = vld [vmem:[%s7648 + $0x10] sm:$0xff]
  %v7652 = vld [vmem:[%s7648 + $0x18] sm:$0xff]
  %v7653 = vadd.f32 %v7649, %v7606
  %v7654 = vadd.f32 %v7650, %v7619
  %v7655 = vadd.f32 %v7651, %v7632
  %v7656 = vadd.f32 %v7652, %v7645
  %v7657 = vxor.u32 %v7653, 2147483648
  %v7658 = vmul.f32 %v7657, 1.442695
  %v7659 = vpow.pop %v7658
  %v7660 = vadd.f32 %v7659, 1.0
  %v7661 = vrcp.pop %v7660
  %v7662 = vmul.f32 %v7660, %v7661
  %v7663 = vsub.f32 1.0, %v7662
  %v7664 = vmul.f32 %v7661, %v7663
  %v7665 = vadd.f32 %v7661, %v7664
  %vm7666 = vweird.f32 %v7660
  %vm7667 = vweird.f32 %v7661
  %vm7668 = vmor %vm7666, %vm7667
  %v7669 = vsel %vm7668, %v7661, %v7665
  %v7670 = vand.u32 2147483647, %v7660
  %vm7671 = vcmp.eq.f32.partialorder %v7670, 8.507059e+37
  %v7672 = vand.u32 %v7660, 2147483648
  %v7673 = vor.u32 1.1754944e-38, %v7672
  %v7674 = vsel %vm7671, %v7673, %v7669
  %v7675 = vmul.f32 1.0, %v7674
  %v7676 = vxor.u32 %v7654, 2147483648
  %v7677 = vmul.f32 %v7676, 1.442695
  %v7678 = vpow.pop %v7677
  %v7679 = vadd.f32 %v7678, 1.0
  %v7680 = vrcp.pop %v7679
  %v7681 = vmul.f32 %v7679, %v7680
  %v7682 = vsub.f32 1.0, %v7681
  %v7683 = vmul.f32 %v7680, %v7682
  %v7684 = vadd.f32 %v7680, %v7683
  %vm7685 = vweird.f32 %v7679
  %vm7686 = vweird.f32 %v7680
  %vm7687 = vmor %vm7685, %vm7686
  %v7688 = vsel %vm7687, %v7680, %v7684
  %v7689 = vand.u32 2147483647, %v7679
  %vm7690 = vcmp.eq.f32.partialorder %v7689, 8.507059e+37
  %v7691 = vand.u32 %v7679, 2147483648
  %v7692 = vor.u32 1.1754944e-38, %v7691
  %v7693 = vsel %vm7690, %v7692, %v7688
  %v7694 = vmul.f32 1.0, %v7693
  %v7695 = vtanh.pop %v7655
  %v7696 = vxor.u32 %v7656, 2147483648
  %v7697 = vmul.f32 %v7696, 1.442695
  %v7698 = vpow.pop %v7697
  %v7699 = vadd.f32 %v7698, 1.0
  %v7700 = vrcp.pop %v7699
  %v7701 = vmul.f32 %v7699, %v7700
  %v7702 = vsub.f32 1.0, %v7701
  %v7703 = vmul.f32 %v7700, %v7702
  %v7704 = vadd.f32 %v7700, %v7703
  %vm7705 = vweird.f32 %v7699
  %vm7706 = vweird.f32 %v7700
  %vm7707 = vmor %vm7705, %vm7706
  %v7708 = vsel %vm7707, %v7700, %v7704
  %v7709 = vand.u32 2147483647, %v7699
  %vm7710 = vcmp.eq.f32.partialorder %v7709, 8.507059e+37
  %v7711 = vand.u32 %v7699, 2147483648
  %v7712 = vor.u32 1.1754944e-38, %v7711
  %v7713 = vsel %vm7710, %v7712, %v7708
  %v7714 = vmul.f32 1.0, %v7713
  %v7715 = vmul.f32 %v7694, %v7592
  %v7716 = vmul.f32 %v7675, %v7695
  %v7717 = vadd.f32 %v7715, %v7716
  %v7718 = vtanh.pop %v7717
  %v7719 = vmul.f32 %v7714, %v7718
  %v7720 = vpack.c.bf16 %v7719, %v7719
  %7721 = vmatpush.bf16.msra.mxu0 %v6936
  %7722 = vmatpush.bf16.msra.mxu0 %v6932
  %7723 = vmatpush.bf16.msra.mxu0 %v6928
  %7724 = vmatpush.bf16.msra.mxu0 %v6924
  %7725 = vmatpush.bf16.msra.mxu0 %v6920
  %7726 = vmatpush.bf16.msra.mxu0 %v6916
  %7727 = vmatpush.bf16.msra.mxu0 %v6912
  %7728 = vmatpush.bf16.msra.mxu0 %v6908
  %7729 = vmatmul.bf16.gmra.mxu0 %v7720
  %v7730 = vpop.f32.mrf.mxu0
  %v7731 = vadd.f32 0.0, %v7730
  %v7732 = vpop.f32.mrf.mxu0
  %7733 = vdwg.mxu0
  %7734 = vmatpush.bf16.msra.mxu0 %v6937
  %7735 = vmatpush.bf16.msra.mxu0 %v6933
  %7736 = vmatpush.bf16.msra.mxu0 %v6929
  %7737 = vmatpush.bf16.msra.mxu0 %v6925
  %7738 = vmatpush.bf16.msra.mxu0 %v6921
  %7739 = vmatpush.bf16.msra.mxu0 %v6917
  %7740 = vmatpush.bf16.msra.mxu0 %v6913
  %7741 = vmatpush.bf16.msra.mxu0 %v6909
  %7742 = vmatmul.bf16.gmra.mxu0 %v7720
  %v7743 = vpop.f32.mrf.mxu0
  %v7744 = vadd.f32 0.0, %v7743
  %v7745 = vpop.f32.mrf.mxu0
  %7746 = vdwg.mxu0
  %7747 = vmatpush.bf16.msra.mxu0 %v6938
  %7748 = vmatpush.bf16.msra.mxu0 %v6934
  %7749 = vmatpush.bf16.msra.mxu0 %v6930
  %7750 = vmatpush.bf16.msra.mxu0 %v6926
  %7751 = vmatpush.bf16.msra.mxu0 %v6922
  %7752 = vmatpush.bf16.msra.mxu0 %v6918
  %7753 = vmatpush.bf16.msra.mxu0 %v6914
  %7754 = vmatpush.bf16.msra.mxu0 %v6910
  %7755 = vmatmul.bf16.gmra.mxu0 %v7720
  %v7756 = vpop.f32.mrf.mxu0
  %v7757 = vadd.f32 0.0, %v7756
  %v7758 = vpop.f32.mrf.mxu0
  %7759 = vdwg.mxu0
  %7760 = vmatpush.bf16.msra.mxu0 %v6939
  %7761 = vmatpush.bf16.msra.mxu0 %v6935
  %7762 = vmatpush.bf16.msra.mxu0 %v6931
  %7763 = vmatpush.bf16.msra.mxu0 %v6927
  %7764 = vmatpush.bf16.msra.mxu0 %v6923
  %7765 = vmatpush.bf16.msra.mxu0 %v6919
  %7766 = vmatpush.bf16.msra.mxu0 %v6915
  %7767 = vmatpush.bf16.msra.mxu0 %v6911
  %7768 = vmatmul.bf16.gmra.mxu0 %v7720
  %v7769 = vpop.f32.mrf.mxu0
  %v7770 = vadd.f32 0.0, %v7769
  %v7771 = vpop.f32.mrf.mxu0
  %7772 = vdwg.mxu0
  %s7773 = scalar_lea.vmem [#allocation3], 384
  %v7774 = vld [vmem:[%s7773] sm:$0xff]
  %v7775 = vld [vmem:[%s7773 + $0x8] sm:$0xff]
  %v7776 = vld [vmem:[%s7773 + $0x10] sm:$0xff]
  %v7777 = vld [vmem:[%s7773 + $0x18] sm:$0xff]
  %v7778 = vadd.f32 %v7774, %v7731
  %v7779 = vadd.f32 %v7775, %v7744
  %v7780 = vadd.f32 %v7776, %v7757
  %v7781 = vadd.f32 %v7777, %v7770
  %v7782 = vxor.u32 %v7778, 2147483648
  %v7783 = vmul.f32 %v7782, 1.442695
  %v7784 = vpow.pop %v7783
  %v7785 = vadd.f32 %v7784, 1.0
  %v7786 = vrcp.pop %v7785
  %v7787 = vmul.f32 %v7785, %v7786
  %v7788 = vsub.f32 1.0, %v7787
  %v7789 = vmul.f32 %v7786, %v7788
  %v7790 = vadd.f32 %v7786, %v7789
  %vm7791 = vweird.f32 %v7785
  %vm7792 = vweird.f32 %v7786
  %vm7793 = vmor %vm7791, %vm7792
  %v7794 = vsel %vm7793, %v7786, %v7790
  %v7795 = vand.u32 2147483647, %v7785
  %vm7796 = vcmp.eq.f32.partialorder %v7795, 8.507059e+37
  %v7797 = vand.u32 %v7785, 2147483648
  %v7798 = vor.u32 1.1754944e-38, %v7797
  %v7799 = vsel %vm7796, %v7798, %v7794
  %v7800 = vmul.f32 1.0, %v7799
  %v7801 = vxor.u32 %v7779, 2147483648
  %v7802 = vmul.f32 %v7801, 1.442695
  %v7803 = vpow.pop %v7802
  %v7804 = vadd.f32 %v7803, 1.0
  %v7805 = vrcp.pop %v7804
  %v7806 = vmul.f32 %v7804, %v7805
  %v7807 = vsub.f32 1.0, %v7806
  %v7808 = vmul.f32 %v7805, %v7807
  %v7809 = vadd.f32 %v7805, %v7808
  %vm7810 = vweird.f32 %v7804
  %vm7811 = vweird.f32 %v7805
  %vm7812 = vmor %vm7810, %vm7811
  %v7813 = vsel %vm7812, %v7805, %v7809
  %v7814 = vand.u32 2147483647, %v7804
  %vm7815 = vcmp.eq.f32.partialorder %v7814, 8.507059e+37
  %v7816 = vand.u32 %v7804, 2147483648
  %v7817 = vor.u32 1.1754944e-38, %v7816
  %v7818 = vsel %vm7815, %v7817, %v7813
  %v7819 = vmul.f32 1.0, %v7818
  %v7820 = vtanh.pop %v7780
  %v7821 = vxor.u32 %v7781, 2147483648
  %v7822 = vmul.f32 %v7821, 1.442695
  %v7823 = vpow.pop %v7822
  %v7824 = vadd.f32 %v7823, 1.0
  %v7825 = vrcp.pop %v7824
  %v7826 = vmul.f32 %v7824, %v7825
  %v7827 = vsub.f32 1.0, %v7826
  %v7828 = vmul.f32 %v7825, %v7827
  %v7829 = vadd.f32 %v7825, %v7828
  %vm7830 = vweird.f32 %v7824
  %vm7831 = vweird.f32 %v7825
  %vm7832 = vmor %vm7830, %vm7831
  %v7833 = vsel %vm7832, %v7825, %v7829
  %v7834 = vand.u32 2147483647, %v7824
  %vm7835 = vcmp.eq.f32.partialorder %v7834, 8.507059e+37
  %v7836 = vand.u32 %v7824, 2147483648
  %v7837 = vor.u32 1.1754944e-38, %v7836
  %v7838 = vsel %vm7835, %v7837, %v7833
  %v7839 = vmul.f32 1.0, %v7838
  %v7840 = vmul.f32 %v7819, %v7717
  %v7841 = vmul.f32 %v7800, %v7820
  %v7842 = vadd.f32 %v7840, %v7841
  %v7843 = vtanh.pop %v7842
  %v7844 = vmul.f32 %v7839, %v7843
  %v7845 = vpack.c.bf16 %v7844, %v7844
  %7846 = vmatpush.bf16.msra.mxu0 %v6936
  %7847 = vmatpush.bf16.msra.mxu0 %v6932
  %7848 = vmatpush.bf16.msra.mxu0 %v6928
  %7849 = vmatpush.bf16.msra.mxu0 %v6924
  %7850 = vmatpush.bf16.msra.mxu0 %v6920
  %7851 = vmatpush.bf16.msra.mxu0 %v6916
  %7852 = vmatpush.bf16.msra.mxu0 %v6912
  %7853 = vmatpush.bf16.msra.mxu0 %v6908
  %7854 = vmatmul.bf16.gmra.mxu0 %v7845
  %v7855 = vpop.f32.mrf.mxu0
  %v7856 = vadd.f32 0.0, %v7855
  %v7857 = vpop.f32.mrf.mxu0
  %7858 = vdwg.mxu0
  %7859 = vmatpush.bf16.msra.mxu0 %v6937
  %7860 = vmatpush.bf16.msra.mxu0 %v6933
  %7861 = vmatpush.bf16.msra.mxu0 %v6929
  %7862 = vmatpush.bf16.msra.mxu0 %v6925
  %7863 = vmatpush.bf16.msra.mxu0 %v6921
  %7864 = vmatpush.bf16.msra.mxu0 %v6917
  %7865 = vmatpush.bf16.msra.mxu0 %v6913
  %7866 = vmatpush.bf16.msra.mxu0 %v6909
  %7867 = vmatmul.bf16.gmra.mxu0 %v7845
  %v7868 = vpop.f32.mrf.mxu0
  %v7869 = vadd.f32 0.0, %v7868
  %v7870 = vpop.f32.mrf.mxu0
  %7871 = vdwg.mxu0
  %7872 = vmatpush.bf16.msra.mxu0 %v6938
  %7873 = vmatpush.bf16.msra.mxu0 %v6934
  %7874 = vmatpush.bf16.msra.mxu0 %v6930
  %7875 = vmatpush.bf16.msra.mxu0 %v6926
  %7876 = vmatpush.bf16.msra.mxu0 %v6922
  %7877 = vmatpush.bf16.msra.mxu0 %v6918
  %7878 = vmatpush.bf16.msra.mxu0 %v6914
  %7879 = vmatpush.bf16.msra.mxu0 %v6910
  %7880 = vmatmul.bf16.gmra.mxu0 %v7845
  %v7881 = vpop.f32.mrf.mxu0
  %v7882 = vadd.f32 0.0, %v7881
  %v7883 = vpop.f32.mrf.mxu0
  %7884 = vdwg.mxu0
  %7885 = vmatpush.bf16.msra.mxu0 %v6939
  %7886 = vmatpush.bf16.msra.mxu0 %v6935
  %7887 = vmatpush.bf16.msra.mxu0 %v6931
  %7888 = vmatpush.bf16.msra.mxu0 %v6927
  %7889 = vmatpush.bf16.msra.mxu0 %v6923
  %7890 = vmatpush.bf16.msra.mxu0 %v6919
  %7891 = vmatpush.bf16.msra.mxu0 %v6915
  %7892 = vmatpush.bf16.msra.mxu0 %v6911
  %7893 = vmatmul.bf16.gmra.mxu0 %v7845
  %v7894 = vpop.f32.mrf.mxu0
  %v7895 = vadd.f32 0.0, %v7894
  %v7896 = vpop.f32.mrf.mxu0
  %7897 = vdwg.mxu0
  %v7898 = vld [vmem:[%s6701] sm:$0xff]
  %v7899 = vld [vmem:[%s6701 + $0x8] sm:$0xff]
  %v7900 = vld [vmem:[%s6701 + $0x10] sm:$0xff]
  %v7901 = vld [vmem:[%s6701 + $0x18] sm:$0xff]
  %v7902 = vadd.f32 %v7898, %v7856
  %v7903 = vadd.f32 %v7899, %v7869
  %v7904 = vadd.f32 %v7900, %v7882
  %v7905 = vadd.f32 %v7901, %v7895
  %v7906 = vxor.u32 %v7902, 2147483648
  %v7907 = vmul.f32 %v7906, 1.442695
  %v7908 = vpow.pop %v7907
  %v7909 = vadd.f32 %v7908, 1.0
  %v7910 = vrcp.pop %v7909
  %v7911 = vmul.f32 %v7909, %v7910
  %v7912 = vsub.f32 1.0, %v7911
  %v7913 = vmul.f32 %v7910, %v7912
  %v7914 = vadd.f32 %v7910, %v7913
  %vm7915 = vweird.f32 %v7909
  %vm7916 = vweird.f32 %v7910
  %vm7917 = vmor %vm7915, %vm7916
  %v7918 = vsel %vm7917, %v7910, %v7914
  %v7919 = vand.u32 2147483647, %v7909
  %vm7920 = vcmp.eq.f32.partialorder %v7919, 8.507059e+37
  %v7921 = vand.u32 %v7909, 2147483648
  %v7922 = vor.u32 1.1754944e-38, %v7921
  %v7923 = vsel %vm7920, %v7922, %v7918
  %v7924 = vmul.f32 1.0, %v7923
  %v7925 = vxor.u32 %v7903, 2147483648
  %v7926 = vmul.f32 %v7925, 1.442695
  %v7927 = vpow.pop %v7926
  %v7928 = vadd.f32 %v7927, 1.0
  %v7929 = vrcp.pop %v7928
  %v7930 = vmul.f32 %v7928, %v7929
  %v7931 = vsub.f32 1.0, %v7930
  %v7932 = vmul.f32 %v7929, %v7931
  %v7933 = vadd.f32 %v7929, %v7932
  %vm7934 = vweird.f32 %v7928
  %vm7935 = vweird.f32 %v7929
  %vm7936 = vmor %vm7934, %vm7935
  %v7937 = vsel %vm7936, %v7929, %v7933
  %v7938 = vand.u32 2147483647, %v7928
  %vm7939 = vcmp.eq.f32.partialorder %v7938, 8.507059e+37
  %v7940 = vand.u32 %v7928, 2147483648
  %v7941 = vor.u32 1.1754944e-38, %v7940
  %v7942 = vsel %vm7939, %v7941, %v7937
  %v7943 = vmul.f32 1.0, %v7942
  %v7944 = vtanh.pop %v7904
  %v7945 = vxor.u32 %v7905, 2147483648
  %v7946 = vmul.f32 %v7945, 1.442695
  %v7947 = vpow.pop %v7946
  %v7948 = vadd.f32 %v7947, 1.0
  %v7949 = vrcp.pop %v7948
  %v7950 = vmul.f32 %v7948, %v7949
  %v7951 = vsub.f32 1.0, %v7950
  %v7952 = vmul.f32 %v7949, %v7951
  %v7953 = vadd.f32 %v7949, %v7952
  %vm7954 = vweird.f32 %v7948
  %vm7955 = vweird.f32 %v7949
  %vm7956 = vmor %vm7954, %vm7955
  %v7957 = vsel %vm7956, %v7949, %v7953
  %v7958 = vand.u32 2147483647, %v7948
  %vm7959 = vcmp.eq.f32.partialorder %v7958, 8.507059e+37
  %v7960 = vand.u32 %v7948, 2147483648
  %v7961 = vor.u32 1.1754944e-38, %v7960
  %v7962 = vsel %vm7959, %v7961, %v7957
  %v7963 = vmul.f32 1.0, %v7962
  %v7964 = vmul.f32 %v7943, %v7842
  %v7965 = vmul.f32 %v7924, %v7944
  %v7966 = vadd.f32 %v7964, %v7965
  %v7967 = vtanh.pop %v7966
  %v7968 = vmul.f32 %v7963, %v7967
  %v7969 = vld [vmem:[%s7] sm:$0xff]
  %v7970 = vld [vmem:[%s7 + $0x8] sm:$0xff]
  %v7971 = vld [vmem:[%s7 + $0x10] sm:$0xff]
  %v7972 = vld [vmem:[%s7 + $0x18] sm:$0xff]
  %v7973 = vld [vmem:[%s7 + $0x20] sm:$0xff]
  %v7974 = vld [vmem:[%s7 + $0x28] sm:$0xff]
  %v7975 = vld [vmem:[%s7 + $0x30] sm:$0xff]
  %v7976 = vld [vmem:[%s7 + $0x38] sm:$0xff]
  %v7977 = vld [vmem:[%s7 + $0x40] sm:$0xff]
  %v7978 = vld [vmem:[%s7 + $0x48] sm:$0xff]
  %v7979 = vld [vmem:[%s7 + $0x50] sm:$0xff]
  %v7980 = vld [vmem:[%s7 + $0x58] sm:$0xff]
  %v7981 = vld [vmem:[%s7 + $0x60] sm:$0xff]
  %v7982 = vld [vmem:[%s7 + $0x68] sm:$0xff]
  %v7983 = vld [vmem:[%s7 + $0x70] sm:$0xff]
  %v7984 = vld [vmem:[%s7 + $0x78] sm:$0xff]
  %v7985 = vld [vmem:[%s7 + $0x80] sm:$0xff]
  %v7986 = vld [vmem:[%s7 + $0x88] sm:$0xff]
  %v7987 = vld [vmem:[%s7 + $0x90] sm:$0xff]
  %v7988 = vld [vmem:[%s7 + $0x98] sm:$0xff]
  %v7989 = vld [vmem:[%s7 + $0xa0] sm:$0xff]
  %v7990 = vld [vmem:[%s7 + $0xa8] sm:$0xff]
  %v7991 = vld [vmem:[%s7 + $0xb0] sm:$0xff]
  %v7992 = vld [vmem:[%s7 + $0xb8] sm:$0xff]
  %v7993 = vld [vmem:[%s7 + $0xc0] sm:$0xff]
  %v7994 = vld [vmem:[%s7 + $0xc8] sm:$0xff]
  %v7995 = vld [vmem:[%s7 + $0xd0] sm:$0xff]
  %v7996 = vld [vmem:[%s7 + $0xd8] sm:$0xff]
  %v7997 = vld [vmem:[%s7 + $0xe0] sm:$0xff]
  %v7998 = vld [vmem:[%s7 + $0xe8] sm:$0xff]
  %v7999 = vld [vmem:[%s7 + $0xf0] sm:$0xff]
  %v8000 = vld [vmem:[%s7 + $0xf8] sm:$0xff]
  %v8001 = vld [vmem:[%s8] sm:$0x1]
  %v8003 = vperm.slane %v8001, 0
  %8005 = vmatpush.msra.mxu0 %v7984
  %8006 = vmatpush.msra.mxu0 %v7983
  %8007 = vmatpush.msra.mxu0 %v7982
  %8008 = vmatpush.msra.mxu0 %v7981
  %8009 = vmatpush.msra.mxu0 %v7980
  %8010 = vmatpush.msra.mxu0 %v7979
  %8011 = vmatpush.msra.mxu0 %v7978
  %8012 = vmatpush.msra.mxu0 %v7977
  %8013 = vmatpush.msra.mxu0 %v7976
  %8014 = vmatpush.msra.mxu0 %v7975
  %8015 = vmatpush.msra.mxu0 %v7974
  %8016 = vmatpush.msra.mxu0 %v7973
  %8017 = vmatpush.msra.mxu0 %v7972
  %8018 = vmatpush.msra.mxu0 %v7971
  %8019 = vmatpush.msra.mxu0 %v7970
  %8020 = vmatpush.msra.mxu0 %v7969
  %8021 = vmatmul.f32.gmra.mxu0 %v7968
  %v8022 = vpop.f32.mrf.mxu0
  %v8023 = vadd.f32 %v8003, %v8022
  %8024 = vdwg.mxu0
  %8025 = vmatpush.msra.mxu0 %v8000
  %8026 = vmatpush.msra.mxu0 %v7999
  %8027 = vmatpush.msra.mxu0 %v7998
  %8028 = vmatpush.msra.mxu0 %v7997
  %8029 = vmatpush.msra.mxu0 %v7996
  %8030 = vmatpush.msra.mxu0 %v7995
  %8031 = vmatpush.msra.mxu0 %v7994
  %8032 = vmatpush.msra.mxu0 %v7993
  %8033 = vmatpush.msra.mxu0 %v7992
  %8034 = vmatpush.msra.mxu0 %v7991
  %8035 = vmatpush.msra.mxu0 %v7990
  %8036 = vmatpush.msra.mxu0 %v7989
  %8037 = vmatpush.msra.mxu0 %v7988
  %8038 = vmatpush.msra.mxu0 %v7987
  %8039 = vmatpush.msra.mxu0 %v7986
  %8040 = vmatpush.msra.mxu0 %v7985
  %8041 = vmatmul.f32.gmra.mxu0 %v6774
  %v8042 = vpop.f32.mrf.mxu0
  %v8043 = vadd.f32 %v8023, %v8042
  %8044 = vdwg.mxu0
  %v8045 = vmax.f32 %v8043, 0.0
  %8046 = vst [vmem:[%s9] sm:$0xff] %v8045
  // Predicated region
  $region38: #{bilstm_forward.3} parent=0 // pred_check
    _
  $region39: #{bilstm_forward.3} parent=0 // pred_check_branch
    %8048 = sbr.rel (0) target = $region41
  $region40: #{bilstm_forward.3} parent=0 // pred_region
    _
  $region41: #{bilstm_forward.3} parent=0 // pred_fallthru
    _
  // Predicated region
  $region42: #{bilstm_forward.3} parent=0 // pred_check
    _
  $region43: #{bilstm_forward.3} parent=0 // pred_check_branch
    %8050 = sbr.rel (0) target = $region45
  $region44: #{bilstm_forward.3} parent=0 // pred_region
    _
  $region45: #{bilstm_forward.3} parent=0 // pred_fallthru
    _

</llo_original>
